<compile_context>
chip_gen: v7x
topology: tpu7x:2x2x1
jax: 0.10.0
libtpu: 0.0.40
codegen_flags: <defaults>
</compile_context>

<pallas_src>
import functools

import jax
import jax.numpy as jnp
from jax.experimental import pallas as pl
from jax.experimental.pallas import tpu as pltpu


# -----------------------------------------------------------------------------
# VGG19 plan (mirrors torchvision vgg19().features and the PyTorch truncation)
# -----------------------------------------------------------------------------
_VGG19_CFG = [64, 64, "M", 128, 128, "M", 256, 256, 256, 256, "M",
              512, 512, 512, 512, "M", 512, 512, 512, 512, "M"]


def truncated_vgg19_plan(i, j):
    """Replicates TruncatedVGG19.__init__'s truncation; returns an op plan."""
    layers = []
    for v in _VGG19_CFG:
        if v == "M":
            layers.append(("pool",))
        else:
            layers.append(("conv", v))
            layers.append(("relu",))

    maxpool_counter = 0
    conv_counter = 0
    truncate_at = 0
    found = False
    for layer in layers:
        truncate_at += 1
        if layer[0] == "conv":
            conv_counter += 1
        if layer[0] == "pool":
            maxpool_counter += 1
            conv_counter = 0
        if maxpool_counter == i - 1 and conv_counter == j:
            found = True
            break
    assert found, f"One or both of i={i} and j={j} are not valid for VGG19"
    truncated = layers[:truncate_at + 1]

    plan = []
    in_ch = 3
    idx = 0
    while idx < len(truncated):
        tag = truncated[idx]
        if tag[0] == "conv":
            out_ch = tag[1]
            fuse_relu = idx + 1 < len(truncated) and truncated[idx + 1][0] == "relu"
            plan.append(("conv", in_ch, out_ch, fuse_relu))
            in_ch = out_ch
            idx += 2 if fuse_relu else 1
        elif tag[0] == "pool":
            plan.append(("pool",))
            idx += 1
        else:  # stray relu
            idx += 1
    return plan


# -----------------------------------------------------------------------------
# Fused conv3x3 (+bias, +ReLU, +2x2 max-pool, +zero-halo output) Pallas kernel
# -----------------------------------------------------------------------------
@functools.lru_cache(maxsize=1)
def _preferred_cout_tile():
    # v6e/v7x MXUs are 256 wide -> 256-wide Cout tiles halve grid steps and
    # weight DMAs there; v5e (and older) MXUs are 128 wide -> keep 128.
    try:
        kind = jax.devices()[0].device_kind.lower()
    except Exception:
        return 128
    return 128 if any(v in kind for v in ("v2", "v3", "v4", "v5")) else 256


def _make_conv_kernel(*, mode, apply_relu, fuse_pool, pad_output):
    """mode == "im2col": x_ref is (1, H, W, 9*Cin), taps pre-gathered on lanes
                         (Cin=3 first layer) -> one K=9*Cin matmul.
       mode == "dh3":    x_ref is (1, H+2, W+2, Cin) zero-halo padded; the 3 dw
                         taps per dh are packed onto the lane axis in a VMEM
                         scratch -> one (H*W, 3*Cin) x (3*Cin, TCout) matmul
                         per dh (3 matmuls total)."""

    def kernel(x_ref, w_ref, b_ref, o_ref, *scratch):
        sidx = 0
        taps_ref = None
        pool_ref = None
        if mode == "dh3":
            taps_ref = scratch[sidx]
            sidx += 1
        if fuse_pool:
            pool_ref = scratch[sidx]
            sidx += 1

        tcout = o_ref.shape[-1]

        if mode == "im2col":
            _, h, w, k = x_ref.shape
            # f32 accumulator initialised with the broadcast bias (no extra add)
            acc = jnp.broadcast_to(b_ref[...], (h * w, tcout))
            acc = acc + jnp.dot(x_ref[0].reshape(h * w, k), w_ref[...],
                                preferred_element_type=jnp.float32)
        else:  # "dh3"
            _, hp, wp, cin = x_ref.shape
            h, w = hp - 2, wp - 2
            acc = jnp.broadcast_to(b_ref[...], (h * w, tcout))
            for dh in range(3):
                # Pack the 3 dw taps side-by-side on the lane axis, then do a
                # single bf16 MXU matmul with K = 3*Cin and f32 accumulation.
                for dw in range(3):
                    taps_ref[:, :, dw * cin:(dw + 1) * cin] = (
                        x_ref[0, dh:dh + h, dw:dw + w, :])
                acc = acc + jnp.dot(taps_ref[...].reshape(h * w, 3 * cin),
                                    w_ref[dh],
                                    preferred_element_type=jnp.float32)

        if apply_relu:
            acc = jnp.maximum(acc, 0.0)          # epilogue in f32
        y = acc.reshape(h, w, tcout)

        if fuse_pool:
            # 2x2 / stride-2 max-pool fused on the f32 result (pre-store):
            # H pairs via a free leading-dim split, W pairs via strided reads
            # from a small VMEM scratch.
            yh = y.reshape(h // 2, 2, w, tcout)
            pool_ref[...] = jnp.maximum(yh[:, 0], yh[:, 1])      # (H/2, W, C)
            y = jnp.maximum(pool_ref[:, pl.ds(0, w // 2, stride=2), :],
                            pool_ref[:, pl.ds(1, w // 2, stride=2), :])

        y = y.astype(o_ref.dtype)
        ph, pw = y.shape[0], y.shape[1]
        if pad_output:
            # Write a zero halo so the next conv reads an already-padded input
            # (removes the per-layer jnp.pad HBM round trip between layers).
            o_ref[...] = jnp.zeros(o_ref.shape, o_ref.dtype)
            o_ref[0, 1:1 + ph, 1:1 + pw, :] = y
        else:
            o_ref[0] = y

    return kernel


def conv_block(x, wk, bk, *, apply_relu, fuse_pool, pad_output):
    """Fused VGG block. x is bf16 NHWC:
         wk.ndim == 2 -> (N, H, W, 9*Cin)  pre-gathered taps (first layer)
         wk.ndim == 3 -> (N, H+2, W+2, Cin) zero-halo padded activation
       Output bf16 NHWC, optionally pooled, optionally zero-halo padded."""
    n = x.shape[0]
    if wk.ndim == 2:
        mode = "im2col"
        _, h, w, _ = x.shape
        cin = wk.shape[0] // 9
    else:
        mode = "dh3"
        _, hp, wp, cin = x.shape
        h, w = hp - 2, wp - 2
    cout = wk.shape[-1]
    tcout = min(cout, _preferred_cout_tile())
    assert cout % tcout == 0
    n_ct = cout // tcout

    oh, ow = (h // 2, w // 2) if fuse_pool else (h, w)
    if pad_output:
        oshape = (n, oh + 2, ow + 2, cout)
        oblock = (1, oh + 2, ow + 2, tcout)
    else:
        oshape = (n, oh, ow, cout)
        oblock = (1, oh, ow, tcout)

    if mode == "im2col":
        w_spec = pl.BlockSpec((wk.shape[0], tcout), lambda c, b: (0, c))
    else:
        w_spec = pl.BlockSpec((3, wk.shape[1], tcout), lambda c, b: (0, 0, c))

    scratch_shapes = []
    if mode == "dh3":
        scratch_shapes.append(pltpu.VMEM((h, w, 3 * cin), jnp.bfloat16))
    if fuse_pool:
        scratch_shapes.append(pltpu.VMEM((h // 2, w, tcout), jnp.float32))

    in_block = (1,) + tuple(x.shape[1:])

    flops = 2 * n * h * w * 9 * cin * cout
    bytes_accessed = int(n_ct * x.size * x.dtype.itemsize
                         + wk.size * 2 + bk.size * 4
                         + n * oshape[1] * oshape[2] * cout * 2)

    return pl.pallas_call(
        _make_conv_kernel(mode=mode, apply_relu=apply_relu,
                          fuse_pool=fuse_pool, pad_output=pad_output),
        out_shape=jax.ShapeDtypeStruct(oshape, jnp.bfloat16),
        grid_spec=pltpu.PrefetchScalarGridSpec(
            num_scalar_prefetch=0,
            # Cout tiles outermost, batch innermost: the weight tile's block
            # index is constant across the inner axis, so Pallas fetches each
            # weight tile once instead of once per batch element.
            grid=(n_ct, n),
            in_specs=[
                pl.BlockSpec(in_block, lambda c, b: (b, 0, 0, 0)),
                w_spec,
                pl.BlockSpec((1, tcout), lambda c, b: (0, c)),
            ],
            out_specs=pl.BlockSpec(oblock, lambda c, b: (b, 0, 0, c)),
            scratch_shapes=scratch_shapes,
        ),
        compiler_params=pltpu.CompilerParams(
            dimension_semantics=("parallel", "parallel")),
        cost_estimate=pl.CostEstimate(flops=flops, transcendentals=0,
                                      bytes_accessed=bytes_accessed),
    )(x, wk, bk)


# -----------------------------------------------------------------------------
# Truncated-VGG19 forward (NCHW in / NCHW out, like the PyTorch module)
# -----------------------------------------------------------------------------
def truncated_vgg19_apply(x_nchw, kparams, plan):
    n, _, hh, ww = x_nchw.shape
    act = jnp.transpose(x_nchw, (0, 2, 3, 1)).astype(jnp.bfloat16)   # NHWC bf16

    # First conv has Cin=3: tiny wrapper-side space-to-depth / im2col at the
    # module boundary -> the kernel runs a single K=27 MXU matmul instead of
    # nine K=3 matmuls that waste 125/128 lanes.
    xpad = jnp.pad(act, ((0, 0), (1, 1), (1, 1), (0, 0)))
    act = jnp.concatenate(
        [xpad[:, dh:dh + hh, dw:dw + ww, :] for dh in range(3) for dw in range(3)],
        axis=-1)                                                     # (N, H, W, 27)

    ci = 0
    idx = 0
    n_ops = len(plan)
    while idx < n_ops:
        op = plan[idx]
        assert op[0] == "conv", "in VGG19 every pool directly follows a conv"
        fuse_relu = op[3]
        fuse_pool = (idx + 1 < n_ops) and plan[idx + 1][0] == "pool"
        idx += 2 if fuse_pool else 1
        is_last = idx >= n_ops
        wk, bk = kparams[ci]
        ci += 1
        act = conv_block(act, wk, bk, apply_relu=fuse_relu,
                         fuse_pool=fuse_pool, pad_output=not is_last)
    return jnp.transpose(act, (0, 3, 1, 2)).astype(jnp.float32)


def make_params(key, plan):
    """Deterministic stand-in weights (He init), HWIO layout, f32."""
    # TODO(synk): the PyTorch module loads torchvision's *pretrained* VGG19
    # weights; no file/network access here, so shapes match but values are random.
    params = []
    for op in plan:
        if op[0] != "conv":
            continue
        _, cin, cout, _ = op
        key, kw, kb = jax.random.split(key, 3)
        w = jax.random.normal(kw, (3, 3, cin, cout), jnp.float32)
        w = w * (2.0 / (9 * cin)) ** 0.5
        b = 0.05 * jax.random.normal(kb, (cout,), jnp.float32)
        params.append((w, b))
    return params


def to_kernel_params(params):
    """Pack weights for the kernels: (27, Cout) for the Cin=3 first layer
    (matches the wrapper im2col channel order), (3, 3*Cin, Cout) otherwise."""
    kparams = []
    for w, b in params:
        cin, cout = w.shape[2], w.shape[3]
        if cin == 3:
            wk = w.reshape(9 * cin, cout)
        else:
            wk = w.reshape(3, 3 * cin, cout)
        kparams.append((wk.astype(jnp.bfloat16),
                        b.reshape(1, -1).astype(jnp.float32)))
    return kparams


def reference_apply(x_nchw, params, plan):
    """Pure-JAX/XLA reference using the same compute dtypes as the kernels."""
    act = jnp.transpose(x_nchw, (0, 2, 3, 1)).astype(jnp.bfloat16)
    ci = 0
    for op in plan:
        if op[0] == "conv":
            _, _, _, fuse_relu = op
            w, b = params[ci]
            ci += 1
            y = jax.lax.conv_general_dilated(
                act, w.astype(jnp.bfloat16),
                window_strides=(1, 1), padding=((1, 1), (1, 1)),
                dimension_numbers=("NHWC", "HWIO", "NHWC"),
                preferred_element_type=jnp.float32)
            y = y + b.reshape(1, 1, 1, -1)
            if fuse_relu:
                y = jnp.maximum(y, 0.0)
            act = y.astype(jnp.bfloat16)
        else:
            n_, hh_, ww_, c_ = act.shape
            act = act.reshape(n_, hh_ // 2, 2, ww_ // 2, 2, c_).max(axis=(2, 4))
    return jnp.transpose(act, (0, 3, 1, 2)).astype(jnp.float32)


if __name__ == "__main__":
    key = jax.random.PRNGKey(0)
    kx, kp = jax.random.split(key)

    i, j = 2, 2                          # truncate VGG19 after conv2_2 + ReLU
    plan = truncated_vgg19_plan(i, j)

    n, c, h, w = 2, 3, 16, 16            # small RGB images (VGG input has C=3)
    x = jax.random.normal(kx, (n, c, h, w), jnp.float32)

    params = make_params(kp, plan)
    kparams = to_kernel_params(params)

    fwd = jax.jit(functools.partial(truncated_vgg19_apply, plan=plan))
    out = jax.block_until_ready(fwd(x, kparams))

    ref = jax.block_until_ready(reference_apply(x, params, plan))
    assert out.shape == ref.shape, (out.shape, ref.shape)
    assert jnp.allclose(out, ref, rtol=2e-2, atol=2e-2), (
        float(jnp.max(jnp.abs(out - ref))))

    print("KERNEL_OK")
</pallas_src>

<mosaic_0001>
module attributes {stable_mosaic.version = 11 : i64} {
  func.func @kernel(%arg0: i32, %arg1: i32, %arg2: memref<1x16x16x27xbf16, #tpu.memory_space<vmem>>, %arg3: memref<27x64xbf16, #tpu.memory_space<vmem>>, %arg4: memref<1x64xf32, #tpu.memory_space<vmem>>, %arg5: memref<1x18x18x64xbf16, #tpu.memory_space<vmem>>) attributes {dimension_semantics = [#tpu.dimension_semantics<parallel>, #tpu.dimension_semantics<parallel>], iteration_bounds = array<i64: 1, 2>, scalar_prefetch = 0 : i64, scratch_operands = 0 : i64, tpu.core_type = #tpu.core_type<tc>, window_params = [{transform_indices = @transform_0, window_bounds = array<i64: 1, 16, 16, 27>}, {transform_indices = @transform_1, window_bounds = array<i64: 27, 64>}, {transform_indices = @transform_2, window_bounds = array<i64: 1, 64>}, {transform_indices = @transform_3, window_bounds = array<i64: 1, 18, 18, 64>}]} {
    %c0 = arith.constant 0 : index
    %c0_0 = arith.constant 0 : index
    %0 = vector.load %arg4[%c0, %c0_0] : memref<1x64xf32, #tpu.memory_space<vmem>>, vector<1x64xf32>
    %1 = vector.shape_cast %0 : vector<1x64xf32> to vector<1x64xf32>
    %2 = vector.broadcast %1 : vector<1x64xf32> to vector<256x64xf32>
    %c0_1 = arith.constant 0 : index
    %c0_2 = arith.constant 0 : index
    %c0_3 = arith.constant 0 : index
    %c0_4 = arith.constant 0 : index
    %3 = vector.load %arg2[%c0_1, %c0_2, %c0_3, %c0_4] : memref<1x16x16x27xbf16, #tpu.memory_space<vmem>>, vector<1x16x16x27xbf16>
    %4 = vector.shape_cast %3 : vector<1x16x16x27xbf16> to vector<16x16x27xbf16>
    %5 = vector.shape_cast %4 : vector<16x16x27xbf16> to vector<256x27xbf16>
    %c0_5 = arith.constant 0 : index
    %c0_6 = arith.constant 0 : index
    %6 = vector.load %arg3[%c0_5, %c0_6] : memref<27x64xbf16, #tpu.memory_space<vmem>>, vector<27x64xbf16>
    %cst = arith.constant dense<0.000000e+00> : vector<256x64xf32>
    %7 = tpu.matmul %5, %6, %cst {dimension_numbers = #tpu.dot_dimension_numbers<[1], [0], [0], [1], [0, 0, 1, 1], [], []>} : vector<256x27xbf16>, vector<27x64xbf16>, vector<256x64xf32> -> vector<256x64xf32>
    %8 = arith.addf %2, %7 : vector<256x64xf32>
    %cst_7 = arith.constant 0.000000e+00 : f32
    %9 = vector.broadcast %cst_7 : f32 to vector<256x64xf32>
    %10 = arith.maximumf %8, %9 : vector<256x64xf32>
    %11 = vector.shape_cast %10 : vector<256x64xf32> to vector<16x16x64xf32>
    %12 = arith.truncf %11 : vector<16x16x64xf32> to vector<16x16x64xbf16>
    %cst_8 = arith.constant 0.000000e+00 : bf16
    %13 = vector.broadcast %cst_8 : bf16 to vector<1x18x18x64xbf16>
    %c0_9 = arith.constant 0 : index
    %c0_10 = arith.constant 0 : index
    %c0_11 = arith.constant 0 : index
    %c0_12 = arith.constant 0 : index
    %14 = vector.load %arg5[%c0_9, %c0_10, %c0_11, %c0_12] : memref<1x18x18x64xbf16, #tpu.memory_space<vmem>>, vector<1x18x18x64xbf16>
    tpu.vector_store %arg5[%c0_9, %c0_10, %c0_11, %c0_12], %13 {strides = array<i32>} : memref<1x18x18x64xbf16, #tpu.memory_space<vmem>>, vector<1x18x18x64xbf16>,
    %c0_13 = arith.constant 0 : index
    %c1 = arith.constant 1 : index
    %c1_14 = arith.constant 1 : index
    %c0_15 = arith.constant 0 : index
    %15 = vector.load %arg5[%c0_13, %c1, %c1_14, %c0_15] : memref<1x18x18x64xbf16, #tpu.memory_space<vmem>>, vector<1x16x16x64xbf16>
    %16 = vector.shape_cast %15 : vector<1x16x16x64xbf16> to vector<16x16x64xbf16>
    %17 = vector.shape_cast %12 : vector<16x16x64xbf16> to vector<1x16x16x64xbf16>
    tpu.vector_store %arg5[%c0_13, %c1, %c1_14, %c0_15], %17 {strides = array<i32>} : memref<1x18x18x64xbf16, #tpu.memory_space<vmem>>, vector<1x16x16x64xbf16>,
    return
  }
  func.func @transform_0(%arg0: i32, %arg1: i32) -> (i32, i32, i32, i32) {
    %c0_i32 = arith.constant 0 : i32
    %c0_i32_0 = arith.constant 0 : i32
    %c0_i32_1 = arith.constant 0 : i32
    %c0_i32_2 = arith.constant 0 : i32
    return %arg1, %c0_i32, %c0_i32_0, %c0_i32_1 : i32, i32, i32, i32
  }
  func.func @transform_1(%arg0: i32, %arg1: i32) -> (i32, i32) {
    %c0_i32 = arith.constant 0 : i32
    %c0_i32_0 = arith.constant 0 : i32
    return %c0_i32, %arg0 : i32, i32
  }
  func.func @transform_2(%arg0: i32, %arg1: i32) -> (i32, i32) {
    %c0_i32 = arith.constant 0 : i32
    %c0_i32_0 = arith.constant 0 : i32
    return %c0_i32, %arg0 : i32, i32
  }
  func.func @transform_3(%arg0: i32, %arg1: i32) -> (i32, i32, i32, i32) {
    %c0_i32 = arith.constant 0 : i32
    %c0_i32_0 = arith.constant 0 : i32
    %c0_i32_1 = arith.constant 0 : i32
    return %arg1, %c0_i32, %c0_i32_0, %arg0 : i32, i32, i32, i32
  }
}

module attributes {stable_mosaic.version = 11 : i64} {
  func.func @kernel(%arg0: i32, %arg1: i32, %arg2: memref<1x18x18x64xbf16, #tpu.memory_space<vmem>>, %arg3: memref<3x192x64xbf16, #tpu.memory_space<vmem>>, %arg4: memref<1x64xf32, #tpu.memory_space<vmem>>, %arg5: memref<1x10x10x64xbf16, #tpu.memory_space<vmem>>, %arg6: memref<16x16x192xbf16, #tpu.memory_space<vmem>>, %arg7: memref<8x16x64xf32, #tpu.memory_space<vmem>>) attributes {dimension_semantics = [#tpu.dimension_semantics<parallel>, #tpu.dimension_semantics<parallel>], iteration_bounds = array<i64: 1, 2>, scalar_prefetch = 0 : i64, scratch_operands = 2 : i64, tpu.core_type = #tpu.core_type<tc>, window_params = [{transform_indices = @transform_0, window_bounds = array<i64: 1, 18, 18, 64>}, {transform_indices = @transform_1, window_bounds = array<i64: 3, 192, 64>}, {transform_indices = @transform_2, window_bounds = array<i64: 1, 64>}, {transform_indices = @transform_3, window_bounds = array<i64: 1, 10, 10, 64>}]} {
    %c0 = arith.constant 0 : index
    %c0_0 = arith.constant 0 : index
    %0 = vector.load %arg4[%c0, %c0_0] : memref<1x64xf32, #tpu.memory_space<vmem>>, vector<1x64xf32>
    %1 = vector.shape_cast %0 : vector<1x64xf32> to vector<1x64xf32>
    %2 = vector.broadcast %1 : vector<1x64xf32> to vector<256x64xf32>
    %c0_1 = arith.constant 0 : index
    %c0_2 = arith.constant 0 : index
    %c0_3 = arith.constant 0 : index
    %c0_4 = arith.constant 0 : index
    %3 = vector.load %arg2[%c0_1, %c0_2, %c0_3, %c0_4] : memref<1x18x18x64xbf16, #tpu.memory_space<vmem>>, vector<1x16x16x64xbf16>
    %4 = vector.shape_cast %3 : vector<1x16x16x64xbf16> to vector<16x16x64xbf16>
    %c0_5 = arith.constant 0 : index
    %c0_6 = arith.constant 0 : index
    %c0_7 = arith.constant 0 : index
    %5 = vector.load %arg6[%c0_5, %c0_6, %c0_7] : memref<16x16x192xbf16, #tpu.memory_space<vmem>>, vector<16x16x64xbf16>
    tpu.vector_store %arg6[%c0_5, %c0_6, %c0_7], %4 {strides = array<i32>} : memref<16x16x192xbf16, #tpu.memory_space<vmem>>, vector<16x16x64xbf16>,
    %c0_8 = arith.constant 0 : index
    %c0_9 = arith.constant 0 : index
    %c1 = arith.constant 1 : index
    %c0_10 = arith.constant 0 : index
    %6 = vector.load %arg2[%c0_8, %c0_9, %c1, %c0_10] : memref<1x18x18x64xbf16, #tpu.memory_space<vmem>>, vector<1x16x16x64xbf16>
    %7 = vector.shape_cast %6 : vector<1x16x16x64xbf16> to vector<16x16x64xbf16>
    %c0_11 = arith.constant 0 : index
    %c0_12 = arith.constant 0 : index
    %c64 = arith.constant 64 : index
    %8 = vector.load %arg6[%c0_11, %c0_12, %c64] : memref<16x16x192xbf16, #tpu.memory_space<vmem>>, vector<16x16x64xbf16>
    tpu.vector_store %arg6[%c0_11, %c0_12, %c64], %7 {strides = array<i32>} : memref<16x16x192xbf16, #tpu.memory_space<vmem>>, vector<16x16x64xbf16>,
    %c0_13 = arith.constant 0 : index
    %c0_14 = arith.constant 0 : index
    %c2 = arith.constant 2 : index
    %c0_15 = arith.constant 0 : index
    %9 = vector.load %arg2[%c0_13, %c0_14, %c2, %c0_15] : memref<1x18x18x64xbf16, #tpu.memory_space<vmem>>, vector<1x16x16x64xbf16>
    %10 = vector.shape_cast %9 : vector<1x16x16x64xbf16> to vector<16x16x64xbf16>
    %c0_16 = arith.constant 0 : index
    %c0_17 = arith.constant 0 : index
    %c128 = arith.constant 128 : index
    %11 = vector.load %arg6[%c0_16, %c0_17, %c128] : memref<16x16x192xbf16, #tpu.memory_space<vmem>>, vector<16x16x64xbf16>
    tpu.vector_store %arg6[%c0_16, %c0_17, %c128], %10 {strides = array<i32>} : memref<16x16x192xbf16, #tpu.memory_space<vmem>>, vector<16x16x64xbf16>,
    %c0_18 = arith.constant 0 : index
    %c0_19 = arith.constant 0 : index
    %c0_20 = arith.constant 0 : index
    %12 = vector.load %arg6[%c0_18, %c0_19, %c0_20] : memref<16x16x192xbf16, #tpu.memory_space<vmem>>, vector<16x16x192xbf16>
    %13 = vector.shape_cast %12 : vector<16x16x192xbf16> to vector<256x192xbf16>
    %c0_21 = arith.constant 0 : index
    %c0_22 = arith.constant 0 : index
    %c0_23 = arith.constant 0 : index
    %14 = vector.load %arg3[%c0_21, %c0_22, %c0_23] : memref<3x192x64xbf16, #tpu.memory_space<vmem>>, vector<1x192x64xbf16>
    %15 = vector.shape_cast %14 : vector<1x192x64xbf16> to vector<192x64xbf16>
    %cst = arith.constant dense<0.000000e+00> : vector<256x64xf32>
    %16 = tpu.matmul %13, %15, %cst {dimension_numbers = #tpu.dot_dimension_numbers<[1], [0], [0], [1], [0, 0, 1, 1], [], []>} : vector<256x192xbf16>, vector<192x64xbf16>, vector<256x64xf32> -> vector<256x64xf32>
    %17 = arith.addf %2, %16 : vector<256x64xf32>
    %c0_24 = arith.constant 0 : index
    %c1_25 = arith.constant 1 : index
    %c0_26 = arith.constant 0 : index
    %c0_27 = arith.constant 0 : index
    %18 = vector.load %arg2[%c0_24, %c1_25, %c0_26, %c0_27] : memref<1x18x18x64xbf16, #tpu.memory_space<vmem>>, vector<1x16x16x64xbf16>
    %19 = vector.shape_cast %18 : vector<1x16x16x64xbf16> to vector<16x16x64xbf16>
    %c0_28 = arith.constant 0 : index
    %c0_29 = arith.constant 0 : index
    %c0_30 = arith.constant 0 : index
    %20 = vector.load %arg6[%c0_28, %c0_29, %c0_30] : memref<16x16x192xbf16, #tpu.memory_space<vmem>>, vector<16x16x64xbf16>
    tpu.vector_store %arg6[%c0_28, %c0_29, %c0_30], %19 {strides = array<i32>} : memref<16x16x192xbf16, #tpu.memory_space<vmem>>, vector<16x16x64xbf16>,
    %c0_31 = arith.constant 0 : index
    %c1_32 = arith.constant 1 : index
    %c1_33 = arith.constant 1 : index
    %c0_34 = arith.constant 0 : index
    %21 = vector.load %arg2[%c0_31, %c1_32, %c1_33, %c0_34] : memref<1x18x18x64xbf16, #tpu.memory_space<vmem>>, vector<1x16x16x64xbf16>
    %22 = vector.shape_cast %21 : vector<1x16x16x64xbf16> to vector<16x16x64xbf16>
    %c0_35 = arith.constant 0 : index
    %c0_36 = arith.constant 0 : index
    %c64_37 = arith.constant 64 : index
    %23 = vector.load %arg6[%c0_35, %c0_36, %c64_37] : memref<16x16x192xbf16, #tpu.memory_space<vmem>>, vector<16x16x64xbf16>
    tpu.vector_store %arg6[%c0_35, %c0_36, %c64_37], %22 {strides = array<i32>} : memref<16x16x192xbf16, #tpu.memory_space<vmem>>, vector<16x16x64xbf16>,
    %c0_38 = arith.constant 0 : index
    %c1_39 = arith.constant 1 : index
    %c2_40 = arith.constant 2 : index
    %c0_41 = arith.constant 0 : index
    %24 = vector.load %arg2[%c0_38, %c1_39, %c2_40, %c0_41] : memref<1x18x18x64xbf16, #tpu.memory_space<vmem>>, vector<1x16x16x64xbf16>
    %25 = vector.shape_cast %24 : vector<1x16x16x64xbf16> to vector<16x16x64xbf16>
    %c0_42 = arith.constant 0 : index
    %c0_43 = arith.constant 0 : index
    %c128_44 = arith.constant 128 : index
    %26 = vector.load %arg6[%c0_42, %c0_43, %c128_44] : memref<16x16x192xbf16, #tpu.memory_space<vmem>>, vector<16x16x64xbf16>
    tpu.vector_store %arg6[%c0_42, %c0_43, %c128_44], %25 {strides = array<i32>} : memref<16x16x192xbf16, #tpu.memory_space<vmem>>, vector<16x16x64xbf16>,
    %c0_45 = arith.constant 0 : index
    %c0_46 = arith.constant 0 : index
    %c0_47 = arith.constant 0 : index
    %27 = vector.load %arg6[%c0_45, %c0_46, %c0_47] : memref<16x16x192xbf16, #tpu.memory_space<vmem>>, vector<16x16x192xbf16>
    %28 = vector.shape_cast %27 : vector<16x16x192xbf16> to vector<256x192xbf16>
    %c1_48 = arith.constant 1 : index
    %c0_49 = arith.constant 0 : index
    %c0_50 = arith.constant 0 : index
    %29 = vector.load %arg3[%c1_48, %c0_49, %c0_50] : memref<3x192x64xbf16, #tpu.memory_space<vmem>>, vector<1x192x64xbf16>
    %30 = vector.shape_cast %29 : vector<1x192x64xbf16> to vector<192x64xbf16>
    %cst_51 = arith.constant dense<0.000000e+00> : vector<256x64xf32>
    %31 = tpu.matmul %28, %30, %cst_51 {dimension_numbers = #tpu.dot_dimension_numbers<[1], [0], [0], [1], [0, 0, 1, 1], [], []>} : vector<256x192xbf16>, vector<192x64xbf16>, vector<256x64xf32> -> vector<256x64xf32>
    %32 = arith.addf %17, %31 : vector<256x64xf32>
    %c0_52 = arith.constant 0 : index
    %c2_53 = arith.constant 2 : index
    %c0_54 = arith.constant 0 : index
    %c0_55 = arith.constant 0 : index
    %33 = vector.load %arg2[%c0_52, %c2_53, %c0_54, %c0_55] : memref<1x18x18x64xbf16, #tpu.memory_space<vmem>>, vector<1x16x16x64xbf16>
    %34 = vector.shape_cast %33 : vector<1x16x16x64xbf16> to vector<16x16x64xbf16>
    %c0_56 = arith.constant 0 : index
    %c0_57 = arith.constant 0 : index
    %c0_58 = arith.constant 0 : index
    %35 = vector.load %arg6[%c0_56, %c0_57, %c0_58] : memref<16x16x192xbf16, #tpu.memory_space<vmem>>, vector<16x16x64xbf16>
    tpu.vector_store %arg6[%c0_56, %c0_57, %c0_58], %34 {strides = array<i32>} : memref<16x16x192xbf16, #tpu.memory_space<vmem>>, vector<16x16x64xbf16>,
    %c0_59 = arith.constant 0 : index
    %c2_60 = arith.constant 2 : index
    %c1_61 = arith.constant 1 : index
    %c0_62 = arith.constant 0 : index
    %36 = vector.load %arg2[%c0_59, %c2_60, %c1_61, %c0_62] : memref<1x18x18x64xbf16, #tpu.memory_space<vmem>>, vector<1x16x16x64xbf16>
    %37 = vector.shape_cast %36 : vector<1x16x16x64xbf16> to vector<16x16x64xbf16>
    %c0_63 = arith.constant 0 : index
    %c0_64 = arith.constant 0 : index
    %c64_65 = arith.constant 64 : index
    %38 = vector.load %arg6[%c0_63, %c0_64, %c64_65] : memref<16x16x192xbf16, #tpu.memory_space<vmem>>, vector<16x16x64xbf16>
    tpu.vector_store %arg6[%c0_63, %c0_64, %c64_65], %37 {strides = array<i32>} : memref<16x16x192xbf16, #tpu.memory_space<vmem>>, vector<16x16x64xbf16>,
    %c0_66 = arith.constant 0 : index
    %c2_67 = arith.constant 2 : index
    %c2_68 = arith.constant 2 : index
    %c0_69 = arith.constant 0 : index
    %39 = vector.load %arg2[%c0_66, %c2_67, %c2_68, %c0_69] : memref<1x18x18x64xbf16, #tpu.memory_space<vmem>>, vector<1x16x16x64xbf16>
    %40 = vector.shape_cast %39 : vector<1x16x16x64xbf16> to vector<16x16x64xbf16>
    %c0_70 = arith.constant 0 : index
    %c0_71 = arith.constant 0 : index
    %c128_72 = arith.constant 128 : index
    %41 = vector.load %arg6[%c0_70, %c0_71, %c128_72] : memref<16x16x192xbf16, #tpu.memory_space<vmem>>, vector<16x16x64xbf16>
    tpu.vector_store %arg6[%c0_70, %c0_71, %c128_72], %40 {strides = array<i32>} : memref<16x16x192xbf16, #tpu.memory_space<vmem>>, vector<16x16x64xbf16>,
    %c0_73 = arith.constant 0 : index
    %c0_74 = arith.constant 0 : index
    %c0_75 = arith.constant 0 : index
    %42 = vector.load %arg6[%c0_73, %c0_74, %c0_75] : memref<16x16x192xbf16, #tpu.memory_space<vmem>>, vector<16x16x192xbf16>
    %43 = vector.shape_cast %42 : vector<16x16x192xbf16> to vector<256x192xbf16>
    %c2_76 = arith.constant 2 : index
    %c0_77 = arith.constant 0 : index
    %c0_78 = arith.constant 0 : index
    %44 = vector.load %arg3[%c2_76, %c0_77, %c0_78] : memref<3x192x64xbf16, #tpu.memory_space<vmem>>, vector<1x192x64xbf16>
    %45 = vector.shape_cast %44 : vector<1x192x64xbf16> to vector<192x64xbf16>
    %cst_79 = arith.constant dense<0.000000e+00> : vector<256x64xf32>
    %46 = tpu.matmul %43, %45, %cst_79 {dimension_numbers = #tpu.dot_dimension_numbers<[1], [0], [0], [1], [0, 0, 1, 1], [], []>} : vector<256x192xbf16>, vector<192x64xbf16>, vector<256x64xf32> -> vector<256x64xf32>
    %47 = arith.addf %32, %46 : vector<256x64xf32>
    %cst_80 = arith.constant 0.000000e+00 : f32
    %48 = vector.broadcast %cst_80 : f32 to vector<256x64xf32>
    %49 = arith.maximumf %47, %48 : vector<256x64xf32>
    %50 = vector.shape_cast %49 : vector<256x64xf32> to vector<16x16x64xf32>
    %51 = vector.shape_cast %50 : vector<16x16x64xf32> to vector<8x2x16x64xf32>
    %52 = vector.extract_strided_slice %51 {offsets = [0, 0, 0, 0], sizes = [8, 1, 16, 64], strides = [1, 1, 1, 1]} : vector<8x2x16x64xf32> to vector<8x1x16x64xf32>
    %53 = vector.shape_cast %52 : vector<8x1x16x64xf32> to vector<8x16x64xf32>
    %54 = vector.extract_strided_slice %51 {offsets = [0, 1, 0, 0], sizes = [8, 1, 16, 64], strides = [1, 1, 1, 1]} : vector<8x2x16x64xf32> to vector<8x1x16x64xf32>
    %55 = vector.shape_cast %54 : vector<8x1x16x64xf32> to vector<8x16x64xf32>
    %56 = arith.maximumf %53, %55 : vector<8x16x64xf32>
    %c0_81 = arith.constant 0 : index
    %c0_82 = arith.constant 0 : index
    %c0_83 = arith.constant 0 : index
    %57 = vector.load %arg7[%c0_81, %c0_82, %c0_83] : memref<8x16x64xf32, #tpu.memory_space<vmem>>, vector<8x16x64xf32>
    tpu.vector_store %arg7[%c0_81, %c0_82, %c0_83], %56 {strides = array<i32>} : memref<8x16x64xf32, #tpu.memory_space<vmem>>, vector<8x16x64xf32>,
    %c0_84 = arith.constant 0 : index
    %c0_85 = arith.constant 0 : index
    %c0_86 = arith.constant 0 : index
    %58 = tpu.strided_load %arg7[%c0_84, %c0_85, %c0_86] {strides = array<i32: 1, 2, 1>} : memref<8x16x64xf32, #tpu.memory_space<vmem>>, vector<8x8x64xf32>
    %c0_87 = arith.constant 0 : index
    %c1_88 = arith.constant 1 : index
    %c0_89 = arith.constant 0 : index
    %59 = tpu.strided_load %arg7[%c0_87, %c1_88, %c0_89] {strides = array<i32: 1, 2, 1>} : memref<8x16x64xf32, #tpu.memory_space<vmem>>, vector<8x8x64xf32>
    %60 = arith.maximumf %58, %59 : vector<8x8x64xf32>
    %61 = arith.truncf %60 : vector<8x8x64xf32> to vector<8x8x64xbf16>
    %cst_90 = arith.constant 0.000000e+00 : bf16
    %62 = vector.broadcast %cst_90 : bf16 to vector<1x10x10x64xbf16>
    %c0_91 = arith.constant 0 : index
    %c0_92 = arith.constant 0 : index
    %c0_93 = arith.constant 0 : index
    %c0_94 = arith.constant 0 : index
    %63 = vector.load %arg5[%c0_91, %c0_92, %c0_93, %c0_94] : memref<1x10x10x64xbf16, #tpu.memory_space<vmem>>, vector<1x10x10x64xbf16>
    tpu.vector_store %arg5[%c0_91, %c0_92, %c0_93, %c0_94], %62 {strides = array<i32>} : memref<1x10x10x64xbf16, #tpu.memory_space<vmem>>, vector<1x10x10x64xbf16>,
    %c0_95 = arith.constant 0 : index
    %c1_96 = arith.constant 1 : index
    %c1_97 = arith.constant 1 : index
    %c0_98 = arith.constant 0 : index
    %64 = vector.load %arg5[%c0_95, %c1_96, %c1_97, %c0_98] : memref<1x10x10x64xbf16, #tpu.memory_space<vmem>>, vector<1x8x8x64xbf16>
    %65 = vector.shape_cast %64 : vector<1x8x8x64xbf16> to vector<8x8x64xbf16>
    %66 = vector.shape_cast %61 : vector<8x8x64xbf16> to vector<1x8x8x64xbf16>
    tpu.vector_store %arg5[%c0_95, %c1_96, %c1_97, %c0_98], %66 {strides = array<i32>} : memref<1x10x10x64xbf16, #tpu.memory_space<vmem>>, vector<1x8x8x64xbf16>,
    return
  }
  func.func @transform_0(%arg0: i32, %arg1: i32) -> (i32, i32, i32, i32) {
    %c0_i32 = arith.constant 0 : i32
    %c0_i32_0 = arith.constant 0 : i32
    %c0_i32_1 = arith.constant 0 : i32
    %c0_i32_2 = arith.constant 0 : i32
    return %arg1, %c0_i32, %c0_i32_0, %c0_i32_1 : i32, i32, i32, i32
  }
  func.func @transform_1(%arg0: i32, %arg1: i32) -> (i32, i32, i32) {
    %c0_i32 = arith.constant 0 : i32
    %c0_i32_0 = arith.constant 0 : i32
    %c0_i32_1 = arith.constant 0 : i32
    return %c0_i32, %c0_i32_0, %arg0 : i32, i32, i32
  }
  func.func @transform_2(%arg0: i32, %arg1: i32) -> (i32, i32) {
    %c0_i32 = arith.constant 0 : i32
    %c0_i32_0 = arith.constant 0 : i32
    return %c0_i32, %arg0 : i32, i32
  }
  func.func @transform_3(%arg0: i32, %arg1: i32) -> (i32, i32, i32, i32) {
    %c0_i32 = arith.constant 0 : i32
    %c0_i32_0 = arith.constant 0 : i32
    %c0_i32_1 = arith.constant 0 : i32
    return %arg1, %c0_i32, %c0_i32_0, %arg0 : i32, i32, i32, i32
  }
}

module attributes {stable_mosaic.version = 11 : i64} {
  func.func @kernel(%arg0: i32, %arg1: i32, %arg2: memref<1x10x10x64xbf16, #tpu.memory_space<vmem>>, %arg3: memref<3x192x128xbf16, #tpu.memory_space<vmem>>, %arg4: memref<1x128xf32, #tpu.memory_space<vmem>>, %arg5: memref<1x10x10x128xbf16, #tpu.memory_space<vmem>>, %arg6: memref<8x8x192xbf16, #tpu.memory_space<vmem>>) attributes {dimension_semantics = [#tpu.dimension_semantics<parallel>, #tpu.dimension_semantics<parallel>], iteration_bounds = array<i64: 1, 2>, scalar_prefetch = 0 : i64, scratch_operands = 1 : i64, tpu.core_type = #tpu.core_type<tc>, window_params = [{transform_indices = @transform_0, window_bounds = array<i64: 1, 10, 10, 64>}, {transform_indices = @transform_1, window_bounds = array<i64: 3, 192, 128>}, {transform_indices = @transform_2, window_bounds = array<i64: 1, 128>}, {transform_indices = @transform_3, window_bounds = array<i64: 1, 10, 10, 128>}]} {
    %c0 = arith.constant 0 : index
    %c0_0 = arith.constant 0 : index
    %0 = vector.load %arg4[%c0, %c0_0] : memref<1x128xf32, #tpu.memory_space<vmem>>, vector<1x128xf32>
    %1 = vector.shape_cast %0 : vector<1x128xf32> to vector<1x128xf32>
    %2 = vector.broadcast %1 : vector<1x128xf32> to vector<64x128xf32>
    %c0_1 = arith.constant 0 : index
    %c0_2 = arith.constant 0 : index
    %c0_3 = arith.constant 0 : index
    %c0_4 = arith.constant 0 : index
    %3 = vector.load %arg2[%c0_1, %c0_2, %c0_3, %c0_4] : memref<1x10x10x64xbf16, #tpu.memory_space<vmem>>, vector<1x8x8x64xbf16>
    %4 = vector.shape_cast %3 : vector<1x8x8x64xbf16> to vector<8x8x64xbf16>
    %c0_5 = arith.constant 0 : index
    %c0_6 = arith.constant 0 : index
    %c0_7 = arith.constant 0 : index
    %5 = vector.load %arg6[%c0_5, %c0_6, %c0_7] : memref<8x8x192xbf16, #tpu.memory_space<vmem>>, vector<8x8x64xbf16>
    tpu.vector_store %arg6[%c0_5, %c0_6, %c0_7], %4 {strides = array<i32>} : memref<8x8x192xbf16, #tpu.memory_space<vmem>>, vector<8x8x64xbf16>,
    %c0_8 = arith.constant 0 : index
    %c0_9 = arith.constant 0 : index
    %c1 = arith.constant 1 : index
    %c0_10 = arith.constant 0 : index
    %6 = vector.load %arg2[%c0_8, %c0_9, %c1, %c0_10] : memref<1x10x10x64xbf16, #tpu.memory_space<vmem>>, vector<1x8x8x64xbf16>
    %7 = vector.shape_cast %6 : vector<1x8x8x64xbf16> to vector<8x8x64xbf16>
    %c0_11 = arith.constant 0 : index
    %c0_12 = arith.constant 0 : index
    %c64 = arith.constant 64 : index
    %8 = vector.load %arg6[%c0_11, %c0_12, %c64] : memref<8x8x192xbf16, #tpu.memory_space<vmem>>, vector<8x8x64xbf16>
    tpu.vector_store %arg6[%c0_11, %c0_12, %c64], %7 {strides = array<i32>} : memref<8x8x192xbf16, #tpu.memory_space<vmem>>, vector<8x8x64xbf16>,
    %c0_13 = arith.constant 0 : index
    %c0_14 = arith.constant 0 : index
    %c2 = arith.constant 2 : index
    %c0_15 = arith.constant 0 : index
    %9 = vector.load %arg2[%c0_13, %c0_14, %c2, %c0_15] : memref<1x10x10x64xbf16, #tpu.memory_space<vmem>>, vector<1x8x8x64xbf16>
    %10 = vector.shape_cast %9 : vector<1x8x8x64xbf16> to vector<8x8x64xbf16>
    %c0_16 = arith.constant 0 : index
    %c0_17 = arith.constant 0 : index
    %c128 = arith.constant 128 : index
    %11 = vector.load %arg6[%c0_16, %c0_17, %c128] : memref<8x8x192xbf16, #tpu.memory_space<vmem>>, vector<8x8x64xbf16>
    tpu.vector_store %arg6[%c0_16, %c0_17, %c128], %10 {strides = array<i32>} : memref<8x8x192xbf16, #tpu.memory_space<vmem>>, vector<8x8x64xbf16>,
    %c0_18 = arith.constant 0 : index
    %c0_19 = arith.constant 0 : index
    %c0_20 = arith.constant 0 : index
    %12 = vector.load %arg6[%c0_18, %c0_19, %c0_20] : memref<8x8x192xbf16, #tpu.memory_space<vmem>>, vector<8x8x192xbf16>
    %13 = vector.shape_cast %12 : vector<8x8x192xbf16> to vector<64x192xbf16>
    %c0_21 = arith.constant 0 : index
    %c0_22 = arith.constant 0 : index
    %c0_23 = arith.constant 0 : index
    %14 = vector.load %arg3[%c0_21, %c0_22, %c0_23] : memref<3x192x128xbf16, #tpu.memory_space<vmem>>, vector<1x192x128xbf16>
    %15 = vector.shape_cast %14 : vector<1x192x128xbf16> to vector<192x128xbf16>
    %cst = arith.constant dense<0.000000e+00> : vector<64x128xf32>
    %16 = tpu.matmul %13, %15, %cst {dimension_numbers = #tpu.dot_dimension_numbers<[1], [0], [0], [1], [0, 0, 1, 1], [], []>} : vector<64x192xbf16>, vector<192x128xbf16>, vector<64x128xf32> -> vector<64x128xf32>
    %17 = arith.addf %2, %16 : vector<64x128xf32>
    %c0_24 = arith.constant 0 : index
    %c1_25 = arith.constant 1 : index
    %c0_26 = arith.constant 0 : index
    %c0_27 = arith.constant 0 : index
    %18 = vector.load %arg2[%c0_24, %c1_25, %c0_26, %c0_27] : memref<1x10x10x64xbf16, #tpu.memory_space<vmem>>, vector<1x8x8x64xbf16>
    %19 = vector.shape_cast %18 : vector<1x8x8x64xbf16> to vector<8x8x64xbf16>
    %c0_28 = arith.constant 0 : index
    %c0_29 = arith.constant 0 : index
    %c0_30 = arith.constant 0 : index
    %20 = vector.load %arg6[%c0_28, %c0_29, %c0_30] : memref<8x8x192xbf16, #tpu.memory_space<vmem>>, vector<8x8x64xbf16>
    tpu.vector_store %arg6[%c0_28, %c0_29, %c0_30], %19 {strides = array<i32>} : memref<8x8x192xbf16, #tpu.memory_space<vmem>>, vector<8x8x64xbf16>,
    %c0_31 = arith.constant 0 : index
    %c1_32 = arith.constant 1 : index
    %c1_33 = arith.constant 1 : index
    %c0_34 = arith.constant 0 : index
    %21 = vector.load %arg2[%c0_31, %c1_32, %c1_33, %c0_34] : memref<1x10x10x64xbf16, #tpu.memory_space<vmem>>, vector<1x8x8x64xbf16>
    %22 = vector.shape_cast %21 : vector<1x8x8x64xbf16> to vector<8x8x64xbf16>
    %c0_35 = arith.constant 0 : index
    %c0_36 = arith.constant 0 : index
    %c64_37 = arith.constant 64 : index
    %23 = vector.load %arg6[%c0_35, %c0_36, %c64_37] : memref<8x8x192xbf16, #tpu.memory_space<vmem>>, vector<8x8x64xbf16>
    tpu.vector_store %arg6[%c0_35, %c0_36, %c64_37], %22 {strides = array<i32>} : memref<8x8x192xbf16, #tpu.memory_space<vmem>>, vector<8x8x64xbf16>,
    %c0_38 = arith.constant 0 : index
    %c1_39 = arith.constant 1 : index
    %c2_40 = arith.constant 2 : index
    %c0_41 = arith.constant 0 : index
    %24 = vector.load %arg2[%c0_38, %c1_39, %c2_40, %c0_41] : memref<1x10x10x64xbf16, #tpu.memory_space<vmem>>, vector<1x8x8x64xbf16>
    %25 = vector.shape_cast %24 : vector<1x8x8x64xbf16> to vector<8x8x64xbf16>
    %c0_42 = arith.constant 0 : index
    %c0_43 = arith.constant 0 : index
    %c128_44 = arith.constant 128 : index
    %26 = vector.load %arg6[%c0_42, %c0_43, %c128_44] : memref<8x8x192xbf16, #tpu.memory_space<vmem>>, vector<8x8x64xbf16>
    tpu.vector_store %arg6[%c0_42, %c0_43, %c128_44], %25 {strides = array<i32>} : memref<8x8x192xbf16, #tpu.memory_space<vmem>>, vector<8x8x64xbf16>,
    %c0_45 = arith.constant 0 : index
    %c0_46 = arith.constant 0 : index
    %c0_47 = arith.constant 0 : index
    %27 = vector.load %arg6[%c0_45, %c0_46, %c0_47] : memref<8x8x192xbf16, #tpu.memory_space<vmem>>, vector<8x8x192xbf16>
    %28 = vector.shape_cast %27 : vector<8x8x192xbf16> to vector<64x192xbf16>
    %c1_48 = arith.constant 1 : index
    %c0_49 = arith.constant 0 : index
    %c0_50 = arith.constant 0 : index
    %29 = vector.load %arg3[%c1_48, %c0_49, %c0_50] : memref<3x192x128xbf16, #tpu.memory_space<vmem>>, vector<1x192x128xbf16>
    %30 = vector.shape_cast %29 : vector<1x192x128xbf16> to vector<192x128xbf16>
    %cst_51 = arith.constant dense<0.000000e+00> : vector<64x128xf32>
    %31 = tpu.matmul %28, %30, %cst_51 {dimension_numbers = #tpu.dot_dimension_numbers<[1], [0], [0], [1], [0, 0, 1, 1], [], []>} : vector<64x192xbf16>, vector<192x128xbf16>, vector<64x128xf32> -> vector<64x128xf32>
    %32 = arith.addf %17, %31 : vector<64x128xf32>
    %c0_52 = arith.constant 0 : index
    %c2_53 = arith.constant 2 : index
    %c0_54 = arith.constant 0 : index
    %c0_55 = arith.constant 0 : index
    %33 = vector.load %arg2[%c0_52, %c2_53, %c0_54, %c0_55] : memref<1x10x10x64xbf16, #tpu.memory_space<vmem>>, vector<1x8x8x64xbf16>
    %34 = vector.shape_cast %33 : vector<1x8x8x64xbf16> to vector<8x8x64xbf16>
    %c0_56 = arith.constant 0 : index
    %c0_57 = arith.constant 0 : index
    %c0_58 = arith.constant 0 : index
    %35 = vector.load %arg6[%c0_56, %c0_57, %c0_58] : memref<8x8x192xbf16, #tpu.memory_space<vmem>>, vector<8x8x64xbf16>
    tpu.vector_store %arg6[%c0_56, %c0_57, %c0_58], %34 {strides = array<i32>} : memref<8x8x192xbf16, #tpu.memory_space<vmem>>, vector<8x8x64xbf16>,
    %c0_59 = arith.constant 0 : index
    %c2_60 = arith.constant 2 : index
    %c1_61 = arith.constant 1 : index
    %c0_62 = arith.constant 0 : index
    %36 = vector.load %arg2[%c0_59, %c2_60, %c1_61, %c0_62] : memref<1x10x10x64xbf16, #tpu.memory_space<vmem>>, vector<1x8x8x64xbf16>
    %37 = vector.shape_cast %36 : vector<1x8x8x64xbf16> to vector<8x8x64xbf16>
    %c0_63 = arith.constant 0 : index
    %c0_64 = arith.constant 0 : index
    %c64_65 = arith.constant 64 : index
    %38 = vector.load %arg6[%c0_63, %c0_64, %c64_65] : memref<8x8x192xbf16, #tpu.memory_space<vmem>>, vector<8x8x64xbf16>
    tpu.vector_store %arg6[%c0_63, %c0_64, %c64_65], %37 {strides = array<i32>} : memref<8x8x192xbf16, #tpu.memory_space<vmem>>, vector<8x8x64xbf16>,
    %c0_66 = arith.constant 0 : index
    %c2_67 = arith.constant 2 : index
    %c2_68 = arith.constant 2 : index
    %c0_69 = arith.constant 0 : index
    %39 = vector.load %arg2[%c0_66, %c2_67, %c2_68, %c0_69] : memref<1x10x10x64xbf16, #tpu.memory_space<vmem>>, vector<1x8x8x64xbf16>
    %40 = vector.shape_cast %39 : vector<1x8x8x64xbf16> to vector<8x8x64xbf16>
    %c0_70 = arith.constant 0 : index
    %c0_71 = arith.constant 0 : index
    %c128_72 = arith.constant 128 : index
    %41 = vector.load %arg6[%c0_70, %c0_71, %c128_72] : memref<8x8x192xbf16, #tpu.memory_space<vmem>>, vector<8x8x64xbf16>
    tpu.vector_store %arg6[%c0_70, %c0_71, %c128_72], %40 {strides = array<i32>} : memref<8x8x192xbf16, #tpu.memory_space<vmem>>, vector<8x8x64xbf16>,
    %c0_73 = arith.constant 0 : index
    %c0_74 = arith.constant 0 : index
    %c0_75 = arith.constant 0 : index
    %42 = vector.load %arg6[%c0_73, %c0_74, %c0_75] : memref<8x8x192xbf16, #tpu.memory_space<vmem>>, vector<8x8x192xbf16>
    %43 = vector.shape_cast %42 : vector<8x8x192xbf16> to vector<64x192xbf16>
    %c2_76 = arith.constant 2 : index
    %c0_77 = arith.constant 0 : index
    %c0_78 = arith.constant 0 : index
    %44 = vector.load %arg3[%c2_76, %c0_77, %c0_78] : memref<3x192x128xbf16, #tpu.memory_space<vmem>>, vector<1x192x128xbf16>
    %45 = vector.shape_cast %44 : vector<1x192x128xbf16> to vector<192x128xbf16>
    %cst_79 = arith.constant dense<0.000000e+00> : vector<64x128xf32>
    %46 = tpu.matmul %43, %45, %cst_79 {dimension_numbers = #tpu.dot_dimension_numbers<[1], [0], [0], [1], [0, 0, 1, 1], [], []>} : vector<64x192xbf16>, vector<192x128xbf16>, vector<64x128xf32> -> vector<64x128xf32>
    %47 = arith.addf %32, %46 : vector<64x128xf32>
    %cst_80 = arith.constant 0.000000e+00 : f32
    %48 = vector.broadcast %cst_80 : f32 to vector<64x128xf32>
    %49 = arith.maximumf %47, %48 : vector<64x128xf32>
    %50 = vector.shape_cast %49 : vector<64x128xf32> to vector<8x8x128xf32>
    %51 = arith.truncf %50 : vector<8x8x128xf32> to vector<8x8x128xbf16>
    %cst_81 = arith.constant 0.000000e+00 : bf16
    %52 = vector.broadcast %cst_81 : bf16 to vector<1x10x10x128xbf16>
    %c0_82 = arith.constant 0 : index
    %c0_83 = arith.constant 0 : index
    %c0_84 = arith.constant 0 : index
    %c0_85 = arith.constant 0 : index
    %53 = vector.load %arg5[%c0_82, %c0_83, %c0_84, %c0_85] : memref<1x10x10x128xbf16, #tpu.memory_space<vmem>>, vector<1x10x10x128xbf16>
    tpu.vector_store %arg5[%c0_82, %c0_83, %c0_84, %c0_85], %52 {strides = array<i32>} : memref<1x10x10x128xbf16, #tpu.memory_space<vmem>>, vector<1x10x10x128xbf16>,
    %c0_86 = arith.constant 0 : index
    %c1_87 = arith.constant 1 : index
    %c1_88 = arith.constant 1 : index
    %c0_89 = arith.constant 0 : index
    %54 = vector.load %arg5[%c0_86, %c1_87, %c1_88, %c0_89] : memref<1x10x10x128xbf16, #tpu.memory_space<vmem>>, vector<1x8x8x128xbf16>
    %55 = vector.shape_cast %54 : vector<1x8x8x128xbf16> to vector<8x8x128xbf16>
    %56 = vector.shape_cast %51 : vector<8x8x128xbf16> to vector<1x8x8x128xbf16>
    tpu.vector_store %arg5[%c0_86, %c1_87, %c1_88, %c0_89], %56 {strides = array<i32>} : memref<1x10x10x128xbf16, #tpu.memory_space<vmem>>, vector<1x8x8x128xbf16>,
    return
  }
  func.func @transform_0(%arg0: i32, %arg1: i32) -> (i32, i32, i32, i32) {
    %c0_i32 = arith.constant 0 : i32
    %c0_i32_0 = arith.constant 0 : i32
    %c0_i32_1 = arith.constant 0 : i32
    %c0_i32_2 = arith.constant 0 : i32
    return %arg1, %c0_i32, %c0_i32_0, %c0_i32_1 : i32, i32, i32, i32
  }
  func.func @transform_1(%arg0: i32, %arg1: i32) -> (i32, i32, i32) {
    %c0_i32 = arith.constant 0 : i32
    %c0_i32_0 = arith.constant 0 : i32
    %c0_i32_1 = arith.constant 0 : i32
    return %c0_i32, %c0_i32_0, %arg0 : i32, i32, i32
  }
  func.func @transform_2(%arg0: i32, %arg1: i32) -> (i32, i32) {
    %c0_i32 = arith.constant 0 : i32
    %c0_i32_0 = arith.constant 0 : i32
    return %c0_i32, %arg0 : i32, i32
  }
  func.func @transform_3(%arg0: i32, %arg1: i32) -> (i32, i32, i32, i32) {
    %c0_i32 = arith.constant 0 : i32
    %c0_i32_0 = arith.constant 0 : i32
    %c0_i32_1 = arith.constant 0 : i32
    return %arg1, %c0_i32, %c0_i32_0, %arg0 : i32, i32, i32, i32
  }
}

module attributes {stable_mosaic.version = 11 : i64} {
  func.func @kernel(%arg0: i32, %arg1: i32, %arg2: memref<1x10x10x128xbf16, #tpu.memory_space<vmem>>, %arg3: memref<3x384x128xbf16, #tpu.memory_space<vmem>>, %arg4: memref<1x128xf32, #tpu.memory_space<vmem>>, %arg5: memref<1x8x8x128xbf16, #tpu.memory_space<vmem>>, %arg6: memref<8x8x384xbf16, #tpu.memory_space<vmem>>) attributes {dimension_semantics = [#tpu.dimension_semantics<parallel>, #tpu.dimension_semantics<parallel>], iteration_bounds = array<i64: 1, 2>, scalar_prefetch = 0 : i64, scratch_operands = 1 : i64, tpu.core_type = #tpu.core_type<tc>, window_params = [{transform_indices = @transform_0, window_bounds = array<i64: 1, 10, 10, 128>}, {transform_indices = @transform_1, window_bounds = array<i64: 3, 384, 128>}, {transform_indices = @transform_2, window_bounds = array<i64: 1, 128>}, {transform_indices = @transform_3, window_bounds = array<i64: 1, 8, 8, 128>}]} {
    %c0 = arith.constant 0 : index
    %c0_0 = arith.constant 0 : index
    %0 = vector.load %arg4[%c0, %c0_0] : memref<1x128xf32, #tpu.memory_space<vmem>>, vector<1x128xf32>
    %1 = vector.shape_cast %0 : vector<1x128xf32> to vector<1x128xf32>
    %2 = vector.broadcast %1 : vector<1x128xf32> to vector<64x128xf32>
    %c0_1 = arith.constant 0 : index
    %c0_2 = arith.constant 0 : index
    %c0_3 = arith.constant 0 : index
    %c0_4 = arith.constant 0 : index
    %3 = vector.load %arg2[%c0_1, %c0_2, %c0_3, %c0_4] : memref<1x10x10x128xbf16, #tpu.memory_space<vmem>>, vector<1x8x8x128xbf16>
    %4 = vector.shape_cast %3 : vector<1x8x8x128xbf16> to vector<8x8x128xbf16>
    %c0_5 = arith.constant 0 : index
    %c0_6 = arith.constant 0 : index
    %c0_7 = arith.constant 0 : index
    %5 = vector.load %arg6[%c0_5, %c0_6, %c0_7] : memref<8x8x384xbf16, #tpu.memory_space<vmem>>, vector<8x8x128xbf16>
    tpu.vector_store %arg6[%c0_5, %c0_6, %c0_7], %4 {strides = array<i32>} : memref<8x8x384xbf16, #tpu.memory_space<vmem>>, vector<8x8x128xbf16>,
    %c0_8 = arith.constant 0 : index
    %c0_9 = arith.constant 0 : index
    %c1 = arith.constant 1 : index
    %c0_10 = arith.constant 0 : index
    %6 = vector.load %arg2[%c0_8, %c0_9, %c1, %c0_10] : memref<1x10x10x128xbf16, #tpu.memory_space<vmem>>, vector<1x8x8x128xbf16>
    %7 = vector.shape_cast %6 : vector<1x8x8x128xbf16> to vector<8x8x128xbf16>
    %c0_11 = arith.constant 0 : index
    %c0_12 = arith.constant 0 : index
    %c128 = arith.constant 128 : index
    %8 = vector.load %arg6[%c0_11, %c0_12, %c128] : memref<8x8x384xbf16, #tpu.memory_space<vmem>>, vector<8x8x128xbf16>
    tpu.vector_store %arg6[%c0_11, %c0_12, %c128], %7 {strides = array<i32>} : memref<8x8x384xbf16, #tpu.memory_space<vmem>>, vector<8x8x128xbf16>,
    %c0_13 = arith.constant 0 : index
    %c0_14 = arith.constant 0 : index
    %c2 = arith.constant 2 : index
    %c0_15 = arith.constant 0 : index
    %9 = vector.load %arg2[%c0_13, %c0_14, %c2, %c0_15] : memref<1x10x10x128xbf16, #tpu.memory_space<vmem>>, vector<1x8x8x128xbf16>
    %10 = vector.shape_cast %9 : vector<1x8x8x128xbf16> to vector<8x8x128xbf16>
    %c0_16 = arith.constant 0 : index
    %c0_17 = arith.constant 0 : index
    %c256 = arith.constant 256 : index
    %11 = vector.load %arg6[%c0_16, %c0_17, %c256] : memref<8x8x384xbf16, #tpu.memory_space<vmem>>, vector<8x8x128xbf16>
    tpu.vector_store %arg6[%c0_16, %c0_17, %c256], %10 {strides = array<i32>} : memref<8x8x384xbf16, #tpu.memory_space<vmem>>, vector<8x8x128xbf16>,
    %c0_18 = arith.constant 0 : index
    %c0_19 = arith.constant 0 : index
    %c0_20 = arith.constant 0 : index
    %12 = vector.load %arg6[%c0_18, %c0_19, %c0_20] : memref<8x8x384xbf16, #tpu.memory_space<vmem>>, vector<8x8x384xbf16>
    %13 = vector.shape_cast %12 : vector<8x8x384xbf16> to vector<64x384xbf16>
    %c0_21 = arith.constant 0 : index
    %c0_22 = arith.constant 0 : index
    %c0_23 = arith.constant 0 : index
    %14 = vector.load %arg3[%c0_21, %c0_22, %c0_23] : memref<3x384x128xbf16, #tpu.memory_space<vmem>>, vector<1x384x128xbf16>
    %15 = vector.shape_cast %14 : vector<1x384x128xbf16> to vector<384x128xbf16>
    %cst = arith.constant dense<0.000000e+00> : vector<64x128xf32>
    %16 = tpu.matmul %13, %15, %cst {dimension_numbers = #tpu.dot_dimension_numbers<[1], [0], [0], [1], [0, 0, 1, 1], [], []>} : vector<64x384xbf16>, vector<384x128xbf16>, vector<64x128xf32> -> vector<64x128xf32>
    %17 = arith.addf %2, %16 : vector<64x128xf32>
    %c0_24 = arith.constant 0 : index
    %c1_25 = arith.constant 1 : index
    %c0_26 = arith.constant 0 : index
    %c0_27 = arith.constant 0 : index
    %18 = vector.load %arg2[%c0_24, %c1_25, %c0_26, %c0_27] : memref<1x10x10x128xbf16, #tpu.memory_space<vmem>>, vector<1x8x8x128xbf16>
    %19 = vector.shape_cast %18 : vector<1x8x8x128xbf16> to vector<8x8x128xbf16>
    %c0_28 = arith.constant 0 : index
    %c0_29 = arith.constant 0 : index
    %c0_30 = arith.constant 0 : index
    %20 = vector.load %arg6[%c0_28, %c0_29, %c0_30] : memref<8x8x384xbf16, #tpu.memory_space<vmem>>, vector<8x8x128xbf16>
    tpu.vector_store %arg6[%c0_28, %c0_29, %c0_30], %19 {strides = array<i32>} : memref<8x8x384xbf16, #tpu.memory_space<vmem>>, vector<8x8x128xbf16>,
    %c0_31 = arith.constant 0 : index
    %c1_32 = arith.constant 1 : index
    %c1_33 = arith.constant 1 : index
    %c0_34 = arith.constant 0 : index
    %21 = vector.load %arg2[%c0_31, %c1_32, %c1_33, %c0_34] : memref<1x10x10x128xbf16, #tpu.memory_space<vmem>>, vector<1x8x8x128xbf16>
    %22 = vector.shape_cast %21 : vector<1x8x8x128xbf16> to vector<8x8x128xbf16>
    %c0_35 = arith.constant 0 : index
    %c0_36 = arith.constant 0 : index
    %c128_37 = arith.constant 128 : index
    %23 = vector.load %arg6[%c0_35, %c0_36, %c128_37] : memref<8x8x384xbf16, #tpu.memory_space<vmem>>, vector<8x8x128xbf16>
    tpu.vector_store %arg6[%c0_35, %c0_36, %c128_37], %22 {strides = array<i32>} : memref<8x8x384xbf16, #tpu.memory_space<vmem>>, vector<8x8x128xbf16>,
    %c0_38 = arith.constant 0 : index
    %c1_39 = arith.constant 1 : index
    %c2_40 = arith.constant 2 : index
    %c0_41 = arith.constant 0 : index
    %24 = vector.load %arg2[%c0_38, %c1_39, %c2_40, %c0_41] : memref<1x10x10x128xbf16, #tpu.memory_space<vmem>>, vector<1x8x8x128xbf16>
    %25 = vector.shape_cast %24 : vector<1x8x8x128xbf16> to vector<8x8x128xbf16>
    %c0_42 = arith.constant 0 : index
    %c0_43 = arith.constant 0 : index
    %c256_44 = arith.constant 256 : index
    %26 = vector.load %arg6[%c0_42, %c0_43, %c256_44] : memref<8x8x384xbf16, #tpu.memory_space<vmem>>, vector<8x8x128xbf16>
    tpu.vector_store %arg6[%c0_42, %c0_43, %c256_44], %25 {strides = array<i32>} : memref<8x8x384xbf16, #tpu.memory_space<vmem>>, vector<8x8x128xbf16>,
    %c0_45 = arith.constant 0 : index
    %c0_46 = arith.constant 0 : index
    %c0_47 = arith.constant 0 : index
    %27 = vector.load %arg6[%c0_45, %c0_46, %c0_47] : memref<8x8x384xbf16, #tpu.memory_space<vmem>>, vector<8x8x384xbf16>
    %28 = vector.shape_cast %27 : vector<8x8x384xbf16> to vector<64x384xbf16>
    %c1_48 = arith.constant 1 : index
    %c0_49 = arith.constant 0 : index
    %c0_50 = arith.constant 0 : index
    %29 = vector.load %arg3[%c1_48, %c0_49, %c0_50] : memref<3x384x128xbf16, #tpu.memory_space<vmem>>, vector<1x384x128xbf16>
    %30 = vector.shape_cast %29 : vector<1x384x128xbf16> to vector<384x128xbf16>
    %cst_51 = arith.constant dense<0.000000e+00> : vector<64x128xf32>
    %31 = tpu.matmul %28, %30, %cst_51 {dimension_numbers = #tpu.dot_dimension_numbers<[1], [0], [0], [1], [0, 0, 1, 1], [], []>} : vector<64x384xbf16>, vector<384x128xbf16>, vector<64x128xf32> -> vector<64x128xf32>
    %32 = arith.addf %17, %31 : vector<64x128xf32>
    %c0_52 = arith.constant 0 : index
    %c2_53 = arith.constant 2 : index
    %c0_54 = arith.constant 0 : index
    %c0_55 = arith.constant 0 : index
    %33 = vector.load %arg2[%c0_52, %c2_53, %c0_54, %c0_55] : memref<1x10x10x128xbf16, #tpu.memory_space<vmem>>, vector<1x8x8x128xbf16>
    %34 = vector.shape_cast %33 : vector<1x8x8x128xbf16> to vector<8x8x128xbf16>
    %c0_56 = arith.constant 0 : index
    %c0_57 = arith.constant 0 : index
    %c0_58 = arith.constant 0 : index
    %35 = vector.load %arg6[%c0_56, %c0_57, %c0_58] : memref<8x8x384xbf16, #tpu.memory_space<vmem>>, vector<8x8x128xbf16>
    tpu.vector_store %arg6[%c0_56, %c0_57, %c0_58], %34 {strides = array<i32>} : memref<8x8x384xbf16, #tpu.memory_space<vmem>>, vector<8x8x128xbf16>,
    %c0_59 = arith.constant 0 : index
    %c2_60 = arith.constant 2 : index
    %c1_61 = arith.constant 1 : index
    %c0_62 = arith.constant 0 : index
    %36 = vector.load %arg2[%c0_59, %c2_60, %c1_61, %c0_62] : memref<1x10x10x128xbf16, #tpu.memory_space<vmem>>, vector<1x8x8x128xbf16>
    %37 = vector.shape_cast %36 : vector<1x8x8x128xbf16> to vector<8x8x128xbf16>
    %c0_63 = arith.constant 0 : index
    %c0_64 = arith.constant 0 : index
    %c128_65 = arith.constant 128 : index
    %38 = vector.load %arg6[%c0_63, %c0_64, %c128_65] : memref<8x8x384xbf16, #tpu.memory_space<vmem>>, vector<8x8x128xbf16>
    tpu.vector_store %arg6[%c0_63, %c0_64, %c128_65], %37 {strides = array<i32>} : memref<8x8x384xbf16, #tpu.memory_space<vmem>>, vector<8x8x128xbf16>,
    %c0_66 = arith.constant 0 : index
    %c2_67 = arith.constant 2 : index
    %c2_68 = arith.constant 2 : index
    %c0_69 = arith.constant 0 : index
    %39 = vector.load %arg2[%c0_66, %c2_67, %c2_68, %c0_69] : memref<1x10x10x128xbf16, #tpu.memory_space<vmem>>, vector<1x8x8x128xbf16>
    %40 = vector.shape_cast %39 : vector<1x8x8x128xbf16> to vector<8x8x128xbf16>
    %c0_70 = arith.constant 0 : index
    %c0_71 = arith.constant 0 : index
    %c256_72 = arith.constant 256 : index
    %41 = vector.load %arg6[%c0_70, %c0_71, %c256_72] : memref<8x8x384xbf16, #tpu.memory_space<vmem>>, vector<8x8x128xbf16>
    tpu.vector_store %arg6[%c0_70, %c0_71, %c256_72], %40 {strides = array<i32>} : memref<8x8x384xbf16, #tpu.memory_space<vmem>>, vector<8x8x128xbf16>,
    %c0_73 = arith.constant 0 : index
    %c0_74 = arith.constant 0 : index
    %c0_75 = arith.constant 0 : index
    %42 = vector.load %arg6[%c0_73, %c0_74, %c0_75] : memref<8x8x384xbf16, #tpu.memory_space<vmem>>, vector<8x8x384xbf16>
    %43 = vector.shape_cast %42 : vector<8x8x384xbf16> to vector<64x384xbf16>
    %c2_76 = arith.constant 2 : index
    %c0_77 = arith.constant 0 : index
    %c0_78 = arith.constant 0 : index
    %44 = vector.load %arg3[%c2_76, %c0_77, %c0_78] : memref<3x384x128xbf16, #tpu.memory_space<vmem>>, vector<1x384x128xbf16>
    %45 = vector.shape_cast %44 : vector<1x384x128xbf16> to vector<384x128xbf16>
    %cst_79 = arith.constant dense<0.000000e+00> : vector<64x128xf32>
    %46 = tpu.matmul %43, %45, %cst_79 {dimension_numbers = #tpu.dot_dimension_numbers<[1], [0], [0], [1], [0, 0, 1, 1], [], []>} : vector<64x384xbf16>, vector<384x128xbf16>, vector<64x128xf32> -> vector<64x128xf32>
    %47 = arith.addf %32, %46 : vector<64x128xf32>
    %cst_80 = arith.constant 0.000000e+00 : f32
    %48 = vector.broadcast %cst_80 : f32 to vector<64x128xf32>
    %49 = arith.maximumf %47, %48 : vector<64x128xf32>
    %50 = vector.shape_cast %49 : vector<64x128xf32> to vector<8x8x128xf32>
    %51 = arith.truncf %50 : vector<8x8x128xf32> to vector<8x8x128xbf16>
    %c0_81 = arith.constant 0 : index
    %c0_82 = arith.constant 0 : index
    %c0_83 = arith.constant 0 : index
    %c0_84 = arith.constant 0 : index
    %52 = vector.load %arg5[%c0_81, %c0_82, %c0_83, %c0_84] : memref<1x8x8x128xbf16, #tpu.memory_space<vmem>>, vector<1x8x8x128xbf16>
    %53 = vector.shape_cast %52 : vector<1x8x8x128xbf16> to vector<8x8x128xbf16>
    %54 = vector.shape_cast %51 : vector<8x8x128xbf16> to vector<1x8x8x128xbf16>
    tpu.vector_store %arg5[%c0_81, %c0_82, %c0_83, %c0_84], %54 {strides = array<i32>} : memref<1x8x8x128xbf16, #tpu.memory_space<vmem>>, vector<1x8x8x128xbf16>,
    return
  }
  func.func @transform_0(%arg0: i32, %arg1: i32) -> (i32, i32, i32, i32) {
    %c0_i32 = arith.constant 0 : i32
    %c0_i32_0 = arith.constant 0 : i32
    %c0_i32_1 = arith.constant 0 : i32
    %c0_i32_2 = arith.constant 0 : i32
    return %arg1, %c0_i32, %c0_i32_0, %c0_i32_1 : i32, i32, i32, i32
  }
  func.func @transform_1(%arg0: i32, %arg1: i32) -> (i32, i32, i32) {
    %c0_i32 = arith.constant 0 : i32
    %c0_i32_0 = arith.constant 0 : i32
    %c0_i32_1 = arith.constant 0 : i32
    return %c0_i32, %c0_i32_0, %arg0 : i32, i32, i32
  }
  func.func @transform_2(%arg0: i32, %arg1: i32) -> (i32, i32) {
    %c0_i32 = arith.constant 0 : i32
    %c0_i32_0 = arith.constant 0 : i32
    return %c0_i32, %arg0 : i32, i32
  }
  func.func @transform_3(%arg0: i32, %arg1: i32) -> (i32, i32, i32, i32) {
    %c0_i32 = arith.constant 0 : i32
    %c0_i32_0 = arith.constant 0 : i32
    %c0_i32_1 = arith.constant 0 : i32
    return %arg1, %c0_i32, %c0_i32_0, %arg0 : i32, i32, i32, i32
  }
}

</mosaic_0001>

<llo_original>
// kernel: truncated_vgg19_apply.4
$region0: #{truncated_vgg19_apply.4}
  #allocation0 [shape = 'u32[]', space=smem, size = 0x4, offset = 0x4, fixed_abs, tag = 'smem constant byte address 0x4 - core index']
  #allocation1 [shape = 'u32[144,128]{1,0:T(1,128)}', space=vmem, size = 0x12000, scoped, tag = 'internal scratch']
  %s0 = inlined_call_operand.vmem [shape: bf16[2,16,16,27], index: 0, kind: input, shape index: {}]
  %s1 = inlined_call_operand.vmem [shape: bf16[27,64], index: 1, kind: input, shape index: {}]
  %s2 = inlined_call_operand.vmem [shape: f32[1,64], index: 2, kind: input, shape index: {}]
  %s3 = inlined_call_operand.vmem [shape: bf16[2,18,18,64], index: 3, kind: output, shape index: {}]
  %s4 = sld [smem:[#allocation0]]
  $region45: #{truncated_vgg19_apply.4} parent=0
    _
  %s6 = ssub.s32 1, %s4
  %s7 = scalar_select 0, %s6, %s4
  loop: start=0, step=1, limit=4
  $region2: #{truncated_vgg19_apply.4} parent=0 // loop_pre_header
    _
  $region3: #{truncated_vgg19_apply.4} parent=0 // loop_header
    %s9 = sphi 0, %s13
    %p10 = scmp.ge.s32.totalorder %s9, 4
    %s16 = sphi 0, %s28
    %s17 = sphi 0, %s24
    %s18 = sphi 0, %s16
    %s19 = sphi 0, %s17
    %s20 = sphi 0, %s18
    %s21 = sphi 0, %s19
    %s31 = sphi 0, %s33
    %s34 = sphi 0, %s31
    %s35 = sphi 0, %s34
    %s51 = sphi 0, %s35
    %s57 = sphi 0, %s59
    %s60 = sphi 0, %s57
    %s61 = sphi 0, %s60
    %s77 = sphi 0, %s61
    %s83 = sphi 0, %s85
    %s86 = sphi 0, %s83
    %s87 = sphi 0, %s86
    %s103 = sphi 0, %s87
    %s111 = sphi 0, %s113
    %s114 = sphi 0, %s111
    %s115 = sphi 0, %s114
    %s131 = sphi 0, %s115
  $region4: #{truncated_vgg19_apply.4} parent=0 // loop_header_branch
    %12 = sbr.rel (%p10) target = $region8
  $region5: #{truncated_vgg19_apply.4} parent=0 // loop_body
    %s14 = ssub.s32 %s9, 1
    %s15 = ssub.s32 %s9, 2
    %s22 = sadd.s32 1, %s17
    %p23 = scmp.ge.s32.totalorder %s22, 2
    %s24 = scalar_select %p23, 0, %s22
    %s25 = sadd.s32 1, %s16
    %s26 = scalar_select %p23, %s25, %s16
    %p27 = scmp.ge.s32.totalorder %s26, 1
    %s28 = scalar_select %p27, 0, %s26
    %s29 = ssub.s32 %s17, %s24
    %p30 = scmp.eq.s32.totalorder %s29, 0
    %s32 = sadd.s32 %s31, 1
    %s33 = scalar_select %p30, %s31, %s32
    %p36 = pneg %p30
    %p37 = scmp.eq.s32.totalorder %s9, 1
    %p38 = por %p36, %p37
    %p39 = scmp.ne.s32.totalorder %s31, %s34
    %p40 = scmp.eq.s32.totalorder %s9, 0
    %p41 = por %p39, %p40
    %p42 = scmp.ne.s32.totalorder %s31, %s34
    %p43 = scmp.eq.s32.totalorder %s14, 1
    %p44 = por %p42, %p43
    %p45 = scmp.ne.s32.totalorder %s34, %s35
    %p46 = scmp.eq.s32.totalorder %s14, 0
    %p47 = por %p45, %p46
    %p48 = scmp.ne.s32.totalorder %s34, %s35
    %p49 = scmp.eq.s32.totalorder %s15, 1
    %p50 = por %p48, %p49
    %p52 = scmp.ne.s32.totalorder %s35, %s51
    %p53 = scmp.eq.s32.totalorder %s15, 0
    %p54 = por %p52, %p53
    %s55 = ssub.s32 %s16, %s28
    %p56 = scmp.eq.s32.totalorder %s55, 0
    %s58 = sadd.s32 %s57, 1
    %s59 = scalar_select %p56, %s57, %s58
    %p62 = pneg %p56
    %p63 = scmp.eq.s32.totalorder %s9, 1
    %p64 = por %p62, %p63
    %p65 = scmp.ne.s32.totalorder %s57, %s60
    %p66 = scmp.eq.s32.totalorder %s9, 0
    %p67 = por %p65, %p66
    %p68 = scmp.ne.s32.totalorder %s57, %s60
    %p69 = scmp.eq.s32.totalorder %s14, 1
    %p70 = por %p68, %p69
    %p71 = scmp.ne.s32.totalorder %s60, %s61
    %p72 = scmp.eq.s32.totalorder %s14, 0
    %p73 = por %p71, %p72
    %p74 = scmp.ne.s32.totalorder %s60, %s61
    %p75 = scmp.eq.s32.totalorder %s15, 1
    %p76 = por %p74, %p75
    %p78 = scmp.ne.s32.totalorder %s61, %s77
    %p79 = scmp.eq.s32.totalorder %s15, 0
    %p80 = por %p78, %p79
    %s81 = ssub.s32 %s16, %s28
    %p82 = scmp.eq.s32.totalorder %s81, 0
    %s84 = sadd.s32 %s83, 1
    %s85 = scalar_select %p82, %s83, %s84
    %p88 = pneg %p82
    %p89 = scmp.eq.s32.totalorder %s9, 1
    %p90 = por %p88, %p89
    %p91 = scmp.ne.s32.totalorder %s83, %s86
    %p92 = scmp.eq.s32.totalorder %s9, 0
    %p93 = por %p91, %p92
    %p94 = scmp.ne.s32.totalorder %s83, %s86
    %p95 = scmp.eq.s32.totalorder %s14, 1
    %p96 = por %p94, %p95
    %p97 = scmp.ne.s32.totalorder %s86, %s87
    %p98 = scmp.eq.s32.totalorder %s14, 0
    %p99 = por %p97, %p98
    %p100 = scmp.ne.s32.totalorder %s86, %s87
    %p101 = scmp.eq.s32.totalorder %s15, 1
    %p102 = por %p100, %p101
    %p104 = scmp.ne.s32.totalorder %s87, %s103
    %p105 = scmp.eq.s32.totalorder %s15, 0
    %p106 = por %p104, %p105
    %s107 = ssub.s32 %s17, %s24
    %s108 = ssub.s32 %s16, %s28
    %s109 = sor.u32 %s107, %s108
    %p110 = scmp.eq.s32.totalorder %s109, 0
    %s112 = sadd.s32 %s111, 1
    %s113 = scalar_select %p110, %s111, %s112
    %p116 = pneg %p110
    %p117 = scmp.eq.s32.totalorder %s9, 1
    %p118 = por %p116, %p117
    %p119 = scmp.ne.s32.totalorder %s111, %s114
    %p120 = scmp.eq.s32.totalorder %s9, 0
    %p121 = por %p119, %p120
    %p122 = scmp.ne.s32.totalorder %s111, %s114
    %p123 = scmp.eq.s32.totalorder %s14, 1
    %p124 = por %p122, %p123
    %p125 = scmp.ne.s32.totalorder %s114, %s115
    %p126 = scmp.eq.s32.totalorder %s14, 0
    %p127 = por %p125, %p126
    %p128 = scmp.ne.s32.totalorder %s114, %s115
    %p129 = scmp.eq.s32.totalorder %s15, 1
    %p130 = por %p128, %p129
    %p132 = scmp.ne.s32.totalorder %s115, %s131
    %p133 = scmp.eq.s32.totalorder %s15, 0
    %p134 = por %p132, %p133
    %p135 = scmp.le.s32.totalorder 1, %s9
    %p136 = scmp.lt.s32.totalorder %s9, 3
    %p137 = pnand %p135, %p136
    %p138 = pneg %p137
    // Predicated region
    $region9: #{truncated_vgg19_apply.4} parent=5 // pred_check
      _
    $region10: #{truncated_vgg19_apply.4} parent=5 // pred_check_branch
      %140 = sbr.rel (%p137) target = $region12
    $region11: #{truncated_vgg19_apply.4} parent=5 // pred_region
      %s141 = ssub.s32 %s9, 1
      // Predicated region
      $region13: #{truncated_vgg19_apply.4} parent=11 // pred_check
        %p142 = pneg %p73
      $region14: #{truncated_vgg19_apply.4} parent=11 // pred_check_branch
        %144 = sbr.rel (%p142) target = $region16
      $region15: #{truncated_vgg19_apply.4} parent=11 // pred_region
        %p145 = scmp.lt.s32.totalorder %s18, 0
        %s146 = scalar_select %p145, %s18, 0
        %s147 = smul.addr %s146, 4
        %s148 = scalar_lea.vmem %s1, %s147
      $region16: #{truncated_vgg19_apply.4} parent=11 // pred_fallthru
        _
      // Predicated region
      $region17: #{truncated_vgg19_apply.4} parent=11 // pred_check
        %p149 = pneg %p99
      $region18: #{truncated_vgg19_apply.4} parent=11 // pred_check_branch
        %151 = sbr.rel (%p149) target = $region20
      $region19: #{truncated_vgg19_apply.4} parent=11 // pred_region
        %p152 = scmp.lt.s32.totalorder %s18, 0
        %s153 = scalar_select %p152, %s18, 0
        %s154 = scalar_lea.vmem %s2, %s153
      $region20: #{truncated_vgg19_apply.4} parent=11 // pred_fallthru
        _
    $region12: #{truncated_vgg19_apply.4} parent=5 // pred_fallthru
      _
    %p155 = scmp.lt.s32.totalorder %s9, 2
    // Predicated region
    $region21: #{truncated_vgg19_apply.4} parent=5 // pred_check
      %p156 = pneg %p155
    $region22: #{truncated_vgg19_apply.4} parent=5 // pred_check_branch
      %158 = sbr.rel (%p156) target = $region24
    $region23: #{truncated_vgg19_apply.4} parent=5 // pred_region
      // Predicated region
      $region25: #{truncated_vgg19_apply.4} parent=23 // pred_check
        %p159 = pneg %p41
      $region26: #{truncated_vgg19_apply.4} parent=23 // pred_check_branch
        %161 = sbr.rel (%p159) target = $region28
      $region27: #{truncated_vgg19_apply.4} parent=23 // pred_region
        %p162 = scmp.lt.s32.totalorder %s17, 1
        %s163 = scalar_select %p162, %s17, 1
        %s164 = smul.addr %s163, 32
        %s165 = smul.addr %s164, 4
        %s166 = scalar_lea.vmem %s0, %s165
      $region28: #{truncated_vgg19_apply.4} parent=23 // pred_fallthru
        _
    $region24: #{truncated_vgg19_apply.4} parent=5 // pred_fallthru
      _
    %p167 = scmp.le.s32.totalorder 1, %s9
    %p168 = scmp.lt.s32.totalorder %s9, 3
    %p169 = pnand %p167, %p168
    %p170 = pneg %p169
    // Predicated region
    $region29: #{truncated_vgg19_apply.4} parent=5 // pred_check
      _
    $region30: #{truncated_vgg19_apply.4} parent=5 // pred_check_branch
      %172 = sbr.rel (%p169) target = $region32
    $region31: #{truncated_vgg19_apply.4} parent=5 // pred_region
      %s173 = ssub.s32 %s9, 1
      %p174 = scmp.lt.s32.totalorder %s19, 1
      %s175 = scalar_select %p174, %s19, 1
      %s176 = smul.addr %s175, 32
      %s177 = smul.addr %s176, 4
      %s178 = scalar_lea.vmem %s0, %s177
      %p179 = pneg %p47
      %p180 = pneg %p44
      %p181 = scmp.lt.s32.totalorder %s18, 0
      %s182 = scalar_select %p181, %s18, 0
      %s183 = smul.addr %s182, 4
      %s184 = scalar_lea.vmem %s1, %s183
      %p185 = pneg %p73
      %p186 = pneg %p70
      %p187 = scmp.lt.s32.totalorder %s18, 0
      %s188 = scalar_select %p187, %s18, 0
      %s189 = scalar_lea.vmem %s2, %s188
      %p190 = pneg %p99
      %p191 = pneg %p96
      %p192 = pneg %p127
      %p193 = pneg %p124
      %p194 = scmp.lt.s32.totalorder %s19, 1
      %s195 = scalar_select %p194, %s19, 1
      %p196 = scmp.lt.s32.totalorder %s18, 0
      %s197 = scalar_select %p196, %s18, 0
      %s198 = smul.addr %s195, 54
      %s199 = sadd.s32 %s197, %s198
      %s200 = smul.addr %s199, 4
      %s201 = scalar_lea.vmem %s3, %s200
      %p202 = scmp.lt.s32.totalorder %s19, 1
      %s203 = scalar_select %p202, %s19, 1
      %s204 = smul.addr %s203, 32
      %s205 = smul.addr %s204, 4
      %s206 = scalar_lea.vmem %s0, %s205
      %p207 = scmp.lt.s32.totalorder %s18, 0
      %s208 = scalar_select %p207, %s18, 0
      %s209 = smul.addr %s208, 4
      %s210 = scalar_lea.vmem %s1, %s209
      %p211 = scmp.lt.s32.totalorder %s18, 0
      %s212 = scalar_select %p211, %s18, 0
      %s213 = scalar_lea.vmem %s2, %s212
      %p214 = scmp.lt.s32.totalorder %s19, 1
      %s215 = scalar_select %p214, %s19, 1
      %p216 = scmp.lt.s32.totalorder %s18, 0
      %s217 = scalar_select %p216, %s18, 0
      %s218 = smul.addr %s215, 54
      %s219 = sadd.s32 %s217, %s218
      %s220 = smul.addr %s219, 4
      %s221 = scalar_lea.vmem %s3, %s220
      %v223 = vld [vmem:[%s213] sm:$0x1]
      %v225 = vlaneseq
      %v226 = vshrl.u32 %v225, 7
      %v227 = vsub.s32 0, %v226
      %v228 = vrot.slane %v223, %v227
      %v230 = vld [vmem:[%s206] sm:$0xf]
      %v231 = vld [vmem:[%s206 + $0x4] sm:$0xf]
      %v232 = vld [vmem:[%s206 + $0x8] sm:$0xf]
      %v233 = vld [vmem:[%s206 + $0xc] sm:$0xf]
      %v234 = vld [vmem:[%s206 + $0x10] sm:$0xf]
      %v235 = vld [vmem:[%s206 + $0x14] sm:$0xf]
      %v236 = vld [vmem:[%s206 + $0x18] sm:$0xf]
      %v237 = vld [vmem:[%s206 + $0x1c] sm:$0xf]
      %v238 = vld [vmem:[%s206 + $0x20] sm:$0xf]
      %v239 = vld [vmem:[%s206 + $0x24] sm:$0xf]
      %v240 = vld [vmem:[%s206 + $0x28] sm:$0xf]
      %v241 = vld [vmem:[%s206 + $0x2c] sm:$0xf]
      %v242 = vld [vmem:[%s206 + $0x30] sm:$0xf]
      %v243 = vld [vmem:[%s206 + $0x34] sm:$0xf]
      %v244 = vld [vmem:[%s206 + $0x38] sm:$0xf]
      %v245 = vld [vmem:[%s206 + $0x3c] sm:$0xf]
      %v246 = vld [vmem:[%s206 + $0x40] sm:$0xf]
      %v247 = vld [vmem:[%s206 + $0x44] sm:$0xf]
      %v248 = vld [vmem:[%s206 + $0x48] sm:$0xf]
      %v249 = vld [vmem:[%s206 + $0x4c] sm:$0xf]
      %v250 = vld [vmem:[%s206 + $0x50] sm:$0xf]
      %v251 = vld [vmem:[%s206 + $0x54] sm:$0xf]
      %v252 = vld [vmem:[%s206 + $0x58] sm:$0xf]
      %v253 = vld [vmem:[%s206 + $0x5c] sm:$0xf]
      %v254 = vld [vmem:[%s206 + $0x60] sm:$0xf]
      %v255 = vld [vmem:[%s206 + $0x64] sm:$0xf]
      %v256 = vld [vmem:[%s206 + $0x68] sm:$0xf]
      %v257 = vld [vmem:[%s206 + $0x6c] sm:$0xf]
      %v258 = vld [vmem:[%s206 + $0x70] sm:$0xf]
      %v259 = vld [vmem:[%s206 + $0x74] sm:$0xf]
      %v260 = vld [vmem:[%s206 + $0x78] sm:$0xf]
      %v261 = vld [vmem:[%s206 + $0x7c] sm:$0xf]
      %v262 = vld [vmem:[%s210] sm:$0xf]
      %v263 = vld [vmem:[%s210 + $0x4] sm:$0xf]
      %v264 = vld [vmem:[%s210 + $0x8] sm:$0xf]
      %v265 = vld [vmem:[%s210 + $0xc] sm:$0x3]
      %v298 = vunpack.c.l.b16 %v230
      %v299 = vunpack.c.l.b16 %v231
      %v300 = vunpack.c.l.b16 %v232
      %v301 = vunpack.c.l.b16 %v233
      %v302 = vunpack.c.l.b16 %v234
      %v303 = vunpack.c.l.b16 %v235
      %v304 = vunpack.c.l.b16 %v236
      %v305 = vunpack.c.l.b16 %v237
      %v306 = vunpack.c.l.b16 %v238
      %v307 = vunpack.c.l.b16 %v239
      %v308 = vunpack.c.l.b16 %v240
      %v309 = vunpack.c.l.b16 %v241
      %v310 = vunpack.c.l.b16 %v242
      %v311 = vunpack.c.l.b16 %v243
      %v312 = vunpack.c.l.b16 %v244
      %v313 = vunpack.c.l.b16 %v245
      %v314 = vunpack.c.l.b16 %v246
      %v315 = vunpack.c.l.b16 %v247
      %v316 = vunpack.c.l.b16 %v248
      %v317 = vunpack.c.l.b16 %v249
      %v318 = vunpack.c.l.b16 %v250
      %v319 = vunpack.c.l.b16 %v251
      %v320 = vunpack.c.l.b16 %v252
      %v321 = vunpack.c.l.b16 %v253
      %v322 = vunpack.c.l.b16 %v254
      %v323 = vunpack.c.l.b16 %v255
      %v324 = vunpack.c.l.b16 %v256
      %v325 = vunpack.c.l.b16 %v257
      %v326 = vunpack.c.l.b16 %v258
      %v327 = vunpack.c.l.b16 %v259
      %v328 = vunpack.c.l.b16 %v260
      %v329 = vunpack.c.l.b16 %v261
      %v330 = vpack.c.b16 %v299, %v298
      %v331 = vpack.c.b16 %v301, %v300
      %v332 = vpack.c.b16 %v303, %v302
      %v333 = vpack.c.b16 %v305, %v304
      %v334 = vpack.c.b16 %v307, %v306
      %v335 = vpack.c.b16 %v309, %v308
      %v336 = vpack.c.b16 %v311, %v310
      %v337 = vpack.c.b16 %v313, %v312
      %v338 = vpack.c.b16 %v315, %v314
      %v339 = vpack.c.b16 %v317, %v316
      %v340 = vpack.c.b16 %v319, %v318
      %v341 = vpack.c.b16 %v321, %v320
      %v342 = vpack.c.b16 %v323, %v322
      %v343 = vpack.c.b16 %v325, %v324
      %v344 = vpack.c.b16 %v327, %v326
      %v345 = vpack.c.b16 %v329, %v328
      %v350 = vunpack.c.l.b16 %v262
      %v351 = vunpack.c.l.b16 %v263
      %v352 = vunpack.c.l.b16 %v264
      %v353 = vunpack.c.l.b16 %v265
      %v354 = vpack.c.b16 %v351, %v350
      %v355 = vpack.c.b16 %v353, %v352
      %vm357 = vcmask 220160
      %v359 = vsel %vm357, %v330, 0
      %v362 = vsel %vm357, %v331, 0
      %v365 = vsel %vm357, %v332, 0
      %v368 = vsel %vm357, %v333, 0
      %v371 = vsel %vm357, %v334, 0
      %v374 = vsel %vm357, %v335, 0
      %v377 = vsel %vm357, %v336, 0
      %v380 = vsel %vm357, %v337, 0
      %v383 = vsel %vm357, %v338, 0
      %v386 = vsel %vm357, %v339, 0
      %v389 = vsel %vm357, %v340, 0
      %v392 = vsel %vm357, %v341, 0
      %v395 = vsel %vm357, %v342, 0
      %v398 = vsel %vm357, %v343, 0
      %v401 = vsel %vm357, %v344, 0
      %v404 = vsel %vm357, %v345, 0
      %vm406 = vcmask 1044480
      %vm407 = vcmask 1045504
      %v408 = vsel %vm406, 4294967295, 65535
      %v409 = vsel %vm407, %v408, 0
      %v411 = vand.u32 %v355, %v409
      %413 = vmatprep.subr.bf16.mxu0 0
      %414 = vmatpush1.bf16.msra.mxu0 %v354
      %415 = vmatprep.subr.bf16.mxu0 0
      %416 = vmatpush1.bf16.msra.mxu0 %v411
      %417 = vmatprep.subr.bf16.mxu0 0
      %418 = vmatpush1.bf16.msra.mxu0 0
      %419 = vmatprep.subr.bf16.mxu0 0
      %420 = vmatpush1.bf16.msra.mxu0 0
      %421 = vmatprep.subr.bf16.mxu0 0
      %422 = vmatpush1.bf16.msra.mxu0 0
      %423 = vmatprep.subr.bf16.mxu0 0
      %424 = vmatpush1.bf16.msra.mxu0 0
      %425 = vmatprep.subr.bf16.mxu0 0
      %426 = vmatpush1.bf16.msra.mxu0 0
      %427 = vmatprep.subr.bf16.mxu0 0
      %428 = vmatpush1.bf16.msra.mxu0 0
      %429 = vmatprep.subr.bf16.mxu0 0
      %430 = vmatpush1.bf16.msra.mxu0 0
      %431 = vmatprep.subr.bf16.mxu0 0
      %432 = vmatpush1.bf16.msra.mxu0 0
      %433 = vmatprep.subr.bf16.mxu0 0
      %434 = vmatpush1.bf16.msra.mxu0 0
      %435 = vmatprep.subr.bf16.mxu0 0
      %436 = vmatpush1.bf16.msra.mxu0 0
      %437 = vmatprep.subr.bf16.mxu0 0
      %438 = vmatpush1.bf16.msra.mxu0 0
      %439 = vmatprep.subr.bf16.mxu0 0
      %440 = vmatpush1.bf16.msra.mxu0 0
      %441 = vmatprep.subr.bf16.mxu0 0
      %442 = vmatpush1.bf16.msra.mxu0 0
      %443 = vmatprep.subr.bf16.mxu0 0
      %444 = vmatpush1.bf16.msra.mxu0 0
      %445 = vmatprep.mubr.bf16.mxu0 0
      %446 = vmatmul.mubr.bf16.gmra.mrb[0].mxu0 %v359
      %v447 = vpop.f32.mrb[0].mxu0
      %v448 = vadd.f32 0.0, %v447
      %v449 = vpop.f32.mrb[0].mxu0
      %v450 = vpop.f32.mrb[0].mxu0
      %v451 = vadd.f32 0.0, %v450
      %v452 = vpop.f32.mrb[0].mxu0
      %453 = vmatprep.mubr.bf16.mxu0 0
      %454 = vmatmul.mubr.bf16.gmra.mrb[0].mxu0 %v362
      %v455 = vpop.f32.mrb[0].mxu0
      %v456 = vadd.f32 0.0, %v455
      %v457 = vpop.f32.mrb[0].mxu0
      %v458 = vpop.f32.mrb[0].mxu0
      %v459 = vadd.f32 0.0, %v458
      %v460 = vpop.f32.mrb[0].mxu0
      %461 = vmatprep.mubr.bf16.mxu0 0
      %462 = vmatmul.mubr.bf16.gmra.mrb[0].mxu0 %v365
      %v463 = vpop.f32.mrb[0].mxu0
      %v464 = vadd.f32 0.0, %v463
      %v465 = vpop.f32.mrb[0].mxu0
      %v466 = vpop.f32.mrb[0].mxu0
      %v467 = vadd.f32 0.0, %v466
      %v468 = vpop.f32.mrb[0].mxu0
      %469 = vmatprep.mubr.bf16.mxu0 0
      %470 = vmatmul.mubr.bf16.gmra.mrb[0].mxu0 %v368
      %v471 = vpop.f32.mrb[0].mxu0
      %v472 = vadd.f32 0.0, %v471
      %v473 = vpop.f32.mrb[0].mxu0
      %v474 = vpop.f32.mrb[0].mxu0
      %v475 = vadd.f32 0.0, %v474
      %v476 = vpop.f32.mrb[0].mxu0
      %477 = vmatprep.mubr.bf16.mxu0 0
      %478 = vmatmul.mubr.bf16.gmra.mrb[0].mxu0 %v371
      %v479 = vpop.f32.mrb[0].mxu0
      %v480 = vadd.f32 0.0, %v479
      %v481 = vpop.f32.mrb[0].mxu0
      %v482 = vpop.f32.mrb[0].mxu0
      %v483 = vadd.f32 0.0, %v482
      %v484 = vpop.f32.mrb[0].mxu0
      %485 = vmatprep.mubr.bf16.mxu0 0
      %486 = vmatmul.mubr.bf16.gmra.mrb[0].mxu0 %v374
      %v487 = vpop.f32.mrb[0].mxu0
      %v488 = vadd.f32 0.0, %v487
      %v489 = vpop.f32.mrb[0].mxu0
      %v490 = vpop.f32.mrb[0].mxu0
      %v491 = vadd.f32 0.0, %v490
      %v492 = vpop.f32.mrb[0].mxu0
      %493 = vmatprep.mubr.bf16.mxu0 0
      %494 = vmatmul.mubr.bf16.gmra.mrb[0].mxu0 %v377
      %v495 = vpop.f32.mrb[0].mxu0
      %v496 = vadd.f32 0.0, %v495
      %v497 = vpop.f32.mrb[0].mxu0
      %v498 = vpop.f32.mrb[0].mxu0
      %v499 = vadd.f32 0.0, %v498
      %v500 = vpop.f32.mrb[0].mxu0
      %501 = vmatprep.mubr.bf16.mxu0 0
      %502 = vmatmul.mubr.bf16.gmra.mrb[0].mxu0 %v380
      %v503 = vpop.f32.mrb[0].mxu0
      %v504 = vadd.f32 0.0, %v503
      %v505 = vpop.f32.mrb[0].mxu0
      %v506 = vpop.f32.mrb[0].mxu0
      %v507 = vadd.f32 0.0, %v506
      %v508 = vpop.f32.mrb[0].mxu0
      %509 = vmatprep.mubr.bf16.mxu0 0
      %510 = vmatmul.mubr.bf16.gmra.mrb[0].mxu0 %v383
      %v511 = vpop.f32.mrb[0].mxu0
      %v512 = vadd.f32 0.0, %v511
      %v513 = vpop.f32.mrb[0].mxu0
      %v514 = vpop.f32.mrb[0].mxu0
      %v515 = vadd.f32 0.0, %v514
      %v516 = vpop.f32.mrb[0].mxu0
      %517 = vmatprep.mubr.bf16.mxu0 0
      %518 = vmatmul.mubr.bf16.gmra.mrb[0].mxu0 %v386
      %v519 = vpop.f32.mrb[0].mxu0
      %v520 = vadd.f32 0.0, %v519
      %v521 = vpop.f32.mrb[0].mxu0
      %v522 = vpop.f32.mrb[0].mxu0
      %v523 = vadd.f32 0.0, %v522
      %v524 = vpop.f32.mrb[0].mxu0
      %525 = vmatprep.mubr.bf16.mxu0 0
      %526 = vmatmul.mubr.bf16.gmra.mrb[0].mxu0 %v389
      %v527 = vpop.f32.mrb[0].mxu0
      %v528 = vadd.f32 0.0, %v527
      %v529 = vpop.f32.mrb[0].mxu0
      %v530 = vpop.f32.mrb[0].mxu0
      %v531 = vadd.f32 0.0, %v530
      %v532 = vpop.f32.mrb[0].mxu0
      %533 = vmatprep.mubr.bf16.mxu0 0
      %534 = vmatmul.mubr.bf16.gmra.mrb[0].mxu0 %v392
      %v535 = vpop.f32.mrb[0].mxu0
      %v536 = vadd.f32 0.0, %v535
      %v537 = vpop.f32.mrb[0].mxu0
      %v538 = vpop.f32.mrb[0].mxu0
      %v539 = vadd.f32 0.0, %v538
      %v540 = vpop.f32.mrb[0].mxu0
      %541 = vmatprep.mubr.bf16.mxu0 0
      %542 = vmatmul.mubr.bf16.gmra.mrb[0].mxu0 %v395
      %v543 = vpop.f32.mrb[0].mxu0
      %v544 = vadd.f32 0.0, %v543
      %v545 = vpop.f32.mrb[0].mxu0
      %v546 = vpop.f32.mrb[0].mxu0
      %v547 = vadd.f32 0.0, %v546
      %v548 = vpop.f32.mrb[0].mxu0
      %549 = vmatprep.mubr.bf16.mxu0 0
      %550 = vmatmul.mubr.bf16.gmra.mrb[0].mxu0 %v398
      %v551 = vpop.f32.mrb[0].mxu0
      %v552 = vadd.f32 0.0, %v551
      %v553 = vpop.f32.mrb[0].mxu0
      %v554 = vpop.f32.mrb[0].mxu0
      %v555 = vadd.f32 0.0, %v554
      %v556 = vpop.f32.mrb[0].mxu0
      %557 = vmatprep.mubr.bf16.mxu0 0
      %558 = vmatmul.mubr.bf16.gmra.mrb[0].mxu0 %v401
      %v559 = vpop.f32.mrb[0].mxu0
      %v560 = vadd.f32 0.0, %v559
      %v561 = vpop.f32.mrb[0].mxu0
      %v562 = vpop.f32.mrb[0].mxu0
      %v563 = vadd.f32 0.0, %v562
      %v564 = vpop.f32.mrb[0].mxu0
      %565 = vmatprep.mubr.bf16.mxu0 0
      %566 = vmatmul.mubr.bf16.gmra.mrb[0].mxu0 %v404
      %v567 = vpop.f32.mrb[0].mxu0
      %v568 = vadd.f32 0.0, %v567
      %v569 = vpop.f32.mrb[0].mxu0
      %v570 = vpop.f32.mrb[0].mxu0
      %v571 = vadd.f32 0.0, %v570
      %v572 = vpop.f32.mrb[0].mxu0
      %573 = vdwg.mxu0
      %v574 = vadd.f32 %v228, %v448
      %v575 = vadd.f32 %v228, %v451
      %v576 = vadd.f32 %v228, %v456
      %v577 = vadd.f32 %v228, %v459
      %v578 = vadd.f32 %v228, %v464
      %v579 = vadd.f32 %v228, %v467
      %v580 = vadd.f32 %v228, %v472
      %v581 = vadd.f32 %v228, %v475
      %v582 = vadd.f32 %v228, %v480
      %v583 = vadd.f32 %v228, %v483
      %v584 = vadd.f32 %v228, %v488
      %v585 = vadd.f32 %v228, %v491
      %v586 = vadd.f32 %v228, %v496
      %v587 = vadd.f32 %v228, %v499
      %v588 = vadd.f32 %v228, %v504
      %v589 = vadd.f32 %v228, %v507
      %v590 = vadd.f32 %v228, %v512
      %v591 = vadd.f32 %v228, %v515
      %v592 = vadd.f32 %v228, %v520
      %v593 = vadd.f32 %v228, %v523
      %v594 = vadd.f32 %v228, %v528
      %v595 = vadd.f32 %v228, %v531
      %v596 = vadd.f32 %v228, %v536
      %v597 = vadd.f32 %v228, %v539
      %v598 = vadd.f32 %v228, %v544
      %v599 = vadd.f32 %v228, %v547
      %v600 = vadd.f32 %v228, %v552
      %v601 = vadd.f32 %v228, %v555
      %v602 = vadd.f32 %v228, %v560
      %v603 = vadd.f32 %v228, %v563
      %v604 = vadd.f32 %v228, %v568
      %v605 = vadd.f32 %v228, %v571
      %v606 = vmax.f32 %v574, 0.0
      %v607 = vmax.f32 %v575, 0.0
      %v608 = vmax.f32 %v576, 0.0
      %v609 = vmax.f32 %v577, 0.0
      %v610 = vmax.f32 %v578, 0.0
      %v611 = vmax.f32 %v579, 0.0
      %v612 = vmax.f32 %v580, 0.0
      %v613 = vmax.f32 %v581, 0.0
      %v614 = vmax.f32 %v582, 0.0
      %v615 = vmax.f32 %v583, 0.0
      %v616 = vmax.f32 %v584, 0.0
      %v617 = vmax.f32 %v585, 0.0
      %v618 = vmax.f32 %v586, 0.0
      %v619 = vmax.f32 %v587, 0.0
      %v620 = vmax.f32 %v588, 0.0
      %v621 = vmax.f32 %v589, 0.0
      %v622 = vmax.f32 %v590, 0.0
      %v623 = vmax.f32 %v591, 0.0
      %v624 = vmax.f32 %v592, 0.0
      %v625 = vmax.f32 %v593, 0.0
      %v626 = vmax.f32 %v594, 0.0
      %v627 = vmax.f32 %v595, 0.0
      %v628 = vmax.f32 %v596, 0.0
      %v629 = vmax.f32 %v597, 0.0
      %v630 = vmax.f32 %v598, 0.0
      %v631 = vmax.f32 %v599, 0.0
      %v632 = vmax.f32 %v600, 0.0
      %v633 = vmax.f32 %v601, 0.0
      %v634 = vmax.f32 %v602, 0.0
      %v635 = vmax.f32 %v603, 0.0
      %v636 = vmax.f32 %v604, 0.0
      %v637 = vmax.f32 %v605, 0.0
      %v638 = vpack.c.bf16 %v607, %v606
      %v639 = vpack.c.bf16 %v609, %v608
      %v640 = vpack.c.bf16 %v611, %v610
      %v641 = vpack.c.bf16 %v613, %v612
      %v642 = vpack.c.bf16 %v615, %v614
      %v643 = vpack.c.bf16 %v617, %v616
      %v644 = vpack.c.bf16 %v619, %v618
      %v645 = vpack.c.bf16 %v621, %v620
      %v646 = vpack.c.bf16 %v623, %v622
      %v647 = vpack.c.bf16 %v625, %v624
      %v648 = vpack.c.bf16 %v627, %v626
      %v649 = vpack.c.bf16 %v629, %v628
      %v650 = vpack.c.bf16 %v631, %v630
      %v651 = vpack.c.bf16 %v633, %v632
      %v652 = vpack.c.bf16 %v635, %v634
      %v653 = vpack.c.bf16 %v637, %v636
      %vm654 = vcmask 519168
      %655 = vst.msk [vmem:[%s221] sm:$0xf] %vm654, 0
      %656 = vst.msk [vmem:[%s221 + $0x4] sm:$0xf] %vm654, 0
      %vm657 = vcmask 516096
      %658 = vst.msk [vmem:[%s221 + $0x8] sm:$0x1] %vm657, 0
      %659 = vst.msk [vmem:[%s221 + $0xc] sm:$0xf] %vm654, 0
      %660 = vst.msk [vmem:[%s221 + $0x10] sm:$0xf] %vm654, 0
      %661 = vst.msk [vmem:[%s221 + $0x14] sm:$0x1] %vm657, 0
      %662 = vst.msk [vmem:[%s221 + $0x18] sm:$0xf] %vm654, 0
      %663 = vst.msk [vmem:[%s221 + $0x1c] sm:$0xf] %vm654, 0
      %664 = vst.msk [vmem:[%s221 + $0x20] sm:$0x1] %vm657, 0
      %665 = vst.msk [vmem:[%s221 + $0x24] sm:$0xf] %vm654, 0
      %666 = vst.msk [vmem:[%s221 + $0x28] sm:$0xf] %vm654, 0
      %667 = vst.msk [vmem:[%s221 + $0x2c] sm:$0x1] %vm657, 0
      %668 = vst.msk [vmem:[%s221 + $0x30] sm:$0xf] %vm654, 0
      %669 = vst.msk [vmem:[%s221 + $0x34] sm:$0xf] %vm654, 0
      %670 = vst.msk [vmem:[%s221 + $0x38] sm:$0x1] %vm657, 0
      %671 = vst.msk [vmem:[%s221 + $0x3c] sm:$0xf] %vm654, 0
      %672 = vst.msk [vmem:[%s221 + $0x40] sm:$0xf] %vm654, 0
      %673 = vst.msk [vmem:[%s221 + $0x44] sm:$0x1] %vm657, 0
      %674 = vst.msk [vmem:[%s221 + $0x48] sm:$0xf] %vm654, 0
      %675 = vst.msk [vmem:[%s221 + $0x4c] sm:$0xf] %vm654, 0
      %676 = vst.msk [vmem:[%s221 + $0x50] sm:$0x1] %vm657, 0
      %677 = vst.msk [vmem:[%s221 + $0x54] sm:$0xf] %vm654, 0
      %678 = vst.msk [vmem:[%s221 + $0x58] sm:$0xf] %vm654, 0
      %679 = vst.msk [vmem:[%s221 + $0x5c] sm:$0x1] %vm657, 0
      %680 = vst.msk [vmem:[%s221 + $0x60] sm:$0xf] %vm654, 0
      %681 = vst.msk [vmem:[%s221 + $0x64] sm:$0xf] %vm654, 0
      %682 = vst.msk [vmem:[%s221 + $0x68] sm:$0x1] %vm657, 0
      %683 = vst.msk [vmem:[%s221 + $0x6c] sm:$0xf] %vm654, 0
      %684 = vst.msk [vmem:[%s221 + $0x70] sm:$0xf] %vm654, 0
      %685 = vst.msk [vmem:[%s221 + $0x74] sm:$0x1] %vm657, 0
      %686 = vst.msk [vmem:[%s221 + $0x78] sm:$0xf] %vm654, 0
      %687 = vst.msk [vmem:[%s221 + $0x7c] sm:$0xf] %vm654, 0
      %688 = vst.msk [vmem:[%s221 + $0x80] sm:$0x1] %vm657, 0
      %689 = vst.msk [vmem:[%s221 + $0x84] sm:$0xf] %vm654, 0
      %690 = vst.msk [vmem:[%s221 + $0x88] sm:$0xf] %vm654, 0
      %691 = vst.msk [vmem:[%s221 + $0x8c] sm:$0x1] %vm657, 0
      %692 = vst.msk [vmem:[%s221 + $0x90] sm:$0xf] %vm654, 0
      %693 = vst.msk [vmem:[%s221 + $0x94] sm:$0xf] %vm654, 0
      %694 = vst.msk [vmem:[%s221 + $0x98] sm:$0x1] %vm657, 0
      %695 = vst.msk [vmem:[%s221 + $0x9c] sm:$0xf] %vm654, 0
      %696 = vst.msk [vmem:[%s221 + $0xa0] sm:$0xf] %vm654, 0
      %697 = vst.msk [vmem:[%s221 + $0xa4] sm:$0x1] %vm657, 0
      %698 = vst.msk [vmem:[%s221 + $0xa8] sm:$0xf] %vm654, 0
      %699 = vst.msk [vmem:[%s221 + $0xac] sm:$0xf] %vm654, 0
      %700 = vst.msk [vmem:[%s221 + $0xb0] sm:$0x1] %vm657, 0
      %701 = vst.msk [vmem:[%s221 + $0xb4] sm:$0xf] %vm654, 0
      %702 = vst.msk [vmem:[%s221 + $0xb8] sm:$0xf] %vm654, 0
      %703 = vst.msk [vmem:[%s221 + $0xbc] sm:$0x1] %vm657, 0
      %704 = vst.msk [vmem:[%s221 + $0xc0] sm:$0xf] %vm654, 0
      %705 = vst.msk [vmem:[%s221 + $0xc4] sm:$0xf] %vm654, 0
      %706 = vst.msk [vmem:[%s221 + $0xc8] sm:$0x1] %vm657, 0
      %707 = vst.msk [vmem:[%s221 + $0xcc] sm:$0xf] %vm654, 0
      %708 = vst.msk [vmem:[%s221 + $0xd0] sm:$0xf] %vm654, 0
      %709 = vst.msk [vmem:[%s221 + $0xd4] sm:$0x1] %vm657, 0
      %v726 = vunpack.c.l.b16 %v638
      %v727 = vunpack.c.h.b16 %v638
      %v728 = vunpack.c.l.b16 %v639
      %v729 = vunpack.c.h.b16 %v639
      %v730 = vunpack.c.l.b16 %v640
      %v731 = vunpack.c.h.b16 %v640
      %v732 = vunpack.c.l.b16 %v641
      %v733 = vunpack.c.h.b16 %v641
      %v734 = vunpack.c.l.b16 %v642
      %v735 = vunpack.c.h.b16 %v642
      %v736 = vunpack.c.l.b16 %v643
      %v737 = vunpack.c.h.b16 %v643
      %v738 = vunpack.c.l.b16 %v644
      %v739 = vunpack.c.h.b16 %v644
      %v740 = vunpack.c.l.b16 %v645
      %v741 = vunpack.c.h.b16 %v645
      %v742 = vunpack.c.l.b16 %v646
      %v743 = vunpack.c.h.b16 %v646
      %v744 = vunpack.c.l.b16 %v647
      %v745 = vunpack.c.h.b16 %v647
      %v746 = vunpack.c.l.b16 %v648
      %v747 = vunpack.c.h.b16 %v648
      %v748 = vunpack.c.l.b16 %v649
      %v749 = vunpack.c.h.b16 %v649
      %v750 = vunpack.c.l.b16 %v650
      %v751 = vunpack.c.h.b16 %v650
      %v752 = vunpack.c.l.b16 %v651
      %v753 = vunpack.c.h.b16 %v651
      %v754 = vunpack.c.l.b16 %v652
      %v755 = vunpack.c.h.b16 %v652
      %v756 = vunpack.c.l.b16 %v653
      %v757 = vunpack.c.h.b16 %v653
      %v758 = vpack.c.b16 %v726, %v726
      %v759 = vpack.c.b16 %v727, %v727
      %v760 = vpack.c.b16 %v728, %v728
      %v761 = vpack.c.b16 %v729, %v729
      %v762 = vpack.c.b16 %v730, %v730
      %v763 = vpack.c.b16 %v731, %v731
      %v764 = vpack.c.b16 %v732, %v732
      %v765 = vpack.c.b16 %v733, %v733
      %v766 = vpack.c.b16 %v734, %v734
      %v767 = vpack.c.b16 %v735, %v735
      %v768 = vpack.c.b16 %v736, %v736
      %v769 = vpack.c.b16 %v737, %v737
      %v770 = vpack.c.b16 %v738, %v738
      %v771 = vpack.c.b16 %v739, %v739
      %v772 = vpack.c.b16 %v740, %v740
      %v773 = vpack.c.b16 %v741, %v741
      %v774 = vpack.c.b16 %v742, %v742
      %v775 = vpack.c.b16 %v743, %v743
      %v776 = vpack.c.b16 %v744, %v744
      %v777 = vpack.c.b16 %v745, %v745
      %v778 = vpack.c.b16 %v746, %v746
      %v779 = vpack.c.b16 %v747, %v747
      %v780 = vpack.c.b16 %v748, %v748
      %v781 = vpack.c.b16 %v749, %v749
      %v782 = vpack.c.b16 %v750, %v750
      %v783 = vpack.c.b16 %v751, %v751
      %v784 = vpack.c.b16 %v752, %v752
      %v785 = vpack.c.b16 %v753, %v753
      %v786 = vpack.c.b16 %v754, %v754
      %v787 = vpack.c.b16 %v755, %v755
      %v788 = vpack.c.b16 %v756, %v756
      %v789 = vpack.c.b16 %v757, %v757
      %vm790 = vsmask.f32 256
      %vm791 = vsmask.f32 4368
      %vm792 = vmor %vm790, %vm791
      %v794 = vshrl.u32 %v758, 16
      %v796 = vrot.slane %v794, 7
      %v797 = vshll.u32 %v758, 16
      %v799 = vor.u32 %v796, %v797
      %v800 = vrot.slane %v796, 4
      %v802 = vshrl.u32 %v759, 16
      %v804 = vrot.slane %v802, 7
      %v805 = vshll.u32 %v759, 16
      %v807 = vor.u32 %v804, %v805
      %v808 = vsel %vm792, %v800, %v807
      %v809 = vrot.slane %v804, 4
      %v811 = vshrl.u32 %v760, 16
      %v813 = vrot.slane %v811, 7
      %v814 = vshll.u32 %v760, 16
      %v816 = vor.u32 %v813, %v814
      %v817 = vrot.slane %v813, 4
      %v819 = vshrl.u32 %v761, 16
      %v821 = vrot.slane %v819, 7
      %v822 = vshll.u32 %v761, 16
      %v824 = vor.u32 %v821, %v822
      %v825 = vsel %vm792, %v817, %v824
      %v826 = vrot.slane %v821, 4
      %v828 = vshrl.u32 %v762, 16
      %v830 = vrot.slane %v828, 7
      %v831 = vshll.u32 %v762, 16
      %v833 = vor.u32 %v830, %v831
      %v834 = vrot.slane %v830, 4
      %v836 = vshrl.u32 %v763, 16
      %v838 = vrot.slane %v836, 7
      %v839 = vshll.u32 %v763, 16
      %v841 = vor.u32 %v838, %v839
      %v842 = vsel %vm792, %v834, %v841
      %v843 = vrot.slane %v838, 4
      %v845 = vshrl.u32 %v764, 16
      %v847 = vrot.slane %v845, 7
      %v848 = vshll.u32 %v764, 16
      %v850 = vor.u32 %v847, %v848
      %v851 = vrot.slane %v847, 4
      %v853 = vshrl.u32 %v765, 16
      %v855 = vrot.slane %v853, 7
      %v856 = vshll.u32 %v765, 16
      %v858 = vor.u32 %v855, %v856
      %v859 = vsel %vm792, %v851, %v858
      %v860 = vrot.slane %v855, 4
      %v862 = vshrl.u32 %v766, 16
      %v864 = vrot.slane %v862, 7
      %v865 = vshll.u32 %v766, 16
      %v867 = vor.u32 %v864, %v865
      %v868 = vrot.slane %v864, 4
      %v870 = vshrl.u32 %v767, 16
      %v872 = vrot.slane %v870, 7
      %v873 = vshll.u32 %v767, 16
      %v875 = vor.u32 %v872, %v873
      %v876 = vsel %vm792, %v868, %v875
      %v877 = vrot.slane %v872, 4
      %v879 = vshrl.u32 %v768, 16
      %v881 = vrot.slane %v879, 7
      %v882 = vshll.u32 %v768, 16
      %v884 = vor.u32 %v881, %v882
      %v885 = vrot.slane %v881, 4
      %v887 = vshrl.u32 %v769, 16
      %v889 = vrot.slane %v887, 7
      %v890 = vshll.u32 %v769, 16
      %v892 = vor.u32 %v889, %v890
      %v893 = vsel %vm792, %v885, %v892
      %v894 = vrot.slane %v889, 4
      %v896 = vshrl.u32 %v770, 16
      %v898 = vrot.slane %v896, 7
      %v899 = vshll.u32 %v770, 16
      %v901 = vor.u32 %v898, %v899
      %v902 = vrot.slane %v898, 4
      %v904 = vshrl.u32 %v771, 16
      %v906 = vrot.slane %v904, 7
      %v907 = vshll.u32 %v771, 16
      %v909 = vor.u32 %v906, %v907
      %v910 = vsel %vm792, %v902, %v909
      %v911 = vrot.slane %v906, 4
      %v913 = vshrl.u32 %v772, 16
      %v915 = vrot.slane %v913, 7
      %v916 = vshll.u32 %v772, 16
      %v918 = vor.u32 %v915, %v916
      %v919 = vrot.slane %v915, 4
      %v921 = vshrl.u32 %v773, 16
      %v923 = vrot.slane %v921, 7
      %v924 = vshll.u32 %v773, 16
      %v926 = vor.u32 %v923, %v924
      %v927 = vsel %vm792, %v919, %v926
      %v928 = vrot.slane %v923, 4
      %v930 = vshrl.u32 %v774, 16
      %v932 = vrot.slane %v930, 7
      %v933 = vshll.u32 %v774, 16
      %v935 = vor.u32 %v932, %v933
      %v936 = vrot.slane %v932, 4
      %v938 = vshrl.u32 %v775, 16
      %v940 = vrot.slane %v938, 7
      %v941 = vshll.u32 %v775, 16
      %v943 = vor.u32 %v940, %v941
      %v944 = vsel %vm792, %v936, %v943
      %v945 = vrot.slane %v940, 4
      %v947 = vshrl.u32 %v776, 16
      %v949 = vrot.slane %v947, 7
      %v950 = vshll.u32 %v776, 16
      %v952 = vor.u32 %v949, %v950
      %v953 = vrot.slane %v949, 4
      %v955 = vshrl.u32 %v777, 16
      %v957 = vrot.slane %v955, 7
      %v958 = vshll.u32 %v777, 16
      %v960 = vor.u32 %v957, %v958
      %v961 = vsel %vm792, %v953, %v960
      %v962 = vrot.slane %v957, 4
      %v964 = vshrl.u32 %v778, 16
      %v966 = vrot.slane %v964, 7
      %v967 = vshll.u32 %v778, 16
      %v969 = vor.u32 %v966, %v967
      %v970 = vrot.slane %v966, 4
      %v972 = vshrl.u32 %v779, 16
      %v974 = vrot.slane %v972, 7
      %v975 = vshll.u32 %v779, 16
      %v977 = vor.u32 %v974, %v975
      %v978 = vsel %vm792, %v970, %v977
      %v979 = vrot.slane %v974, 4
      %v981 = vshrl.u32 %v780, 16
      %v983 = vrot.slane %v981, 7
      %v984 = vshll.u32 %v780, 16
      %v986 = vor.u32 %v983, %v984
      %v987 = vrot.slane %v983, 4
      %v989 = vshrl.u32 %v781, 16
      %v991 = vrot.slane %v989, 7
      %v992 = vshll.u32 %v781, 16
      %v994 = vor.u32 %v991, %v992
      %v995 = vsel %vm792, %v987, %v994
      %v996 = vrot.slane %v991, 4
      %v998 = vshrl.u32 %v782, 16
      %v1000 = vrot.slane %v998, 7
      %v1001 = vshll.u32 %v782, 16
      %v1003 = vor.u32 %v1000, %v1001
      %v1004 = vrot.slane %v1000, 4
      %v1006 = vshrl.u32 %v783, 16
      %v1008 = vrot.slane %v1006, 7
      %v1009 = vshll.u32 %v783, 16
      %v1011 = vor.u32 %v1008, %v1009
      %v1012 = vsel %vm792, %v1004, %v1011
      %v1013 = vrot.slane %v1008, 4
      %v1015 = vshrl.u32 %v784, 16
      %v1017 = vrot.slane %v1015, 7
      %v1018 = vshll.u32 %v784, 16
      %v1020 = vor.u32 %v1017, %v1018
      %v1021 = vrot.slane %v1017, 4
      %v1023 = vshrl.u32 %v785, 16
      %v1025 = vrot.slane %v1023, 7
      %v1026 = vshll.u32 %v785, 16
      %v1028 = vor.u32 %v1025, %v1026
      %v1029 = vsel %vm792, %v1021, %v1028
      %v1030 = vrot.slane %v1025, 4
      %v1032 = vshrl.u32 %v786, 16
      %v1034 = vrot.slane %v1032, 7
      %v1035 = vshll.u32 %v786, 16
      %v1037 = vor.u32 %v1034, %v1035
      %v1038 = vrot.slane %v1034, 4
      %v1040 = vshrl.u32 %v787, 16
      %v1042 = vrot.slane %v1040, 7
      %v1043 = vshll.u32 %v787, 16
      %v1045 = vor.u32 %v1042, %v1043
      %v1046 = vsel %vm792, %v1038, %v1045
      %v1047 = vrot.slane %v1042, 4
      %v1049 = vshrl.u32 %v788, 16
      %v1051 = vrot.slane %v1049, 7
      %v1052 = vshll.u32 %v788, 16
      %v1054 = vor.u32 %v1051, %v1052
      %v1055 = vrot.slane %v1051, 4
      %v1057 = vshrl.u32 %v789, 16
      %v1059 = vrot.slane %v1057, 7
      %v1060 = vshll.u32 %v789, 16
      %v1062 = vor.u32 %v1059, %v1060
      %v1063 = vsel %vm792, %v1055, %v1062
      %v1064 = vrot.slane %v1059, 4
      %s1113 = scalar_lea.vmem %s221, 12
      %vm1114 = vcmask 519168
      %vm1115 = vsmask.f32 7938
      %vm1116 = vmand %vm1114, %vm1115
      %v1117 = vld [vmem:[%s1113] sm:$0xf]
      %v1118 = vsel %vm1116, %v799, %v1117
      %1119 = vst [vmem:[%s1113] sm:$0xf] %v1118
      %1120 = vst.msk [vmem:[%s1113 + $0x4] sm:$0xf] %vm654, %v808
      %vm1121 = vcmask 516096
      %vm1122 = vmand %vm1121, %vm790
      %v1123 = vld [vmem:[%s1113 + $0x8] sm:$0x1]
      %v1124 = vsel %vm1122, %v809, %v1123
      %1125 = vst [vmem:[%s1113 + $0x8] sm:$0x1] %v1124
      %v1126 = vld [vmem:[%s1113 + $0xc] sm:$0xf]
      %v1127 = vsel %vm1116, %v816, %v1126
      %1128 = vst [vmem:[%s1113 + $0xc] sm:$0xf] %v1127
      %1129 = vst.msk [vmem:[%s1113 + $0x10] sm:$0xf] %vm654, %v825
      %v1130 = vld [vmem:[%s1113 + $0x14] sm:$0x1]
      %v1131 = vsel %vm1122, %v826, %v1130
      %1132 = vst [vmem:[%s1113 + $0x14] sm:$0x1] %v1131
      %v1133 = vld [vmem:[%s1113 + $0x18] sm:$0xf]
      %v1134 = vsel %vm1116, %v833, %v1133
      %1135 = vst [vmem:[%s1113 + $0x18] sm:$0xf] %v1134
      %1136 = vst.msk [vmem:[%s1113 + $0x1c] sm:$0xf] %vm654, %v842
      %v1137 = vld [vmem:[%s1113 + $0x20] sm:$0x1]
      %v1138 = vsel %vm1122, %v843, %v1137
      %1139 = vst [vmem:[%s1113 + $0x20] sm:$0x1] %v1138
      %v1140 = vld [vmem:[%s1113 + $0x24] sm:$0xf]
      %v1141 = vsel %vm1116, %v850, %v1140
      %1142 = vst [vmem:[%s1113 + $0x24] sm:$0xf] %v1141
      %1143 = vst.msk [vmem:[%s1113 + $0x28] sm:$0xf] %vm654, %v859
      %v1144 = vld [vmem:[%s1113 + $0x2c] sm:$0x1]
      %v1145 = vsel %vm1122, %v860, %v1144
      %1146 = vst [vmem:[%s1113 + $0x2c] sm:$0x1] %v1145
      %v1147 = vld [vmem:[%s1113 + $0x30] sm:$0xf]
      %v1148 = vsel %vm1116, %v867, %v1147
      %1149 = vst [vmem:[%s1113 + $0x30] sm:$0xf] %v1148
      %1150 = vst.msk [vmem:[%s1113 + $0x34] sm:$0xf] %vm654, %v876
      %v1151 = vld [vmem:[%s1113 + $0x38] sm:$0x1]
      %v1152 = vsel %vm1122, %v877, %v1151
      %1153 = vst [vmem:[%s1113 + $0x38] sm:$0x1] %v1152
      %v1154 = vld [vmem:[%s1113 + $0x3c] sm:$0xf]
      %v1155 = vsel %vm1116, %v884, %v1154
      %1156 = vst [vmem:[%s1113 + $0x3c] sm:$0xf] %v1155
      %1157 = vst.msk [vmem:[%s1113 + $0x40] sm:$0xf] %vm654, %v893
      %v1158 = vld [vmem:[%s1113 + $0x44] sm:$0x1]
      %v1159 = vsel %vm1122, %v894, %v1158
      %1160 = vst [vmem:[%s1113 + $0x44] sm:$0x1] %v1159
      %v1161 = vld [vmem:[%s1113 + $0x48] sm:$0xf]
      %v1162 = vsel %vm1116, %v901, %v1161
      %1163 = vst [vmem:[%s1113 + $0x48] sm:$0xf] %v1162
      %1164 = vst.msk [vmem:[%s1113 + $0x4c] sm:$0xf] %vm654, %v910
      %v1165 = vld [vmem:[%s1113 + $0x50] sm:$0x1]
      %v1166 = vsel %vm1122, %v911, %v1165
      %1167 = vst [vmem:[%s1113 + $0x50] sm:$0x1] %v1166
      %v1168 = vld [vmem:[%s1113 + $0x54] sm:$0xf]
      %v1169 = vsel %vm1116, %v918, %v1168
      %1170 = vst [vmem:[%s1113 + $0x54] sm:$0xf] %v1169
      %1171 = vst.msk [vmem:[%s1113 + $0x58] sm:$0xf] %vm654, %v927
      %v1172 = vld [vmem:[%s1113 + $0x5c] sm:$0x1]
      %v1173 = vsel %vm1122, %v928, %v1172
      %1174 = vst [vmem:[%s1113 + $0x5c] sm:$0x1] %v1173
      %v1175 = vld [vmem:[%s1113 + $0x60] sm:$0xf]
      %v1176 = vsel %vm1116, %v935, %v1175
      %1177 = vst [vmem:[%s1113 + $0x60] sm:$0xf] %v1176
      %1178 = vst.msk [vmem:[%s1113 + $0x64] sm:$0xf] %vm654, %v944
      %v1179 = vld [vmem:[%s1113 + $0x68] sm:$0x1]
      %v1180 = vsel %vm1122, %v945, %v1179
      %1181 = vst [vmem:[%s1113 + $0x68] sm:$0x1] %v1180
      %v1182 = vld [vmem:[%s1113 + $0x6c] sm:$0xf]
      %v1183 = vsel %vm1116, %v952, %v1182
      %1184 = vst [vmem:[%s1113 + $0x6c] sm:$0xf] %v1183
      %1185 = vst.msk [vmem:[%s1113 + $0x70] sm:$0xf] %vm654, %v961
      %v1186 = vld [vmem:[%s1113 + $0x74] sm:$0x1]
      %v1187 = vsel %vm1122, %v962, %v1186
      %1188 = vst [vmem:[%s1113 + $0x74] sm:$0x1] %v1187
      %v1189 = vld [vmem:[%s1113 + $0x78] sm:$0xf]
      %v1190 = vsel %vm1116, %v969, %v1189
      %1191 = vst [vmem:[%s1113 + $0x78] sm:$0xf] %v1190
      %1192 = vst.msk [vmem:[%s1113 + $0x7c] sm:$0xf] %vm654, %v978
      %v1193 = vld [vmem:[%s1113 + $0x80] sm:$0x1]
      %v1194 = vsel %vm1122, %v979, %v1193
      %1195 = vst [vmem:[%s1113 + $0x80] sm:$0x1] %v1194
      %v1196 = vld [vmem:[%s1113 + $0x84] sm:$0xf]
      %v1197 = vsel %vm1116, %v986, %v1196
      %1198 = vst [vmem:[%s1113 + $0x84] sm:$0xf] %v1197
      %1199 = vst.msk [vmem:[%s1113 + $0x88] sm:$0xf] %vm654, %v995
      %v1200 = vld [vmem:[%s1113 + $0x8c] sm:$0x1]
      %v1201 = vsel %vm1122, %v996, %v1200
      %1202 = vst [vmem:[%s1113 + $0x8c] sm:$0x1] %v1201
      %v1203 = vld [vmem:[%s1113 + $0x90] sm:$0xf]
      %v1204 = vsel %vm1116, %v1003, %v1203
      %1205 = vst [vmem:[%s1113 + $0x90] sm:$0xf] %v1204
      %1206 = vst.msk [vmem:[%s1113 + $0x94] sm:$0xf] %vm654, %v1012
      %v1207 = vld [vmem:[%s1113 + $0x98] sm:$0x1]
      %v1208 = vsel %vm1122, %v1013, %v1207
      %1209 = vst [vmem:[%s1113 + $0x98] sm:$0x1] %v1208
      %v1210 = vld [vmem:[%s1113 + $0x9c] sm:$0xf]
      %v1211 = vsel %vm1116, %v1020, %v1210
      %1212 = vst [vmem:[%s1113 + $0x9c] sm:$0xf] %v1211
      %1213 = vst.msk [vmem:[%s1113 + $0xa0] sm:$0xf] %vm654, %v1029
      %v1214 = vld [vmem:[%s1113 + $0xa4] sm:$0x1]
      %v1215 = vsel %vm1122, %v1030, %v1214
      %1216 = vst [vmem:[%s1113 + $0xa4] sm:$0x1] %v1215
      %v1217 = vld [vmem:[%s1113 + $0xa8] sm:$0xf]
      %v1218 = vsel %vm1116, %v1037, %v1217
      %1219 = vst [vmem:[%s1113 + $0xa8] sm:$0xf] %v1218
      %1220 = vst.msk [vmem:[%s1113 + $0xac] sm:$0xf] %vm654, %v1046
      %v1221 = vld [vmem:[%s1113 + $0xb0] sm:$0x1]
      %v1222 = vsel %vm1122, %v1047, %v1221
      %1223 = vst [vmem:[%s1113 + $0xb0] sm:$0x1] %v1222
      %v1224 = vld [vmem:[%s1113 + $0xb4] sm:$0xf]
      %v1225 = vsel %vm1116, %v1054, %v1224
      %1226 = vst [vmem:[%s1113 + $0xb4] sm:$0xf] %v1225
      %1227 = vst.msk [vmem:[%s1113 + $0xb8] sm:$0xf] %vm654, %v1063
      %v1228 = vld [vmem:[%s1113 + $0xbc] sm:$0x1]
      %v1229 = vsel %vm1122, %v1064, %v1228
      %1230 = vst [vmem:[%s1113 + $0xbc] sm:$0x1] %v1229
      %p1231 = scmp.lt.s32.totalorder %s19, 1
      %s1232 = scalar_select %p1231, %s19, 1
      %p1233 = scmp.lt.s32.totalorder %s18, 0
      %s1234 = scalar_select %p1233, %s18, 0
      %s1235 = smul.addr %s1232, 54
      %s1236 = sadd.s32 %s1234, %s1235
      %s1237 = smul.addr %s1236, 4
      %s1238 = scalar_lea.vmem %s3, %s1237
      // Predicated region
      $region33: #{truncated_vgg19_apply.4} parent=31 // pred_check
        %p1239 = pneg %p124
      $region34: #{truncated_vgg19_apply.4} parent=31 // pred_check_branch
        %1241 = sbr.rel (%p1239) target = $region36
      $region35: #{truncated_vgg19_apply.4} parent=31 // pred_region
        _
      $region36: #{truncated_vgg19_apply.4} parent=31 // pred_fallthru
        _
    $region32: #{truncated_vgg19_apply.4} parent=5 // pred_fallthru
      _
    %p1242 = scmp.le.s32.totalorder 2, %s9
    // Predicated region
    $region37: #{truncated_vgg19_apply.4} parent=5 // pred_check
      %p1243 = pneg %p1242
    $region38: #{truncated_vgg19_apply.4} parent=5 // pred_check_branch
      %1245 = sbr.rel (%p1243) target = $region40
    $region39: #{truncated_vgg19_apply.4} parent=5 // pred_region
      %s1246 = ssub.s32 %s9, 2
      // Predicated region
      $region41: #{truncated_vgg19_apply.4} parent=39 // pred_check
        %p1247 = pneg %p130
      $region42: #{truncated_vgg19_apply.4} parent=39 // pred_check_branch
        %1249 = sbr.rel (%p1247) target = $region44
      $region43: #{truncated_vgg19_apply.4} parent=39 // pred_region
        %p1250 = scmp.lt.s32.totalorder %s21, 1
        %s1251 = scalar_select %p1250, %s21, 1
        %p1252 = scmp.lt.s32.totalorder %s20, 0
        %s1253 = scalar_select %p1252, %s20, 0
        %s1254 = smul.addr %s1251, 54
        %s1255 = sadd.s32 %s1253, %s1254
        %s1256 = smul.addr %s1255, 4
        %s1257 = scalar_lea.vmem %s3, %s1256
      $region44: #{truncated_vgg19_apply.4} parent=39 // pred_fallthru
        _
    $region40: #{truncated_vgg19_apply.4} parent=5 // pred_fallthru
      _
  $region6: #{truncated_vgg19_apply.4} parent=0 // loop_footer
    %s13 = sadd.s32 1, %s9
  $region7: #{truncated_vgg19_apply.4} parent=0 // loop_footer_branch
    %8 = sbr.rel target = $region3
  $region8: #{truncated_vgg19_apply.4} parent=0 // loop_exit
    _

// kernel: truncated_vgg19_apply.6
$region0: #{truncated_vgg19_apply.6}
  #allocation0 [shape = 'u32[]', space=smem, size = 0x4, offset = 0x4, fixed_abs, tag = 'smem constant byte address 0x4 - core index']
  #allocation1 [shape = 'u32[144,128]{1,0:T(1,128)}', space=vmem, size = 0x12000, scoped, tag = 'internal scratch']
  #allocation2 [shape = 'bf16[8,8,192]{2,1,0:T(8,128)(2,1)}', space=vmem, size = 0x8000, scoped, tag = 'scratch operand']
  %s0 = inlined_call_operand.vmem [shape: bf16[2,10,10,64], index: 0, kind: input, shape index: {}]
  %s1 = inlined_call_operand.vmem [shape: bf16[3,192,128], index: 1, kind: input, shape index: {}]
  %s2 = inlined_call_operand.vmem [shape: f32[1,128], index: 2, kind: input, shape index: {}]
  %s3 = inlined_call_operand.vmem [shape: bf16[2,10,10,128], index: 3, kind: output, shape index: {}]
  %s4 = sld [smem:[#allocation0]]
  $region45: #{truncated_vgg19_apply.6} parent=0
    _
  %s6 = ssub.s32 1, %s4
  %s7 = scalar_select 0, %s6, %s4
  loop: start=0, step=1, limit=4
  $region2: #{truncated_vgg19_apply.6} parent=0 // loop_pre_header
    _
  $region3: #{truncated_vgg19_apply.6} parent=0 // loop_header
    %s9 = sphi 0, %s13
    %p10 = scmp.ge.s32.totalorder %s9, 4
    %s16 = sphi 0, %s28
    %s17 = sphi 0, %s24
    %s18 = sphi 0, %s16
    %s19 = sphi 0, %s17
    %s20 = sphi 0, %s18
    %s21 = sphi 0, %s19
    %s31 = sphi 0, %s33
    %s34 = sphi 0, %s31
    %s35 = sphi 0, %s34
    %s51 = sphi 0, %s35
    %s57 = sphi 0, %s59
    %s60 = sphi 0, %s57
    %s61 = sphi 0, %s60
    %s77 = sphi 0, %s61
    %s83 = sphi 0, %s85
    %s86 = sphi 0, %s83
    %s87 = sphi 0, %s86
    %s103 = sphi 0, %s87
    %s111 = sphi 0, %s113
    %s114 = sphi 0, %s111
    %s115 = sphi 0, %s114
    %s131 = sphi 0, %s115
  $region4: #{truncated_vgg19_apply.6} parent=0 // loop_header_branch
    %12 = sbr.rel (%p10) target = $region8
  $region5: #{truncated_vgg19_apply.6} parent=0 // loop_body
    %s14 = ssub.s32 %s9, 1
    %s15 = ssub.s32 %s9, 2
    %s22 = sadd.s32 1, %s17
    %p23 = scmp.ge.s32.totalorder %s22, 2
    %s24 = scalar_select %p23, 0, %s22
    %s25 = sadd.s32 1, %s16
    %s26 = scalar_select %p23, %s25, %s16
    %p27 = scmp.ge.s32.totalorder %s26, 1
    %s28 = scalar_select %p27, 0, %s26
    %s29 = ssub.s32 %s17, %s24
    %p30 = scmp.eq.s32.totalorder %s29, 0
    %s32 = sadd.s32 %s31, 1
    %s33 = scalar_select %p30, %s31, %s32
    %p36 = pneg %p30
    %p37 = scmp.eq.s32.totalorder %s9, 1
    %p38 = por %p36, %p37
    %p39 = scmp.ne.s32.totalorder %s31, %s34
    %p40 = scmp.eq.s32.totalorder %s9, 0
    %p41 = por %p39, %p40
    %p42 = scmp.ne.s32.totalorder %s31, %s34
    %p43 = scmp.eq.s32.totalorder %s14, 1
    %p44 = por %p42, %p43
    %p45 = scmp.ne.s32.totalorder %s34, %s35
    %p46 = scmp.eq.s32.totalorder %s14, 0
    %p47 = por %p45, %p46
    %p48 = scmp.ne.s32.totalorder %s34, %s35
    %p49 = scmp.eq.s32.totalorder %s15, 1
    %p50 = por %p48, %p49
    %p52 = scmp.ne.s32.totalorder %s35, %s51
    %p53 = scmp.eq.s32.totalorder %s15, 0
    %p54 = por %p52, %p53
    %s55 = ssub.s32 %s16, %s28
    %p56 = scmp.eq.s32.totalorder %s55, 0
    %s58 = sadd.s32 %s57, 1
    %s59 = scalar_select %p56, %s57, %s58
    %p62 = pneg %p56
    %p63 = scmp.eq.s32.totalorder %s9, 1
    %p64 = por %p62, %p63
    %p65 = scmp.ne.s32.totalorder %s57, %s60
    %p66 = scmp.eq.s32.totalorder %s9, 0
    %p67 = por %p65, %p66
    %p68 = scmp.ne.s32.totalorder %s57, %s60
    %p69 = scmp.eq.s32.totalorder %s14, 1
    %p70 = por %p68, %p69
    %p71 = scmp.ne.s32.totalorder %s60, %s61
    %p72 = scmp.eq.s32.totalorder %s14, 0
    %p73 = por %p71, %p72
    %p74 = scmp.ne.s32.totalorder %s60, %s61
    %p75 = scmp.eq.s32.totalorder %s15, 1
    %p76 = por %p74, %p75
    %p78 = scmp.ne.s32.totalorder %s61, %s77
    %p79 = scmp.eq.s32.totalorder %s15, 0
    %p80 = por %p78, %p79
    %s81 = ssub.s32 %s16, %s28
    %p82 = scmp.eq.s32.totalorder %s81, 0
    %s84 = sadd.s32 %s83, 1
    %s85 = scalar_select %p82, %s83, %s84
    %p88 = pneg %p82
    %p89 = scmp.eq.s32.totalorder %s9, 1
    %p90 = por %p88, %p89
    %p91 = scmp.ne.s32.totalorder %s83, %s86
    %p92 = scmp.eq.s32.totalorder %s9, 0
    %p93 = por %p91, %p92
    %p94 = scmp.ne.s32.totalorder %s83, %s86
    %p95 = scmp.eq.s32.totalorder %s14, 1
    %p96 = por %p94, %p95
    %p97 = scmp.ne.s32.totalorder %s86, %s87
    %p98 = scmp.eq.s32.totalorder %s14, 0
    %p99 = por %p97, %p98
    %p100 = scmp.ne.s32.totalorder %s86, %s87
    %p101 = scmp.eq.s32.totalorder %s15, 1
    %p102 = por %p100, %p101
    %p104 = scmp.ne.s32.totalorder %s87, %s103
    %p105 = scmp.eq.s32.totalorder %s15, 0
    %p106 = por %p104, %p105
    %s107 = ssub.s32 %s17, %s24
    %s108 = ssub.s32 %s16, %s28
    %s109 = sor.u32 %s107, %s108
    %p110 = scmp.eq.s32.totalorder %s109, 0
    %s112 = sadd.s32 %s111, 1
    %s113 = scalar_select %p110, %s111, %s112
    %p116 = pneg %p110
    %p117 = scmp.eq.s32.totalorder %s9, 1
    %p118 = por %p116, %p117
    %p119 = scmp.ne.s32.totalorder %s111, %s114
    %p120 = scmp.eq.s32.totalorder %s9, 0
    %p121 = por %p119, %p120
    %p122 = scmp.ne.s32.totalorder %s111, %s114
    %p123 = scmp.eq.s32.totalorder %s14, 1
    %p124 = por %p122, %p123
    %p125 = scmp.ne.s32.totalorder %s114, %s115
    %p126 = scmp.eq.s32.totalorder %s14, 0
    %p127 = por %p125, %p126
    %p128 = scmp.ne.s32.totalorder %s114, %s115
    %p129 = scmp.eq.s32.totalorder %s15, 1
    %p130 = por %p128, %p129
    %p132 = scmp.ne.s32.totalorder %s115, %s131
    %p133 = scmp.eq.s32.totalorder %s15, 0
    %p134 = por %p132, %p133
    %p135 = scmp.le.s32.totalorder 1, %s9
    %p136 = scmp.lt.s32.totalorder %s9, 3
    %p137 = pnand %p135, %p136
    %p138 = pneg %p137
    // Predicated region
    $region9: #{truncated_vgg19_apply.6} parent=5 // pred_check
      _
    $region10: #{truncated_vgg19_apply.6} parent=5 // pred_check_branch
      %140 = sbr.rel (%p137) target = $region12
    $region11: #{truncated_vgg19_apply.6} parent=5 // pred_region
      %s141 = ssub.s32 %s9, 1
      // Predicated region
      $region13: #{truncated_vgg19_apply.6} parent=11 // pred_check
        %p142 = pneg %p73
      $region14: #{truncated_vgg19_apply.6} parent=11 // pred_check_branch
        %144 = sbr.rel (%p142) target = $region16
      $region15: #{truncated_vgg19_apply.6} parent=11 // pred_region
        %p145 = scmp.lt.s32.totalorder %s18, 0
        %s146 = scalar_select %p145, %s18, 0
        %s147 = smul.addr %s146, 4
        %s148 = scalar_lea.vmem %s1, %s147
      $region16: #{truncated_vgg19_apply.6} parent=11 // pred_fallthru
        _
      // Predicated region
      $region17: #{truncated_vgg19_apply.6} parent=11 // pred_check
        %p149 = pneg %p99
      $region18: #{truncated_vgg19_apply.6} parent=11 // pred_check_branch
        %151 = sbr.rel (%p149) target = $region20
      $region19: #{truncated_vgg19_apply.6} parent=11 // pred_region
        %p152 = scmp.lt.s32.totalorder %s18, 0
        %s153 = scalar_select %p152, %s18, 0
        %s154 = scalar_lea.vmem %s2, %s153
      $region20: #{truncated_vgg19_apply.6} parent=11 // pred_fallthru
        _
    $region12: #{truncated_vgg19_apply.6} parent=5 // pred_fallthru
      _
    %p155 = scmp.lt.s32.totalorder %s9, 2
    // Predicated region
    $region21: #{truncated_vgg19_apply.6} parent=5 // pred_check
      %p156 = pneg %p155
    $region22: #{truncated_vgg19_apply.6} parent=5 // pred_check_branch
      %158 = sbr.rel (%p156) target = $region24
    $region23: #{truncated_vgg19_apply.6} parent=5 // pred_region
      // Predicated region
      $region25: #{truncated_vgg19_apply.6} parent=23 // pred_check
        %p159 = pneg %p41
      $region26: #{truncated_vgg19_apply.6} parent=23 // pred_check_branch
        %161 = sbr.rel (%p159) target = $region28
      $region27: #{truncated_vgg19_apply.6} parent=23 // pred_region
        %p162 = scmp.lt.s32.totalorder %s17, 1
        %s163 = scalar_select %p162, %s17, 1
        %s164 = smul.addr %s163, 20
        %s165 = smul.addr %s164, 4
        %s166 = scalar_lea.vmem %s0, %s165
      $region28: #{truncated_vgg19_apply.6} parent=23 // pred_fallthru
        _
    $region24: #{truncated_vgg19_apply.6} parent=5 // pred_fallthru
      _
    %p167 = scmp.le.s32.totalorder 1, %s9
    %p168 = scmp.lt.s32.totalorder %s9, 3
    %p169 = pnand %p167, %p168
    %p170 = pneg %p169
    // Predicated region
    $region29: #{truncated_vgg19_apply.6} parent=5 // pred_check
      _
    $region30: #{truncated_vgg19_apply.6} parent=5 // pred_check_branch
      %172 = sbr.rel (%p169) target = $region32
    $region31: #{truncated_vgg19_apply.6} parent=5 // pred_region
      %s173 = ssub.s32 %s9, 1
      %p174 = scmp.lt.s32.totalorder %s19, 1
      %s175 = scalar_select %p174, %s19, 1
      %s176 = smul.addr %s175, 20
      %s177 = smul.addr %s176, 4
      %s178 = scalar_lea.vmem %s0, %s177
      %p179 = pneg %p47
      %p180 = pneg %p44
      %p181 = scmp.lt.s32.totalorder %s18, 0
      %s182 = scalar_select %p181, %s18, 0
      %s183 = smul.addr %s182, 4
      %s184 = scalar_lea.vmem %s1, %s183
      %p185 = pneg %p73
      %p186 = pneg %p70
      %p187 = scmp.lt.s32.totalorder %s18, 0
      %s188 = scalar_select %p187, %s18, 0
      %s189 = scalar_lea.vmem %s2, %s188
      %p190 = pneg %p99
      %p191 = pneg %p96
      %p192 = pneg %p127
      %p193 = pneg %p124
      %p194 = scmp.lt.s32.totalorder %s19, 1
      %s195 = scalar_select %p194, %s19, 1
      %p196 = scmp.lt.s32.totalorder %s18, 0
      %s197 = scalar_select %p196, %s18, 0
      %s198 = smul.addr %s195, 20
      %s199 = sadd.s32 %s197, %s198
      %s200 = smul.addr %s199, 4
      %s201 = scalar_lea.vmem %s3, %s200
      %p202 = scmp.lt.s32.totalorder %s19, 1
      %s203 = scalar_select %p202, %s19, 1
      %s204 = smul.addr %s203, 20
      %s205 = smul.addr %s204, 4
      %s206 = scalar_lea.vmem %s0, %s205
      %p207 = scmp.lt.s32.totalorder %s18, 0
      %s208 = scalar_select %p207, %s18, 0
      %s209 = smul.addr %s208, 4
      %s210 = scalar_lea.vmem %s1, %s209
      %p211 = scmp.lt.s32.totalorder %s18, 0
      %s212 = scalar_select %p211, %s18, 0
      %s213 = scalar_lea.vmem %s2, %s212
      %p214 = scmp.lt.s32.totalorder %s19, 1
      %s215 = scalar_select %p214, %s19, 1
      %p216 = scmp.lt.s32.totalorder %s18, 0
      %s217 = scalar_select %p216, %s18, 0
      %s218 = smul.addr %s215, 20
      %s219 = sadd.s32 %s217, %s218
      %s220 = smul.addr %s219, 4
      %s221 = scalar_lea.vmem %s3, %s220
      %v223 = vld [vmem:[%s213] sm:$0x1]
      %v225 = vlaneseq
      %v226 = vshrl.u32 %v225, 7
      %v227 = vsub.s32 0, %v226
      %v228 = vrot.slane %v223, %v227
      %v230 = vld [vmem:[%s206] sm:$0xf]
      %v231 = vld [vmem:[%s206 + $0x8] sm:$0xf]
      %v232 = vld [vmem:[%s206 + $0x10] sm:$0xf]
      %v233 = vld [vmem:[%s206 + $0x18] sm:$0xf]
      %v234 = vld [vmem:[%s206 + $0x20] sm:$0xf]
      %v235 = vld [vmem:[%s206 + $0x28] sm:$0xf]
      %v236 = vld [vmem:[%s206 + $0x30] sm:$0xf]
      %v237 = vld [vmem:[%s206 + $0x38] sm:$0xf]
      %vm238 = vcmask 519168
      %239 = vst.msk [vmem:[#allocation2] sm:$0xf] %vm238, %v230
      %240 = vst.msk [vmem:[#allocation2 + $0x8] sm:$0xf] %vm238, %v231
      %241 = vst.msk [vmem:[#allocation2 + $0x10] sm:$0xf] %vm238, %v232
      %242 = vst.msk [vmem:[#allocation2 + $0x18] sm:$0xf] %vm238, %v233
      %243 = vst.msk [vmem:[#allocation2 + $0x20] sm:$0xf] %vm238, %v234
      %244 = vst.msk [vmem:[#allocation2 + $0x28] sm:$0xf] %vm238, %v235
      %245 = vst.msk [vmem:[#allocation2 + $0x30] sm:$0xf] %vm238, %v236
      %246 = vst.msk [vmem:[#allocation2 + $0x38] sm:$0xf] %vm238, %v237
      %v247 = vld [vmem:[%s206] sm:$0xf]
      %v248 = vld [vmem:[%s206 + $0x4] sm:$0x1]
      %v249 = vld [vmem:[%s206 + $0x8] sm:$0xf]
      %v250 = vld [vmem:[%s206 + $0xc] sm:$0x1]
      %v251 = vld [vmem:[%s206 + $0x10] sm:$0xf]
      %v252 = vld [vmem:[%s206 + $0x14] sm:$0x1]
      %v253 = vld [vmem:[%s206 + $0x18] sm:$0xf]
      %v254 = vld [vmem:[%s206 + $0x1c] sm:$0x1]
      %v255 = vld [vmem:[%s206 + $0x20] sm:$0xf]
      %v256 = vld [vmem:[%s206 + $0x24] sm:$0x1]
      %v257 = vld [vmem:[%s206 + $0x28] sm:$0xf]
      %v258 = vld [vmem:[%s206 + $0x2c] sm:$0x1]
      %v259 = vld [vmem:[%s206 + $0x30] sm:$0xf]
      %v260 = vld [vmem:[%s206 + $0x34] sm:$0x1]
      %v261 = vld [vmem:[%s206 + $0x38] sm:$0xf]
      %v262 = vld [vmem:[%s206 + $0x3c] sm:$0x1]
      %vm263 = vsmask.f32 3328
      %vm264 = vsmask.f32 7440
      %vm265 = vmor %vm263, %vm264
      %v267 = vshrl.u32 %v247, 16
      %v269 = vrot.slane %v267, 4
      %v270 = vshll.u32 %v247, 16
      %v272 = vrot.slane %v270, 5
      %v273 = vor.u32 %v269, %v272
      %v274 = vrot.slane %v273, 4
      %v276 = vshll.u32 %v248, 16
      %v278 = vrot.slane %v276, 5
      %v279 = vsel %vm265, %v274, %v278
      %v281 = vshrl.u32 %v249, 16
      %v283 = vrot.slane %v281, 4
      %v284 = vshll.u32 %v249, 16
      %v286 = vrot.slane %v284, 5
      %v287 = vor.u32 %v283, %v286
      %v288 = vrot.slane %v287, 4
      %v290 = vshll.u32 %v250, 16
      %v292 = vrot.slane %v290, 5
      %v293 = vsel %vm265, %v288, %v292
      %v295 = vshrl.u32 %v251, 16
      %v297 = vrot.slane %v295, 4
      %v298 = vshll.u32 %v251, 16
      %v300 = vrot.slane %v298, 5
      %v301 = vor.u32 %v297, %v300
      %v302 = vrot.slane %v301, 4
      %v304 = vshll.u32 %v252, 16
      %v306 = vrot.slane %v304, 5
      %v307 = vsel %vm265, %v302, %v306
      %v309 = vshrl.u32 %v253, 16
      %v311 = vrot.slane %v309, 4
      %v312 = vshll.u32 %v253, 16
      %v314 = vrot.slane %v312, 5
      %v315 = vor.u32 %v311, %v314
      %v316 = vrot.slane %v315, 4
      %v318 = vshll.u32 %v254, 16
      %v320 = vrot.slane %v318, 5
      %v321 = vsel %vm265, %v316, %v320
      %v323 = vshrl.u32 %v255, 16
      %v325 = vrot.slane %v323, 4
      %v326 = vshll.u32 %v255, 16
      %v328 = vrot.slane %v326, 5
      %v329 = vor.u32 %v325, %v328
      %v330 = vrot.slane %v329, 4
      %v332 = vshll.u32 %v256, 16
      %v334 = vrot.slane %v332, 5
      %v335 = vsel %vm265, %v330, %v334
      %v337 = vshrl.u32 %v257, 16
      %v339 = vrot.slane %v337, 4
      %v340 = vshll.u32 %v257, 16
      %v342 = vrot.slane %v340, 5
      %v343 = vor.u32 %v339, %v342
      %v344 = vrot.slane %v343, 4
      %v346 = vshll.u32 %v258, 16
      %v348 = vrot.slane %v346, 5
      %v349 = vsel %vm265, %v344, %v348
      %v351 = vshrl.u32 %v259, 16
      %v353 = vrot.slane %v351, 4
      %v354 = vshll.u32 %v259, 16
      %v356 = vrot.slane %v354, 5
      %v357 = vor.u32 %v353, %v356
      %v358 = vrot.slane %v357, 4
      %v360 = vshll.u32 %v260, 16
      %v362 = vrot.slane %v360, 5
      %v363 = vsel %vm265, %v358, %v362
      %v365 = vshrl.u32 %v261, 16
      %v367 = vrot.slane %v365, 4
      %v368 = vshll.u32 %v261, 16
      %v370 = vrot.slane %v368, 5
      %v371 = vor.u32 %v367, %v370
      %v372 = vrot.slane %v371, 4
      %v374 = vshll.u32 %v262, 16
      %v376 = vrot.slane %v374, 5
      %v377 = vsel %vm265, %v372, %v376
      %378 = vrot.lane.b32.xlu0 %v279, 64
      %v379 = vpop.permute.xlu0 %378
      %380 = vrot.lane.b32.xlu0 %v293, 64
      %v381 = vpop.permute.xlu0 %380
      %382 = vrot.lane.b32.xlu0 %v307, 64
      %v383 = vpop.permute.xlu0 %382
      %384 = vrot.lane.b32.xlu0 %v321, 64
      %v385 = vpop.permute.xlu0 %384
      %386 = vrot.lane.b32.xlu0 %v335, 64
      %v387 = vpop.permute.xlu0 %386
      %388 = vrot.lane.b32.xlu0 %v349, 64
      %v389 = vpop.permute.xlu0 %388
      %390 = vrot.lane.b32.xlu0 %v363, 64
      %v391 = vpop.permute.xlu0 %390
      %392 = vrot.lane.b32.xlu0 %v377, 64
      %v393 = vpop.permute.xlu0 %392
      %vm402 = vcmask 1043968
      %403 = vst.msk [vmem:[#allocation2] sm:$0xf] %vm402, %v379
      %404 = vst.msk [vmem:[#allocation2 + $0x8] sm:$0xf] %vm402, %v381
      %405 = vst.msk [vmem:[#allocation2 + $0x10] sm:$0xf] %vm402, %v383
      %406 = vst.msk [vmem:[#allocation2 + $0x18] sm:$0xf] %vm402, %v385
      %407 = vst.msk [vmem:[#allocation2 + $0x20] sm:$0xf] %vm402, %v387
      %408 = vst.msk [vmem:[#allocation2 + $0x28] sm:$0xf] %vm402, %v389
      %409 = vst.msk [vmem:[#allocation2 + $0x30] sm:$0xf] %vm402, %v391
      %410 = vst.msk [vmem:[#allocation2 + $0x38] sm:$0xf] %vm402, %v393
      %v411 = vld [vmem:[%s206] sm:$0xe]
      %v412 = vld [vmem:[%s206 + $0x4] sm:$0x1]
      %v413 = vld [vmem:[%s206 + $0x8] sm:$0xe]
      %v414 = vld [vmem:[%s206 + $0xc] sm:$0x1]
      %v415 = vld [vmem:[%s206 + $0x10] sm:$0xe]
      %v416 = vld [vmem:[%s206 + $0x14] sm:$0x1]
      %v417 = vld [vmem:[%s206 + $0x18] sm:$0xe]
      %v418 = vld [vmem:[%s206 + $0x1c] sm:$0x1]
      %v419 = vld [vmem:[%s206 + $0x20] sm:$0xe]
      %v420 = vld [vmem:[%s206 + $0x24] sm:$0x1]
      %v421 = vld [vmem:[%s206 + $0x28] sm:$0xe]
      %v422 = vld [vmem:[%s206 + $0x2c] sm:$0x1]
      %v423 = vld [vmem:[%s206 + $0x30] sm:$0xe]
      %v424 = vld [vmem:[%s206 + $0x34] sm:$0x1]
      %v425 = vld [vmem:[%s206 + $0x38] sm:$0xe]
      %v426 = vld [vmem:[%s206 + $0x3c] sm:$0x1]
      %vm443 = vcmask 1042432
      %vm444 = vcmask 1046532
      %vm445 = vmor %vm443, %vm444
      %v446 = vrot.slane %v411, 5
      %v447 = vrot.slane %v446, 4
      %v448 = vrot.slane %v412, 5
      %v449 = vsel %vm445, %v447, %v448
      %v450 = vrot.slane %v413, 5
      %v451 = vrot.slane %v450, 4
      %v452 = vrot.slane %v414, 5
      %v453 = vsel %vm445, %v451, %v452
      %v454 = vrot.slane %v415, 5
      %v455 = vrot.slane %v454, 4
      %v456 = vrot.slane %v416, 5
      %v457 = vsel %vm445, %v455, %v456
      %v458 = vrot.slane %v417, 5
      %v459 = vrot.slane %v458, 4
      %v460 = vrot.slane %v418, 5
      %v461 = vsel %vm445, %v459, %v460
      %v462 = vrot.slane %v419, 5
      %v463 = vrot.slane %v462, 4
      %v464 = vrot.slane %v420, 5
      %v465 = vsel %vm445, %v463, %v464
      %v466 = vrot.slane %v421, 5
      %v467 = vrot.slane %v466, 4
      %v468 = vrot.slane %v422, 5
      %v469 = vsel %vm445, %v467, %v468
      %v470 = vrot.slane %v423, 5
      %v471 = vrot.slane %v470, 4
      %v472 = vrot.slane %v424, 5
      %v473 = vsel %vm445, %v471, %v472
      %v474 = vrot.slane %v425, 5
      %v475 = vrot.slane %v474, 4
      %v476 = vrot.slane %v426, 5
      %v477 = vsel %vm445, %v475, %v476
      %486 = vst.msk [vmem:[#allocation2 + $0x4] sm:$0xf] %vm238, %v449
      %487 = vst.msk [vmem:[#allocation2 + $0xc] sm:$0xf] %vm238, %v453
      %488 = vst.msk [vmem:[#allocation2 + $0x14] sm:$0xf] %vm238, %v457
      %489 = vst.msk [vmem:[#allocation2 + $0x1c] sm:$0xf] %vm238, %v461
      %490 = vst.msk [vmem:[#allocation2 + $0x24] sm:$0xf] %vm238, %v465
      %491 = vst.msk [vmem:[#allocation2 + $0x2c] sm:$0xf] %vm238, %v469
      %492 = vst.msk [vmem:[#allocation2 + $0x34] sm:$0xf] %vm238, %v473
      %493 = vst.msk [vmem:[#allocation2 + $0x3c] sm:$0xf] %vm238, %v477
      %v494 = vld [vmem:[#allocation2] sm:$0xff]
      %v495 = vld [vmem:[#allocation2 + $0x8] sm:$0xff]
      %v496 = vld [vmem:[#allocation2 + $0x10] sm:$0xff]
      %v497 = vld [vmem:[#allocation2 + $0x18] sm:$0xff]
      %v498 = vld [vmem:[#allocation2 + $0x20] sm:$0xff]
      %v499 = vld [vmem:[#allocation2 + $0x28] sm:$0xff]
      %v500 = vld [vmem:[#allocation2 + $0x30] sm:$0xff]
      %v501 = vld [vmem:[#allocation2 + $0x38] sm:$0xff]
      %v502 = vld [vmem:[%s210] sm:$0xf]
      %v503 = vld [vmem:[%s210 + $0x4] sm:$0xf]
      %v504 = vld [vmem:[%s210 + $0x8] sm:$0xf]
      %v505 = vld [vmem:[%s210 + $0xc] sm:$0xf]
      %v506 = vld [vmem:[%s210 + $0x10] sm:$0xf]
      %v507 = vld [vmem:[%s210 + $0x14] sm:$0xf]
      %v508 = vld [vmem:[%s210 + $0x18] sm:$0xf]
      %v509 = vld [vmem:[%s210 + $0x1c] sm:$0xf]
      %v510 = vld [vmem:[%s210 + $0x20] sm:$0xf]
      %v511 = vld [vmem:[%s210 + $0x24] sm:$0xf]
      %v512 = vld [vmem:[%s210 + $0x28] sm:$0xf]
      %v513 = vld [vmem:[%s210 + $0x2c] sm:$0xf]
      %v514 = vld [vmem:[%s210 + $0x30] sm:$0xf]
      %v515 = vld [vmem:[%s210 + $0x34] sm:$0xf]
      %v516 = vld [vmem:[%s210 + $0x38] sm:$0xf]
      %v517 = vld [vmem:[%s210 + $0x3c] sm:$0xf]
      %v518 = vld [vmem:[%s210 + $0x40] sm:$0xf]
      %v519 = vld [vmem:[%s210 + $0x44] sm:$0xf]
      %v520 = vld [vmem:[%s210 + $0x48] sm:$0xf]
      %v521 = vld [vmem:[%s210 + $0x4c] sm:$0xf]
      %v522 = vld [vmem:[%s210 + $0x50] sm:$0xf]
      %v523 = vld [vmem:[%s210 + $0x54] sm:$0xf]
      %v524 = vld [vmem:[%s210 + $0x58] sm:$0xf]
      %v525 = vld [vmem:[%s210 + $0x5c] sm:$0xf]
      %v534 = vunpack.c.l.b16 %v494
      %v535 = vunpack.c.h.b16 %v494
      %v536 = vunpack.c.l.b16 %v495
      %v537 = vunpack.c.h.b16 %v495
      %v538 = vunpack.c.l.b16 %v496
      %v539 = vunpack.c.h.b16 %v496
      %v540 = vunpack.c.l.b16 %v497
      %v541 = vunpack.c.h.b16 %v497
      %v542 = vunpack.c.l.b16 %v498
      %v543 = vunpack.c.h.b16 %v498
      %v544 = vunpack.c.l.b16 %v499
      %v545 = vunpack.c.h.b16 %v499
      %v546 = vunpack.c.l.b16 %v500
      %v547 = vunpack.c.h.b16 %v500
      %v548 = vunpack.c.l.b16 %v501
      %v549 = vunpack.c.h.b16 %v501
      %v550 = vpack.c.b16 %v536, %v534
      %v551 = vpack.c.b16 %v537, %v535
      %v552 = vpack.c.b16 %v540, %v538
      %v553 = vpack.c.b16 %v541, %v539
      %v554 = vpack.c.b16 %v544, %v542
      %v555 = vpack.c.b16 %v545, %v543
      %v556 = vpack.c.b16 %v548, %v546
      %v557 = vpack.c.b16 %v549, %v547
      %v586 = vunpack.c.l.b16 %v502
      %v587 = vunpack.c.l.b16 %v503
      %v588 = vunpack.c.l.b16 %v504
      %v589 = vunpack.c.l.b16 %v505
      %v590 = vunpack.c.l.b16 %v506
      %v591 = vunpack.c.l.b16 %v507
      %v592 = vunpack.c.l.b16 %v508
      %v593 = vunpack.c.l.b16 %v509
      %v594 = vunpack.c.l.b16 %v510
      %v595 = vunpack.c.l.b16 %v511
      %v596 = vunpack.c.l.b16 %v512
      %v597 = vunpack.c.l.b16 %v513
      %v598 = vunpack.c.l.b16 %v514
      %v599 = vunpack.c.l.b16 %v515
      %v600 = vunpack.c.l.b16 %v516
      %v601 = vunpack.c.l.b16 %v517
      %v602 = vunpack.c.l.b16 %v518
      %v603 = vunpack.c.l.b16 %v519
      %v604 = vunpack.c.l.b16 %v520
      %v605 = vunpack.c.l.b16 %v521
      %v606 = vunpack.c.l.b16 %v522
      %v607 = vunpack.c.l.b16 %v523
      %v608 = vunpack.c.l.b16 %v524
      %v609 = vunpack.c.l.b16 %v525
      %v610 = vpack.c.b16 %v587, %v586
      %v611 = vpack.c.b16 %v589, %v588
      %v612 = vpack.c.b16 %v591, %v590
      %v613 = vpack.c.b16 %v593, %v592
      %v614 = vpack.c.b16 %v595, %v594
      %v615 = vpack.c.b16 %v597, %v596
      %v616 = vpack.c.b16 %v599, %v598
      %v617 = vpack.c.b16 %v601, %v600
      %v618 = vpack.c.b16 %v603, %v602
      %v619 = vpack.c.b16 %v605, %v604
      %v620 = vpack.c.b16 %v607, %v606
      %v621 = vpack.c.b16 %v609, %v608
      %vm634 = vcmask 523264
      %v636 = vsel %vm634, %v551, 0
      %v639 = vsel %vm634, %v553, 0
      %v642 = vsel %vm634, %v555, 0
      %v645 = vsel %vm634, %v557, 0
      %647 = vmatprep.subr.bf16.mxu0 0
      %648 = vmatpush1.bf16.msra.mxu0 %v610
      %649 = vmatprep.subr.bf16.mxu0 0
      %650 = vmatpush1.bf16.msra.mxu0 %v611
      %651 = vmatprep.subr.bf16.mxu0 0
      %652 = vmatpush1.bf16.msra.mxu0 %v612
      %653 = vmatprep.subr.bf16.mxu0 0
      %654 = vmatpush1.bf16.msra.mxu0 %v613
      %655 = vmatprep.subr.bf16.mxu0 0
      %656 = vmatpush1.bf16.msra.mxu0 %v614
      %657 = vmatprep.subr.bf16.mxu0 0
      %658 = vmatpush1.bf16.msra.mxu0 %v615
      %659 = vmatprep.subr.bf16.mxu0 0
      %660 = vmatpush1.bf16.msra.mxu0 %v616
      %661 = vmatprep.subr.bf16.mxu0 0
      %662 = vmatpush1.bf16.msra.mxu0 %v617
      %663 = vmatprep.subr.bf16.mxu0 0
      %664 = vmatpush1.bf16.msra.mxu0 %v618
      %665 = vmatprep.subr.bf16.mxu0 0
      %666 = vmatpush1.bf16.msra.mxu0 %v619
      %667 = vmatprep.subr.bf16.mxu0 0
      %668 = vmatpush1.bf16.msra.mxu0 %v620
      %669 = vmatprep.subr.bf16.mxu0 0
      %670 = vmatpush1.bf16.msra.mxu0 %v621
      %671 = vmatprep.subr.bf16.mxu0 0
      %672 = vmatpush1.bf16.msra.mxu0 0
      %673 = vmatprep.subr.bf16.mxu0 0
      %674 = vmatpush1.bf16.msra.mxu0 0
      %675 = vmatprep.subr.bf16.mxu0 0
      %676 = vmatpush1.bf16.msra.mxu0 0
      %677 = vmatprep.subr.bf16.mxu0 0
      %678 = vmatpush1.bf16.msra.mxu0 0
      %679 = vmatprep.mubr.bf16.mxu0 %v636
      %680 = vmatmul.mubr.bf16.gmra.mrb[0].mxu0 %v550
      %v681 = vpop.f32.mrb[0].mxu0
      %v682 = vadd.f32 0.0, %v681
      %v683 = vpop.f32.mrb[0].mxu0
      %v684 = vpop.f32.mrb[0].mxu0
      %v685 = vadd.f32 0.0, %v684
      %v686 = vpop.f32.mrb[0].mxu0
      %687 = vmatprep.mubr.bf16.mxu0 %v639
      %688 = vmatmul.mubr.bf16.gmra.mrb[0].mxu0 %v552
      %v689 = vpop.f32.mrb[0].mxu0
      %v690 = vadd.f32 0.0, %v689
      %v691 = vpop.f32.mrb[0].mxu0
      %v692 = vpop.f32.mrb[0].mxu0
      %v693 = vadd.f32 0.0, %v692
      %v694 = vpop.f32.mrb[0].mxu0
      %695 = vmatprep.mubr.bf16.mxu0 %v642
      %696 = vmatmul.mubr.bf16.gmra.mrb[0].mxu0 %v554
      %v697 = vpop.f32.mrb[0].mxu0
      %v698 = vadd.f32 0.0, %v697
      %v699 = vpop.f32.mrb[0].mxu0
      %v700 = vpop.f32.mrb[0].mxu0
      %v701 = vadd.f32 0.0, %v700
      %v702 = vpop.f32.mrb[0].mxu0
      %703 = vmatprep.mubr.bf16.mxu0 %v645
      %704 = vmatmul.mubr.bf16.gmra.mrb[0].mxu0 %v556
      %v705 = vpop.f32.mrb[0].mxu0
      %v706 = vadd.f32 0.0, %v705
      %v707 = vpop.f32.mrb[0].mxu0
      %v708 = vpop.f32.mrb[0].mxu0
      %v709 = vadd.f32 0.0, %v708
      %v710 = vpop.f32.mrb[0].mxu0
      %711 = vdwg.mxu0
      %v712 = vadd.f32 %v228, %v682
      %v713 = vadd.f32 %v228, %v685
      %v714 = vadd.f32 %v228, %v690
      %v715 = vadd.f32 %v228, %v693
      %v716 = vadd.f32 %v228, %v698
      %v717 = vadd.f32 %v228, %v701
      %v718 = vadd.f32 %v228, %v706
      %v719 = vadd.f32 %v228, %v709
      %s720 = scalar_lea.vmem %s206, 8
      %v721 = vld [vmem:[%s720] sm:$0xf]
      %v722 = vld [vmem:[%s720 + $0x8] sm:$0xf]
      %v723 = vld [vmem:[%s720 + $0x10] sm:$0xf]
      %v724 = vld [vmem:[%s720 + $0x18] sm:$0xf]
      %v725 = vld [vmem:[%s720 + $0x20] sm:$0xf]
      %v726 = vld [vmem:[%s720 + $0x28] sm:$0xf]
      %v727 = vld [vmem:[%s720 + $0x30] sm:$0xf]
      %v728 = vld [vmem:[%s720 + $0x38] sm:$0xf]
      %729 = vst.msk [vmem:[#allocation2] sm:$0xf] %vm238, %v721
      %730 = vst.msk [vmem:[#allocation2 + $0x8] sm:$0xf] %vm238, %v722
      %731 = vst.msk [vmem:[#allocation2 + $0x10] sm:$0xf] %vm238, %v723
      %732 = vst.msk [vmem:[#allocation2 + $0x18] sm:$0xf] %vm238, %v724
      %733 = vst.msk [vmem:[#allocation2 + $0x20] sm:$0xf] %vm238, %v725
      %734 = vst.msk [vmem:[#allocation2 + $0x28] sm:$0xf] %vm238, %v726
      %735 = vst.msk [vmem:[#allocation2 + $0x30] sm:$0xf] %vm238, %v727
      %736 = vst.msk [vmem:[#allocation2 + $0x38] sm:$0xf] %vm238, %v728
      %v737 = vld [vmem:[%s720] sm:$0xf]
      %v738 = vld [vmem:[%s720 + $0x4] sm:$0x1]
      %v739 = vld [vmem:[%s720 + $0x8] sm:$0xf]
      %v740 = vld [vmem:[%s720 + $0xc] sm:$0x1]
      %v741 = vld [vmem:[%s720 + $0x10] sm:$0xf]
      %v742 = vld [vmem:[%s720 + $0x14] sm:$0x1]
      %v743 = vld [vmem:[%s720 + $0x18] sm:$0xf]
      %v744 = vld [vmem:[%s720 + $0x1c] sm:$0x1]
      %v745 = vld [vmem:[%s720 + $0x20] sm:$0xf]
      %v746 = vld [vmem:[%s720 + $0x24] sm:$0x1]
      %v747 = vld [vmem:[%s720 + $0x28] sm:$0xf]
      %v748 = vld [vmem:[%s720 + $0x2c] sm:$0x1]
      %v749 = vld [vmem:[%s720 + $0x30] sm:$0xf]
      %v750 = vld [vmem:[%s720 + $0x34] sm:$0x1]
      %v751 = vld [vmem:[%s720 + $0x38] sm:$0xf]
      %v752 = vld [vmem:[%s720 + $0x3c] sm:$0x1]
      %v754 = vshrl.u32 %v737, 16
      %v756 = vrot.slane %v754, 4
      %v757 = vshll.u32 %v737, 16
      %v759 = vrot.slane %v757, 5
      %v760 = vor.u32 %v756, %v759
      %v761 = vrot.slane %v760, 4
      %v763 = vshll.u32 %v738, 16
      %v765 = vrot.slane %v763, 5
      %v766 = vsel %vm265, %v761, %v765
      %v768 = vshrl.u32 %v739, 16
      %v770 = vrot.slane %v768, 4
      %v771 = vshll.u32 %v739, 16
      %v773 = vrot.slane %v771, 5
      %v774 = vor.u32 %v770, %v773
      %v775 = vrot.slane %v774, 4
      %v777 = vshll.u32 %v740, 16
      %v779 = vrot.slane %v777, 5
      %v780 = vsel %vm265, %v775, %v779
      %v782 = vshrl.u32 %v741, 16
      %v784 = vrot.slane %v782, 4
      %v785 = vshll.u32 %v741, 16
      %v787 = vrot.slane %v785, 5
      %v788 = vor.u32 %v784, %v787
      %v789 = vrot.slane %v788, 4
      %v791 = vshll.u32 %v742, 16
      %v793 = vrot.slane %v791, 5
      %v794 = vsel %vm265, %v789, %v793
      %v796 = vshrl.u32 %v743, 16
      %v798 = vrot.slane %v796, 4
      %v799 = vshll.u32 %v743, 16
      %v801 = vrot.slane %v799, 5
      %v802 = vor.u32 %v798, %v801
      %v803 = vrot.slane %v802, 4
      %v805 = vshll.u32 %v744, 16
      %v807 = vrot.slane %v805, 5
      %v808 = vsel %vm265, %v803, %v807
      %v810 = vshrl.u32 %v745, 16
      %v812 = vrot.slane %v810, 4
      %v813 = vshll.u32 %v745, 16
      %v815 = vrot.slane %v813, 5
      %v816 = vor.u32 %v812, %v815
      %v817 = vrot.slane %v816, 4
      %v819 = vshll.u32 %v746, 16
      %v821 = vrot.slane %v819, 5
      %v822 = vsel %vm265, %v817, %v821
      %v824 = vshrl.u32 %v747, 16
      %v826 = vrot.slane %v824, 4
      %v827 = vshll.u32 %v747, 16
      %v829 = vrot.slane %v827, 5
      %v830 = vor.u32 %v826, %v829
      %v831 = vrot.slane %v830, 4
      %v833 = vshll.u32 %v748, 16
      %v835 = vrot.slane %v833, 5
      %v836 = vsel %vm265, %v831, %v835
      %v838 = vshrl.u32 %v749, 16
      %v840 = vrot.slane %v838, 4
      %v841 = vshll.u32 %v749, 16
      %v843 = vrot.slane %v841, 5
      %v844 = vor.u32 %v840, %v843
      %v845 = vrot.slane %v844, 4
      %v847 = vshll.u32 %v750, 16
      %v849 = vrot.slane %v847, 5
      %v850 = vsel %vm265, %v845, %v849
      %v852 = vshrl.u32 %v751, 16
      %v854 = vrot.slane %v852, 4
      %v855 = vshll.u32 %v751, 16
      %v857 = vrot.slane %v855, 5
      %v858 = vor.u32 %v854, %v857
      %v859 = vrot.slane %v858, 4
      %v861 = vshll.u32 %v752, 16
      %v863 = vrot.slane %v861, 5
      %v864 = vsel %vm265, %v859, %v863
      %865 = vrot.lane.b32.xlu0 %v766, 64
      %v866 = vpop.permute.xlu0 %865
      %867 = vrot.lane.b32.xlu0 %v780, 64
      %v868 = vpop.permute.xlu0 %867
      %869 = vrot.lane.b32.xlu0 %v794, 64
      %v870 = vpop.permute.xlu0 %869
      %871 = vrot.lane.b32.xlu0 %v808, 64
      %v872 = vpop.permute.xlu0 %871
      %873 = vrot.lane.b32.xlu0 %v822, 64
      %v874 = vpop.permute.xlu0 %873
      %875 = vrot.lane.b32.xlu0 %v836, 64
      %v876 = vpop.permute.xlu0 %875
      %877 = vrot.lane.b32.xlu0 %v850, 64
      %v878 = vpop.permute.xlu0 %877
      %879 = vrot.lane.b32.xlu0 %v864, 64
      %v880 = vpop.permute.xlu0 %879
      %889 = vst.msk [vmem:[#allocation2] sm:$0xf] %vm402, %v866
      %890 = vst.msk [vmem:[#allocation2 + $0x8] sm:$0xf] %vm402, %v868
      %891 = vst.msk [vmem:[#allocation2 + $0x10] sm:$0xf] %vm402, %v870
      %892 = vst.msk [vmem:[#allocation2 + $0x18] sm:$0xf] %vm402, %v872
      %893 = vst.msk [vmem:[#allocation2 + $0x20] sm:$0xf] %vm402, %v874
      %894 = vst.msk [vmem:[#allocation2 + $0x28] sm:$0xf] %vm402, %v876
      %895 = vst.msk [vmem:[#allocation2 + $0x30] sm:$0xf] %vm402, %v878
      %896 = vst.msk [vmem:[#allocation2 + $0x38] sm:$0xf] %vm402, %v880
      %v897 = vld [vmem:[%s720] sm:$0xe]
      %v898 = vld [vmem:[%s720 + $0x4] sm:$0x1]
      %v899 = vld [vmem:[%s720 + $0x8] sm:$0xe]
      %v900 = vld [vmem:[%s720 + $0xc] sm:$0x1]
      %v901 = vld [vmem:[%s720 + $0x10] sm:$0xe]
      %v902 = vld [vmem:[%s720 + $0x14] sm:$0x1]
      %v903 = vld [vmem:[%s720 + $0x18] sm:$0xe]
      %v904 = vld [vmem:[%s720 + $0x1c] sm:$0x1]
      %v905 = vld [vmem:[%s720 + $0x20] sm:$0xe]
      %v906 = vld [vmem:[%s720 + $0x24] sm:$0x1]
      %v907 = vld [vmem:[%s720 + $0x28] sm:$0xe]
      %v908 = vld [vmem:[%s720 + $0x2c] sm:$0x1]
      %v909 = vld [vmem:[%s720 + $0x30] sm:$0xe]
      %v910 = vld [vmem:[%s720 + $0x34] sm:$0x1]
      %v911 = vld [vmem:[%s720 + $0x38] sm:$0xe]
      %v912 = vld [vmem:[%s720 + $0x3c] sm:$0x1]
      %v929 = vrot.slane %v897, 5
      %v930 = vrot.slane %v929, 4
      %v931 = vrot.slane %v898, 5
      %v932 = vsel %vm445, %v930, %v931
      %v933 = vrot.slane %v899, 5
      %v934 = vrot.slane %v933, 4
      %v935 = vrot.slane %v900, 5
      %v936 = vsel %vm445, %v934, %v935
      %v937 = vrot.slane %v901, 5
      %v938 = vrot.slane %v937, 4
      %v939 = vrot.slane %v902, 5
      %v940 = vsel %vm445, %v938, %v939
      %v941 = vrot.slane %v903, 5
      %v942 = vrot.slane %v941, 4
      %v943 = vrot.slane %v904, 5
      %v944 = vsel %vm445, %v942, %v943
      %v945 = vrot.slane %v905, 5
      %v946 = vrot.slane %v945, 4
      %v947 = vrot.slane %v906, 5
      %v948 = vsel %vm445, %v946, %v947
      %v949 = vrot.slane %v907, 5
      %v950 = vrot.slane %v949, 4
      %v951 = vrot.slane %v908, 5
      %v952 = vsel %vm445, %v950, %v951
      %v953 = vrot.slane %v909, 5
      %v954 = vrot.slane %v953, 4
      %v955 = vrot.slane %v910, 5
      %v956 = vsel %vm445, %v954, %v955
      %v957 = vrot.slane %v911, 5
      %v958 = vrot.slane %v957, 4
      %v959 = vrot.slane %v912, 5
      %v960 = vsel %vm445, %v958, %v959
      %969 = vst.msk [vmem:[#allocation2 + $0x4] sm:$0xf] %vm238, %v932
      %970 = vst.msk [vmem:[#allocation2 + $0xc] sm:$0xf] %vm238, %v936
      %971 = vst.msk [vmem:[#allocation2 + $0x14] sm:$0xf] %vm238, %v940
      %972 = vst.msk [vmem:[#allocation2 + $0x1c] sm:$0xf] %vm238, %v944
      %973 = vst.msk [vmem:[#allocation2 + $0x24] sm:$0xf] %vm238, %v948
      %974 = vst.msk [vmem:[#allocation2 + $0x2c] sm:$0xf] %vm238, %v952
      %975 = vst.msk [vmem:[#allocation2 + $0x34] sm:$0xf] %vm238, %v956
      %976 = vst.msk [vmem:[#allocation2 + $0x3c] sm:$0xf] %vm238, %v960
      %v977 = vld [vmem:[#allocation2] sm:$0xff]
      %v978 = vld [vmem:[#allocation2 + $0x8] sm:$0xff]
      %v979 = vld [vmem:[#allocation2 + $0x10] sm:$0xff]
      %v980 = vld [vmem:[#allocation2 + $0x18] sm:$0xff]
      %v981 = vld [vmem:[#allocation2 + $0x20] sm:$0xff]
      %v982 = vld [vmem:[#allocation2 + $0x28] sm:$0xff]
      %v983 = vld [vmem:[#allocation2 + $0x30] sm:$0xff]
      %v984 = vld [vmem:[#allocation2 + $0x38] sm:$0xff]
      %s985 = scalar_lea.vmem %s210, 96
      %v986 = vld [vmem:[%s985] sm:$0xf]
      %v987 = vld [vmem:[%s985 + $0x4] sm:$0xf]
      %v988 = vld [vmem:[%s985 + $0x8] sm:$0xf]
      %v989 = vld [vmem:[%s985 + $0xc] sm:$0xf]
      %v990 = vld [vmem:[%s985 + $0x10] sm:$0xf]
      %v991 = vld [vmem:[%s985 + $0x14] sm:$0xf]
      %v992 = vld [vmem:[%s985 + $0x18] sm:$0xf]
      %v993 = vld [vmem:[%s985 + $0x1c] sm:$0xf]
      %v994 = vld [vmem:[%s985 + $0x20] sm:$0xf]
      %v995 = vld [vmem:[%s985 + $0x24] sm:$0xf]
      %v996 = vld [vmem:[%s985 + $0x28] sm:$0xf]
      %v997 = vld [vmem:[%s985 + $0x2c] sm:$0xf]
      %v998 = vld [vmem:[%s985 + $0x30] sm:$0xf]
      %v999 = vld [vmem:[%s985 + $0x34] sm:$0xf]
      %v1000 = vld [vmem:[%s985 + $0x38] sm:$0xf]
      %v1001 = vld [vmem:[%s985 + $0x3c] sm:$0xf]
      %v1002 = vld [vmem:[%s985 + $0x40] sm:$0xf]
      %v1003 = vld [vmem:[%s985 + $0x44] sm:$0xf]
      %v1004 = vld [vmem:[%s985 + $0x48] sm:$0xf]
      %v1005 = vld [vmem:[%s985 + $0x4c] sm:$0xf]
      %v1006 = vld [vmem:[%s985 + $0x50] sm:$0xf]
      %v1007 = vld [vmem:[%s985 + $0x54] sm:$0xf]
      %v1008 = vld [vmem:[%s985 + $0x58] sm:$0xf]
      %v1009 = vld [vmem:[%s985 + $0x5c] sm:$0xf]
      %v1018 = vunpack.c.l.b16 %v977
      %v1019 = vunpack.c.h.b16 %v977
      %v1020 = vunpack.c.l.b16 %v978
      %v1021 = vunpack.c.h.b16 %v978
      %v1022 = vunpack.c.l.b16 %v979
      %v1023 = vunpack.c.h.b16 %v979
      %v1024 = vunpack.c.l.b16 %v980
      %v1025 = vunpack.c.h.b16 %v980
      %v1026 = vunpack.c.l.b16 %v981
      %v1027 = vunpack.c.h.b16 %v981
      %v1028 = vunpack.c.l.b16 %v982
      %v1029 = vunpack.c.h.b16 %v982
      %v1030 = vunpack.c.l.b16 %v983
      %v1031 = vunpack.c.h.b16 %v983
      %v1032 = vunpack.c.l.b16 %v984
      %v1033 = vunpack.c.h.b16 %v984
      %v1034 = vpack.c.b16 %v1020, %v1018
      %v1035 = vpack.c.b16 %v1021, %v1019
      %v1036 = vpack.c.b16 %v1024, %v1022
      %v1037 = vpack.c.b16 %v1025, %v1023
      %v1038 = vpack.c.b16 %v1028, %v1026
      %v1039 = vpack.c.b16 %v1029, %v1027
      %v1040 = vpack.c.b16 %v1032, %v1030
      %v1041 = vpack.c.b16 %v1033, %v1031
      %v1070 = vunpack.c.l.b16 %v986
      %v1071 = vunpack.c.l.b16 %v987
      %v1072 = vunpack.c.l.b16 %v988
      %v1073 = vunpack.c.l.b16 %v989
      %v1074 = vunpack.c.l.b16 %v990
      %v1075 = vunpack.c.l.b16 %v991
      %v1076 = vunpack.c.l.b16 %v992
      %v1077 = vunpack.c.l.b16 %v993
      %v1078 = vunpack.c.l.b16 %v994
      %v1079 = vunpack.c.l.b16 %v995
      %v1080 = vunpack.c.l.b16 %v996
      %v1081 = vunpack.c.l.b16 %v997
      %v1082 = vunpack.c.l.b16 %v998
      %v1083 = vunpack.c.l.b16 %v999
      %v1084 = vunpack.c.l.b16 %v1000
      %v1085 = vunpack.c.l.b16 %v1001
      %v1086 = vunpack.c.l.b16 %v1002
      %v1087 = vunpack.c.l.b16 %v1003
      %v1088 = vunpack.c.l.b16 %v1004
      %v1089 = vunpack.c.l.b16 %v1005
      %v1090 = vunpack.c.l.b16 %v1006
      %v1091 = vunpack.c.l.b16 %v1007
      %v1092 = vunpack.c.l.b16 %v1008
      %v1093 = vunpack.c.l.b16 %v1009
      %v1094 = vpack.c.b16 %v1071, %v1070
      %v1095 = vpack.c.b16 %v1073, %v1072
      %v1096 = vpack.c.b16 %v1075, %v1074
      %v1097 = vpack.c.b16 %v1077, %v1076
      %v1098 = vpack.c.b16 %v1079, %v1078
      %v1099 = vpack.c.b16 %v1081, %v1080
      %v1100 = vpack.c.b16 %v1083, %v1082
      %v1101 = vpack.c.b16 %v1085, %v1084
      %v1102 = vpack.c.b16 %v1087, %v1086
      %v1103 = vpack.c.b16 %v1089, %v1088
      %v1104 = vpack.c.b16 %v1091, %v1090
      %v1105 = vpack.c.b16 %v1093, %v1092
      %v1119 = vsel %vm634, %v1035, 0
      %v1122 = vsel %vm634, %v1037, 0
      %v1125 = vsel %vm634, %v1039, 0
      %v1128 = vsel %vm634, %v1041, 0
      %1130 = vmatprep.subr.bf16.mxu0 0
      %1131 = vmatpush1.bf16.msra.mxu0 %v1094
      %1132 = vmatprep.subr.bf16.mxu0 0
      %1133 = vmatpush1.bf16.msra.mxu0 %v1095
      %1134 = vmatprep.subr.bf16.mxu0 0
      %1135 = vmatpush1.bf16.msra.mxu0 %v1096
      %1136 = vmatprep.subr.bf16.mxu0 0
      %1137 = vmatpush1.bf16.msra.mxu0 %v1097
      %1138 = vmatprep.subr.bf16.mxu0 0
      %1139 = vmatpush1.bf16.msra.mxu0 %v1098
      %1140 = vmatprep.subr.bf16.mxu0 0
      %1141 = vmatpush1.bf16.msra.mxu0 %v1099
      %1142 = vmatprep.subr.bf16.mxu0 0
      %1143 = vmatpush1.bf16.msra.mxu0 %v1100
      %1144 = vmatprep.subr.bf16.mxu0 0
      %1145 = vmatpush1.bf16.msra.mxu0 %v1101
      %1146 = vmatprep.subr.bf16.mxu0 0
      %1147 = vmatpush1.bf16.msra.mxu0 %v1102
      %1148 = vmatprep.subr.bf16.mxu0 0
      %1149 = vmatpush1.bf16.msra.mxu0 %v1103
      %1150 = vmatprep.subr.bf16.mxu0 0
      %1151 = vmatpush1.bf16.msra.mxu0 %v1104
      %1152 = vmatprep.subr.bf16.mxu0 0
      %1153 = vmatpush1.bf16.msra.mxu0 %v1105
      %1154 = vmatprep.subr.bf16.mxu0 0
      %1155 = vmatpush1.bf16.msra.mxu0 0
      %1156 = vmatprep.subr.bf16.mxu0 0
      %1157 = vmatpush1.bf16.msra.mxu0 0
      %1158 = vmatprep.subr.bf16.mxu0 0
      %1159 = vmatpush1.bf16.msra.mxu0 0
      %1160 = vmatprep.subr.bf16.mxu0 0
      %1161 = vmatpush1.bf16.msra.mxu0 0
      %1162 = vmatprep.mubr.bf16.mxu0 %v1119
      %1163 = vmatmul.mubr.bf16.gmra.mrb[0].mxu0 %v1034
      %v1164 = vpop.f32.mrb[0].mxu0
      %v1165 = vadd.f32 0.0, %v1164
      %v1166 = vpop.f32.mrb[0].mxu0
      %v1167 = vpop.f32.mrb[0].mxu0
      %v1168 = vadd.f32 0.0, %v1167
      %v1169 = vpop.f32.mrb[0].mxu0
      %1170 = vmatprep.mubr.bf16.mxu0 %v1122
      %1171 = vmatmul.mubr.bf16.gmra.mrb[0].mxu0 %v1036
      %v1172 = vpop.f32.mrb[0].mxu0
      %v1173 = vadd.f32 0.0, %v1172
      %v1174 = vpop.f32.mrb[0].mxu0
      %v1175 = vpop.f32.mrb[0].mxu0
      %v1176 = vadd.f32 0.0, %v1175
      %v1177 = vpop.f32.mrb[0].mxu0
      %1178 = vmatprep.mubr.bf16.mxu0 %v1125
      %1179 = vmatmul.mubr.bf16.gmra.mrb[0].mxu0 %v1038
      %v1180 = vpop.f32.mrb[0].mxu0
      %v1181 = vadd.f32 0.0, %v1180
      %v1182 = vpop.f32.mrb[0].mxu0
      %v1183 = vpop.f32.mrb[0].mxu0
      %v1184 = vadd.f32 0.0, %v1183
      %v1185 = vpop.f32.mrb[0].mxu0
      %1186 = vmatprep.mubr.bf16.mxu0 %v1128
      %1187 = vmatmul.mubr.bf16.gmra.mrb[0].mxu0 %v1040
      %v1188 = vpop.f32.mrb[0].mxu0
      %v1189 = vadd.f32 0.0, %v1188
      %v1190 = vpop.f32.mrb[0].mxu0
      %v1191 = vpop.f32.mrb[0].mxu0
      %v1192 = vadd.f32 0.0, %v1191
      %v1193 = vpop.f32.mrb[0].mxu0
      %1194 = vdwg.mxu0
      %v1195 = vadd.f32 %v712, %v1165
      %v1196 = vadd.f32 %v713, %v1168
      %v1197 = vadd.f32 %v714, %v1173
      %v1198 = vadd.f32 %v715, %v1176
      %v1199 = vadd.f32 %v716, %v1181
      %v1200 = vadd.f32 %v717, %v1184
      %v1201 = vadd.f32 %v718, %v1189
      %v1202 = vadd.f32 %v719, %v1192
      %s1203 = scalar_lea.vmem %s206, 16
      %v1204 = vld [vmem:[%s1203] sm:$0xf]
      %v1205 = vld [vmem:[%s1203 + $0x8] sm:$0xf]
      %v1206 = vld [vmem:[%s1203 + $0x10] sm:$0xf]
      %v1207 = vld [vmem:[%s1203 + $0x18] sm:$0xf]
      %v1208 = vld [vmem:[%s1203 + $0x20] sm:$0xf]
      %v1209 = vld [vmem:[%s1203 + $0x28] sm:$0xf]
      %v1210 = vld [vmem:[%s1203 + $0x30] sm:$0xf]
      %v1211 = vld [vmem:[%s1203 + $0x38] sm:$0xf]
      %1212 = vst.msk [vmem:[#allocation2] sm:$0xf] %vm238, %v1204
      %1213 = vst.msk [vmem:[#allocation2 + $0x8] sm:$0xf] %vm238, %v1205
      %1214 = vst.msk [vmem:[#allocation2 + $0x10] sm:$0xf] %vm238, %v1206
      %1215 = vst.msk [vmem:[#allocation2 + $0x18] sm:$0xf] %vm238, %v1207
      %1216 = vst.msk [vmem:[#allocation2 + $0x20] sm:$0xf] %vm238, %v1208
      %1217 = vst.msk [vmem:[#allocation2 + $0x28] sm:$0xf] %vm238, %v1209
      %1218 = vst.msk [vmem:[#allocation2 + $0x30] sm:$0xf] %vm238, %v1210
      %1219 = vst.msk [vmem:[#allocation2 + $0x38] sm:$0xf] %vm238, %v1211
      %v1220 = vld [vmem:[%s1203] sm:$0xf]
      %v1221 = vld [vmem:[%s1203 + $0x4] sm:$0x1]
      %v1222 = vld [vmem:[%s1203 + $0x8] sm:$0xf]
      %v1223 = vld [vmem:[%s1203 + $0xc] sm:$0x1]
      %v1224 = vld [vmem:[%s1203 + $0x10] sm:$0xf]
      %v1225 = vld [vmem:[%s1203 + $0x14] sm:$0x1]
      %v1226 = vld [vmem:[%s1203 + $0x18] sm:$0xf]
      %v1227 = vld [vmem:[%s1203 + $0x1c] sm:$0x1]
      %v1228 = vld [vmem:[%s1203 + $0x20] sm:$0xf]
      %v1229 = vld [vmem:[%s1203 + $0x24] sm:$0x1]
      %v1230 = vld [vmem:[%s1203 + $0x28] sm:$0xf]
      %v1231 = vld [vmem:[%s1203 + $0x2c] sm:$0x1]
      %v1232 = vld [vmem:[%s1203 + $0x30] sm:$0xf]
      %v1233 = vld [vmem:[%s1203 + $0x34] sm:$0x1]
      %v1234 = vld [vmem:[%s1203 + $0x38] sm:$0xf]
      %v1235 = vld [vmem:[%s1203 + $0x3c] sm:$0x1]
      %v1237 = vshrl.u32 %v1220, 16
      %v1239 = vrot.slane %v1237, 4
      %v1240 = vshll.u32 %v1220, 16
      %v1242 = vrot.slane %v1240, 5
      %v1243 = vor.u32 %v1239, %v1242
      %v1244 = vrot.slane %v1243, 4
      %v1246 = vshll.u32 %v1221, 16
      %v1248 = vrot.slane %v1246, 5
      %v1249 = vsel %vm265, %v1244, %v1248
      %v1251 = vshrl.u32 %v1222, 16
      %v1253 = vrot.slane %v1251, 4
      %v1254 = vshll.u32 %v1222, 16
      %v1256 = vrot.slane %v1254, 5
      %v1257 = vor.u32 %v1253, %v1256
      %v1258 = vrot.slane %v1257, 4
      %v1260 = vshll.u32 %v1223, 16
      %v1262 = vrot.slane %v1260, 5
      %v1263 = vsel %vm265, %v1258, %v1262
      %v1265 = vshrl.u32 %v1224, 16
      %v1267 = vrot.slane %v1265, 4
      %v1268 = vshll.u32 %v1224, 16
      %v1270 = vrot.slane %v1268, 5
      %v1271 = vor.u32 %v1267, %v1270
      %v1272 = vrot.slane %v1271, 4
      %v1274 = vshll.u32 %v1225, 16
      %v1276 = vrot.slane %v1274, 5
      %v1277 = vsel %vm265, %v1272, %v1276
      %v1279 = vshrl.u32 %v1226, 16
      %v1281 = vrot.slane %v1279, 4
      %v1282 = vshll.u32 %v1226, 16
      %v1284 = vrot.slane %v1282, 5
      %v1285 = vor.u32 %v1281, %v1284
      %v1286 = vrot.slane %v1285, 4
      %v1288 = vshll.u32 %v1227, 16
      %v1290 = vrot.slane %v1288, 5
      %v1291 = vsel %vm265, %v1286, %v1290
      %v1293 = vshrl.u32 %v1228, 16
      %v1295 = vrot.slane %v1293, 4
      %v1296 = vshll.u32 %v1228, 16
      %v1298 = vrot.slane %v1296, 5
      %v1299 = vor.u32 %v1295, %v1298
      %v1300 = vrot.slane %v1299, 4
      %v1302 = vshll.u32 %v1229, 16
      %v1304 = vrot.slane %v1302, 5
      %v1305 = vsel %vm265, %v1300, %v1304
      %v1307 = vshrl.u32 %v1230, 16
      %v1309 = vrot.slane %v1307, 4
      %v1310 = vshll.u32 %v1230, 16
      %v1312 = vrot.slane %v1310, 5
      %v1313 = vor.u32 %v1309, %v1312
      %v1314 = vrot.slane %v1313, 4
      %v1316 = vshll.u32 %v1231, 16
      %v1318 = vrot.slane %v1316, 5
      %v1319 = vsel %vm265, %v1314, %v1318
      %v1321 = vshrl.u32 %v1232, 16
      %v1323 = vrot.slane %v1321, 4
      %v1324 = vshll.u32 %v1232, 16
      %v1326 = vrot.slane %v1324, 5
      %v1327 = vor.u32 %v1323, %v1326
      %v1328 = vrot.slane %v1327, 4
      %v1330 = vshll.u32 %v1233, 16
      %v1332 = vrot.slane %v1330, 5
      %v1333 = vsel %vm265, %v1328, %v1332
      %v1335 = vshrl.u32 %v1234, 16
      %v1337 = vrot.slane %v1335, 4
      %v1338 = vshll.u32 %v1234, 16
      %v1340 = vrot.slane %v1338, 5
      %v1341 = vor.u32 %v1337, %v1340
      %v1342 = vrot.slane %v1341, 4
      %v1344 = vshll.u32 %v1235, 16
      %v1346 = vrot.slane %v1344, 5
      %v1347 = vsel %vm265, %v1342, %v1346
      %1348 = vrot.lane.b32.xlu0 %v1249, 64
      %v1349 = vpop.permute.xlu0 %1348
      %1350 = vrot.lane.b32.xlu0 %v1263, 64
      %v1351 = vpop.permute.xlu0 %1350
      %1352 = vrot.lane.b32.xlu0 %v1277, 64
      %v1353 = vpop.permute.xlu0 %1352
      %1354 = vrot.lane.b32.xlu0 %v1291, 64
      %v1355 = vpop.permute.xlu0 %1354
      %1356 = vrot.lane.b32.xlu0 %v1305, 64
      %v1357 = vpop.permute.xlu0 %1356
      %1358 = vrot.lane.b32.xlu0 %v1319, 64
      %v1359 = vpop.permute.xlu0 %1358
      %1360 = vrot.lane.b32.xlu0 %v1333, 64
      %v1361 = vpop.permute.xlu0 %1360
      %1362 = vrot.lane.b32.xlu0 %v1347, 64
      %v1363 = vpop.permute.xlu0 %1362
      %1372 = vst.msk [vmem:[#allocation2] sm:$0xf] %vm402, %v1349
      %1373 = vst.msk [vmem:[#allocation2 + $0x8] sm:$0xf] %vm402, %v1351
      %1374 = vst.msk [vmem:[#allocation2 + $0x10] sm:$0xf] %vm402, %v1353
      %1375 = vst.msk [vmem:[#allocation2 + $0x18] sm:$0xf] %vm402, %v1355
      %1376 = vst.msk [vmem:[#allocation2 + $0x20] sm:$0xf] %vm402, %v1357
      %1377 = vst.msk [vmem:[#allocation2 + $0x28] sm:$0xf] %vm402, %v1359
      %1378 = vst.msk [vmem:[#allocation2 + $0x30] sm:$0xf] %vm402, %v1361
      %1379 = vst.msk [vmem:[#allocation2 + $0x38] sm:$0xf] %vm402, %v1363
      %v1380 = vld [vmem:[%s1203] sm:$0xe]
      %v1381 = vld [vmem:[%s1203 + $0x4] sm:$0x1]
      %v1382 = vld [vmem:[%s1203 + $0x8] sm:$0xe]
      %v1383 = vld [vmem:[%s1203 + $0xc] sm:$0x1]
      %v1384 = vld [vmem:[%s1203 + $0x10] sm:$0xe]
      %v1385 = vld [vmem:[%s1203 + $0x14] sm:$0x1]
      %v1386 = vld [vmem:[%s1203 + $0x18] sm:$0xe]
      %v1387 = vld [vmem:[%s1203 + $0x1c] sm:$0x1]
      %v1388 = vld [vmem:[%s1203 + $0x20] sm:$0xe]
      %v1389 = vld [vmem:[%s1203 + $0x24] sm:$0x1]
      %v1390 = vld [vmem:[%s1203 + $0x28] sm:$0xe]
      %v1391 = vld [vmem:[%s1203 + $0x2c] sm:$0x1]
      %v1392 = vld [vmem:[%s1203 + $0x30] sm:$0xe]
      %v1393 = vld [vmem:[%s1203 + $0x34] sm:$0x1]
      %v1394 = vld [vmem:[%s1203 + $0x38] sm:$0xe]
      %v1395 = vld [vmem:[%s1203 + $0x3c] sm:$0x1]
      %v1412 = vrot.slane %v1380, 5
      %v1413 = vrot.slane %v1412, 4
      %v1414 = vrot.slane %v1381, 5
      %v1415 = vsel %vm445, %v1413, %v1414
      %v1416 = vrot.slane %v1382, 5
      %v1417 = vrot.slane %v1416, 4
      %v1418 = vrot.slane %v1383, 5
      %v1419 = vsel %vm445, %v1417, %v1418
      %v1420 = vrot.slane %v1384, 5
      %v1421 = vrot.slane %v1420, 4
      %v1422 = vrot.slane %v1385, 5
      %v1423 = vsel %vm445, %v1421, %v1422
      %v1424 = vrot.slane %v1386, 5
      %v1425 = vrot.slane %v1424, 4
      %v1426 = vrot.slane %v1387, 5
      %v1427 = vsel %vm445, %v1425, %v1426
      %v1428 = vrot.slane %v1388, 5
      %v1429 = vrot.slane %v1428, 4
      %v1430 = vrot.slane %v1389, 5
      %v1431 = vsel %vm445, %v1429, %v1430
      %v1432 = vrot.slane %v1390, 5
      %v1433 = vrot.slane %v1432, 4
      %v1434 = vrot.slane %v1391, 5
      %v1435 = vsel %vm445, %v1433, %v1434
      %v1436 = vrot.slane %v1392, 5
      %v1437 = vrot.slane %v1436, 4
      %v1438 = vrot.slane %v1393, 5
      %v1439 = vsel %vm445, %v1437, %v1438
      %v1440 = vrot.slane %v1394, 5
      %v1441 = vrot.slane %v1440, 4
      %v1442 = vrot.slane %v1395, 5
      %v1443 = vsel %vm445, %v1441, %v1442
      %1452 = vst.msk [vmem:[#allocation2 + $0x4] sm:$0xf] %vm238, %v1415
      %1453 = vst.msk [vmem:[#allocation2 + $0xc] sm:$0xf] %vm238, %v1419
      %1454 = vst.msk [vmem:[#allocation2 + $0x14] sm:$0xf] %vm238, %v1423
      %1455 = vst.msk [vmem:[#allocation2 + $0x1c] sm:$0xf] %vm238, %v1427
      %1456 = vst.msk [vmem:[#allocation2 + $0x24] sm:$0xf] %vm238, %v1431
      %1457 = vst.msk [vmem:[#allocation2 + $0x2c] sm:$0xf] %vm238, %v1435
      %1458 = vst.msk [vmem:[#allocation2 + $0x34] sm:$0xf] %vm238, %v1439
      %1459 = vst.msk [vmem:[#allocation2 + $0x3c] sm:$0xf] %vm238, %v1443
      %v1460 = vld [vmem:[#allocation2] sm:$0xff]
      %v1461 = vld [vmem:[#allocation2 + $0x8] sm:$0xff]
      %v1462 = vld [vmem:[#allocation2 + $0x10] sm:$0xff]
      %v1463 = vld [vmem:[#allocation2 + $0x18] sm:$0xff]
      %v1464 = vld [vmem:[#allocation2 + $0x20] sm:$0xff]
      %v1465 = vld [vmem:[#allocation2 + $0x28] sm:$0xff]
      %v1466 = vld [vmem:[#allocation2 + $0x30] sm:$0xff]
      %v1467 = vld [vmem:[#allocation2 + $0x38] sm:$0xff]
      %s1468 = scalar_lea.vmem %s210, 192
      %v1469 = vld [vmem:[%s1468] sm:$0xf]
      %v1470 = vld [vmem:[%s1468 + $0x4] sm:$0xf]
      %v1471 = vld [vmem:[%s1468 + $0x8] sm:$0xf]
      %v1472 = vld [vmem:[%s1468 + $0xc] sm:$0xf]
      %v1473 = vld [vmem:[%s1468 + $0x10] sm:$0xf]
      %v1474 = vld [vmem:[%s1468 + $0x14] sm:$0xf]
      %v1475 = vld [vmem:[%s1468 + $0x18] sm:$0xf]
      %v1476 = vld [vmem:[%s1468 + $0x1c] sm:$0xf]
      %v1477 = vld [vmem:[%s1468 + $0x20] sm:$0xf]
      %v1478 = vld [vmem:[%s1468 + $0x24] sm:$0xf]
      %v1479 = vld [vmem:[%s1468 + $0x28] sm:$0xf]
      %v1480 = vld [vmem:[%s1468 + $0x2c] sm:$0xf]
      %v1481 = vld [vmem:[%s1468 + $0x30] sm:$0xf]
      %v1482 = vld [vmem:[%s1468 + $0x34] sm:$0xf]
      %v1483 = vld [vmem:[%s1468 + $0x38] sm:$0xf]
      %v1484 = vld [vmem:[%s1468 + $0x3c] sm:$0xf]
      %v1485 = vld [vmem:[%s1468 + $0x40] sm:$0xf]
      %v1486 = vld [vmem:[%s1468 + $0x44] sm:$0xf]
      %v1487 = vld [vmem:[%s1468 + $0x48] sm:$0xf]
      %v1488 = vld [vmem:[%s1468 + $0x4c] sm:$0xf]
      %v1489 = vld [vmem:[%s1468 + $0x50] sm:$0xf]
      %v1490 = vld [vmem:[%s1468 + $0x54] sm:$0xf]
      %v1491 = vld [vmem:[%s1468 + $0x58] sm:$0xf]
      %v1492 = vld [vmem:[%s1468 + $0x5c] sm:$0xf]
      %v1501 = vunpack.c.l.b16 %v1460
      %v1502 = vunpack.c.h.b16 %v1460
      %v1503 = vunpack.c.l.b16 %v1461
      %v1504 = vunpack.c.h.b16 %v1461
      %v1505 = vunpack.c.l.b16 %v1462
      %v1506 = vunpack.c.h.b16 %v1462
      %v1507 = vunpack.c.l.b16 %v1463
      %v1508 = vunpack.c.h.b16 %v1463
      %v1509 = vunpack.c.l.b16 %v1464
      %v1510 = vunpack.c.h.b16 %v1464
      %v1511 = vunpack.c.l.b16 %v1465
      %v1512 = vunpack.c.h.b16 %v1465
      %v1513 = vunpack.c.l.b16 %v1466
      %v1514 = vunpack.c.h.b16 %v1466
      %v1515 = vunpack.c.l.b16 %v1467
      %v1516 = vunpack.c.h.b16 %v1467
      %v1517 = vpack.c.b16 %v1503, %v1501
      %v1518 = vpack.c.b16 %v1504, %v1502
      %v1519 = vpack.c.b16 %v1507, %v1505
      %v1520 = vpack.c.b16 %v1508, %v1506
      %v1521 = vpack.c.b16 %v1511, %v1509
      %v1522 = vpack.c.b16 %v1512, %v1510
      %v1523 = vpack.c.b16 %v1515, %v1513
      %v1524 = vpack.c.b16 %v1516, %v1514
      %v1553 = vunpack.c.l.b16 %v1469
      %v1554 = vunpack.c.l.b16 %v1470
      %v1555 = vunpack.c.l.b16 %v1471
      %v1556 = vunpack.c.l.b16 %v1472
      %v1557 = vunpack.c.l.b16 %v1473
      %v1558 = vunpack.c.l.b16 %v1474
      %v1559 = vunpack.c.l.b16 %v1475
      %v1560 = vunpack.c.l.b16 %v1476
      %v1561 = vunpack.c.l.b16 %v1477
      %v1562 = vunpack.c.l.b16 %v1478
      %v1563 = vunpack.c.l.b16 %v1479
      %v1564 = vunpack.c.l.b16 %v1480
      %v1565 = vunpack.c.l.b16 %v1481
      %v1566 = vunpack.c.l.b16 %v1482
      %v1567 = vunpack.c.l.b16 %v1483
      %v1568 = vunpack.c.l.b16 %v1484
      %v1569 = vunpack.c.l.b16 %v1485
      %v1570 = vunpack.c.l.b16 %v1486
      %v1571 = vunpack.c.l.b16 %v1487
      %v1572 = vunpack.c.l.b16 %v1488
      %v1573 = vunpack.c.l.b16 %v1489
      %v1574 = vunpack.c.l.b16 %v1490
      %v1575 = vunpack.c.l.b16 %v1491
      %v1576 = vunpack.c.l.b16 %v1492
      %v1577 = vpack.c.b16 %v1554, %v1553
      %v1578 = vpack.c.b16 %v1556, %v1555
      %v1579 = vpack.c.b16 %v1558, %v1557
      %v1580 = vpack.c.b16 %v1560, %v1559
      %v1581 = vpack.c.b16 %v1562, %v1561
      %v1582 = vpack.c.b16 %v1564, %v1563
      %v1583 = vpack.c.b16 %v1566, %v1565
      %v1584 = vpack.c.b16 %v1568, %v1567
      %v1585 = vpack.c.b16 %v1570, %v1569
      %v1586 = vpack.c.b16 %v1572, %v1571
      %v1587 = vpack.c.b16 %v1574, %v1573
      %v1588 = vpack.c.b16 %v1576, %v1575
      %v1602 = vsel %vm634, %v1518, 0
      %v1605 = vsel %vm634, %v1520, 0
      %v1608 = vsel %vm634, %v1522, 0
      %v1611 = vsel %vm634, %v1524, 0
      %1613 = vmatprep.subr.bf16.mxu0 0
      %1614 = vmatpush1.bf16.msra.mxu0 %v1577
      %1615 = vmatprep.subr.bf16.mxu0 0
      %1616 = vmatpush1.bf16.msra.mxu0 %v1578
      %1617 = vmatprep.subr.bf16.mxu0 0
      %1618 = vmatpush1.bf16.msra.mxu0 %v1579
      %1619 = vmatprep.subr.bf16.mxu0 0
      %1620 = vmatpush1.bf16.msra.mxu0 %v1580
      %1621 = vmatprep.subr.bf16.mxu0 0
      %1622 = vmatpush1.bf16.msra.mxu0 %v1581
      %1623 = vmatprep.subr.bf16.mxu0 0
      %1624 = vmatpush1.bf16.msra.mxu0 %v1582
      %1625 = vmatprep.subr.bf16.mxu0 0
      %1626 = vmatpush1.bf16.msra.mxu0 %v1583
      %1627 = vmatprep.subr.bf16.mxu0 0
      %1628 = vmatpush1.bf16.msra.mxu0 %v1584
      %1629 = vmatprep.subr.bf16.mxu0 0
      %1630 = vmatpush1.bf16.msra.mxu0 %v1585
      %1631 = vmatprep.subr.bf16.mxu0 0
      %1632 = vmatpush1.bf16.msra.mxu0 %v1586
      %1633 = vmatprep.subr.bf16.mxu0 0
      %1634 = vmatpush1.bf16.msra.mxu0 %v1587
      %1635 = vmatprep.subr.bf16.mxu0 0
      %1636 = vmatpush1.bf16.msra.mxu0 %v1588
      %1637 = vmatprep.subr.bf16.mxu0 0
      %1638 = vmatpush1.bf16.msra.mxu0 0
      %1639 = vmatprep.subr.bf16.mxu0 0
      %1640 = vmatpush1.bf16.msra.mxu0 0
      %1641 = vmatprep.subr.bf16.mxu0 0
      %1642 = vmatpush1.bf16.msra.mxu0 0
      %1643 = vmatprep.subr.bf16.mxu0 0
      %1644 = vmatpush1.bf16.msra.mxu0 0
      %1645 = vmatprep.mubr.bf16.mxu0 %v1602
      %1646 = vmatmul.mubr.bf16.gmra.mrb[0].mxu0 %v1517
      %v1647 = vpop.f32.mrb[0].mxu0
      %v1648 = vadd.f32 0.0, %v1647
      %v1649 = vpop.f32.mrb[0].mxu0
      %v1650 = vpop.f32.mrb[0].mxu0
      %v1651 = vadd.f32 0.0, %v1650
      %v1652 = vpop.f32.mrb[0].mxu0
      %1653 = vmatprep.mubr.bf16.mxu0 %v1605
      %1654 = vmatmul.mubr.bf16.gmra.mrb[0].mxu0 %v1519
      %v1655 = vpop.f32.mrb[0].mxu0
      %v1656 = vadd.f32 0.0, %v1655
      %v1657 = vpop.f32.mrb[0].mxu0
      %v1658 = vpop.f32.mrb[0].mxu0
      %v1659 = vadd.f32 0.0, %v1658
      %v1660 = vpop.f32.mrb[0].mxu0
      %1661 = vmatprep.mubr.bf16.mxu0 %v1608
      %1662 = vmatmul.mubr.bf16.gmra.mrb[0].mxu0 %v1521
      %v1663 = vpop.f32.mrb[0].mxu0
      %v1664 = vadd.f32 0.0, %v1663
      %v1665 = vpop.f32.mrb[0].mxu0
      %v1666 = vpop.f32.mrb[0].mxu0
      %v1667 = vadd.f32 0.0, %v1666
      %v1668 = vpop.f32.mrb[0].mxu0
      %1669 = vmatprep.mubr.bf16.mxu0 %v1611
      %1670 = vmatmul.mubr.bf16.gmra.mrb[0].mxu0 %v1523
      %v1671 = vpop.f32.mrb[0].mxu0
      %v1672 = vadd.f32 0.0, %v1671
      %v1673 = vpop.f32.mrb[0].mxu0
      %v1674 = vpop.f32.mrb[0].mxu0
      %v1675 = vadd.f32 0.0, %v1674
      %v1676 = vpop.f32.mrb[0].mxu0
      %1677 = vdwg.mxu0
      %v1678 = vadd.f32 %v1195, %v1648
      %v1679 = vadd.f32 %v1196, %v1651
      %v1680 = vadd.f32 %v1197, %v1656
      %v1681 = vadd.f32 %v1198, %v1659
      %v1682 = vadd.f32 %v1199, %v1664
      %v1683 = vadd.f32 %v1200, %v1667
      %v1684 = vadd.f32 %v1201, %v1672
      %v1685 = vadd.f32 %v1202, %v1675
      %v1686 = vmax.f32 %v1678, 0.0
      %v1687 = vmax.f32 %v1679, 0.0
      %v1688 = vmax.f32 %v1680, 0.0
      %v1689 = vmax.f32 %v1681, 0.0
      %v1690 = vmax.f32 %v1682, 0.0
      %v1691 = vmax.f32 %v1683, 0.0
      %v1692 = vmax.f32 %v1684, 0.0
      %v1693 = vmax.f32 %v1685, 0.0
      %v1694 = vpack.c.bf16 %v1686, %v1686
      %v1695 = vpack.c.bf16 %v1687, %v1687
      %v1696 = vpack.c.bf16 %v1688, %v1688
      %v1697 = vpack.c.bf16 %v1689, %v1689
      %v1698 = vpack.c.bf16 %v1690, %v1690
      %v1699 = vpack.c.bf16 %v1691, %v1691
      %v1700 = vpack.c.bf16 %v1692, %v1692
      %v1701 = vpack.c.bf16 %v1693, %v1693
      %1702 = vst [vmem:[%s221] sm:$0xf] 0
      %1703 = vst [vmem:[%s221 + $0x4] sm:$0x1] 0
      %1704 = vst [vmem:[%s221 + $0x8] sm:$0xf] 0
      %1705 = vst [vmem:[%s221 + $0xc] sm:$0x1] 0
      %1706 = vst [vmem:[%s221 + $0x10] sm:$0xf] 0
      %1707 = vst [vmem:[%s221 + $0x14] sm:$0x1] 0
      %1708 = vst [vmem:[%s221 + $0x18] sm:$0xf] 0
      %1709 = vst [vmem:[%s221 + $0x1c] sm:$0x1] 0
      %1710 = vst [vmem:[%s221 + $0x20] sm:$0xf] 0
      %1711 = vst [vmem:[%s221 + $0x24] sm:$0x1] 0
      %1712 = vst [vmem:[%s221 + $0x28] sm:$0xf] 0
      %1713 = vst [vmem:[%s221 + $0x2c] sm:$0x1] 0
      %1714 = vst [vmem:[%s221 + $0x30] sm:$0xf] 0
      %1715 = vst [vmem:[%s221 + $0x34] sm:$0x1] 0
      %1716 = vst [vmem:[%s221 + $0x38] sm:$0xf] 0
      %1717 = vst [vmem:[%s221 + $0x3c] sm:$0x1] 0
      %1718 = vst [vmem:[%s221 + $0x40] sm:$0xf] 0
      %1719 = vst [vmem:[%s221 + $0x44] sm:$0x1] 0
      %1720 = vst [vmem:[%s221 + $0x48] sm:$0xf] 0
      %1721 = vst [vmem:[%s221 + $0x4c] sm:$0x1] 0
      %v1730 = vunpack.c.l.b16 %v1694
      %v1731 = vunpack.c.l.b16 %v1695
      %v1732 = vunpack.c.l.b16 %v1696
      %v1733 = vunpack.c.l.b16 %v1697
      %v1734 = vunpack.c.l.b16 %v1698
      %v1735 = vunpack.c.l.b16 %v1699
      %v1736 = vunpack.c.l.b16 %v1700
      %v1737 = vunpack.c.l.b16 %v1701
      %v1738 = vpack.c.b16 %v1730, %v1730
      %v1739 = vpack.c.b16 %v1731, %v1731
      %v1740 = vpack.c.b16 %v1732, %v1732
      %v1741 = vpack.c.b16 %v1733, %v1733
      %v1742 = vpack.c.b16 %v1734, %v1734
      %v1743 = vpack.c.b16 %v1735, %v1735
      %v1744 = vpack.c.b16 %v1736, %v1736
      %v1745 = vpack.c.b16 %v1737, %v1737
      %v1747 = vshrl.u32 %v1738, 16
      %v1749 = vrot.slane %v1747, 7
      %v1750 = vshll.u32 %v1738, 16
      %v1752 = vor.u32 %v1749, %v1750
      %v1753 = vrot.slane %v1749, 4
      %v1755 = vshrl.u32 %v1739, 16
      %v1757 = vrot.slane %v1755, 7
      %v1758 = vshll.u32 %v1739, 16
      %v1760 = vor.u32 %v1757, %v1758
      %v1761 = vrot.slane %v1757, 4
      %v1763 = vshrl.u32 %v1740, 16
      %v1765 = vrot.slane %v1763, 7
      %v1766 = vshll.u32 %v1740, 16
      %v1768 = vor.u32 %v1765, %v1766
      %v1769 = vrot.slane %v1765, 4
      %v1771 = vshrl.u32 %v1741, 16
      %v1773 = vrot.slane %v1771, 7
      %v1774 = vshll.u32 %v1741, 16
      %v1776 = vor.u32 %v1773, %v1774
      %v1777 = vrot.slane %v1773, 4
      %v1779 = vshrl.u32 %v1742, 16
      %v1781 = vrot.slane %v1779, 7
      %v1782 = vshll.u32 %v1742, 16
      %v1784 = vor.u32 %v1781, %v1782
      %v1785 = vrot.slane %v1781, 4
      %v1787 = vshrl.u32 %v1743, 16
      %v1789 = vrot.slane %v1787, 7
      %v1790 = vshll.u32 %v1743, 16
      %v1792 = vor.u32 %v1789, %v1790
      %v1793 = vrot.slane %v1789, 4
      %v1795 = vshrl.u32 %v1744, 16
      %v1797 = vrot.slane %v1795, 7
      %v1798 = vshll.u32 %v1744, 16
      %v1800 = vor.u32 %v1797, %v1798
      %v1801 = vrot.slane %v1797, 4
      %v1803 = vshrl.u32 %v1745, 16
      %v1805 = vrot.slane %v1803, 7
      %v1806 = vshll.u32 %v1745, 16
      %v1808 = vor.u32 %v1805, %v1806
      %v1809 = vrot.slane %v1805, 4
      %s1826 = scalar_lea.vmem %s221, 8
      %vm1827 = vcmask 1043456
      %vm1828 = vsmask.f32 7938
      %vm1829 = vmand %vm1827, %vm1828
      %v1830 = vld [vmem:[%s1826] sm:$0xf]
      %v1831 = vsel %vm1829, %v1752, %v1830
      %1832 = vst [vmem:[%s1826] sm:$0xf] %v1831
      %vm1833 = vcmask 1040384
      %vm1834 = vsmask.f32 256
      %vm1835 = vmand %vm1833, %vm1834
      %v1836 = vld [vmem:[%s1826 + $0x4] sm:$0x1]
      %v1837 = vsel %vm1835, %v1753, %v1836
      %1838 = vst [vmem:[%s1826 + $0x4] sm:$0x1] %v1837
      %v1839 = vld [vmem:[%s1826 + $0x8] sm:$0xf]
      %v1840 = vsel %vm1829, %v1760, %v1839
      %1841 = vst [vmem:[%s1826 + $0x8] sm:$0xf] %v1840
      %v1842 = vld [vmem:[%s1826 + $0xc] sm:$0x1]
      %v1843 = vsel %vm1835, %v1761, %v1842
      %1844 = vst [vmem:[%s1826 + $0xc] sm:$0x1] %v1843
      %v1845 = vld [vmem:[%s1826 + $0x10] sm:$0xf]
      %v1846 = vsel %vm1829, %v1768, %v1845
      %1847 = vst [vmem:[%s1826 + $0x10] sm:$0xf] %v1846
      %v1848 = vld [vmem:[%s1826 + $0x14] sm:$0x1]
      %v1849 = vsel %vm1835, %v1769, %v1848
      %1850 = vst [vmem:[%s1826 + $0x14] sm:$0x1] %v1849
      %v1851 = vld [vmem:[%s1826 + $0x18] sm:$0xf]
      %v1852 = vsel %vm1829, %v1776, %v1851
      %1853 = vst [vmem:[%s1826 + $0x18] sm:$0xf] %v1852
      %v1854 = vld [vmem:[%s1826 + $0x1c] sm:$0x1]
      %v1855 = vsel %vm1835, %v1777, %v1854
      %1856 = vst [vmem:[%s1826 + $0x1c] sm:$0x1] %v1855
      %v1857 = vld [vmem:[%s1826 + $0x20] sm:$0xf]
      %v1858 = vsel %vm1829, %v1784, %v1857
      %1859 = vst [vmem:[%s1826 + $0x20] sm:$0xf] %v1858
      %v1860 = vld [vmem:[%s1826 + $0x24] sm:$0x1]
      %v1861 = vsel %vm1835, %v1785, %v1860
      %1862 = vst [vmem:[%s1826 + $0x24] sm:$0x1] %v1861
      %v1863 = vld [vmem:[%s1826 + $0x28] sm:$0xf]
      %v1864 = vsel %vm1829, %v1792, %v1863
      %1865 = vst [vmem:[%s1826 + $0x28] sm:$0xf] %v1864
      %v1866 = vld [vmem:[%s1826 + $0x2c] sm:$0x1]
      %v1867 = vsel %vm1835, %v1793, %v1866
      %1868 = vst [vmem:[%s1826 + $0x2c] sm:$0x1] %v1867
      %v1869 = vld [vmem:[%s1826 + $0x30] sm:$0xf]
      %v1870 = vsel %vm1829, %v1800, %v1869
      %1871 = vst [vmem:[%s1826 + $0x30] sm:$0xf] %v1870
      %v1872 = vld [vmem:[%s1826 + $0x34] sm:$0x1]
      %v1873 = vsel %vm1835, %v1801, %v1872
      %1874 = vst [vmem:[%s1826 + $0x34] sm:$0x1] %v1873
      %v1875 = vld [vmem:[%s1826 + $0x38] sm:$0xf]
      %v1876 = vsel %vm1829, %v1808, %v1875
      %1877 = vst [vmem:[%s1826 + $0x38] sm:$0xf] %v1876
      %v1878 = vld [vmem:[%s1826 + $0x3c] sm:$0x1]
      %v1879 = vsel %vm1835, %v1809, %v1878
      %1880 = vst [vmem:[%s1826 + $0x3c] sm:$0x1] %v1879
      %p1881 = scmp.lt.s32.totalorder %s19, 1
      %s1882 = scalar_select %p1881, %s19, 1
      %p1883 = scmp.lt.s32.totalorder %s18, 0
      %s1884 = scalar_select %p1883, %s18, 0
      %s1885 = smul.addr %s1882, 20
      %s1886 = sadd.s32 %s1884, %s1885
      %s1887 = smul.addr %s1886, 4
      %s1888 = scalar_lea.vmem %s3, %s1887
      // Predicated region
      $region33: #{truncated_vgg19_apply.6} parent=31 // pred_check
        %p1889 = pneg %p124
      $region34: #{truncated_vgg19_apply.6} parent=31 // pred_check_branch
        %1891 = sbr.rel (%p1889) target = $region36
      $region35: #{truncated_vgg19_apply.6} parent=31 // pred_region
        _
      $region36: #{truncated_vgg19_apply.6} parent=31 // pred_fallthru
        _
    $region32: #{truncated_vgg19_apply.6} parent=5 // pred_fallthru
      _
    %p1892 = scmp.le.s32.totalorder 2, %s9
    // Predicated region
    $region37: #{truncated_vgg19_apply.6} parent=5 // pred_check
      %p1893 = pneg %p1892
    $region38: #{truncated_vgg19_apply.6} parent=5 // pred_check_branch
      %1895 = sbr.rel (%p1893) target = $region40
    $region39: #{truncated_vgg19_apply.6} parent=5 // pred_region
      %s1896 = ssub.s32 %s9, 2
      // Predicated region
      $region41: #{truncated_vgg19_apply.6} parent=39 // pred_check
        %p1897 = pneg %p130
      $region42: #{truncated_vgg19_apply.6} parent=39 // pred_check_branch
        %1899 = sbr.rel (%p1897) target = $region44
      $region43: #{truncated_vgg19_apply.6} parent=39 // pred_region
        %p1900 = scmp.lt.s32.totalorder %s21, 1
        %s1901 = scalar_select %p1900, %s21, 1
        %p1902 = scmp.lt.s32.totalorder %s20, 0
        %s1903 = scalar_select %p1902, %s20, 0
        %s1904 = smul.addr %s1901, 20
        %s1905 = sadd.s32 %s1903, %s1904
        %s1906 = smul.addr %s1905, 4
        %s1907 = scalar_lea.vmem %s3, %s1906
      $region44: #{truncated_vgg19_apply.6} parent=39 // pred_fallthru
        _
    $region40: #{truncated_vgg19_apply.6} parent=5 // pred_fallthru
      _
  $region6: #{truncated_vgg19_apply.6} parent=0 // loop_footer
    %s13 = sadd.s32 1, %s9
  $region7: #{truncated_vgg19_apply.6} parent=0 // loop_footer_branch
    %8 = sbr.rel target = $region3
  $region8: #{truncated_vgg19_apply.6} parent=0 // loop_exit
    _

// kernel: truncated_vgg19_apply.5
$region0: #{truncated_vgg19_apply.5}
  #allocation0 [shape = 'u32[]', space=smem, size = 0x4, offset = 0x4, fixed_abs, tag = 'smem constant byte address 0x4 - core index']
  #allocation1 [shape = 'u32[144,128]{1,0:T(1,128)}', space=vmem, size = 0x12000, scoped, tag = 'internal scratch']
  #allocation2 [shape = 'bf16[16,16,192]{2,1,0:T(16,128)(2,1)}', space=vmem, size = 0x20000, scoped, tag = 'scratch operand']
  #allocation3 [shape = 'f32[8,16,64]{2,1,0:T(8,128)}', space=vmem, size = 0x10000, scoped, tag = 'scratch operand']
  %s0 = inlined_call_operand.vmem [shape: bf16[2,18,18,64], index: 0, kind: input, shape index: {}]
  %s1 = inlined_call_operand.vmem [shape: bf16[3,192,64], index: 1, kind: input, shape index: {}]
  %s2 = inlined_call_operand.vmem [shape: f32[1,64], index: 2, kind: input, shape index: {}]
  %s3 = inlined_call_operand.vmem [shape: bf16[2,10,10,64], index: 3, kind: output, shape index: {}]
  %s4 = sld [smem:[#allocation0]]
  $region45: #{truncated_vgg19_apply.5} parent=0
    _
  %s6 = ssub.s32 1, %s4
  %s7 = scalar_select 0, %s6, %s4
  loop: start=0, step=1, limit=4
  $region2: #{truncated_vgg19_apply.5} parent=0 // loop_pre_header
    _
  $region3: #{truncated_vgg19_apply.5} parent=0 // loop_header
    %s9 = sphi 0, %s13
    %p10 = scmp.ge.s32.totalorder %s9, 4
    %s16 = sphi 0, %s28
    %s17 = sphi 0, %s24
    %s18 = sphi 0, %s16
    %s19 = sphi 0, %s17
    %s20 = sphi 0, %s18
    %s21 = sphi 0, %s19
    %s31 = sphi 0, %s33
    %s34 = sphi 0, %s31
    %s35 = sphi 0, %s34
    %s51 = sphi 0, %s35
    %s57 = sphi 0, %s59
    %s60 = sphi 0, %s57
    %s61 = sphi 0, %s60
    %s77 = sphi 0, %s61
    %s83 = sphi 0, %s85
    %s86 = sphi 0, %s83
    %s87 = sphi 0, %s86
    %s103 = sphi 0, %s87
    %s111 = sphi 0, %s113
    %s114 = sphi 0, %s111
    %s115 = sphi 0, %s114
    %s131 = sphi 0, %s115
  $region4: #{truncated_vgg19_apply.5} parent=0 // loop_header_branch
    %12 = sbr.rel (%p10) target = $region8
  $region5: #{truncated_vgg19_apply.5} parent=0 // loop_body
    %s14 = ssub.s32 %s9, 1
    %s15 = ssub.s32 %s9, 2
    %s22 = sadd.s32 1, %s17
    %p23 = scmp.ge.s32.totalorder %s22, 2
    %s24 = scalar_select %p23, 0, %s22
    %s25 = sadd.s32 1, %s16
    %s26 = scalar_select %p23, %s25, %s16
    %p27 = scmp.ge.s32.totalorder %s26, 1
    %s28 = scalar_select %p27, 0, %s26
    %s29 = ssub.s32 %s17, %s24
    %p30 = scmp.eq.s32.totalorder %s29, 0
    %s32 = sadd.s32 %s31, 1
    %s33 = scalar_select %p30, %s31, %s32
    %p36 = pneg %p30
    %p37 = scmp.eq.s32.totalorder %s9, 1
    %p38 = por %p36, %p37
    %p39 = scmp.ne.s32.totalorder %s31, %s34
    %p40 = scmp.eq.s32.totalorder %s9, 0
    %p41 = por %p39, %p40
    %p42 = scmp.ne.s32.totalorder %s31, %s34
    %p43 = scmp.eq.s32.totalorder %s14, 1
    %p44 = por %p42, %p43
    %p45 = scmp.ne.s32.totalorder %s34, %s35
    %p46 = scmp.eq.s32.totalorder %s14, 0
    %p47 = por %p45, %p46
    %p48 = scmp.ne.s32.totalorder %s34, %s35
    %p49 = scmp.eq.s32.totalorder %s15, 1
    %p50 = por %p48, %p49
    %p52 = scmp.ne.s32.totalorder %s35, %s51
    %p53 = scmp.eq.s32.totalorder %s15, 0
    %p54 = por %p52, %p53
    %s55 = ssub.s32 %s16, %s28
    %p56 = scmp.eq.s32.totalorder %s55, 0
    %s58 = sadd.s32 %s57, 1
    %s59 = scalar_select %p56, %s57, %s58
    %p62 = pneg %p56
    %p63 = scmp.eq.s32.totalorder %s9, 1
    %p64 = por %p62, %p63
    %p65 = scmp.ne.s32.totalorder %s57, %s60
    %p66 = scmp.eq.s32.totalorder %s9, 0
    %p67 = por %p65, %p66
    %p68 = scmp.ne.s32.totalorder %s57, %s60
    %p69 = scmp.eq.s32.totalorder %s14, 1
    %p70 = por %p68, %p69
    %p71 = scmp.ne.s32.totalorder %s60, %s61
    %p72 = scmp.eq.s32.totalorder %s14, 0
    %p73 = por %p71, %p72
    %p74 = scmp.ne.s32.totalorder %s60, %s61
    %p75 = scmp.eq.s32.totalorder %s15, 1
    %p76 = por %p74, %p75
    %p78 = scmp.ne.s32.totalorder %s61, %s77
    %p79 = scmp.eq.s32.totalorder %s15, 0
    %p80 = por %p78, %p79
    %s81 = ssub.s32 %s16, %s28
    %p82 = scmp.eq.s32.totalorder %s81, 0
    %s84 = sadd.s32 %s83, 1
    %s85 = scalar_select %p82, %s83, %s84
    %p88 = pneg %p82
    %p89 = scmp.eq.s32.totalorder %s9, 1
    %p90 = por %p88, %p89
    %p91 = scmp.ne.s32.totalorder %s83, %s86
    %p92 = scmp.eq.s32.totalorder %s9, 0
    %p93 = por %p91, %p92
    %p94 = scmp.ne.s32.totalorder %s83, %s86
    %p95 = scmp.eq.s32.totalorder %s14, 1
    %p96 = por %p94, %p95
    %p97 = scmp.ne.s32.totalorder %s86, %s87
    %p98 = scmp.eq.s32.totalorder %s14, 0
    %p99 = por %p97, %p98
    %p100 = scmp.ne.s32.totalorder %s86, %s87
    %p101 = scmp.eq.s32.totalorder %s15, 1
    %p102 = por %p100, %p101
    %p104 = scmp.ne.s32.totalorder %s87, %s103
    %p105 = scmp.eq.s32.totalorder %s15, 0
    %p106 = por %p104, %p105
    %s107 = ssub.s32 %s17, %s24
    %s108 = ssub.s32 %s16, %s28
    %s109 = sor.u32 %s107, %s108
    %p110 = scmp.eq.s32.totalorder %s109, 0
    %s112 = sadd.s32 %s111, 1
    %s113 = scalar_select %p110, %s111, %s112
    %p116 = pneg %p110
    %p117 = scmp.eq.s32.totalorder %s9, 1
    %p118 = por %p116, %p117
    %p119 = scmp.ne.s32.totalorder %s111, %s114
    %p120 = scmp.eq.s32.totalorder %s9, 0
    %p121 = por %p119, %p120
    %p122 = scmp.ne.s32.totalorder %s111, %s114
    %p123 = scmp.eq.s32.totalorder %s14, 1
    %p124 = por %p122, %p123
    %p125 = scmp.ne.s32.totalorder %s114, %s115
    %p126 = scmp.eq.s32.totalorder %s14, 0
    %p127 = por %p125, %p126
    %p128 = scmp.ne.s32.totalorder %s114, %s115
    %p129 = scmp.eq.s32.totalorder %s15, 1
    %p130 = por %p128, %p129
    %p132 = scmp.ne.s32.totalorder %s115, %s131
    %p133 = scmp.eq.s32.totalorder %s15, 0
    %p134 = por %p132, %p133
    %p135 = scmp.le.s32.totalorder 1, %s9
    %p136 = scmp.lt.s32.totalorder %s9, 3
    %p137 = pnand %p135, %p136
    %p138 = pneg %p137
    // Predicated region
    $region9: #{truncated_vgg19_apply.5} parent=5 // pred_check
      _
    $region10: #{truncated_vgg19_apply.5} parent=5 // pred_check_branch
      %140 = sbr.rel (%p137) target = $region12
    $region11: #{truncated_vgg19_apply.5} parent=5 // pred_region
      %s141 = ssub.s32 %s9, 1
      // Predicated region
      $region13: #{truncated_vgg19_apply.5} parent=11 // pred_check
        %p142 = pneg %p73
      $region14: #{truncated_vgg19_apply.5} parent=11 // pred_check_branch
        %144 = sbr.rel (%p142) target = $region16
      $region15: #{truncated_vgg19_apply.5} parent=11 // pred_region
        %p145 = scmp.lt.s32.totalorder %s18, 0
        %s146 = scalar_select %p145, %s18, 0
        %s147 = smul.addr %s146, 4
        %s148 = scalar_lea.vmem %s1, %s147
      $region16: #{truncated_vgg19_apply.5} parent=11 // pred_fallthru
        _
      // Predicated region
      $region17: #{truncated_vgg19_apply.5} parent=11 // pred_check
        %p149 = pneg %p99
      $region18: #{truncated_vgg19_apply.5} parent=11 // pred_check_branch
        %151 = sbr.rel (%p149) target = $region20
      $region19: #{truncated_vgg19_apply.5} parent=11 // pred_region
        %p152 = scmp.lt.s32.totalorder %s18, 0
        %s153 = scalar_select %p152, %s18, 0
        %s154 = scalar_lea.vmem %s2, %s153
      $region20: #{truncated_vgg19_apply.5} parent=11 // pred_fallthru
        _
    $region12: #{truncated_vgg19_apply.5} parent=5 // pred_fallthru
      _
    %p155 = scmp.lt.s32.totalorder %s9, 2
    // Predicated region
    $region21: #{truncated_vgg19_apply.5} parent=5 // pred_check
      %p156 = pneg %p155
    $region22: #{truncated_vgg19_apply.5} parent=5 // pred_check_branch
      %158 = sbr.rel (%p156) target = $region24
    $region23: #{truncated_vgg19_apply.5} parent=5 // pred_region
      // Predicated region
      $region25: #{truncated_vgg19_apply.5} parent=23 // pred_check
        %p159 = pneg %p41
      $region26: #{truncated_vgg19_apply.5} parent=23 // pred_check_branch
        %161 = sbr.rel (%p159) target = $region28
      $region27: #{truncated_vgg19_apply.5} parent=23 // pred_region
        %p162 = scmp.lt.s32.totalorder %s17, 1
        %s163 = scalar_select %p162, %s17, 1
        %s164 = smul.addr %s163, 54
        %s165 = smul.addr %s164, 4
        %s166 = scalar_lea.vmem %s0, %s165
      $region28: #{truncated_vgg19_apply.5} parent=23 // pred_fallthru
        _
    $region24: #{truncated_vgg19_apply.5} parent=5 // pred_fallthru
      _
    %p167 = scmp.le.s32.totalorder 1, %s9
    %p168 = scmp.lt.s32.totalorder %s9, 3
    %p169 = pnand %p167, %p168
    %p170 = pneg %p169
    // Predicated region
    $region29: #{truncated_vgg19_apply.5} parent=5 // pred_check
      _
    $region30: #{truncated_vgg19_apply.5} parent=5 // pred_check_branch
      %172 = sbr.rel (%p169) target = $region32
    $region31: #{truncated_vgg19_apply.5} parent=5 // pred_region
      %s173 = ssub.s32 %s9, 1
      %p174 = scmp.lt.s32.totalorder %s19, 1
      %s175 = scalar_select %p174, %s19, 1
      %s176 = smul.addr %s175, 54
      %s177 = smul.addr %s176, 4
      %s178 = scalar_lea.vmem %s0, %s177
      %p179 = pneg %p47
      %p180 = pneg %p44
      %p181 = scmp.lt.s32.totalorder %s18, 0
      %s182 = scalar_select %p181, %s18, 0
      %s183 = smul.addr %s182, 4
      %s184 = scalar_lea.vmem %s1, %s183
      %p185 = pneg %p73
      %p186 = pneg %p70
      %p187 = scmp.lt.s32.totalorder %s18, 0
      %s188 = scalar_select %p187, %s18, 0
      %s189 = scalar_lea.vmem %s2, %s188
      %p190 = pneg %p99
      %p191 = pneg %p96
      %p192 = pneg %p127
      %p193 = pneg %p124
      %p194 = scmp.lt.s32.totalorder %s19, 1
      %s195 = scalar_select %p194, %s19, 1
      %p196 = scmp.lt.s32.totalorder %s18, 0
      %s197 = scalar_select %p196, %s18, 0
      %s198 = smul.addr %s195, 20
      %s199 = sadd.s32 %s197, %s198
      %s200 = smul.addr %s199, 4
      %s201 = scalar_lea.vmem %s3, %s200
      %p202 = scmp.lt.s32.totalorder %s19, 1
      %s203 = scalar_select %p202, %s19, 1
      %s204 = smul.addr %s203, 54
      %s205 = smul.addr %s204, 4
      %s206 = scalar_lea.vmem %s0, %s205
      %p207 = scmp.lt.s32.totalorder %s18, 0
      %s208 = scalar_select %p207, %s18, 0
      %s209 = smul.addr %s208, 4
      %s210 = scalar_lea.vmem %s1, %s209
      %p211 = scmp.lt.s32.totalorder %s18, 0
      %s212 = scalar_select %p211, %s18, 0
      %s213 = scalar_lea.vmem %s2, %s212
      %p214 = scmp.lt.s32.totalorder %s19, 1
      %s215 = scalar_select %p214, %s19, 1
      %p216 = scmp.lt.s32.totalorder %s18, 0
      %s217 = scalar_select %p216, %s18, 0
      %s218 = smul.addr %s215, 20
      %s219 = sadd.s32 %s217, %s218
      %s220 = smul.addr %s219, 4
      %s221 = scalar_lea.vmem %s3, %s220
      %v223 = vld [vmem:[%s213] sm:$0x1]
      %v225 = vlaneseq
      %v226 = vshrl.u32 %v225, 7
      %v227 = vsub.s32 0, %v226
      %v228 = vrot.slane %v223, %v227
      %v230 = vld [vmem:[%s206] sm:$0xf]
      %v231 = vld [vmem:[%s206 + $0x4] sm:$0xf]
      %v232 = vld [vmem:[%s206 + $0xc] sm:$0xf]
      %v233 = vld [vmem:[%s206 + $0x10] sm:$0xf]
      %v234 = vld [vmem:[%s206 + $0x18] sm:$0xf]
      %v235 = vld [vmem:[%s206 + $0x1c] sm:$0xf]
      %v236 = vld [vmem:[%s206 + $0x24] sm:$0xf]
      %v237 = vld [vmem:[%s206 + $0x28] sm:$0xf]
      %v238 = vld [vmem:[%s206 + $0x30] sm:$0xf]
      %v239 = vld [vmem:[%s206 + $0x34] sm:$0xf]
      %v240 = vld [vmem:[%s206 + $0x3c] sm:$0xf]
      %v241 = vld [vmem:[%s206 + $0x40] sm:$0xf]
      %v242 = vld [vmem:[%s206 + $0x48] sm:$0xf]
      %v243 = vld [vmem:[%s206 + $0x4c] sm:$0xf]
      %v244 = vld [vmem:[%s206 + $0x54] sm:$0xf]
      %v245 = vld [vmem:[%s206 + $0x58] sm:$0xf]
      %v246 = vld [vmem:[%s206 + $0x60] sm:$0xf]
      %v247 = vld [vmem:[%s206 + $0x64] sm:$0xf]
      %v248 = vld [vmem:[%s206 + $0x6c] sm:$0xf]
      %v249 = vld [vmem:[%s206 + $0x70] sm:$0xf]
      %v250 = vld [vmem:[%s206 + $0x78] sm:$0xf]
      %v251 = vld [vmem:[%s206 + $0x7c] sm:$0xf]
      %v252 = vld [vmem:[%s206 + $0x84] sm:$0xf]
      %v253 = vld [vmem:[%s206 + $0x88] sm:$0xf]
      %v254 = vld [vmem:[%s206 + $0x90] sm:$0xf]
      %v255 = vld [vmem:[%s206 + $0x94] sm:$0xf]
      %v256 = vld [vmem:[%s206 + $0x9c] sm:$0xf]
      %v257 = vld [vmem:[%s206 + $0xa0] sm:$0xf]
      %v258 = vld [vmem:[%s206 + $0xa8] sm:$0xf]
      %v259 = vld [vmem:[%s206 + $0xac] sm:$0xf]
      %v260 = vld [vmem:[%s206 + $0xb4] sm:$0xf]
      %v261 = vld [vmem:[%s206 + $0xb8] sm:$0xf]
      %v294 = vunpack.c.l.b16 %v230
      %v295 = vunpack.c.l.b16 %v231
      %v296 = vunpack.c.l.b16 %v232
      %v297 = vunpack.c.l.b16 %v233
      %v298 = vunpack.c.l.b16 %v234
      %v299 = vunpack.c.l.b16 %v235
      %v300 = vunpack.c.l.b16 %v236
      %v301 = vunpack.c.l.b16 %v237
      %v302 = vunpack.c.l.b16 %v238
      %v303 = vunpack.c.l.b16 %v239
      %v304 = vunpack.c.l.b16 %v240
      %v305 = vunpack.c.l.b16 %v241
      %v306 = vunpack.c.l.b16 %v242
      %v307 = vunpack.c.l.b16 %v243
      %v308 = vunpack.c.l.b16 %v244
      %v309 = vunpack.c.l.b16 %v245
      %v310 = vunpack.c.l.b16 %v246
      %v311 = vunpack.c.l.b16 %v247
      %v312 = vunpack.c.l.b16 %v248
      %v313 = vunpack.c.l.b16 %v249
      %v314 = vunpack.c.l.b16 %v250
      %v315 = vunpack.c.l.b16 %v251
      %v316 = vunpack.c.l.b16 %v252
      %v317 = vunpack.c.l.b16 %v253
      %v318 = vunpack.c.l.b16 %v254
      %v319 = vunpack.c.l.b16 %v255
      %v320 = vunpack.c.l.b16 %v256
      %v321 = vunpack.c.l.b16 %v257
      %v322 = vunpack.c.l.b16 %v258
      %v323 = vunpack.c.l.b16 %v259
      %v324 = vunpack.c.l.b16 %v260
      %v325 = vunpack.c.l.b16 %v261
      %v326 = vpack.c.b16 %v295, %v294
      %v327 = vpack.c.b16 %v297, %v296
      %v328 = vpack.c.b16 %v299, %v298
      %v329 = vpack.c.b16 %v301, %v300
      %v330 = vpack.c.b16 %v303, %v302
      %v331 = vpack.c.b16 %v305, %v304
      %v332 = vpack.c.b16 %v307, %v306
      %v333 = vpack.c.b16 %v309, %v308
      %v334 = vpack.c.b16 %v311, %v310
      %v335 = vpack.c.b16 %v313, %v312
      %v336 = vpack.c.b16 %v315, %v314
      %v337 = vpack.c.b16 %v317, %v316
      %v338 = vpack.c.b16 %v319, %v318
      %v339 = vpack.c.b16 %v321, %v320
      %v340 = vpack.c.b16 %v323, %v322
      %v341 = vpack.c.b16 %v325, %v324
      %vm358 = vcmask 523264
      %359 = vst.msk [vmem:[#allocation2] sm:$0xff] %vm358, %v326
      %360 = vst.msk [vmem:[#allocation2 + $0x10] sm:$0xff] %vm358, %v327
      %361 = vst.msk [vmem:[#allocation2 + $0x20] sm:$0xff] %vm358, %v328
      %362 = vst.msk [vmem:[#allocation2 + $0x30] sm:$0xff] %vm358, %v329
      %363 = vst.msk [vmem:[#allocation2 + $0x40] sm:$0xff] %vm358, %v330
      %364 = vst.msk [vmem:[#allocation2 + $0x50] sm:$0xff] %vm358, %v331
      %365 = vst.msk [vmem:[#allocation2 + $0x60] sm:$0xff] %vm358, %v332
      %366 = vst.msk [vmem:[#allocation2 + $0x70] sm:$0xff] %vm358, %v333
      %367 = vst.msk [vmem:[#allocation2 + $0x80] sm:$0xff] %vm358, %v334
      %368 = vst.msk [vmem:[#allocation2 + $0x90] sm:$0xff] %vm358, %v335
      %369 = vst.msk [vmem:[#allocation2 + $0xa0] sm:$0xff] %vm358, %v336
      %370 = vst.msk [vmem:[#allocation2 + $0xb0] sm:$0xff] %vm358, %v337
      %371 = vst.msk [vmem:[#allocation2 + $0xc0] sm:$0xff] %vm358, %v338
      %372 = vst.msk [vmem:[#allocation2 + $0xd0] sm:$0xff] %vm358, %v339
      %373 = vst.msk [vmem:[#allocation2 + $0xe0] sm:$0xff] %vm358, %v340
      %374 = vst.msk [vmem:[#allocation2 + $0xf0] sm:$0xff] %vm358, %v341
      %v375 = vld [vmem:[%s206] sm:$0xf]
      %v376 = vld [vmem:[%s206 + $0x4] sm:$0xf]
      %v377 = vld [vmem:[%s206 + $0x8] sm:$0x1]
      %v378 = vld [vmem:[%s206 + $0xc] sm:$0xf]
      %v379 = vld [vmem:[%s206 + $0x10] sm:$0xf]
      %v380 = vld [vmem:[%s206 + $0x14] sm:$0x1]
      %v381 = vld [vmem:[%s206 + $0x18] sm:$0xf]
      %v382 = vld [vmem:[%s206 + $0x1c] sm:$0xf]
      %v383 = vld [vmem:[%s206 + $0x20] sm:$0x1]
      %v384 = vld [vmem:[%s206 + $0x24] sm:$0xf]
      %v385 = vld [vmem:[%s206 + $0x28] sm:$0xf]
      %v386 = vld [vmem:[%s206 + $0x2c] sm:$0x1]
      %v387 = vld [vmem:[%s206 + $0x30] sm:$0xf]
      %v388 = vld [vmem:[%s206 + $0x34] sm:$0xf]
      %v389 = vld [vmem:[%s206 + $0x38] sm:$0x1]
      %v390 = vld [vmem:[%s206 + $0x3c] sm:$0xf]
      %v391 = vld [vmem:[%s206 + $0x40] sm:$0xf]
      %v392 = vld [vmem:[%s206 + $0x44] sm:$0x1]
      %v393 = vld [vmem:[%s206 + $0x48] sm:$0xf]
      %v394 = vld [vmem:[%s206 + $0x4c] sm:$0xf]
      %v395 = vld [vmem:[%s206 + $0x50] sm:$0x1]
      %v396 = vld [vmem:[%s206 + $0x54] sm:$0xf]
      %v397 = vld [vmem:[%s206 + $0x58] sm:$0xf]
      %v398 = vld [vmem:[%s206 + $0x5c] sm:$0x1]
      %v399 = vld [vmem:[%s206 + $0x60] sm:$0xf]
      %v400 = vld [vmem:[%s206 + $0x64] sm:$0xf]
      %v401 = vld [vmem:[%s206 + $0x68] sm:$0x1]
      %v402 = vld [vmem:[%s206 + $0x6c] sm:$0xf]
      %v403 = vld [vmem:[%s206 + $0x70] sm:$0xf]
      %v404 = vld [vmem:[%s206 + $0x74] sm:$0x1]
      %v405 = vld [vmem:[%s206 + $0x78] sm:$0xf]
      %v406 = vld [vmem:[%s206 + $0x7c] sm:$0xf]
      %v407 = vld [vmem:[%s206 + $0x80] sm:$0x1]
      %v408 = vld [vmem:[%s206 + $0x84] sm:$0xf]
      %v409 = vld [vmem:[%s206 + $0x88] sm:$0xf]
      %v410 = vld [vmem:[%s206 + $0x8c] sm:$0x1]
      %v411 = vld [vmem:[%s206 + $0x90] sm:$0xf]
      %v412 = vld [vmem:[%s206 + $0x94] sm:$0xf]
      %v413 = vld [vmem:[%s206 + $0x98] sm:$0x1]
      %v414 = vld [vmem:[%s206 + $0x9c] sm:$0xf]
      %v415 = vld [vmem:[%s206 + $0xa0] sm:$0xf]
      %v416 = vld [vmem:[%s206 + $0xa4] sm:$0x1]
      %v417 = vld [vmem:[%s206 + $0xa8] sm:$0xf]
      %v418 = vld [vmem:[%s206 + $0xac] sm:$0xf]
      %v419 = vld [vmem:[%s206 + $0xb0] sm:$0x1]
      %v420 = vld [vmem:[%s206 + $0xb4] sm:$0xf]
      %v421 = vld [vmem:[%s206 + $0xb8] sm:$0xf]
      %v422 = vld [vmem:[%s206 + $0xbc] sm:$0x1]
      %v471 = vunpack.c.l.b16 %v375
      %v472 = vunpack.c.l.b16 %v376
      %v473 = vunpack.c.l.b16 %v377
      %v474 = vunpack.c.l.b16 %v378
      %v475 = vunpack.c.l.b16 %v379
      %v476 = vunpack.c.l.b16 %v380
      %v477 = vunpack.c.l.b16 %v381
      %v478 = vunpack.c.l.b16 %v382
      %v479 = vunpack.c.l.b16 %v383
      %v480 = vunpack.c.l.b16 %v384
      %v481 = vunpack.c.l.b16 %v385
      %v482 = vunpack.c.l.b16 %v386
      %v483 = vunpack.c.l.b16 %v387
      %v484 = vunpack.c.l.b16 %v388
      %v485 = vunpack.c.l.b16 %v389
      %v486 = vunpack.c.l.b16 %v390
      %v487 = vunpack.c.l.b16 %v391
      %v488 = vunpack.c.l.b16 %v392
      %v489 = vunpack.c.l.b16 %v393
      %v490 = vunpack.c.l.b16 %v394
      %v491 = vunpack.c.l.b16 %v395
      %v492 = vunpack.c.l.b16 %v396
      %v493 = vunpack.c.l.b16 %v397
      %v494 = vunpack.c.l.b16 %v398
      %v495 = vunpack.c.l.b16 %v399
      %v496 = vunpack.c.l.b16 %v400
      %v497 = vunpack.c.l.b16 %v401
      %v498 = vunpack.c.l.b16 %v402
      %v499 = vunpack.c.l.b16 %v403
      %v500 = vunpack.c.l.b16 %v404
      %v501 = vunpack.c.l.b16 %v405
      %v502 = vunpack.c.l.b16 %v406
      %v503 = vunpack.c.l.b16 %v407
      %v504 = vunpack.c.l.b16 %v408
      %v505 = vunpack.c.l.b16 %v409
      %v506 = vunpack.c.l.b16 %v410
      %v507 = vunpack.c.l.b16 %v411
      %v508 = vunpack.c.l.b16 %v412
      %v509 = vunpack.c.l.b16 %v413
      %v510 = vunpack.c.l.b16 %v414
      %v511 = vunpack.c.l.b16 %v415
      %v512 = vunpack.c.l.b16 %v416
      %v513 = vunpack.c.l.b16 %v417
      %v514 = vunpack.c.l.b16 %v418
      %v515 = vunpack.c.l.b16 %v419
      %v516 = vunpack.c.l.b16 %v420
      %v517 = vunpack.c.l.b16 %v421
      %v518 = vunpack.c.l.b16 %v422
      %v519 = vpack.c.b16 %v472, %v471
      %v520 = vpack.c.b16 %v473, %v473
      %v521 = vpack.c.b16 %v475, %v474
      %v522 = vpack.c.b16 %v476, %v476
      %v523 = vpack.c.b16 %v478, %v477
      %v524 = vpack.c.b16 %v479, %v479
      %v525 = vpack.c.b16 %v481, %v480
      %v526 = vpack.c.b16 %v482, %v482
      %v527 = vpack.c.b16 %v484, %v483
      %v528 = vpack.c.b16 %v485, %v485
      %v529 = vpack.c.b16 %v487, %v486
      %v530 = vpack.c.b16 %v488, %v488
      %v531 = vpack.c.b16 %v490, %v489
      %v532 = vpack.c.b16 %v491, %v491
      %v533 = vpack.c.b16 %v493, %v492
      %v534 = vpack.c.b16 %v494, %v494
      %v535 = vpack.c.b16 %v496, %v495
      %v536 = vpack.c.b16 %v497, %v497
      %v537 = vpack.c.b16 %v499, %v498
      %v538 = vpack.c.b16 %v500, %v500
      %v539 = vpack.c.b16 %v502, %v501
      %v540 = vpack.c.b16 %v503, %v503
      %v541 = vpack.c.b16 %v505, %v504
      %v542 = vpack.c.b16 %v506, %v506
      %v543 = vpack.c.b16 %v508, %v507
      %v544 = vpack.c.b16 %v509, %v509
      %v545 = vpack.c.b16 %v511, %v510
      %v546 = vpack.c.b16 %v512, %v512
      %v547 = vpack.c.b16 %v514, %v513
      %v548 = vpack.c.b16 %v515, %v515
      %v549 = vpack.c.b16 %v517, %v516
      %v550 = vpack.c.b16 %v518, %v518
      %vm551 = vsmask.f32 7424
      %v553 = vshrl.u32 %v519, 16
      %v555 = vshll.u32 %v519, 16
      %v557 = vrot.slane %v555, 1
      %v558 = vor.u32 %v553, %v557
      %v560 = vshll.u32 %v520, 16
      %v562 = vrot.slane %v560, 1
      %v563 = vsel %vm551, %v558, %v562
      %v565 = vshrl.u32 %v521, 16
      %v567 = vshll.u32 %v521, 16
      %v569 = vrot.slane %v567, 1
      %v570 = vor.u32 %v565, %v569
      %v572 = vshll.u32 %v522, 16
      %v574 = vrot.slane %v572, 1
      %v575 = vsel %vm551, %v570, %v574
      %v577 = vshrl.u32 %v523, 16
      %v579 = vshll.u32 %v523, 16
      %v581 = vrot.slane %v579, 1
      %v582 = vor.u32 %v577, %v581
      %v584 = vshll.u32 %v524, 16
      %v586 = vrot.slane %v584, 1
      %v587 = vsel %vm551, %v582, %v586
      %v589 = vshrl.u32 %v525, 16
      %v591 = vshll.u32 %v525, 16
      %v593 = vrot.slane %v591, 1
      %v594 = vor.u32 %v589, %v593
      %v596 = vshll.u32 %v526, 16
      %v598 = vrot.slane %v596, 1
      %v599 = vsel %vm551, %v594, %v598
      %v601 = vshrl.u32 %v527, 16
      %v603 = vshll.u32 %v527, 16
      %v605 = vrot.slane %v603, 1
      %v606 = vor.u32 %v601, %v605
      %v608 = vshll.u32 %v528, 16
      %v610 = vrot.slane %v608, 1
      %v611 = vsel %vm551, %v606, %v610
      %v613 = vshrl.u32 %v529, 16
      %v615 = vshll.u32 %v529, 16
      %v617 = vrot.slane %v615, 1
      %v618 = vor.u32 %v613, %v617
      %v620 = vshll.u32 %v530, 16
      %v622 = vrot.slane %v620, 1
      %v623 = vsel %vm551, %v618, %v622
      %v625 = vshrl.u32 %v531, 16
      %v627 = vshll.u32 %v531, 16
      %v629 = vrot.slane %v627, 1
      %v630 = vor.u32 %v625, %v629
      %v632 = vshll.u32 %v532, 16
      %v634 = vrot.slane %v632, 1
      %v635 = vsel %vm551, %v630, %v634
      %v637 = vshrl.u32 %v533, 16
      %v639 = vshll.u32 %v533, 16
      %v641 = vrot.slane %v639, 1
      %v642 = vor.u32 %v637, %v641
      %v644 = vshll.u32 %v534, 16
      %v646 = vrot.slane %v644, 1
      %v647 = vsel %vm551, %v642, %v646
      %v649 = vshrl.u32 %v535, 16
      %v651 = vshll.u32 %v535, 16
      %v653 = vrot.slane %v651, 1
      %v654 = vor.u32 %v649, %v653
      %v656 = vshll.u32 %v536, 16
      %v658 = vrot.slane %v656, 1
      %v659 = vsel %vm551, %v654, %v658
      %v661 = vshrl.u32 %v537, 16
      %v663 = vshll.u32 %v537, 16
      %v665 = vrot.slane %v663, 1
      %v666 = vor.u32 %v661, %v665
      %v668 = vshll.u32 %v538, 16
      %v670 = vrot.slane %v668, 1
      %v671 = vsel %vm551, %v666, %v670
      %v673 = vshrl.u32 %v539, 16
      %v675 = vshll.u32 %v539, 16
      %v677 = vrot.slane %v675, 1
      %v678 = vor.u32 %v673, %v677
      %v680 = vshll.u32 %v540, 16
      %v682 = vrot.slane %v680, 1
      %v683 = vsel %vm551, %v678, %v682
      %v685 = vshrl.u32 %v541, 16
      %v687 = vshll.u32 %v541, 16
      %v689 = vrot.slane %v687, 1
      %v690 = vor.u32 %v685, %v689
      %v692 = vshll.u32 %v542, 16
      %v694 = vrot.slane %v692, 1
      %v695 = vsel %vm551, %v690, %v694
      %v697 = vshrl.u32 %v543, 16
      %v699 = vshll.u32 %v543, 16
      %v701 = vrot.slane %v699, 1
      %v702 = vor.u32 %v697, %v701
      %v704 = vshll.u32 %v544, 16
      %v706 = vrot.slane %v704, 1
      %v707 = vsel %vm551, %v702, %v706
      %v709 = vshrl.u32 %v545, 16
      %v711 = vshll.u32 %v545, 16
      %v713 = vrot.slane %v711, 1
      %v714 = vor.u32 %v709, %v713
      %v716 = vshll.u32 %v546, 16
      %v718 = vrot.slane %v716, 1
      %v719 = vsel %vm551, %v714, %v718
      %v721 = vshrl.u32 %v547, 16
      %v723 = vshll.u32 %v547, 16
      %v725 = vrot.slane %v723, 1
      %v726 = vor.u32 %v721, %v725
      %v728 = vshll.u32 %v548, 16
      %v730 = vrot.slane %v728, 1
      %v731 = vsel %vm551, %v726, %v730
      %v733 = vshrl.u32 %v549, 16
      %v735 = vshll.u32 %v549, 16
      %v737 = vrot.slane %v735, 1
      %v738 = vor.u32 %v733, %v737
      %v740 = vshll.u32 %v550, 16
      %v742 = vrot.slane %v740, 1
      %v743 = vsel %vm551, %v738, %v742
      %744 = vrot.lane.b32.xlu0 %v563, 64
      %v745 = vpop.permute.xlu0 %744
      %746 = vrot.lane.b32.xlu0 %v575, 64
      %v747 = vpop.permute.xlu0 %746
      %748 = vrot.lane.b32.xlu0 %v587, 64
      %v749 = vpop.permute.xlu0 %748
      %750 = vrot.lane.b32.xlu0 %v599, 64
      %v751 = vpop.permute.xlu0 %750
      %752 = vrot.lane.b32.xlu0 %v611, 64
      %v753 = vpop.permute.xlu0 %752
      %754 = vrot.lane.b32.xlu0 %v623, 64
      %v755 = vpop.permute.xlu0 %754
      %756 = vrot.lane.b32.xlu0 %v635, 64
      %v757 = vpop.permute.xlu0 %756
      %758 = vrot.lane.b32.xlu0 %v647, 64
      %v759 = vpop.permute.xlu0 %758
      %760 = vrot.lane.b32.xlu0 %v659, 64
      %v761 = vpop.permute.xlu0 %760
      %762 = vrot.lane.b32.xlu0 %v671, 64
      %v763 = vpop.permute.xlu0 %762
      %764 = vrot.lane.b32.xlu0 %v683, 64
      %v765 = vpop.permute.xlu0 %764
      %766 = vrot.lane.b32.xlu0 %v695, 64
      %v767 = vpop.permute.xlu0 %766
      %768 = vrot.lane.b32.xlu0 %v707, 64
      %v769 = vpop.permute.xlu0 %768
      %770 = vrot.lane.b32.xlu0 %v719, 64
      %v771 = vpop.permute.xlu0 %770
      %772 = vrot.lane.b32.xlu0 %v731, 64
      %v773 = vpop.permute.xlu0 %772
      %774 = vrot.lane.b32.xlu0 %v743, 64
      %v775 = vpop.permute.xlu0 %774
      %vm792 = vcmask 1048064
      %793 = vst.msk [vmem:[#allocation2] sm:$0xff] %vm792, %v745
      %794 = vst.msk [vmem:[#allocation2 + $0x10] sm:$0xff] %vm792, %v747
      %795 = vst.msk [vmem:[#allocation2 + $0x20] sm:$0xff] %vm792, %v749
      %796 = vst.msk [vmem:[#allocation2 + $0x30] sm:$0xff] %vm792, %v751
      %797 = vst.msk [vmem:[#allocation2 + $0x40] sm:$0xff] %vm792, %v753
      %798 = vst.msk [vmem:[#allocation2 + $0x50] sm:$0xff] %vm792, %v755
      %799 = vst.msk [vmem:[#allocation2 + $0x60] sm:$0xff] %vm792, %v757
      %800 = vst.msk [vmem:[#allocation2 + $0x70] sm:$0xff] %vm792, %v759
      %801 = vst.msk [vmem:[#allocation2 + $0x80] sm:$0xff] %vm792, %v761
      %802 = vst.msk [vmem:[#allocation2 + $0x90] sm:$0xff] %vm792, %v763
      %803 = vst.msk [vmem:[#allocation2 + $0xa0] sm:$0xff] %vm792, %v765
      %804 = vst.msk [vmem:[#allocation2 + $0xb0] sm:$0xff] %vm792, %v767
      %805 = vst.msk [vmem:[#allocation2 + $0xc0] sm:$0xff] %vm792, %v769
      %806 = vst.msk [vmem:[#allocation2 + $0xd0] sm:$0xff] %vm792, %v771
      %807 = vst.msk [vmem:[#allocation2 + $0xe0] sm:$0xff] %vm792, %v773
      %808 = vst.msk [vmem:[#allocation2 + $0xf0] sm:$0xff] %vm792, %v775
      %v809 = vld [vmem:[%s206] sm:$0xe]
      %v810 = vld [vmem:[%s206 + $0x4] sm:$0xf]
      %v811 = vld [vmem:[%s206 + $0x8] sm:$0x1]
      %v812 = vld [vmem:[%s206 + $0xc] sm:$0xe]
      %v813 = vld [vmem:[%s206 + $0x10] sm:$0xf]
      %v814 = vld [vmem:[%s206 + $0x14] sm:$0x1]
      %v815 = vld [vmem:[%s206 + $0x18] sm:$0xe]
      %v816 = vld [vmem:[%s206 + $0x1c] sm:$0xf]
      %v817 = vld [vmem:[%s206 + $0x20] sm:$0x1]
      %v818 = vld [vmem:[%s206 + $0x24] sm:$0xe]
      %v819 = vld [vmem:[%s206 + $0x28] sm:$0xf]
      %v820 = vld [vmem:[%s206 + $0x2c] sm:$0x1]
      %v821 = vld [vmem:[%s206 + $0x30] sm:$0xe]
      %v822 = vld [vmem:[%s206 + $0x34] sm:$0xf]
      %v823 = vld [vmem:[%s206 + $0x38] sm:$0x1]
      %v824 = vld [vmem:[%s206 + $0x3c] sm:$0xe]
      %v825 = vld [vmem:[%s206 + $0x40] sm:$0xf]
      %v826 = vld [vmem:[%s206 + $0x44] sm:$0x1]
      %v827 = vld [vmem:[%s206 + $0x48] sm:$0xe]
      %v828 = vld [vmem:[%s206 + $0x4c] sm:$0xf]
      %v829 = vld [vmem:[%s206 + $0x50] sm:$0x1]
      %v830 = vld [vmem:[%s206 + $0x54] sm:$0xe]
      %v831 = vld [vmem:[%s206 + $0x58] sm:$0xf]
      %v832 = vld [vmem:[%s206 + $0x5c] sm:$0x1]
      %v833 = vld [vmem:[%s206 + $0x60] sm:$0xe]
      %v834 = vld [vmem:[%s206 + $0x64] sm:$0xf]
      %v835 = vld [vmem:[%s206 + $0x68] sm:$0x1]
      %v836 = vld [vmem:[%s206 + $0x6c] sm:$0xe]
      %v837 = vld [vmem:[%s206 + $0x70] sm:$0xf]
      %v838 = vld [vmem:[%s206 + $0x74] sm:$0x1]
      %v839 = vld [vmem:[%s206 + $0x78] sm:$0xe]
      %v840 = vld [vmem:[%s206 + $0x7c] sm:$0xf]
      %v841 = vld [vmem:[%s206 + $0x80] sm:$0x1]
      %v842 = vld [vmem:[%s206 + $0x84] sm:$0xe]
      %v843 = vld [vmem:[%s206 + $0x88] sm:$0xf]
      %v844 = vld [vmem:[%s206 + $0x8c] sm:$0x1]
      %v845 = vld [vmem:[%s206 + $0x90] sm:$0xe]
      %v846 = vld [vmem:[%s206 + $0x94] sm:$0xf]
      %v847 = vld [vmem:[%s206 + $0x98] sm:$0x1]
      %v848 = vld [vmem:[%s206 + $0x9c] sm:$0xe]
      %v849 = vld [vmem:[%s206 + $0xa0] sm:$0xf]
      %v850 = vld [vmem:[%s206 + $0xa4] sm:$0x1]
      %v851 = vld [vmem:[%s206 + $0xa8] sm:$0xe]
      %v852 = vld [vmem:[%s206 + $0xac] sm:$0xf]
      %v853 = vld [vmem:[%s206 + $0xb0] sm:$0x1]
      %v854 = vld [vmem:[%s206 + $0xb4] sm:$0xe]
      %v855 = vld [vmem:[%s206 + $0xb8] sm:$0xf]
      %v856 = vld [vmem:[%s206 + $0xbc] sm:$0x1]
      %v905 = vunpack.c.l.b16 %v809
      %v906 = vunpack.c.l.b16 %v810
      %v907 = vunpack.c.l.b16 %v811
      %v908 = vunpack.c.l.b16 %v812
      %v909 = vunpack.c.l.b16 %v813
      %v910 = vunpack.c.l.b16 %v814
      %v911 = vunpack.c.l.b16 %v815
      %v912 = vunpack.c.l.b16 %v816
      %v913 = vunpack.c.l.b16 %v817
      %v914 = vunpack.c.l.b16 %v818
      %v915 = vunpack.c.l.b16 %v819
      %v916 = vunpack.c.l.b16 %v820
      %v917 = vunpack.c.l.b16 %v821
      %v918 = vunpack.c.l.b16 %v822
      %v919 = vunpack.c.l.b16 %v823
      %v920 = vunpack.c.l.b16 %v824
      %v921 = vunpack.c.l.b16 %v825
      %v922 = vunpack.c.l.b16 %v826
      %v923 = vunpack.c.l.b16 %v827
      %v924 = vunpack.c.l.b16 %v828
      %v925 = vunpack.c.l.b16 %v829
      %v926 = vunpack.c.l.b16 %v830
      %v927 = vunpack.c.l.b16 %v831
      %v928 = vunpack.c.l.b16 %v832
      %v929 = vunpack.c.l.b16 %v833
      %v930 = vunpack.c.l.b16 %v834
      %v931 = vunpack.c.l.b16 %v835
      %v932 = vunpack.c.l.b16 %v836
      %v933 = vunpack.c.l.b16 %v837
      %v934 = vunpack.c.l.b16 %v838
      %v935 = vunpack.c.l.b16 %v839
      %v936 = vunpack.c.l.b16 %v840
      %v937 = vunpack.c.l.b16 %v841
      %v938 = vunpack.c.l.b16 %v842
      %v939 = vunpack.c.l.b16 %v843
      %v940 = vunpack.c.l.b16 %v844
      %v941 = vunpack.c.l.b16 %v845
      %v942 = vunpack.c.l.b16 %v846
      %v943 = vunpack.c.l.b16 %v847
      %v944 = vunpack.c.l.b16 %v848
      %v945 = vunpack.c.l.b16 %v849
      %v946 = vunpack.c.l.b16 %v850
      %v947 = vunpack.c.l.b16 %v851
      %v948 = vunpack.c.l.b16 %v852
      %v949 = vunpack.c.l.b16 %v853
      %v950 = vunpack.c.l.b16 %v854
      %v951 = vunpack.c.l.b16 %v855
      %v952 = vunpack.c.l.b16 %v856
      %v953 = vpack.c.b16 %v906, %v905
      %v954 = vpack.c.b16 %v907, %v907
      %v955 = vpack.c.b16 %v909, %v908
      %v956 = vpack.c.b16 %v910, %v910
      %v957 = vpack.c.b16 %v912, %v911
      %v958 = vpack.c.b16 %v913, %v913
      %v959 = vpack.c.b16 %v915, %v914
      %v960 = vpack.c.b16 %v916, %v916
      %v961 = vpack.c.b16 %v918, %v917
      %v962 = vpack.c.b16 %v919, %v919
      %v963 = vpack.c.b16 %v921, %v920
      %v964 = vpack.c.b16 %v922, %v922
      %v965 = vpack.c.b16 %v924, %v923
      %v966 = vpack.c.b16 %v925, %v925
      %v967 = vpack.c.b16 %v927, %v926
      %v968 = vpack.c.b16 %v928, %v928
      %v969 = vpack.c.b16 %v930, %v929
      %v970 = vpack.c.b16 %v931, %v931
      %v971 = vpack.c.b16 %v933, %v932
      %v972 = vpack.c.b16 %v934, %v934
      %v973 = vpack.c.b16 %v936, %v935
      %v974 = vpack.c.b16 %v937, %v937
      %v975 = vpack.c.b16 %v939, %v938
      %v976 = vpack.c.b16 %v940, %v940
      %v977 = vpack.c.b16 %v942, %v941
      %v978 = vpack.c.b16 %v943, %v943
      %v979 = vpack.c.b16 %v945, %v944
      %v980 = vpack.c.b16 %v946, %v946
      %v981 = vpack.c.b16 %v948, %v947
      %v982 = vpack.c.b16 %v949, %v949
      %v983 = vpack.c.b16 %v951, %v950
      %v984 = vpack.c.b16 %v952, %v952
      %vm985 = vcmask 1046528
      %v986 = vrot.slane %v953, 1
      %v987 = vrot.slane %v954, 1
      %v988 = vsel %vm985, %v986, %v987
      %v989 = vrot.slane %v955, 1
      %v990 = vrot.slane %v956, 1
      %v991 = vsel %vm985, %v989, %v990
      %v992 = vrot.slane %v957, 1
      %v993 = vrot.slane %v958, 1
      %v994 = vsel %vm985, %v992, %v993
      %v995 = vrot.slane %v959, 1
      %v996 = vrot.slane %v960, 1
      %v997 = vsel %vm985, %v995, %v996
      %v998 = vrot.slane %v961, 1
      %v999 = vrot.slane %v962, 1
      %v1000 = vsel %vm985, %v998, %v999
      %v1001 = vrot.slane %v963, 1
      %v1002 = vrot.slane %v964, 1
      %v1003 = vsel %vm985, %v1001, %v1002
      %v1004 = vrot.slane %v965, 1
      %v1005 = vrot.slane %v966, 1
      %v1006 = vsel %vm985, %v1004, %v1005
      %v1007 = vrot.slane %v967, 1
      %v1008 = vrot.slane %v968, 1
      %v1009 = vsel %vm985, %v1007, %v1008
      %v1010 = vrot.slane %v969, 1
      %v1011 = vrot.slane %v970, 1
      %v1012 = vsel %vm985, %v1010, %v1011
      %v1013 = vrot.slane %v971, 1
      %v1014 = vrot.slane %v972, 1
      %v1015 = vsel %vm985, %v1013, %v1014
      %v1016 = vrot.slane %v973, 1
      %v1017 = vrot.slane %v974, 1
      %v1018 = vsel %vm985, %v1016, %v1017
      %v1019 = vrot.slane %v975, 1
      %v1020 = vrot.slane %v976, 1
      %v1021 = vsel %vm985, %v1019, %v1020
      %v1022 = vrot.slane %v977, 1
      %v1023 = vrot.slane %v978, 1
      %v1024 = vsel %vm985, %v1022, %v1023
      %v1025 = vrot.slane %v979, 1
      %v1026 = vrot.slane %v980, 1
      %v1027 = vsel %vm985, %v1025, %v1026
      %v1028 = vrot.slane %v981, 1
      %v1029 = vrot.slane %v982, 1
      %v1030 = vsel %vm985, %v1028, %v1029
      %v1031 = vrot.slane %v983, 1
      %v1032 = vrot.slane %v984, 1
      %v1033 = vsel %vm985, %v1031, %v1032
      %1050 = vst.msk [vmem:[#allocation2 + $0x8] sm:$0xff] %vm358, %v988
      %1051 = vst.msk [vmem:[#allocation2 + $0x18] sm:$0xff] %vm358, %v991
      %1052 = vst.msk [vmem:[#allocation2 + $0x28] sm:$0xff] %vm358, %v994
      %1053 = vst.msk [vmem:[#allocation2 + $0x38] sm:$0xff] %vm358, %v997
      %1054 = vst.msk [vmem:[#allocation2 + $0x48] sm:$0xff] %vm358, %v1000
      %1055 = vst.msk [vmem:[#allocation2 + $0x58] sm:$0xff] %vm358, %v1003
      %1056 = vst.msk [vmem:[#allocation2 + $0x68] sm:$0xff] %vm358, %v1006
      %1057 = vst.msk [vmem:[#allocation2 + $0x78] sm:$0xff] %vm358, %v1009
      %1058 = vst.msk [vmem:[#allocation2 + $0x88] sm:$0xff] %vm358, %v1012
      %1059 = vst.msk [vmem:[#allocation2 + $0x98] sm:$0xff] %vm358, %v1015
      %1060 = vst.msk [vmem:[#allocation2 + $0xa8] sm:$0xff] %vm358, %v1018
      %1061 = vst.msk [vmem:[#allocation2 + $0xb8] sm:$0xff] %vm358, %v1021
      %1062 = vst.msk [vmem:[#allocation2 + $0xc8] sm:$0xff] %vm358, %v1024
      %1063 = vst.msk [vmem:[#allocation2 + $0xd8] sm:$0xff] %vm358, %v1027
      %1064 = vst.msk [vmem:[#allocation2 + $0xe8] sm:$0xff] %vm358, %v1030
      %1065 = vst.msk [vmem:[#allocation2 + $0xf8] sm:$0xff] %vm358, %v1033
      %v1066 = vld [vmem:[#allocation2] sm:$0xff]
      %v1067 = vld [vmem:[#allocation2 + $0x8] sm:$0xff]
      %v1068 = vld [vmem:[#allocation2 + $0x10] sm:$0xff]
      %v1069 = vld [vmem:[#allocation2 + $0x18] sm:$0xff]
      %v1070 = vld [vmem:[#allocation2 + $0x20] sm:$0xff]
      %v1071 = vld [vmem:[#allocation2 + $0x28] sm:$0xff]
      %v1072 = vld [vmem:[#allocation2 + $0x30] sm:$0xff]
      %v1073 = vld [vmem:[#allocation2 + $0x38] sm:$0xff]
      %v1074 = vld [vmem:[#allocation2 + $0x40] sm:$0xff]
      %v1075 = vld [vmem:[#allocation2 + $0x48] sm:$0xff]
      %v1076 = vld [vmem:[#allocation2 + $0x50] sm:$0xff]
      %v1077 = vld [vmem:[#allocation2 + $0x58] sm:$0xff]
      %v1078 = vld [vmem:[#allocation2 + $0x60] sm:$0xff]
      %v1079 = vld [vmem:[#allocation2 + $0x68] sm:$0xff]
      %v1080 = vld [vmem:[#allocation2 + $0x70] sm:$0xff]
      %v1081 = vld [vmem:[#allocation2 + $0x78] sm:$0xff]
      %v1082 = vld [vmem:[#allocation2 + $0x80] sm:$0xff]
      %v1083 = vld [vmem:[#allocation2 + $0x88] sm:$0xff]
      %v1084 = vld [vmem:[#allocation2 + $0x90] sm:$0xff]
      %v1085 = vld [vmem:[#allocation2 + $0x98] sm:$0xff]
      %v1086 = vld [vmem:[#allocation2 + $0xa0] sm:$0xff]
      %v1087 = vld [vmem:[#allocation2 + $0xa8] sm:$0xff]
      %v1088 = vld [vmem:[#allocation2 + $0xb0] sm:$0xff]
      %v1089 = vld [vmem:[#allocation2 + $0xb8] sm:$0xff]
      %v1090 = vld [vmem:[#allocation2 + $0xc0] sm:$0xff]
      %v1091 = vld [vmem:[#allocation2 + $0xc8] sm:$0xff]
      %v1092 = vld [vmem:[#allocation2 + $0xd0] sm:$0xff]
      %v1093 = vld [vmem:[#allocation2 + $0xd8] sm:$0xff]
      %v1094 = vld [vmem:[#allocation2 + $0xe0] sm:$0xff]
      %v1095 = vld [vmem:[#allocation2 + $0xe8] sm:$0xff]
      %v1096 = vld [vmem:[#allocation2 + $0xf0] sm:$0xff]
      %v1097 = vld [vmem:[#allocation2 + $0xf8] sm:$0xff]
      %v1098 = vld [vmem:[%s210] sm:$0xf]
      %v1099 = vld [vmem:[%s210 + $0x4] sm:$0xf]
      %v1100 = vld [vmem:[%s210 + $0x8] sm:$0xf]
      %v1101 = vld [vmem:[%s210 + $0xc] sm:$0xf]
      %v1102 = vld [vmem:[%s210 + $0x10] sm:$0xf]
      %v1103 = vld [vmem:[%s210 + $0x14] sm:$0xf]
      %v1104 = vld [vmem:[%s210 + $0x18] sm:$0xf]
      %v1105 = vld [vmem:[%s210 + $0x1c] sm:$0xf]
      %v1106 = vld [vmem:[%s210 + $0x20] sm:$0xf]
      %v1107 = vld [vmem:[%s210 + $0x24] sm:$0xf]
      %v1108 = vld [vmem:[%s210 + $0x28] sm:$0xf]
      %v1109 = vld [vmem:[%s210 + $0x2c] sm:$0xf]
      %v1110 = vld [vmem:[%s210 + $0x30] sm:$0xf]
      %v1111 = vld [vmem:[%s210 + $0x34] sm:$0xf]
      %v1112 = vld [vmem:[%s210 + $0x38] sm:$0xf]
      %v1113 = vld [vmem:[%s210 + $0x3c] sm:$0xf]
      %v1114 = vld [vmem:[%s210 + $0x40] sm:$0xf]
      %v1115 = vld [vmem:[%s210 + $0x44] sm:$0xf]
      %v1116 = vld [vmem:[%s210 + $0x48] sm:$0xf]
      %v1117 = vld [vmem:[%s210 + $0x4c] sm:$0xf]
      %v1118 = vld [vmem:[%s210 + $0x50] sm:$0xf]
      %v1119 = vld [vmem:[%s210 + $0x54] sm:$0xf]
      %v1120 = vld [vmem:[%s210 + $0x58] sm:$0xf]
      %v1121 = vld [vmem:[%s210 + $0x5c] sm:$0xf]
      %v1146 = vunpack.c.l.b16 %v1098
      %v1147 = vunpack.c.l.b16 %v1099
      %v1148 = vunpack.c.l.b16 %v1100
      %v1149 = vunpack.c.l.b16 %v1101
      %v1150 = vunpack.c.l.b16 %v1102
      %v1151 = vunpack.c.l.b16 %v1103
      %v1152 = vunpack.c.l.b16 %v1104
      %v1153 = vunpack.c.l.b16 %v1105
      %v1154 = vunpack.c.l.b16 %v1106
      %v1155 = vunpack.c.l.b16 %v1107
      %v1156 = vunpack.c.l.b16 %v1108
      %v1157 = vunpack.c.l.b16 %v1109
      %v1158 = vunpack.c.l.b16 %v1110
      %v1159 = vunpack.c.l.b16 %v1111
      %v1160 = vunpack.c.l.b16 %v1112
      %v1161 = vunpack.c.l.b16 %v1113
      %v1162 = vunpack.c.l.b16 %v1114
      %v1163 = vunpack.c.l.b16 %v1115
      %v1164 = vunpack.c.l.b16 %v1116
      %v1165 = vunpack.c.l.b16 %v1117
      %v1166 = vunpack.c.l.b16 %v1118
      %v1167 = vunpack.c.l.b16 %v1119
      %v1168 = vunpack.c.l.b16 %v1120
      %v1169 = vunpack.c.l.b16 %v1121
      %v1170 = vpack.c.b16 %v1147, %v1146
      %v1171 = vpack.c.b16 %v1149, %v1148
      %v1172 = vpack.c.b16 %v1151, %v1150
      %v1173 = vpack.c.b16 %v1153, %v1152
      %v1174 = vpack.c.b16 %v1155, %v1154
      %v1175 = vpack.c.b16 %v1157, %v1156
      %v1176 = vpack.c.b16 %v1159, %v1158
      %v1177 = vpack.c.b16 %v1161, %v1160
      %v1178 = vpack.c.b16 %v1163, %v1162
      %v1179 = vpack.c.b16 %v1165, %v1164
      %v1180 = vpack.c.b16 %v1167, %v1166
      %v1181 = vpack.c.b16 %v1169, %v1168
      %v1195 = vsel %vm358, %v1067, 0
      %v1198 = vsel %vm358, %v1069, 0
      %v1201 = vsel %vm358, %v1071, 0
      %v1204 = vsel %vm358, %v1073, 0
      %v1207 = vsel %vm358, %v1075, 0
      %v1210 = vsel %vm358, %v1077, 0
      %v1213 = vsel %vm358, %v1079, 0
      %v1216 = vsel %vm358, %v1081, 0
      %v1219 = vsel %vm358, %v1083, 0
      %v1222 = vsel %vm358, %v1085, 0
      %v1225 = vsel %vm358, %v1087, 0
      %v1228 = vsel %vm358, %v1089, 0
      %v1231 = vsel %vm358, %v1091, 0
      %v1234 = vsel %vm358, %v1093, 0
      %v1237 = vsel %vm358, %v1095, 0
      %v1240 = vsel %vm358, %v1097, 0
      %1242 = vmatprep.subr.bf16.mxu0 0
      %1243 = vmatpush1.bf16.msra.mxu0 %v1170
      %1244 = vmatprep.subr.bf16.mxu0 0
      %1245 = vmatpush1.bf16.msra.mxu0 %v1171
      %1246 = vmatprep.subr.bf16.mxu0 0
      %1247 = vmatpush1.bf16.msra.mxu0 %v1172
      %1248 = vmatprep.subr.bf16.mxu0 0
      %1249 = vmatpush1.bf16.msra.mxu0 %v1173
      %1250 = vmatprep.subr.bf16.mxu0 0
      %1251 = vmatpush1.bf16.msra.mxu0 %v1174
      %1252 = vmatprep.subr.bf16.mxu0 0
      %1253 = vmatpush1.bf16.msra.mxu0 %v1175
      %1254 = vmatprep.subr.bf16.mxu0 0
      %1255 = vmatpush1.bf16.msra.mxu0 %v1176
      %1256 = vmatprep.subr.bf16.mxu0 0
      %1257 = vmatpush1.bf16.msra.mxu0 %v1177
      %1258 = vmatprep.subr.bf16.mxu0 0
      %1259 = vmatpush1.bf16.msra.mxu0 %v1178
      %1260 = vmatprep.subr.bf16.mxu0 0
      %1261 = vmatpush1.bf16.msra.mxu0 %v1179
      %1262 = vmatprep.subr.bf16.mxu0 0
      %1263 = vmatpush1.bf16.msra.mxu0 %v1180
      %1264 = vmatprep.subr.bf16.mxu0 0
      %1265 = vmatpush1.bf16.msra.mxu0 %v1181
      %1266 = vmatprep.subr.bf16.mxu0 0
      %1267 = vmatpush1.bf16.msra.mxu0 0
      %1268 = vmatprep.subr.bf16.mxu0 0
      %1269 = vmatpush1.bf16.msra.mxu0 0
      %1270 = vmatprep.subr.bf16.mxu0 0
      %1271 = vmatpush1.bf16.msra.mxu0 0
      %1272 = vmatprep.subr.bf16.mxu0 0
      %1273 = vmatpush1.bf16.msra.mxu0 0
      %1274 = vmatprep.mubr.bf16.mxu0 %v1195
      %1275 = vmatmul.mubr.bf16.gmra.mrb[0].mxu0 %v1066
      %v1276 = vpop.f32.mrb[0].mxu0
      %v1277 = vadd.f32 0.0, %v1276
      %v1278 = vpop.f32.mrb[0].mxu0
      %v1279 = vpop.f32.mrb[0].mxu0
      %v1280 = vadd.f32 0.0, %v1279
      %v1281 = vpop.f32.mrb[0].mxu0
      %1282 = vmatprep.mubr.bf16.mxu0 %v1198
      %1283 = vmatmul.mubr.bf16.gmra.mrb[0].mxu0 %v1068
      %v1284 = vpop.f32.mrb[0].mxu0
      %v1285 = vadd.f32 0.0, %v1284
      %v1286 = vpop.f32.mrb[0].mxu0
      %v1287 = vpop.f32.mrb[0].mxu0
      %v1288 = vadd.f32 0.0, %v1287
      %v1289 = vpop.f32.mrb[0].mxu0
      %1290 = vmatprep.mubr.bf16.mxu0 %v1201
      %1291 = vmatmul.mubr.bf16.gmra.mrb[0].mxu0 %v1070
      %v1292 = vpop.f32.mrb[0].mxu0
      %v1293 = vadd.f32 0.0, %v1292
      %v1294 = vpop.f32.mrb[0].mxu0
      %v1295 = vpop.f32.mrb[0].mxu0
      %v1296 = vadd.f32 0.0, %v1295
      %v1297 = vpop.f32.mrb[0].mxu0
      %1298 = vmatprep.mubr.bf16.mxu0 %v1204
      %1299 = vmatmul.mubr.bf16.gmra.mrb[0].mxu0 %v1072
      %v1300 = vpop.f32.mrb[0].mxu0
      %v1301 = vadd.f32 0.0, %v1300
      %v1302 = vpop.f32.mrb[0].mxu0
      %v1303 = vpop.f32.mrb[0].mxu0
      %v1304 = vadd.f32 0.0, %v1303
      %v1305 = vpop.f32.mrb[0].mxu0
      %1306 = vmatprep.mubr.bf16.mxu0 %v1207
      %1307 = vmatmul.mubr.bf16.gmra.mrb[0].mxu0 %v1074
      %v1308 = vpop.f32.mrb[0].mxu0
      %v1309 = vadd.f32 0.0, %v1308
      %v1310 = vpop.f32.mrb[0].mxu0
      %v1311 = vpop.f32.mrb[0].mxu0
      %v1312 = vadd.f32 0.0, %v1311
      %v1313 = vpop.f32.mrb[0].mxu0
      %1314 = vmatprep.mubr.bf16.mxu0 %v1210
      %1315 = vmatmul.mubr.bf16.gmra.mrb[0].mxu0 %v1076
      %v1316 = vpop.f32.mrb[0].mxu0
      %v1317 = vadd.f32 0.0, %v1316
      %v1318 = vpop.f32.mrb[0].mxu0
      %v1319 = vpop.f32.mrb[0].mxu0
      %v1320 = vadd.f32 0.0, %v1319
      %v1321 = vpop.f32.mrb[0].mxu0
      %1322 = vmatprep.mubr.bf16.mxu0 %v1213
      %1323 = vmatmul.mubr.bf16.gmra.mrb[0].mxu0 %v1078
      %v1324 = vpop.f32.mrb[0].mxu0
      %v1325 = vadd.f32 0.0, %v1324
      %v1326 = vpop.f32.mrb[0].mxu0
      %v1327 = vpop.f32.mrb[0].mxu0
      %v1328 = vadd.f32 0.0, %v1327
      %v1329 = vpop.f32.mrb[0].mxu0
      %1330 = vmatprep.mubr.bf16.mxu0 %v1216
      %1331 = vmatmul.mubr.bf16.gmra.mrb[0].mxu0 %v1080
      %v1332 = vpop.f32.mrb[0].mxu0
      %v1333 = vadd.f32 0.0, %v1332
      %v1334 = vpop.f32.mrb[0].mxu0
      %v1335 = vpop.f32.mrb[0].mxu0
      %v1336 = vadd.f32 0.0, %v1335
      %v1337 = vpop.f32.mrb[0].mxu0
      %1338 = vmatprep.mubr.bf16.mxu0 %v1219
      %1339 = vmatmul.mubr.bf16.gmra.mrb[0].mxu0 %v1082
      %v1340 = vpop.f32.mrb[0].mxu0
      %v1341 = vadd.f32 0.0, %v1340
      %v1342 = vpop.f32.mrb[0].mxu0
      %v1343 = vpop.f32.mrb[0].mxu0
      %v1344 = vadd.f32 0.0, %v1343
      %v1345 = vpop.f32.mrb[0].mxu0
      %1346 = vmatprep.mubr.bf16.mxu0 %v1222
      %1347 = vmatmul.mubr.bf16.gmra.mrb[0].mxu0 %v1084
      %v1348 = vpop.f32.mrb[0].mxu0
      %v1349 = vadd.f32 0.0, %v1348
      %v1350 = vpop.f32.mrb[0].mxu0
      %v1351 = vpop.f32.mrb[0].mxu0
      %v1352 = vadd.f32 0.0, %v1351
      %v1353 = vpop.f32.mrb[0].mxu0
      %1354 = vmatprep.mubr.bf16.mxu0 %v1225
      %1355 = vmatmul.mubr.bf16.gmra.mrb[0].mxu0 %v1086
      %v1356 = vpop.f32.mrb[0].mxu0
      %v1357 = vadd.f32 0.0, %v1356
      %v1358 = vpop.f32.mrb[0].mxu0
      %v1359 = vpop.f32.mrb[0].mxu0
      %v1360 = vadd.f32 0.0, %v1359
      %v1361 = vpop.f32.mrb[0].mxu0
      %1362 = vmatprep.mubr.bf16.mxu0 %v1228
      %1363 = vmatmul.mubr.bf16.gmra.mrb[0].mxu0 %v1088
      %v1364 = vpop.f32.mrb[0].mxu0
      %v1365 = vadd.f32 0.0, %v1364
      %v1366 = vpop.f32.mrb[0].mxu0
      %v1367 = vpop.f32.mrb[0].mxu0
      %v1368 = vadd.f32 0.0, %v1367
      %v1369 = vpop.f32.mrb[0].mxu0
      %1370 = vmatprep.mubr.bf16.mxu0 %v1231
      %1371 = vmatmul.mubr.bf16.gmra.mrb[0].mxu0 %v1090
      %v1372 = vpop.f32.mrb[0].mxu0
      %v1373 = vadd.f32 0.0, %v1372
      %v1374 = vpop.f32.mrb[0].mxu0
      %v1375 = vpop.f32.mrb[0].mxu0
      %v1376 = vadd.f32 0.0, %v1375
      %v1377 = vpop.f32.mrb[0].mxu0
      %1378 = vmatprep.mubr.bf16.mxu0 %v1234
      %1379 = vmatmul.mubr.bf16.gmra.mrb[0].mxu0 %v1092
      %v1380 = vpop.f32.mrb[0].mxu0
      %v1381 = vadd.f32 0.0, %v1380
      %v1382 = vpop.f32.mrb[0].mxu0
      %v1383 = vpop.f32.mrb[0].mxu0
      %v1384 = vadd.f32 0.0, %v1383
      %v1385 = vpop.f32.mrb[0].mxu0
      %1386 = vmatprep.mubr.bf16.mxu0 %v1237
      %1387 = vmatmul.mubr.bf16.gmra.mrb[0].mxu0 %v1094
      %v1388 = vpop.f32.mrb[0].mxu0
      %v1389 = vadd.f32 0.0, %v1388
      %v1390 = vpop.f32.mrb[0].mxu0
      %v1391 = vpop.f32.mrb[0].mxu0
      %v1392 = vadd.f32 0.0, %v1391
      %v1393 = vpop.f32.mrb[0].mxu0
      %1394 = vmatprep.mubr.bf16.mxu0 %v1240
      %1395 = vmatmul.mubr.bf16.gmra.mrb[0].mxu0 %v1096
      %v1396 = vpop.f32.mrb[0].mxu0
      %v1397 = vadd.f32 0.0, %v1396
      %v1398 = vpop.f32.mrb[0].mxu0
      %v1399 = vpop.f32.mrb[0].mxu0
      %v1400 = vadd.f32 0.0, %v1399
      %v1401 = vpop.f32.mrb[0].mxu0
      %1402 = vdwg.mxu0
      %v1403 = vadd.f32 %v228, %v1277
      %v1404 = vadd.f32 %v228, %v1280
      %v1405 = vadd.f32 %v228, %v1285
      %v1406 = vadd.f32 %v228, %v1288
      %v1407 = vadd.f32 %v228, %v1293
      %v1408 = vadd.f32 %v228, %v1296
      %v1409 = vadd.f32 %v228, %v1301
      %v1410 = vadd.f32 %v228, %v1304
      %v1411 = vadd.f32 %v228, %v1309
      %v1412 = vadd.f32 %v228, %v1312
      %v1413 = vadd.f32 %v228, %v1317
      %v1414 = vadd.f32 %v228, %v1320
      %v1415 = vadd.f32 %v228, %v1325
      %v1416 = vadd.f32 %v228, %v1328
      %v1417 = vadd.f32 %v228, %v1333
      %v1418 = vadd.f32 %v228, %v1336
      %v1419 = vadd.f32 %v228, %v1341
      %v1420 = vadd.f32 %v228, %v1344
      %v1421 = vadd.f32 %v228, %v1349
      %v1422 = vadd.f32 %v228, %v1352
      %v1423 = vadd.f32 %v228, %v1357
      %v1424 = vadd.f32 %v228, %v1360
      %v1425 = vadd.f32 %v228, %v1365
      %v1426 = vadd.f32 %v228, %v1368
      %v1427 = vadd.f32 %v228, %v1373
      %v1428 = vadd.f32 %v228, %v1376
      %v1429 = vadd.f32 %v228, %v1381
      %v1430 = vadd.f32 %v228, %v1384
      %v1431 = vadd.f32 %v228, %v1389
      %v1432 = vadd.f32 %v228, %v1392
      %v1433 = vadd.f32 %v228, %v1397
      %v1434 = vadd.f32 %v228, %v1400
      %s1435 = scalar_lea.vmem %s206, 12
      %v1436 = vld [vmem:[%s1435] sm:$0xf]
      %v1437 = vld [vmem:[%s1435 + $0x4] sm:$0xf]
      %v1438 = vld [vmem:[%s1435 + $0xc] sm:$0xf]
      %v1439 = vld [vmem:[%s1435 + $0x10] sm:$0xf]
      %v1440 = vld [vmem:[%s1435 + $0x18] sm:$0xf]
      %v1441 = vld [vmem:[%s1435 + $0x1c] sm:$0xf]
      %v1442 = vld [vmem:[%s1435 + $0x24] sm:$0xf]
      %v1443 = vld [vmem:[%s1435 + $0x28] sm:$0xf]
      %v1444 = vld [vmem:[%s1435 + $0x30] sm:$0xf]
      %v1445 = vld [vmem:[%s1435 + $0x34] sm:$0xf]
      %v1446 = vld [vmem:[%s1435 + $0x3c] sm:$0xf]
      %v1447 = vld [vmem:[%s1435 + $0x40] sm:$0xf]
      %v1448 = vld [vmem:[%s1435 + $0x48] sm:$0xf]
      %v1449 = vld [vmem:[%s1435 + $0x4c] sm:$0xf]
      %v1450 = vld [vmem:[%s1435 + $0x54] sm:$0xf]
      %v1451 = vld [vmem:[%s1435 + $0x58] sm:$0xf]
      %v1452 = vld [vmem:[%s1435 + $0x60] sm:$0xf]
      %v1453 = vld [vmem:[%s1435 + $0x64] sm:$0xf]
      %v1454 = vld [vmem:[%s1435 + $0x6c] sm:$0xf]
      %v1455 = vld [vmem:[%s1435 + $0x70] sm:$0xf]
      %v1456 = vld [vmem:[%s1435 + $0x78] sm:$0xf]
      %v1457 = vld [vmem:[%s1435 + $0x7c] sm:$0xf]
      %v1458 = vld [vmem:[%s1435 + $0x84] sm:$0xf]
      %v1459 = vld [vmem:[%s1435 + $0x88] sm:$0xf]
      %v1460 = vld [vmem:[%s1435 + $0x90] sm:$0xf]
      %v1461 = vld [vmem:[%s1435 + $0x94] sm:$0xf]
      %v1462 = vld [vmem:[%s1435 + $0x9c] sm:$0xf]
      %v1463 = vld [vmem:[%s1435 + $0xa0] sm:$0xf]
      %v1464 = vld [vmem:[%s1435 + $0xa8] sm:$0xf]
      %v1465 = vld [vmem:[%s1435 + $0xac] sm:$0xf]
      %v1466 = vld [vmem:[%s1435 + $0xb4] sm:$0xf]
      %v1467 = vld [vmem:[%s1435 + $0xb8] sm:$0xf]
      %v1500 = vunpack.c.l.b16 %v1436
      %v1501 = vunpack.c.l.b16 %v1437
      %v1502 = vunpack.c.l.b16 %v1438
      %v1503 = vunpack.c.l.b16 %v1439
      %v1504 = vunpack.c.l.b16 %v1440
      %v1505 = vunpack.c.l.b16 %v1441
      %v1506 = vunpack.c.l.b16 %v1442
      %v1507 = vunpack.c.l.b16 %v1443
      %v1508 = vunpack.c.l.b16 %v1444
      %v1509 = vunpack.c.l.b16 %v1445
      %v1510 = vunpack.c.l.b16 %v1446
      %v1511 = vunpack.c.l.b16 %v1447
      %v1512 = vunpack.c.l.b16 %v1448
      %v1513 = vunpack.c.l.b16 %v1449
      %v1514 = vunpack.c.l.b16 %v1450
      %v1515 = vunpack.c.l.b16 %v1451
      %v1516 = vunpack.c.l.b16 %v1452
      %v1517 = vunpack.c.l.b16 %v1453
      %v1518 = vunpack.c.l.b16 %v1454
      %v1519 = vunpack.c.l.b16 %v1455
      %v1520 = vunpack.c.l.b16 %v1456
      %v1521 = vunpack.c.l.b16 %v1457
      %v1522 = vunpack.c.l.b16 %v1458
      %v1523 = vunpack.c.l.b16 %v1459
      %v1524 = vunpack.c.l.b16 %v1460
      %v1525 = vunpack.c.l.b16 %v1461
      %v1526 = vunpack.c.l.b16 %v1462
      %v1527 = vunpack.c.l.b16 %v1463
      %v1528 = vunpack.c.l.b16 %v1464
      %v1529 = vunpack.c.l.b16 %v1465
      %v1530 = vunpack.c.l.b16 %v1466
      %v1531 = vunpack.c.l.b16 %v1467
      %v1532 = vpack.c.b16 %v1501, %v1500
      %v1533 = vpack.c.b16 %v1503, %v1502
      %v1534 = vpack.c.b16 %v1505, %v1504
      %v1535 = vpack.c.b16 %v1507, %v1506
      %v1536 = vpack.c.b16 %v1509, %v1508
      %v1537 = vpack.c.b16 %v1511, %v1510
      %v1538 = vpack.c.b16 %v1513, %v1512
      %v1539 = vpack.c.b16 %v1515, %v1514
      %v1540 = vpack.c.b16 %v1517, %v1516
      %v1541 = vpack.c.b16 %v1519, %v1518
      %v1542 = vpack.c.b16 %v1521, %v1520
      %v1543 = vpack.c.b16 %v1523, %v1522
      %v1544 = vpack.c.b16 %v1525, %v1524
      %v1545 = vpack.c.b16 %v1527, %v1526
      %v1546 = vpack.c.b16 %v1529, %v1528
      %v1547 = vpack.c.b16 %v1531, %v1530
      %1564 = vst.msk [vmem:[#allocation2] sm:$0xff] %vm358, %v1532
      %1565 = vst.msk [vmem:[#allocation2 + $0x10] sm:$0xff] %vm358, %v1533
      %1566 = vst.msk [vmem:[#allocation2 + $0x20] sm:$0xff] %vm358, %v1534
      %1567 = vst.msk [vmem:[#allocation2 + $0x30] sm:$0xff] %vm358, %v1535
      %1568 = vst.msk [vmem:[#allocation2 + $0x40] sm:$0xff] %vm358, %v1536
      %1569 = vst.msk [vmem:[#allocation2 + $0x50] sm:$0xff] %vm358, %v1537
      %1570 = vst.msk [vmem:[#allocation2 + $0x60] sm:$0xff] %vm358, %v1538
      %1571 = vst.msk [vmem:[#allocation2 + $0x70] sm:$0xff] %vm358, %v1539
      %1572 = vst.msk [vmem:[#allocation2 + $0x80] sm:$0xff] %vm358, %v1540
      %1573 = vst.msk [vmem:[#allocation2 + $0x90] sm:$0xff] %vm358, %v1541
      %1574 = vst.msk [vmem:[#allocation2 + $0xa0] sm:$0xff] %vm358, %v1542
      %1575 = vst.msk [vmem:[#allocation2 + $0xb0] sm:$0xff] %vm358, %v1543
      %1576 = vst.msk [vmem:[#allocation2 + $0xc0] sm:$0xff] %vm358, %v1544
      %1577 = vst.msk [vmem:[#allocation2 + $0xd0] sm:$0xff] %vm358, %v1545
      %1578 = vst.msk [vmem:[#allocation2 + $0xe0] sm:$0xff] %vm358, %v1546
      %1579 = vst.msk [vmem:[#allocation2 + $0xf0] sm:$0xff] %vm358, %v1547
      %v1580 = vld [vmem:[%s1435] sm:$0xf]
      %v1581 = vld [vmem:[%s1435 + $0x4] sm:$0xf]
      %v1582 = vld [vmem:[%s1435 + $0x8] sm:$0x1]
      %v1583 = vld [vmem:[%s1435 + $0xc] sm:$0xf]
      %v1584 = vld [vmem:[%s1435 + $0x10] sm:$0xf]
      %v1585 = vld [vmem:[%s1435 + $0x14] sm:$0x1]
      %v1586 = vld [vmem:[%s1435 + $0x18] sm:$0xf]
      %v1587 = vld [vmem:[%s1435 + $0x1c] sm:$0xf]
      %v1588 = vld [vmem:[%s1435 + $0x20] sm:$0x1]
      %v1589 = vld [vmem:[%s1435 + $0x24] sm:$0xf]
      %v1590 = vld [vmem:[%s1435 + $0x28] sm:$0xf]
      %v1591 = vld [vmem:[%s1435 + $0x2c] sm:$0x1]
      %v1592 = vld [vmem:[%s1435 + $0x30] sm:$0xf]
      %v1593 = vld [vmem:[%s1435 + $0x34] sm:$0xf]
      %v1594 = vld [vmem:[%s1435 + $0x38] sm:$0x1]
      %v1595 = vld [vmem:[%s1435 + $0x3c] sm:$0xf]
      %v1596 = vld [vmem:[%s1435 + $0x40] sm:$0xf]
      %v1597 = vld [vmem:[%s1435 + $0x44] sm:$0x1]
      %v1598 = vld [vmem:[%s1435 + $0x48] sm:$0xf]
      %v1599 = vld [vmem:[%s1435 + $0x4c] sm:$0xf]
      %v1600 = vld [vmem:[%s1435 + $0x50] sm:$0x1]
      %v1601 = vld [vmem:[%s1435 + $0x54] sm:$0xf]
      %v1602 = vld [vmem:[%s1435 + $0x58] sm:$0xf]
      %v1603 = vld [vmem:[%s1435 + $0x5c] sm:$0x1]
      %v1604 = vld [vmem:[%s1435 + $0x60] sm:$0xf]
      %v1605 = vld [vmem:[%s1435 + $0x64] sm:$0xf]
      %v1606 = vld [vmem:[%s1435 + $0x68] sm:$0x1]
      %v1607 = vld [vmem:[%s1435 + $0x6c] sm:$0xf]
      %v1608 = vld [vmem:[%s1435 + $0x70] sm:$0xf]
      %v1609 = vld [vmem:[%s1435 + $0x74] sm:$0x1]
      %v1610 = vld [vmem:[%s1435 + $0x78] sm:$0xf]
      %v1611 = vld [vmem:[%s1435 + $0x7c] sm:$0xf]
      %v1612 = vld [vmem:[%s1435 + $0x80] sm:$0x1]
      %v1613 = vld [vmem:[%s1435 + $0x84] sm:$0xf]
      %v1614 = vld [vmem:[%s1435 + $0x88] sm:$0xf]
      %v1615 = vld [vmem:[%s1435 + $0x8c] sm:$0x1]
      %v1616 = vld [vmem:[%s1435 + $0x90] sm:$0xf]
      %v1617 = vld [vmem:[%s1435 + $0x94] sm:$0xf]
      %v1618 = vld [vmem:[%s1435 + $0x98] sm:$0x1]
      %v1619 = vld [vmem:[%s1435 + $0x9c] sm:$0xf]
      %v1620 = vld [vmem:[%s1435 + $0xa0] sm:$0xf]
      %v1621 = vld [vmem:[%s1435 + $0xa4] sm:$0x1]
      %v1622 = vld [vmem:[%s1435 + $0xa8] sm:$0xf]
      %v1623 = vld [vmem:[%s1435 + $0xac] sm:$0xf]
      %v1624 = vld [vmem:[%s1435 + $0xb0] sm:$0x1]
      %v1625 = vld [vmem:[%s1435 + $0xb4] sm:$0xf]
      %v1626 = vld [vmem:[%s1435 + $0xb8] sm:$0xf]
      %v1627 = vld [vmem:[%s1435 + $0xbc] sm:$0x1]
      %v1676 = vunpack.c.l.b16 %v1580
      %v1677 = vunpack.c.l.b16 %v1581
      %v1678 = vunpack.c.l.b16 %v1582
      %v1679 = vunpack.c.l.b16 %v1583
      %v1680 = vunpack.c.l.b16 %v1584
      %v1681 = vunpack.c.l.b16 %v1585
      %v1682 = vunpack.c.l.b16 %v1586
      %v1683 = vunpack.c.l.b16 %v1587
      %v1684 = vunpack.c.l.b16 %v1588
      %v1685 = vunpack.c.l.b16 %v1589
      %v1686 = vunpack.c.l.b16 %v1590
      %v1687 = vunpack.c.l.b16 %v1591
      %v1688 = vunpack.c.l.b16 %v1592
      %v1689 = vunpack.c.l.b16 %v1593
      %v1690 = vunpack.c.l.b16 %v1594
      %v1691 = vunpack.c.l.b16 %v1595
      %v1692 = vunpack.c.l.b16 %v1596
      %v1693 = vunpack.c.l.b16 %v1597
      %v1694 = vunpack.c.l.b16 %v1598
      %v1695 = vunpack.c.l.b16 %v1599
      %v1696 = vunpack.c.l.b16 %v1600
      %v1697 = vunpack.c.l.b16 %v1601
      %v1698 = vunpack.c.l.b16 %v1602
      %v1699 = vunpack.c.l.b16 %v1603
      %v1700 = vunpack.c.l.b16 %v1604
      %v1701 = vunpack.c.l.b16 %v1605
      %v1702 = vunpack.c.l.b16 %v1606
      %v1703 = vunpack.c.l.b16 %v1607
      %v1704 = vunpack.c.l.b16 %v1608
      %v1705 = vunpack.c.l.b16 %v1609
      %v1706 = vunpack.c.l.b16 %v1610
      %v1707 = vunpack.c.l.b16 %v1611
      %v1708 = vunpack.c.l.b16 %v1612
      %v1709 = vunpack.c.l.b16 %v1613
      %v1710 = vunpack.c.l.b16 %v1614
      %v1711 = vunpack.c.l.b16 %v1615
      %v1712 = vunpack.c.l.b16 %v1616
      %v1713 = vunpack.c.l.b16 %v1617
      %v1714 = vunpack.c.l.b16 %v1618
      %v1715 = vunpack.c.l.b16 %v1619
      %v1716 = vunpack.c.l.b16 %v1620
      %v1717 = vunpack.c.l.b16 %v1621
      %v1718 = vunpack.c.l.b16 %v1622
      %v1719 = vunpack.c.l.b16 %v1623
      %v1720 = vunpack.c.l.b16 %v1624
      %v1721 = vunpack.c.l.b16 %v1625
      %v1722 = vunpack.c.l.b16 %v1626
      %v1723 = vunpack.c.l.b16 %v1627
      %v1724 = vpack.c.b16 %v1677, %v1676
      %v1725 = vpack.c.b16 %v1678, %v1678
      %v1726 = vpack.c.b16 %v1680, %v1679
      %v1727 = vpack.c.b16 %v1681, %v1681
      %v1728 = vpack.c.b16 %v1683, %v1682
      %v1729 = vpack.c.b16 %v1684, %v1684
      %v1730 = vpack.c.b16 %v1686, %v1685
      %v1731 = vpack.c.b16 %v1687, %v1687
      %v1732 = vpack.c.b16 %v1689, %v1688
      %v1733 = vpack.c.b16 %v1690, %v1690
      %v1734 = vpack.c.b16 %v1692, %v1691
      %v1735 = vpack.c.b16 %v1693, %v1693
      %v1736 = vpack.c.b16 %v1695, %v1694
      %v1737 = vpack.c.b16 %v1696, %v1696
      %v1738 = vpack.c.b16 %v1698, %v1697
      %v1739 = vpack.c.b16 %v1699, %v1699
      %v1740 = vpack.c.b16 %v1701, %v1700
      %v1741 = vpack.c.b16 %v1702, %v1702
      %v1742 = vpack.c.b16 %v1704, %v1703
      %v1743 = vpack.c.b16 %v1705, %v1705
      %v1744 = vpack.c.b16 %v1707, %v1706
      %v1745 = vpack.c.b16 %v1708, %v1708
      %v1746 = vpack.c.b16 %v1710, %v1709
      %v1747 = vpack.c.b16 %v1711, %v1711
      %v1748 = vpack.c.b16 %v1713, %v1712
      %v1749 = vpack.c.b16 %v1714, %v1714
      %v1750 = vpack.c.b16 %v1716, %v1715
      %v1751 = vpack.c.b16 %v1717, %v1717
      %v1752 = vpack.c.b16 %v1719, %v1718
      %v1753 = vpack.c.b16 %v1720, %v1720
      %v1754 = vpack.c.b16 %v1722, %v1721
      %v1755 = vpack.c.b16 %v1723, %v1723
      %v1757 = vshrl.u32 %v1724, 16
      %v1759 = vshll.u32 %v1724, 16
      %v1761 = vrot.slane %v1759, 1
      %v1762 = vor.u32 %v1757, %v1761
      %v1764 = vshll.u32 %v1725, 16
      %v1766 = vrot.slane %v1764, 1
      %v1767 = vsel %vm551, %v1762, %v1766
      %v1769 = vshrl.u32 %v1726, 16
      %v1771 = vshll.u32 %v1726, 16
      %v1773 = vrot.slane %v1771, 1
      %v1774 = vor.u32 %v1769, %v1773
      %v1776 = vshll.u32 %v1727, 16
      %v1778 = vrot.slane %v1776, 1
      %v1779 = vsel %vm551, %v1774, %v1778
      %v1781 = vshrl.u32 %v1728, 16
      %v1783 = vshll.u32 %v1728, 16
      %v1785 = vrot.slane %v1783, 1
      %v1786 = vor.u32 %v1781, %v1785
      %v1788 = vshll.u32 %v1729, 16
      %v1790 = vrot.slane %v1788, 1
      %v1791 = vsel %vm551, %v1786, %v1790
      %v1793 = vshrl.u32 %v1730, 16
      %v1795 = vshll.u32 %v1730, 16
      %v1797 = vrot.slane %v1795, 1
      %v1798 = vor.u32 %v1793, %v1797
      %v1800 = vshll.u32 %v1731, 16
      %v1802 = vrot.slane %v1800, 1
      %v1803 = vsel %vm551, %v1798, %v1802
      %v1805 = vshrl.u32 %v1732, 16
      %v1807 = vshll.u32 %v1732, 16
      %v1809 = vrot.slane %v1807, 1
      %v1810 = vor.u32 %v1805, %v1809
      %v1812 = vshll.u32 %v1733, 16
      %v1814 = vrot.slane %v1812, 1
      %v1815 = vsel %vm551, %v1810, %v1814
      %v1817 = vshrl.u32 %v1734, 16
      %v1819 = vshll.u32 %v1734, 16
      %v1821 = vrot.slane %v1819, 1
      %v1822 = vor.u32 %v1817, %v1821
      %v1824 = vshll.u32 %v1735, 16
      %v1826 = vrot.slane %v1824, 1
      %v1827 = vsel %vm551, %v1822, %v1826
      %v1829 = vshrl.u32 %v1736, 16
      %v1831 = vshll.u32 %v1736, 16
      %v1833 = vrot.slane %v1831, 1
      %v1834 = vor.u32 %v1829, %v1833
      %v1836 = vshll.u32 %v1737, 16
      %v1838 = vrot.slane %v1836, 1
      %v1839 = vsel %vm551, %v1834, %v1838
      %v1841 = vshrl.u32 %v1738, 16
      %v1843 = vshll.u32 %v1738, 16
      %v1845 = vrot.slane %v1843, 1
      %v1846 = vor.u32 %v1841, %v1845
      %v1848 = vshll.u32 %v1739, 16
      %v1850 = vrot.slane %v1848, 1
      %v1851 = vsel %vm551, %v1846, %v1850
      %v1853 = vshrl.u32 %v1740, 16
      %v1855 = vshll.u32 %v1740, 16
      %v1857 = vrot.slane %v1855, 1
      %v1858 = vor.u32 %v1853, %v1857
      %v1860 = vshll.u32 %v1741, 16
      %v1862 = vrot.slane %v1860, 1
      %v1863 = vsel %vm551, %v1858, %v1862
      %v1865 = vshrl.u32 %v1742, 16
      %v1867 = vshll.u32 %v1742, 16
      %v1869 = vrot.slane %v1867, 1
      %v1870 = vor.u32 %v1865, %v1869
      %v1872 = vshll.u32 %v1743, 16
      %v1874 = vrot.slane %v1872, 1
      %v1875 = vsel %vm551, %v1870, %v1874
      %v1877 = vshrl.u32 %v1744, 16
      %v1879 = vshll.u32 %v1744, 16
      %v1881 = vrot.slane %v1879, 1
      %v1882 = vor.u32 %v1877, %v1881
      %v1884 = vshll.u32 %v1745, 16
      %v1886 = vrot.slane %v1884, 1
      %v1887 = vsel %vm551, %v1882, %v1886
      %v1889 = vshrl.u32 %v1746, 16
      %v1891 = vshll.u32 %v1746, 16
      %v1893 = vrot.slane %v1891, 1
      %v1894 = vor.u32 %v1889, %v1893
      %v1896 = vshll.u32 %v1747, 16
      %v1898 = vrot.slane %v1896, 1
      %v1899 = vsel %vm551, %v1894, %v1898
      %v1901 = vshrl.u32 %v1748, 16
      %v1903 = vshll.u32 %v1748, 16
      %v1905 = vrot.slane %v1903, 1
      %v1906 = vor.u32 %v1901, %v1905
      %v1908 = vshll.u32 %v1749, 16
      %v1910 = vrot.slane %v1908, 1
      %v1911 = vsel %vm551, %v1906, %v1910
      %v1913 = vshrl.u32 %v1750, 16
      %v1915 = vshll.u32 %v1750, 16
      %v1917 = vrot.slane %v1915, 1
      %v1918 = vor.u32 %v1913, %v1917
      %v1920 = vshll.u32 %v1751, 16
      %v1922 = vrot.slane %v1920, 1
      %v1923 = vsel %vm551, %v1918, %v1922
      %v1925 = vshrl.u32 %v1752, 16
      %v1927 = vshll.u32 %v1752, 16
      %v1929 = vrot.slane %v1927, 1
      %v1930 = vor.u32 %v1925, %v1929
      %v1932 = vshll.u32 %v1753, 16
      %v1934 = vrot.slane %v1932, 1
      %v1935 = vsel %vm551, %v1930, %v1934
      %v1937 = vshrl.u32 %v1754, 16
      %v1939 = vshll.u32 %v1754, 16
      %v1941 = vrot.slane %v1939, 1
      %v1942 = vor.u32 %v1937, %v1941
      %v1944 = vshll.u32 %v1755, 16
      %v1946 = vrot.slane %v1944, 1
      %v1947 = vsel %vm551, %v1942, %v1946
      %1948 = vrot.lane.b32.xlu0 %v1767, 64
      %v1949 = vpop.permute.xlu0 %1948
      %1950 = vrot.lane.b32.xlu0 %v1779, 64
      %v1951 = vpop.permute.xlu0 %1950
      %1952 = vrot.lane.b32.xlu0 %v1791, 64
      %v1953 = vpop.permute.xlu0 %1952
      %1954 = vrot.lane.b32.xlu0 %v1803, 64
      %v1955 = vpop.permute.xlu0 %1954
      %1956 = vrot.lane.b32.xlu0 %v1815, 64
      %v1957 = vpop.permute.xlu0 %1956
      %1958 = vrot.lane.b32.xlu0 %v1827, 64
      %v1959 = vpop.permute.xlu0 %1958
      %1960 = vrot.lane.b32.xlu0 %v1839, 64
      %v1961 = vpop.permute.xlu0 %1960
      %1962 = vrot.lane.b32.xlu0 %v1851, 64
      %v1963 = vpop.permute.xlu0 %1962
      %1964 = vrot.lane.b32.xlu0 %v1863, 64
      %v1965 = vpop.permute.xlu0 %1964
      %1966 = vrot.lane.b32.xlu0 %v1875, 64
      %v1967 = vpop.permute.xlu0 %1966
      %1968 = vrot.lane.b32.xlu0 %v1887, 64
      %v1969 = vpop.permute.xlu0 %1968
      %1970 = vrot.lane.b32.xlu0 %v1899, 64
      %v1971 = vpop.permute.xlu0 %1970
      %1972 = vrot.lane.b32.xlu0 %v1911, 64
      %v1973 = vpop.permute.xlu0 %1972
      %1974 = vrot.lane.b32.xlu0 %v1923, 64
      %v1975 = vpop.permute.xlu0 %1974
      %1976 = vrot.lane.b32.xlu0 %v1935, 64
      %v1977 = vpop.permute.xlu0 %1976
      %1978 = vrot.lane.b32.xlu0 %v1947, 64
      %v1979 = vpop.permute.xlu0 %1978
      %1996 = vst.msk [vmem:[#allocation2] sm:$0xff] %vm792, %v1949
      %1997 = vst.msk [vmem:[#allocation2 + $0x10] sm:$0xff] %vm792, %v1951
      %1998 = vst.msk [vmem:[#allocation2 + $0x20] sm:$0xff] %vm792, %v1953
      %1999 = vst.msk [vmem:[#allocation2 + $0x30] sm:$0xff] %vm792, %v1955
      %2000 = vst.msk [vmem:[#allocation2 + $0x40] sm:$0xff] %vm792, %v1957
      %2001 = vst.msk [vmem:[#allocation2 + $0x50] sm:$0xff] %vm792, %v1959
      %2002 = vst.msk [vmem:[#allocation2 + $0x60] sm:$0xff] %vm792, %v1961
      %2003 = vst.msk [vmem:[#allocation2 + $0x70] sm:$0xff] %vm792, %v1963
      %2004 = vst.msk [vmem:[#allocation2 + $0x80] sm:$0xff] %vm792, %v1965
      %2005 = vst.msk [vmem:[#allocation2 + $0x90] sm:$0xff] %vm792, %v1967
      %2006 = vst.msk [vmem:[#allocation2 + $0xa0] sm:$0xff] %vm792, %v1969
      %2007 = vst.msk [vmem:[#allocation2 + $0xb0] sm:$0xff] %vm792, %v1971
      %2008 = vst.msk [vmem:[#allocation2 + $0xc0] sm:$0xff] %vm792, %v1973
      %2009 = vst.msk [vmem:[#allocation2 + $0xd0] sm:$0xff] %vm792, %v1975
      %2010 = vst.msk [vmem:[#allocation2 + $0xe0] sm:$0xff] %vm792, %v1977
      %2011 = vst.msk [vmem:[#allocation2 + $0xf0] sm:$0xff] %vm792, %v1979
      %v2012 = vld [vmem:[%s1435] sm:$0xe]
      %v2013 = vld [vmem:[%s1435 + $0x4] sm:$0xf]
      %v2014 = vld [vmem:[%s1435 + $0x8] sm:$0x1]
      %v2015 = vld [vmem:[%s1435 + $0xc] sm:$0xe]
      %v2016 = vld [vmem:[%s1435 + $0x10] sm:$0xf]
      %v2017 = vld [vmem:[%s1435 + $0x14] sm:$0x1]
      %v2018 = vld [vmem:[%s1435 + $0x18] sm:$0xe]
      %v2019 = vld [vmem:[%s1435 + $0x1c] sm:$0xf]
      %v2020 = vld [vmem:[%s1435 + $0x20] sm:$0x1]
      %v2021 = vld [vmem:[%s1435 + $0x24] sm:$0xe]
      %v2022 = vld [vmem:[%s1435 + $0x28] sm:$0xf]
      %v2023 = vld [vmem:[%s1435 + $0x2c] sm:$0x1]
      %v2024 = vld [vmem:[%s1435 + $0x30] sm:$0xe]
      %v2025 = vld [vmem:[%s1435 + $0x34] sm:$0xf]
      %v2026 = vld [vmem:[%s1435 + $0x38] sm:$0x1]
      %v2027 = vld [vmem:[%s1435 + $0x3c] sm:$0xe]
      %v2028 = vld [vmem:[%s1435 + $0x40] sm:$0xf]
      %v2029 = vld [vmem:[%s1435 + $0x44] sm:$0x1]
      %v2030 = vld [vmem:[%s1435 + $0x48] sm:$0xe]
      %v2031 = vld [vmem:[%s1435 + $0x4c] sm:$0xf]
      %v2032 = vld [vmem:[%s1435 + $0x50] sm:$0x1]
      %v2033 = vld [vmem:[%s1435 + $0x54] sm:$0xe]
      %v2034 = vld [vmem:[%s1435 + $0x58] sm:$0xf]
      %v2035 = vld [vmem:[%s1435 + $0x5c] sm:$0x1]
      %v2036 = vld [vmem:[%s1435 + $0x60] sm:$0xe]
      %v2037 = vld [vmem:[%s1435 + $0x64] sm:$0xf]
      %v2038 = vld [vmem:[%s1435 + $0x68] sm:$0x1]
      %v2039 = vld [vmem:[%s1435 + $0x6c] sm:$0xe]
      %v2040 = vld [vmem:[%s1435 + $0x70] sm:$0xf]
      %v2041 = vld [vmem:[%s1435 + $0x74] sm:$0x1]
      %v2042 = vld [vmem:[%s1435 + $0x78] sm:$0xe]
      %v2043 = vld [vmem:[%s1435 + $0x7c] sm:$0xf]
      %v2044 = vld [vmem:[%s1435 + $0x80] sm:$0x1]
      %v2045 = vld [vmem:[%s1435 + $0x84] sm:$0xe]
      %v2046 = vld [vmem:[%s1435 + $0x88] sm:$0xf]
      %v2047 = vld [vmem:[%s1435 + $0x8c] sm:$0x1]
      %v2048 = vld [vmem:[%s1435 + $0x90] sm:$0xe]
      %v2049 = vld [vmem:[%s1435 + $0x94] sm:$0xf]
      %v2050 = vld [vmem:[%s1435 + $0x98] sm:$0x1]
      %v2051 = vld [vmem:[%s1435 + $0x9c] sm:$0xe]
      %v2052 = vld [vmem:[%s1435 + $0xa0] sm:$0xf]
      %v2053 = vld [vmem:[%s1435 + $0xa4] sm:$0x1]
      %v2054 = vld [vmem:[%s1435 + $0xa8] sm:$0xe]
      %v2055 = vld [vmem:[%s1435 + $0xac] sm:$0xf]
      %v2056 = vld [vmem:[%s1435 + $0xb0] sm:$0x1]
      %v2057 = vld [vmem:[%s1435 + $0xb4] sm:$0xe]
      %v2058 = vld [vmem:[%s1435 + $0xb8] sm:$0xf]
      %v2059 = vld [vmem:[%s1435 + $0xbc] sm:$0x1]
      %v2108 = vunpack.c.l.b16 %v2012
      %v2109 = vunpack.c.l.b16 %v2013
      %v2110 = vunpack.c.l.b16 %v2014
      %v2111 = vunpack.c.l.b16 %v2015
      %v2112 = vunpack.c.l.b16 %v2016
      %v2113 = vunpack.c.l.b16 %v2017
      %v2114 = vunpack.c.l.b16 %v2018
      %v2115 = vunpack.c.l.b16 %v2019
      %v2116 = vunpack.c.l.b16 %v2020
      %v2117 = vunpack.c.l.b16 %v2021
      %v2118 = vunpack.c.l.b16 %v2022
      %v2119 = vunpack.c.l.b16 %v2023
      %v2120 = vunpack.c.l.b16 %v2024
      %v2121 = vunpack.c.l.b16 %v2025
      %v2122 = vunpack.c.l.b16 %v2026
      %v2123 = vunpack.c.l.b16 %v2027
      %v2124 = vunpack.c.l.b16 %v2028
      %v2125 = vunpack.c.l.b16 %v2029
      %v2126 = vunpack.c.l.b16 %v2030
      %v2127 = vunpack.c.l.b16 %v2031
      %v2128 = vunpack.c.l.b16 %v2032
      %v2129 = vunpack.c.l.b16 %v2033
      %v2130 = vunpack.c.l.b16 %v2034
      %v2131 = vunpack.c.l.b16 %v2035
      %v2132 = vunpack.c.l.b16 %v2036
      %v2133 = vunpack.c.l.b16 %v2037
      %v2134 = vunpack.c.l.b16 %v2038
      %v2135 = vunpack.c.l.b16 %v2039
      %v2136 = vunpack.c.l.b16 %v2040
      %v2137 = vunpack.c.l.b16 %v2041
      %v2138 = vunpack.c.l.b16 %v2042
      %v2139 = vunpack.c.l.b16 %v2043
      %v2140 = vunpack.c.l.b16 %v2044
      %v2141 = vunpack.c.l.b16 %v2045
      %v2142 = vunpack.c.l.b16 %v2046
      %v2143 = vunpack.c.l.b16 %v2047
      %v2144 = vunpack.c.l.b16 %v2048
      %v2145 = vunpack.c.l.b16 %v2049
      %v2146 = vunpack.c.l.b16 %v2050
      %v2147 = vunpack.c.l.b16 %v2051
      %v2148 = vunpack.c.l.b16 %v2052
      %v2149 = vunpack.c.l.b16 %v2053
      %v2150 = vunpack.c.l.b16 %v2054
      %v2151 = vunpack.c.l.b16 %v2055
      %v2152 = vunpack.c.l.b16 %v2056
      %v2153 = vunpack.c.l.b16 %v2057
      %v2154 = vunpack.c.l.b16 %v2058
      %v2155 = vunpack.c.l.b16 %v2059
      %v2156 = vpack.c.b16 %v2109, %v2108
      %v2157 = vpack.c.b16 %v2110, %v2110
      %v2158 = vpack.c.b16 %v2112, %v2111
      %v2159 = vpack.c.b16 %v2113, %v2113
      %v2160 = vpack.c.b16 %v2115, %v2114
      %v2161 = vpack.c.b16 %v2116, %v2116
      %v2162 = vpack.c.b16 %v2118, %v2117
      %v2163 = vpack.c.b16 %v2119, %v2119
      %v2164 = vpack.c.b16 %v2121, %v2120
      %v2165 = vpack.c.b16 %v2122, %v2122
      %v2166 = vpack.c.b16 %v2124, %v2123
      %v2167 = vpack.c.b16 %v2125, %v2125
      %v2168 = vpack.c.b16 %v2127, %v2126
      %v2169 = vpack.c.b16 %v2128, %v2128
      %v2170 = vpack.c.b16 %v2130, %v2129
      %v2171 = vpack.c.b16 %v2131, %v2131
      %v2172 = vpack.c.b16 %v2133, %v2132
      %v2173 = vpack.c.b16 %v2134, %v2134
      %v2174 = vpack.c.b16 %v2136, %v2135
      %v2175 = vpack.c.b16 %v2137, %v2137
      %v2176 = vpack.c.b16 %v2139, %v2138
      %v2177 = vpack.c.b16 %v2140, %v2140
      %v2178 = vpack.c.b16 %v2142, %v2141
      %v2179 = vpack.c.b16 %v2143, %v2143
      %v2180 = vpack.c.b16 %v2145, %v2144
      %v2181 = vpack.c.b16 %v2146, %v2146
      %v2182 = vpack.c.b16 %v2148, %v2147
      %v2183 = vpack.c.b16 %v2149, %v2149
      %v2184 = vpack.c.b16 %v2151, %v2150
      %v2185 = vpack.c.b16 %v2152, %v2152
      %v2186 = vpack.c.b16 %v2154, %v2153
      %v2187 = vpack.c.b16 %v2155, %v2155
      %v2188 = vrot.slane %v2156, 1
      %v2189 = vrot.slane %v2157, 1
      %v2190 = vsel %vm985, %v2188, %v2189
      %v2191 = vrot.slane %v2158, 1
      %v2192 = vrot.slane %v2159, 1
      %v2193 = vsel %vm985, %v2191, %v2192
      %v2194 = vrot.slane %v2160, 1
      %v2195 = vrot.slane %v2161, 1
      %v2196 = vsel %vm985, %v2194, %v2195
      %v2197 = vrot.slane %v2162, 1
      %v2198 = vrot.slane %v2163, 1
      %v2199 = vsel %vm985, %v2197, %v2198
      %v2200 = vrot.slane %v2164, 1
      %v2201 = vrot.slane %v2165, 1
      %v2202 = vsel %vm985, %v2200, %v2201
      %v2203 = vrot.slane %v2166, 1
      %v2204 = vrot.slane %v2167, 1
      %v2205 = vsel %vm985, %v2203, %v2204
      %v2206 = vrot.slane %v2168, 1
      %v2207 = vrot.slane %v2169, 1
      %v2208 = vsel %vm985, %v2206, %v2207
      %v2209 = vrot.slane %v2170, 1
      %v2210 = vrot.slane %v2171, 1
      %v2211 = vsel %vm985, %v2209, %v2210
      %v2212 = vrot.slane %v2172, 1
      %v2213 = vrot.slane %v2173, 1
      %v2214 = vsel %vm985, %v2212, %v2213
      %v2215 = vrot.slane %v2174, 1
      %v2216 = vrot.slane %v2175, 1
      %v2217 = vsel %vm985, %v2215, %v2216
      %v2218 = vrot.slane %v2176, 1
      %v2219 = vrot.slane %v2177, 1
      %v2220 = vsel %vm985, %v2218, %v2219
      %v2221 = vrot.slane %v2178, 1
      %v2222 = vrot.slane %v2179, 1
      %v2223 = vsel %vm985, %v2221, %v2222
      %v2224 = vrot.slane %v2180, 1
      %v2225 = vrot.slane %v2181, 1
      %v2226 = vsel %vm985, %v2224, %v2225
      %v2227 = vrot.slane %v2182, 1
      %v2228 = vrot.slane %v2183, 1
      %v2229 = vsel %vm985, %v2227, %v2228
      %v2230 = vrot.slane %v2184, 1
      %v2231 = vrot.slane %v2185, 1
      %v2232 = vsel %vm985, %v2230, %v2231
      %v2233 = vrot.slane %v2186, 1
      %v2234 = vrot.slane %v2187, 1
      %v2235 = vsel %vm985, %v2233, %v2234
      %2252 = vst.msk [vmem:[#allocation2 + $0x8] sm:$0xff] %vm358, %v2190
      %2253 = vst.msk [vmem:[#allocation2 + $0x18] sm:$0xff] %vm358, %v2193
      %2254 = vst.msk [vmem:[#allocation2 + $0x28] sm:$0xff] %vm358, %v2196
      %2255 = vst.msk [vmem:[#allocation2 + $0x38] sm:$0xff] %vm358, %v2199
      %2256 = vst.msk [vmem:[#allocation2 + $0x48] sm:$0xff] %vm358, %v2202
      %2257 = vst.msk [vmem:[#allocation2 + $0x58] sm:$0xff] %vm358, %v2205
      %2258 = vst.msk [vmem:[#allocation2 + $0x68] sm:$0xff] %vm358, %v2208
      %2259 = vst.msk [vmem:[#allocation2 + $0x78] sm:$0xff] %vm358, %v2211
      %2260 = vst.msk [vmem:[#allocation2 + $0x88] sm:$0xff] %vm358, %v2214
      %2261 = vst.msk [vmem:[#allocation2 + $0x98] sm:$0xff] %vm358, %v2217
      %2262 = vst.msk [vmem:[#allocation2 + $0xa8] sm:$0xff] %vm358, %v2220
      %2263 = vst.msk [vmem:[#allocation2 + $0xb8] sm:$0xff] %vm358, %v2223
      %2264 = vst.msk [vmem:[#allocation2 + $0xc8] sm:$0xff] %vm358, %v2226
      %2265 = vst.msk [vmem:[#allocation2 + $0xd8] sm:$0xff] %vm358, %v2229
      %2266 = vst.msk [vmem:[#allocation2 + $0xe8] sm:$0xff] %vm358, %v2232
      %2267 = vst.msk [vmem:[#allocation2 + $0xf8] sm:$0xff] %vm358, %v2235
      %v2268 = vld [vmem:[#allocation2] sm:$0xff]
      %v2269 = vld [vmem:[#allocation2 + $0x8] sm:$0xff]
      %v2270 = vld [vmem:[#allocation2 + $0x10] sm:$0xff]
      %v2271 = vld [vmem:[#allocation2 + $0x18] sm:$0xff]
      %v2272 = vld [vmem:[#allocation2 + $0x20] sm:$0xff]
      %v2273 = vld [vmem:[#allocation2 + $0x28] sm:$0xff]
      %v2274 = vld [vmem:[#allocation2 + $0x30] sm:$0xff]
      %v2275 = vld [vmem:[#allocation2 + $0x38] sm:$0xff]
      %v2276 = vld [vmem:[#allocation2 + $0x40] sm:$0xff]
      %v2277 = vld [vmem:[#allocation2 + $0x48] sm:$0xff]
      %v2278 = vld [vmem:[#allocation2 + $0x50] sm:$0xff]
      %v2279 = vld [vmem:[#allocation2 + $0x58] sm:$0xff]
      %v2280 = vld [vmem:[#allocation2 + $0x60] sm:$0xff]
      %v2281 = vld [vmem:[#allocation2 + $0x68] sm:$0xff]
      %v2282 = vld [vmem:[#allocation2 + $0x70] sm:$0xff]
      %v2283 = vld [vmem:[#allocation2 + $0x78] sm:$0xff]
      %v2284 = vld [vmem:[#allocation2 + $0x80] sm:$0xff]
      %v2285 = vld [vmem:[#allocation2 + $0x88] sm:$0xff]
      %v2286 = vld [vmem:[#allocation2 + $0x90] sm:$0xff]
      %v2287 = vld [vmem:[#allocation2 + $0x98] sm:$0xff]
      %v2288 = vld [vmem:[#allocation2 + $0xa0] sm:$0xff]
      %v2289 = vld [vmem:[#allocation2 + $0xa8] sm:$0xff]
      %v2290 = vld [vmem:[#allocation2 + $0xb0] sm:$0xff]
      %v2291 = vld [vmem:[#allocation2 + $0xb8] sm:$0xff]
      %v2292 = vld [vmem:[#allocation2 + $0xc0] sm:$0xff]
      %v2293 = vld [vmem:[#allocation2 + $0xc8] sm:$0xff]
      %v2294 = vld [vmem:[#allocation2 + $0xd0] sm:$0xff]
      %v2295 = vld [vmem:[#allocation2 + $0xd8] sm:$0xff]
      %v2296 = vld [vmem:[#allocation2 + $0xe0] sm:$0xff]
      %v2297 = vld [vmem:[#allocation2 + $0xe8] sm:$0xff]
      %v2298 = vld [vmem:[#allocation2 + $0xf0] sm:$0xff]
      %v2299 = vld [vmem:[#allocation2 + $0xf8] sm:$0xff]
      %s2300 = scalar_lea.vmem %s210, 96
      %v2301 = vld [vmem:[%s2300] sm:$0xf]
      %v2302 = vld [vmem:[%s2300 + $0x4] sm:$0xf]
      %v2303 = vld [vmem:[%s2300 + $0x8] sm:$0xf]
      %v2304 = vld [vmem:[%s2300 + $0xc] sm:$0xf]
      %v2305 = vld [vmem:[%s2300 + $0x10] sm:$0xf]
      %v2306 = vld [vmem:[%s2300 + $0x14] sm:$0xf]
      %v2307 = vld [vmem:[%s2300 + $0x18] sm:$0xf]
      %v2308 = vld [vmem:[%s2300 + $0x1c] sm:$0xf]
      %v2309 = vld [vmem:[%s2300 + $0x20] sm:$0xf]
      %v2310 = vld [vmem:[%s2300 + $0x24] sm:$0xf]
      %v2311 = vld [vmem:[%s2300 + $0x28] sm:$0xf]
      %v2312 = vld [vmem:[%s2300 + $0x2c] sm:$0xf]
      %v2313 = vld [vmem:[%s2300 + $0x30] sm:$0xf]
      %v2314 = vld [vmem:[%s2300 + $0x34] sm:$0xf]
      %v2315 = vld [vmem:[%s2300 + $0x38] sm:$0xf]
      %v2316 = vld [vmem:[%s2300 + $0x3c] sm:$0xf]
      %v2317 = vld [vmem:[%s2300 + $0x40] sm:$0xf]
      %v2318 = vld [vmem:[%s2300 + $0x44] sm:$0xf]
      %v2319 = vld [vmem:[%s2300 + $0x48] sm:$0xf]
      %v2320 = vld [vmem:[%s2300 + $0x4c] sm:$0xf]
      %v2321 = vld [vmem:[%s2300 + $0x50] sm:$0xf]
      %v2322 = vld [vmem:[%s2300 + $0x54] sm:$0xf]
      %v2323 = vld [vmem:[%s2300 + $0x58] sm:$0xf]
      %v2324 = vld [vmem:[%s2300 + $0x5c] sm:$0xf]
      %v2349 = vunpack.c.l.b16 %v2301
      %v2350 = vunpack.c.l.b16 %v2302
      %v2351 = vunpack.c.l.b16 %v2303
      %v2352 = vunpack.c.l.b16 %v2304
      %v2353 = vunpack.c.l.b16 %v2305
      %v2354 = vunpack.c.l.b16 %v2306
      %v2355 = vunpack.c.l.b16 %v2307
      %v2356 = vunpack.c.l.b16 %v2308
      %v2357 = vunpack.c.l.b16 %v2309
      %v2358 = vunpack.c.l.b16 %v2310
      %v2359 = vunpack.c.l.b16 %v2311
      %v2360 = vunpack.c.l.b16 %v2312
      %v2361 = vunpack.c.l.b16 %v2313
      %v2362 = vunpack.c.l.b16 %v2314
      %v2363 = vunpack.c.l.b16 %v2315
      %v2364 = vunpack.c.l.b16 %v2316
      %v2365 = vunpack.c.l.b16 %v2317
      %v2366 = vunpack.c.l.b16 %v2318
      %v2367 = vunpack.c.l.b16 %v2319
      %v2368 = vunpack.c.l.b16 %v2320
      %v2369 = vunpack.c.l.b16 %v2321
      %v2370 = vunpack.c.l.b16 %v2322
      %v2371 = vunpack.c.l.b16 %v2323
      %v2372 = vunpack.c.l.b16 %v2324
      %v2373 = vpack.c.b16 %v2350, %v2349
      %v2374 = vpack.c.b16 %v2352, %v2351
      %v2375 = vpack.c.b16 %v2354, %v2353
      %v2376 = vpack.c.b16 %v2356, %v2355
      %v2377 = vpack.c.b16 %v2358, %v2357
      %v2378 = vpack.c.b16 %v2360, %v2359
      %v2379 = vpack.c.b16 %v2362, %v2361
      %v2380 = vpack.c.b16 %v2364, %v2363
      %v2381 = vpack.c.b16 %v2366, %v2365
      %v2382 = vpack.c.b16 %v2368, %v2367
      %v2383 = vpack.c.b16 %v2370, %v2369
      %v2384 = vpack.c.b16 %v2372, %v2371
      %v2398 = vsel %vm358, %v2269, 0
      %v2401 = vsel %vm358, %v2271, 0
      %v2404 = vsel %vm358, %v2273, 0
      %v2407 = vsel %vm358, %v2275, 0
      %v2410 = vsel %vm358, %v2277, 0
      %v2413 = vsel %vm358, %v2279, 0
      %v2416 = vsel %vm358, %v2281, 0
      %v2419 = vsel %vm358, %v2283, 0
      %v2422 = vsel %vm358, %v2285, 0
      %v2425 = vsel %vm358, %v2287, 0
      %v2428 = vsel %vm358, %v2289, 0
      %v2431 = vsel %vm358, %v2291, 0
      %v2434 = vsel %vm358, %v2293, 0
      %v2437 = vsel %vm358, %v2295, 0
      %v2440 = vsel %vm358, %v2297, 0
      %v2443 = vsel %vm358, %v2299, 0
      %2445 = vmatprep.subr.bf16.mxu0 0
      %2446 = vmatpush1.bf16.msra.mxu0 %v2373
      %2447 = vmatprep.subr.bf16.mxu0 0
      %2448 = vmatpush1.bf16.msra.mxu0 %v2374
      %2449 = vmatprep.subr.bf16.mxu0 0
      %2450 = vmatpush1.bf16.msra.mxu0 %v2375
      %2451 = vmatprep.subr.bf16.mxu0 0
      %2452 = vmatpush1.bf16.msra.mxu0 %v2376
      %2453 = vmatprep.subr.bf16.mxu0 0
      %2454 = vmatpush1.bf16.msra.mxu0 %v2377
      %2455 = vmatprep.subr.bf16.mxu0 0
      %2456 = vmatpush1.bf16.msra.mxu0 %v2378
      %2457 = vmatprep.subr.bf16.mxu0 0
      %2458 = vmatpush1.bf16.msra.mxu0 %v2379
      %2459 = vmatprep.subr.bf16.mxu0 0
      %2460 = vmatpush1.bf16.msra.mxu0 %v2380
      %2461 = vmatprep.subr.bf16.mxu0 0
      %2462 = vmatpush1.bf16.msra.mxu0 %v2381
      %2463 = vmatprep.subr.bf16.mxu0 0
      %2464 = vmatpush1.bf16.msra.mxu0 %v2382
      %2465 = vmatprep.subr.bf16.mxu0 0
      %2466 = vmatpush1.bf16.msra.mxu0 %v2383
      %2467 = vmatprep.subr.bf16.mxu0 0
      %2468 = vmatpush1.bf16.msra.mxu0 %v2384
      %2469 = vmatprep.subr.bf16.mxu0 0
      %2470 = vmatpush1.bf16.msra.mxu0 0
      %2471 = vmatprep.subr.bf16.mxu0 0
      %2472 = vmatpush1.bf16.msra.mxu0 0
      %2473 = vmatprep.subr.bf16.mxu0 0
      %2474 = vmatpush1.bf16.msra.mxu0 0
      %2475 = vmatprep.subr.bf16.mxu0 0
      %2476 = vmatpush1.bf16.msra.mxu0 0
      %2477 = vmatprep.mubr.bf16.mxu0 %v2398
      %2478 = vmatmul.mubr.bf16.gmra.mrb[0].mxu0 %v2268
      %v2479 = vpop.f32.mrb[0].mxu0
      %v2480 = vadd.f32 0.0, %v2479
      %v2481 = vpop.f32.mrb[0].mxu0
      %v2482 = vpop.f32.mrb[0].mxu0
      %v2483 = vadd.f32 0.0, %v2482
      %v2484 = vpop.f32.mrb[0].mxu0
      %2485 = vmatprep.mubr.bf16.mxu0 %v2401
      %2486 = vmatmul.mubr.bf16.gmra.mrb[0].mxu0 %v2270
      %v2487 = vpop.f32.mrb[0].mxu0
      %v2488 = vadd.f32 0.0, %v2487
      %v2489 = vpop.f32.mrb[0].mxu0
      %v2490 = vpop.f32.mrb[0].mxu0
      %v2491 = vadd.f32 0.0, %v2490
      %v2492 = vpop.f32.mrb[0].mxu0
      %2493 = vmatprep.mubr.bf16.mxu0 %v2404
      %2494 = vmatmul.mubr.bf16.gmra.mrb[0].mxu0 %v2272
      %v2495 = vpop.f32.mrb[0].mxu0
      %v2496 = vadd.f32 0.0, %v2495
      %v2497 = vpop.f32.mrb[0].mxu0
      %v2498 = vpop.f32.mrb[0].mxu0
      %v2499 = vadd.f32 0.0, %v2498
      %v2500 = vpop.f32.mrb[0].mxu0
      %2501 = vmatprep.mubr.bf16.mxu0 %v2407
      %2502 = vmatmul.mubr.bf16.gmra.mrb[0].mxu0 %v2274
      %v2503 = vpop.f32.mrb[0].mxu0
      %v2504 = vadd.f32 0.0, %v2503
      %v2505 = vpop.f32.mrb[0].mxu0
      %v2506 = vpop.f32.mrb[0].mxu0
      %v2507 = vadd.f32 0.0, %v2506
      %v2508 = vpop.f32.mrb[0].mxu0
      %2509 = vmatprep.mubr.bf16.mxu0 %v2410
      %2510 = vmatmul.mubr.bf16.gmra.mrb[0].mxu0 %v2276
      %v2511 = vpop.f32.mrb[0].mxu0
      %v2512 = vadd.f32 0.0, %v2511
      %v2513 = vpop.f32.mrb[0].mxu0
      %v2514 = vpop.f32.mrb[0].mxu0
      %v2515 = vadd.f32 0.0, %v2514
      %v2516 = vpop.f32.mrb[0].mxu0
      %2517 = vmatprep.mubr.bf16.mxu0 %v2413
      %2518 = vmatmul.mubr.bf16.gmra.mrb[0].mxu0 %v2278
      %v2519 = vpop.f32.mrb[0].mxu0
      %v2520 = vadd.f32 0.0, %v2519
      %v2521 = vpop.f32.mrb[0].mxu0
      %v2522 = vpop.f32.mrb[0].mxu0
      %v2523 = vadd.f32 0.0, %v2522
      %v2524 = vpop.f32.mrb[0].mxu0
      %2525 = vmatprep.mubr.bf16.mxu0 %v2416
      %2526 = vmatmul.mubr.bf16.gmra.mrb[0].mxu0 %v2280
      %v2527 = vpop.f32.mrb[0].mxu0
      %v2528 = vadd.f32 0.0, %v2527
      %v2529 = vpop.f32.mrb[0].mxu0
      %v2530 = vpop.f32.mrb[0].mxu0
      %v2531 = vadd.f32 0.0, %v2530
      %v2532 = vpop.f32.mrb[0].mxu0
      %2533 = vmatprep.mubr.bf16.mxu0 %v2419
      %2534 = vmatmul.mubr.bf16.gmra.mrb[0].mxu0 %v2282
      %v2535 = vpop.f32.mrb[0].mxu0
      %v2536 = vadd.f32 0.0, %v2535
      %v2537 = vpop.f32.mrb[0].mxu0
      %v2538 = vpop.f32.mrb[0].mxu0
      %v2539 = vadd.f32 0.0, %v2538
      %v2540 = vpop.f32.mrb[0].mxu0
      %2541 = vmatprep.mubr.bf16.mxu0 %v2422
      %2542 = vmatmul.mubr.bf16.gmra.mrb[0].mxu0 %v2284
      %v2543 = vpop.f32.mrb[0].mxu0
      %v2544 = vadd.f32 0.0, %v2543
      %v2545 = vpop.f32.mrb[0].mxu0
      %v2546 = vpop.f32.mrb[0].mxu0
      %v2547 = vadd.f32 0.0, %v2546
      %v2548 = vpop.f32.mrb[0].mxu0
      %2549 = vmatprep.mubr.bf16.mxu0 %v2425
      %2550 = vmatmul.mubr.bf16.gmra.mrb[0].mxu0 %v2286
      %v2551 = vpop.f32.mrb[0].mxu0
      %v2552 = vadd.f32 0.0, %v2551
      %v2553 = vpop.f32.mrb[0].mxu0
      %v2554 = vpop.f32.mrb[0].mxu0
      %v2555 = vadd.f32 0.0, %v2554
      %v2556 = vpop.f32.mrb[0].mxu0
      %2557 = vmatprep.mubr.bf16.mxu0 %v2428
      %2558 = vmatmul.mubr.bf16.gmra.mrb[0].mxu0 %v2288
      %v2559 = vpop.f32.mrb[0].mxu0
      %v2560 = vadd.f32 0.0, %v2559
      %v2561 = vpop.f32.mrb[0].mxu0
      %v2562 = vpop.f32.mrb[0].mxu0
      %v2563 = vadd.f32 0.0, %v2562
      %v2564 = vpop.f32.mrb[0].mxu0
      %2565 = vmatprep.mubr.bf16.mxu0 %v2431
      %2566 = vmatmul.mubr.bf16.gmra.mrb[0].mxu0 %v2290
      %v2567 = vpop.f32.mrb[0].mxu0
      %v2568 = vadd.f32 0.0, %v2567
      %v2569 = vpop.f32.mrb[0].mxu0
      %v2570 = vpop.f32.mrb[0].mxu0
      %v2571 = vadd.f32 0.0, %v2570
      %v2572 = vpop.f32.mrb[0].mxu0
      %2573 = vmatprep.mubr.bf16.mxu0 %v2434
      %2574 = vmatmul.mubr.bf16.gmra.mrb[0].mxu0 %v2292
      %v2575 = vpop.f32.mrb[0].mxu0
      %v2576 = vadd.f32 0.0, %v2575
      %v2577 = vpop.f32.mrb[0].mxu0
      %v2578 = vpop.f32.mrb[0].mxu0
      %v2579 = vadd.f32 0.0, %v2578
      %v2580 = vpop.f32.mrb[0].mxu0
      %2581 = vmatprep.mubr.bf16.mxu0 %v2437
      %2582 = vmatmul.mubr.bf16.gmra.mrb[0].mxu0 %v2294
      %v2583 = vpop.f32.mrb[0].mxu0
      %v2584 = vadd.f32 0.0, %v2583
      %v2585 = vpop.f32.mrb[0].mxu0
      %v2586 = vpop.f32.mrb[0].mxu0
      %v2587 = vadd.f32 0.0, %v2586
      %v2588 = vpop.f32.mrb[0].mxu0
      %2589 = vmatprep.mubr.bf16.mxu0 %v2440
      %2590 = vmatmul.mubr.bf16.gmra.mrb[0].mxu0 %v2296
      %v2591 = vpop.f32.mrb[0].mxu0
      %v2592 = vadd.f32 0.0, %v2591
      %v2593 = vpop.f32.mrb[0].mxu0
      %v2594 = vpop.f32.mrb[0].mxu0
      %v2595 = vadd.f32 0.0, %v2594
      %v2596 = vpop.f32.mrb[0].mxu0
      %2597 = vmatprep.mubr.bf16.mxu0 %v2443
      %2598 = vmatmul.mubr.bf16.gmra.mrb[0].mxu0 %v2298
      %v2599 = vpop.f32.mrb[0].mxu0
      %v2600 = vadd.f32 0.0, %v2599
      %v2601 = vpop.f32.mrb[0].mxu0
      %v2602 = vpop.f32.mrb[0].mxu0
      %v2603 = vadd.f32 0.0, %v2602
      %v2604 = vpop.f32.mrb[0].mxu0
      %2605 = vdwg.mxu0
      %v2606 = vadd.f32 %v1403, %v2480
      %v2607 = vadd.f32 %v1404, %v2483
      %v2608 = vadd.f32 %v1405, %v2488
      %v2609 = vadd.f32 %v1406, %v2491
      %v2610 = vadd.f32 %v1407, %v2496
      %v2611 = vadd.f32 %v1408, %v2499
      %v2612 = vadd.f32 %v1409, %v2504
      %v2613 = vadd.f32 %v1410, %v2507
      %v2614 = vadd.f32 %v1411, %v2512
      %v2615 = vadd.f32 %v1412, %v2515
      %v2616 = vadd.f32 %v1413, %v2520
      %v2617 = vadd.f32 %v1414, %v2523
      %v2618 = vadd.f32 %v1415, %v2528
      %v2619 = vadd.f32 %v1416, %v2531
      %v2620 = vadd.f32 %v1417, %v2536
      %v2621 = vadd.f32 %v1418, %v2539
      %v2622 = vadd.f32 %v1419, %v2544
      %v2623 = vadd.f32 %v1420, %v2547
      %v2624 = vadd.f32 %v1421, %v2552
      %v2625 = vadd.f32 %v1422, %v2555
      %v2626 = vadd.f32 %v1423, %v2560
      %v2627 = vadd.f32 %v1424, %v2563
      %v2628 = vadd.f32 %v1425, %v2568
      %v2629 = vadd.f32 %v1426, %v2571
      %v2630 = vadd.f32 %v1427, %v2576
      %v2631 = vadd.f32 %v1428, %v2579
      %v2632 = vadd.f32 %v1429, %v2584
      %v2633 = vadd.f32 %v1430, %v2587
      %v2634 = vadd.f32 %v1431, %v2592
      %v2635 = vadd.f32 %v1432, %v2595
      %v2636 = vadd.f32 %v1433, %v2600
      %v2637 = vadd.f32 %v1434, %v2603
      %s2638 = scalar_lea.vmem %s206, 24
      %v2639 = vld [vmem:[%s2638] sm:$0xf]
      %v2640 = vld [vmem:[%s2638 + $0x4] sm:$0xf]
      %v2641 = vld [vmem:[%s2638 + $0xc] sm:$0xf]
      %v2642 = vld [vmem:[%s2638 + $0x10] sm:$0xf]
      %v2643 = vld [vmem:[%s2638 + $0x18] sm:$0xf]
      %v2644 = vld [vmem:[%s2638 + $0x1c] sm:$0xf]
      %v2645 = vld [vmem:[%s2638 + $0x24] sm:$0xf]
      %v2646 = vld [vmem:[%s2638 + $0x28] sm:$0xf]
      %v2647 = vld [vmem:[%s2638 + $0x30] sm:$0xf]
      %v2648 = vld [vmem:[%s2638 + $0x34] sm:$0xf]
      %v2649 = vld [vmem:[%s2638 + $0x3c] sm:$0xf]
      %v2650 = vld [vmem:[%s2638 + $0x40] sm:$0xf]
      %v2651 = vld [vmem:[%s2638 + $0x48] sm:$0xf]
      %v2652 = vld [vmem:[%s2638 + $0x4c] sm:$0xf]
      %v2653 = vld [vmem:[%s2638 + $0x54] sm:$0xf]
      %v2654 = vld [vmem:[%s2638 + $0x58] sm:$0xf]
      %v2655 = vld [vmem:[%s2638 + $0x60] sm:$0xf]
      %v2656 = vld [vmem:[%s2638 + $0x64] sm:$0xf]
      %v2657 = vld [vmem:[%s2638 + $0x6c] sm:$0xf]
      %v2658 = vld [vmem:[%s2638 + $0x70] sm:$0xf]
      %v2659 = vld [vmem:[%s2638 + $0x78] sm:$0xf]
      %v2660 = vld [vmem:[%s2638 + $0x7c] sm:$0xf]
      %v2661 = vld [vmem:[%s2638 + $0x84] sm:$0xf]
      %v2662 = vld [vmem:[%s2638 + $0x88] sm:$0xf]
      %v2663 = vld [vmem:[%s2638 + $0x90] sm:$0xf]
      %v2664 = vld [vmem:[%s2638 + $0x94] sm:$0xf]
      %v2665 = vld [vmem:[%s2638 + $0x9c] sm:$0xf]
      %v2666 = vld [vmem:[%s2638 + $0xa0] sm:$0xf]
      %v2667 = vld [vmem:[%s2638 + $0xa8] sm:$0xf]
      %v2668 = vld [vmem:[%s2638 + $0xac] sm:$0xf]
      %v2669 = vld [vmem:[%s2638 + $0xb4] sm:$0xf]
      %v2670 = vld [vmem:[%s2638 + $0xb8] sm:$0xf]
      %v2703 = vunpack.c.l.b16 %v2639
      %v2704 = vunpack.c.l.b16 %v2640
      %v2705 = vunpack.c.l.b16 %v2641
      %v2706 = vunpack.c.l.b16 %v2642
      %v2707 = vunpack.c.l.b16 %v2643
      %v2708 = vunpack.c.l.b16 %v2644
      %v2709 = vunpack.c.l.b16 %v2645
      %v2710 = vunpack.c.l.b16 %v2646
      %v2711 = vunpack.c.l.b16 %v2647
      %v2712 = vunpack.c.l.b16 %v2648
      %v2713 = vunpack.c.l.b16 %v2649
      %v2714 = vunpack.c.l.b16 %v2650
      %v2715 = vunpack.c.l.b16 %v2651
      %v2716 = vunpack.c.l.b16 %v2652
      %v2717 = vunpack.c.l.b16 %v2653
      %v2718 = vunpack.c.l.b16 %v2654
      %v2719 = vunpack.c.l.b16 %v2655
      %v2720 = vunpack.c.l.b16 %v2656
      %v2721 = vunpack.c.l.b16 %v2657
      %v2722 = vunpack.c.l.b16 %v2658
      %v2723 = vunpack.c.l.b16 %v2659
      %v2724 = vunpack.c.l.b16 %v2660
      %v2725 = vunpack.c.l.b16 %v2661
      %v2726 = vunpack.c.l.b16 %v2662
      %v2727 = vunpack.c.l.b16 %v2663
      %v2728 = vunpack.c.l.b16 %v2664
      %v2729 = vunpack.c.l.b16 %v2665
      %v2730 = vunpack.c.l.b16 %v2666
      %v2731 = vunpack.c.l.b16 %v2667
      %v2732 = vunpack.c.l.b16 %v2668
      %v2733 = vunpack.c.l.b16 %v2669
      %v2734 = vunpack.c.l.b16 %v2670
      %v2735 = vpack.c.b16 %v2704, %v2703
      %v2736 = vpack.c.b16 %v2706, %v2705
      %v2737 = vpack.c.b16 %v2708, %v2707
      %v2738 = vpack.c.b16 %v2710, %v2709
      %v2739 = vpack.c.b16 %v2712, %v2711
      %v2740 = vpack.c.b16 %v2714, %v2713
      %v2741 = vpack.c.b16 %v2716, %v2715
      %v2742 = vpack.c.b16 %v2718, %v2717
      %v2743 = vpack.c.b16 %v2720, %v2719
      %v2744 = vpack.c.b16 %v2722, %v2721
      %v2745 = vpack.c.b16 %v2724, %v2723
      %v2746 = vpack.c.b16 %v2726, %v2725
      %v2747 = vpack.c.b16 %v2728, %v2727
      %v2748 = vpack.c.b16 %v2730, %v2729
      %v2749 = vpack.c.b16 %v2732, %v2731
      %v2750 = vpack.c.b16 %v2734, %v2733
      %2767 = vst.msk [vmem:[#allocation2] sm:$0xff] %vm358, %v2735
      %2768 = vst.msk [vmem:[#allocation2 + $0x10] sm:$0xff] %vm358, %v2736
      %2769 = vst.msk [vmem:[#allocation2 + $0x20] sm:$0xff] %vm358, %v2737
      %2770 = vst.msk [vmem:[#allocation2 + $0x30] sm:$0xff] %vm358, %v2738
      %2771 = vst.msk [vmem:[#allocation2 + $0x40] sm:$0xff] %vm358, %v2739
      %2772 = vst.msk [vmem:[#allocation2 + $0x50] sm:$0xff] %vm358, %v2740
      %2773 = vst.msk [vmem:[#allocation2 + $0x60] sm:$0xff] %vm358, %v2741
      %2774 = vst.msk [vmem:[#allocation2 + $0x70] sm:$0xff] %vm358, %v2742
      %2775 = vst.msk [vmem:[#allocation2 + $0x80] sm:$0xff] %vm358, %v2743
      %2776 = vst.msk [vmem:[#allocation2 + $0x90] sm:$0xff] %vm358, %v2744
      %2777 = vst.msk [vmem:[#allocation2 + $0xa0] sm:$0xff] %vm358, %v2745
      %2778 = vst.msk [vmem:[#allocation2 + $0xb0] sm:$0xff] %vm358, %v2746
      %2779 = vst.msk [vmem:[#allocation2 + $0xc0] sm:$0xff] %vm358, %v2747
      %2780 = vst.msk [vmem:[#allocation2 + $0xd0] sm:$0xff] %vm358, %v2748
      %2781 = vst.msk [vmem:[#allocation2 + $0xe0] sm:$0xff] %vm358, %v2749
      %2782 = vst.msk [vmem:[#allocation2 + $0xf0] sm:$0xff] %vm358, %v2750
      %v2783 = vld [vmem:[%s2638] sm:$0xf]
      %v2784 = vld [vmem:[%s2638 + $0x4] sm:$0xf]
      %v2785 = vld [vmem:[%s2638 + $0x8] sm:$0x1]
      %v2786 = vld [vmem:[%s2638 + $0xc] sm:$0xf]
      %v2787 = vld [vmem:[%s2638 + $0x10] sm:$0xf]
      %v2788 = vld [vmem:[%s2638 + $0x14] sm:$0x1]
      %v2789 = vld [vmem:[%s2638 + $0x18] sm:$0xf]
      %v2790 = vld [vmem:[%s2638 + $0x1c] sm:$0xf]
      %v2791 = vld [vmem:[%s2638 + $0x20] sm:$0x1]
      %v2792 = vld [vmem:[%s2638 + $0x24] sm:$0xf]
      %v2793 = vld [vmem:[%s2638 + $0x28] sm:$0xf]
      %v2794 = vld [vmem:[%s2638 + $0x2c] sm:$0x1]
      %v2795 = vld [vmem:[%s2638 + $0x30] sm:$0xf]
      %v2796 = vld [vmem:[%s2638 + $0x34] sm:$0xf]
      %v2797 = vld [vmem:[%s2638 + $0x38] sm:$0x1]
      %v2798 = vld [vmem:[%s2638 + $0x3c] sm:$0xf]
      %v2799 = vld [vmem:[%s2638 + $0x40] sm:$0xf]
      %v2800 = vld [vmem:[%s2638 + $0x44] sm:$0x1]
      %v2801 = vld [vmem:[%s2638 + $0x48] sm:$0xf]
      %v2802 = vld [vmem:[%s2638 + $0x4c] sm:$0xf]
      %v2803 = vld [vmem:[%s2638 + $0x50] sm:$0x1]
      %v2804 = vld [vmem:[%s2638 + $0x54] sm:$0xf]
      %v2805 = vld [vmem:[%s2638 + $0x58] sm:$0xf]
      %v2806 = vld [vmem:[%s2638 + $0x5c] sm:$0x1]
      %v2807 = vld [vmem:[%s2638 + $0x60] sm:$0xf]
      %v2808 = vld [vmem:[%s2638 + $0x64] sm:$0xf]
      %v2809 = vld [vmem:[%s2638 + $0x68] sm:$0x1]
      %v2810 = vld [vmem:[%s2638 + $0x6c] sm:$0xf]
      %v2811 = vld [vmem:[%s2638 + $0x70] sm:$0xf]
      %v2812 = vld [vmem:[%s2638 + $0x74] sm:$0x1]
      %v2813 = vld [vmem:[%s2638 + $0x78] sm:$0xf]
      %v2814 = vld [vmem:[%s2638 + $0x7c] sm:$0xf]
      %v2815 = vld [vmem:[%s2638 + $0x80] sm:$0x1]
      %v2816 = vld [vmem:[%s2638 + $0x84] sm:$0xf]
      %v2817 = vld [vmem:[%s2638 + $0x88] sm:$0xf]
      %v2818 = vld [vmem:[%s2638 + $0x8c] sm:$0x1]
      %v2819 = vld [vmem:[%s2638 + $0x90] sm:$0xf]
      %v2820 = vld [vmem:[%s2638 + $0x94] sm:$0xf]
      %v2821 = vld [vmem:[%s2638 + $0x98] sm:$0x1]
      %v2822 = vld [vmem:[%s2638 + $0x9c] sm:$0xf]
      %v2823 = vld [vmem:[%s2638 + $0xa0] sm:$0xf]
      %v2824 = vld [vmem:[%s2638 + $0xa4] sm:$0x1]
      %v2825 = vld [vmem:[%s2638 + $0xa8] sm:$0xf]
      %v2826 = vld [vmem:[%s2638 + $0xac] sm:$0xf]
      %v2827 = vld [vmem:[%s2638 + $0xb0] sm:$0x1]
      %v2828 = vld [vmem:[%s2638 + $0xb4] sm:$0xf]
      %v2829 = vld [vmem:[%s2638 + $0xb8] sm:$0xf]
      %v2830 = vld [vmem:[%s2638 + $0xbc] sm:$0x1]
      %v2879 = vunpack.c.l.b16 %v2783
      %v2880 = vunpack.c.l.b16 %v2784
      %v2881 = vunpack.c.l.b16 %v2785
      %v2882 = vunpack.c.l.b16 %v2786
      %v2883 = vunpack.c.l.b16 %v2787
      %v2884 = vunpack.c.l.b16 %v2788
      %v2885 = vunpack.c.l.b16 %v2789
      %v2886 = vunpack.c.l.b16 %v2790
      %v2887 = vunpack.c.l.b16 %v2791
      %v2888 = vunpack.c.l.b16 %v2792
      %v2889 = vunpack.c.l.b16 %v2793
      %v2890 = vunpack.c.l.b16 %v2794
      %v2891 = vunpack.c.l.b16 %v2795
      %v2892 = vunpack.c.l.b16 %v2796
      %v2893 = vunpack.c.l.b16 %v2797
      %v2894 = vunpack.c.l.b16 %v2798
      %v2895 = vunpack.c.l.b16 %v2799
      %v2896 = vunpack.c.l.b16 %v2800
      %v2897 = vunpack.c.l.b16 %v2801
      %v2898 = vunpack.c.l.b16 %v2802
      %v2899 = vunpack.c.l.b16 %v2803
      %v2900 = vunpack.c.l.b16 %v2804
      %v2901 = vunpack.c.l.b16 %v2805
      %v2902 = vunpack.c.l.b16 %v2806
      %v2903 = vunpack.c.l.b16 %v2807
      %v2904 = vunpack.c.l.b16 %v2808
      %v2905 = vunpack.c.l.b16 %v2809
      %v2906 = vunpack.c.l.b16 %v2810
      %v2907 = vunpack.c.l.b16 %v2811
      %v2908 = vunpack.c.l.b16 %v2812
      %v2909 = vunpack.c.l.b16 %v2813
      %v2910 = vunpack.c.l.b16 %v2814
      %v2911 = vunpack.c.l.b16 %v2815
      %v2912 = vunpack.c.l.b16 %v2816
      %v2913 = vunpack.c.l.b16 %v2817
      %v2914 = vunpack.c.l.b16 %v2818
      %v2915 = vunpack.c.l.b16 %v2819
      %v2916 = vunpack.c.l.b16 %v2820
      %v2917 = vunpack.c.l.b16 %v2821
      %v2918 = vunpack.c.l.b16 %v2822
      %v2919 = vunpack.c.l.b16 %v2823
      %v2920 = vunpack.c.l.b16 %v2824
      %v2921 = vunpack.c.l.b16 %v2825
      %v2922 = vunpack.c.l.b16 %v2826
      %v2923 = vunpack.c.l.b16 %v2827
      %v2924 = vunpack.c.l.b16 %v2828
      %v2925 = vunpack.c.l.b16 %v2829
      %v2926 = vunpack.c.l.b16 %v2830
      %v2927 = vpack.c.b16 %v2880, %v2879
      %v2928 = vpack.c.b16 %v2881, %v2881
      %v2929 = vpack.c.b16 %v2883, %v2882
      %v2930 = vpack.c.b16 %v2884, %v2884
      %v2931 = vpack.c.b16 %v2886, %v2885
      %v2932 = vpack.c.b16 %v2887, %v2887
      %v2933 = vpack.c.b16 %v2889, %v2888
      %v2934 = vpack.c.b16 %v2890, %v2890
      %v2935 = vpack.c.b16 %v2892, %v2891
      %v2936 = vpack.c.b16 %v2893, %v2893
      %v2937 = vpack.c.b16 %v2895, %v2894
      %v2938 = vpack.c.b16 %v2896, %v2896
      %v2939 = vpack.c.b16 %v2898, %v2897
      %v2940 = vpack.c.b16 %v2899, %v2899
      %v2941 = vpack.c.b16 %v2901, %v2900
      %v2942 = vpack.c.b16 %v2902, %v2902
      %v2943 = vpack.c.b16 %v2904, %v2903
      %v2944 = vpack.c.b16 %v2905, %v2905
      %v2945 = vpack.c.b16 %v2907, %v2906
      %v2946 = vpack.c.b16 %v2908, %v2908
      %v2947 = vpack.c.b16 %v2910, %v2909
      %v2948 = vpack.c.b16 %v2911, %v2911
      %v2949 = vpack.c.b16 %v2913, %v2912
      %v2950 = vpack.c.b16 %v2914, %v2914
      %v2951 = vpack.c.b16 %v2916, %v2915
      %v2952 = vpack.c.b16 %v2917, %v2917
      %v2953 = vpack.c.b16 %v2919, %v2918
      %v2954 = vpack.c.b16 %v2920, %v2920
      %v2955 = vpack.c.b16 %v2922, %v2921
      %v2956 = vpack.c.b16 %v2923, %v2923
      %v2957 = vpack.c.b16 %v2925, %v2924
      %v2958 = vpack.c.b16 %v2926, %v2926
      %v2960 = vshrl.u32 %v2927, 16
      %v2962 = vshll.u32 %v2927, 16
      %v2964 = vrot.slane %v2962, 1
      %v2965 = vor.u32 %v2960, %v2964
      %v2967 = vshll.u32 %v2928, 16
      %v2969 = vrot.slane %v2967, 1
      %v2970 = vsel %vm551, %v2965, %v2969
      %v2972 = vshrl.u32 %v2929, 16
      %v2974 = vshll.u32 %v2929, 16
      %v2976 = vrot.slane %v2974, 1
      %v2977 = vor.u32 %v2972, %v2976
      %v2979 = vshll.u32 %v2930, 16
      %v2981 = vrot.slane %v2979, 1
      %v2982 = vsel %vm551, %v2977, %v2981
      %v2984 = vshrl.u32 %v2931, 16
      %v2986 = vshll.u32 %v2931, 16
      %v2988 = vrot.slane %v2986, 1
      %v2989 = vor.u32 %v2984, %v2988
      %v2991 = vshll.u32 %v2932, 16
      %v2993 = vrot.slane %v2991, 1
      %v2994 = vsel %vm551, %v2989, %v2993
      %v2996 = vshrl.u32 %v2933, 16
      %v2998 = vshll.u32 %v2933, 16
      %v3000 = vrot.slane %v2998, 1
      %v3001 = vor.u32 %v2996, %v3000
      %v3003 = vshll.u32 %v2934, 16
      %v3005 = vrot.slane %v3003, 1
      %v3006 = vsel %vm551, %v3001, %v3005
      %v3008 = vshrl.u32 %v2935, 16
      %v3010 = vshll.u32 %v2935, 16
      %v3012 = vrot.slane %v3010, 1
      %v3013 = vor.u32 %v3008, %v3012
      %v3015 = vshll.u32 %v2936, 16
      %v3017 = vrot.slane %v3015, 1
      %v3018 = vsel %vm551, %v3013, %v3017
      %v3020 = vshrl.u32 %v2937, 16
      %v3022 = vshll.u32 %v2937, 16
      %v3024 = vrot.slane %v3022, 1
      %v3025 = vor.u32 %v3020, %v3024
      %v3027 = vshll.u32 %v2938, 16
      %v3029 = vrot.slane %v3027, 1
      %v3030 = vsel %vm551, %v3025, %v3029
      %v3032 = vshrl.u32 %v2939, 16
      %v3034 = vshll.u32 %v2939, 16
      %v3036 = vrot.slane %v3034, 1
      %v3037 = vor.u32 %v3032, %v3036
      %v3039 = vshll.u32 %v2940, 16
      %v3041 = vrot.slane %v3039, 1
      %v3042 = vsel %vm551, %v3037, %v3041
      %v3044 = vshrl.u32 %v2941, 16
      %v3046 = vshll.u32 %v2941, 16
      %v3048 = vrot.slane %v3046, 1
      %v3049 = vor.u32 %v3044, %v3048
      %v3051 = vshll.u32 %v2942, 16
      %v3053 = vrot.slane %v3051, 1
      %v3054 = vsel %vm551, %v3049, %v3053
      %v3056 = vshrl.u32 %v2943, 16
      %v3058 = vshll.u32 %v2943, 16
      %v3060 = vrot.slane %v3058, 1
      %v3061 = vor.u32 %v3056, %v3060
      %v3063 = vshll.u32 %v2944, 16
      %v3065 = vrot.slane %v3063, 1
      %v3066 = vsel %vm551, %v3061, %v3065
      %v3068 = vshrl.u32 %v2945, 16
      %v3070 = vshll.u32 %v2945, 16
      %v3072 = vrot.slane %v3070, 1
      %v3073 = vor.u32 %v3068, %v3072
      %v3075 = vshll.u32 %v2946, 16
      %v3077 = vrot.slane %v3075, 1
      %v3078 = vsel %vm551, %v3073, %v3077
      %v3080 = vshrl.u32 %v2947, 16
      %v3082 = vshll.u32 %v2947, 16
      %v3084 = vrot.slane %v3082, 1
      %v3085 = vor.u32 %v3080, %v3084
      %v3087 = vshll.u32 %v2948, 16
      %v3089 = vrot.slane %v3087, 1
      %v3090 = vsel %vm551, %v3085, %v3089
      %v3092 = vshrl.u32 %v2949, 16
      %v3094 = vshll.u32 %v2949, 16
      %v3096 = vrot.slane %v3094, 1
      %v3097 = vor.u32 %v3092, %v3096
      %v3099 = vshll.u32 %v2950, 16
      %v3101 = vrot.slane %v3099, 1
      %v3102 = vsel %vm551, %v3097, %v3101
      %v3104 = vshrl.u32 %v2951, 16
      %v3106 = vshll.u32 %v2951, 16
      %v3108 = vrot.slane %v3106, 1
      %v3109 = vor.u32 %v3104, %v3108
      %v3111 = vshll.u32 %v2952, 16
      %v3113 = vrot.slane %v3111, 1
      %v3114 = vsel %vm551, %v3109, %v3113
      %v3116 = vshrl.u32 %v2953, 16
      %v3118 = vshll.u32 %v2953, 16
      %v3120 = vrot.slane %v3118, 1
      %v3121 = vor.u32 %v3116, %v3120
      %v3123 = vshll.u32 %v2954, 16
      %v3125 = vrot.slane %v3123, 1
      %v3126 = vsel %vm551, %v3121, %v3125
      %v3128 = vshrl.u32 %v2955, 16
      %v3130 = vshll.u32 %v2955, 16
      %v3132 = vrot.slane %v3130, 1
      %v3133 = vor.u32 %v3128, %v3132
      %v3135 = vshll.u32 %v2956, 16
      %v3137 = vrot.slane %v3135, 1
      %v3138 = vsel %vm551, %v3133, %v3137
      %v3140 = vshrl.u32 %v2957, 16
      %v3142 = vshll.u32 %v2957, 16
      %v3144 = vrot.slane %v3142, 1
      %v3145 = vor.u32 %v3140, %v3144
      %v3147 = vshll.u32 %v2958, 16
      %v3149 = vrot.slane %v3147, 1
      %v3150 = vsel %vm551, %v3145, %v3149
      %3151 = vrot.lane.b32.xlu0 %v2970, 64
      %v3152 = vpop.permute.xlu0 %3151
      %3153 = vrot.lane.b32.xlu0 %v2982, 64
      %v3154 = vpop.permute.xlu0 %3153
      %3155 = vrot.lane.b32.xlu0 %v2994, 64
      %v3156 = vpop.permute.xlu0 %3155
      %3157 = vrot.lane.b32.xlu0 %v3006, 64
      %v3158 = vpop.permute.xlu0 %3157
      %3159 = vrot.lane.b32.xlu0 %v3018, 64
      %v3160 = vpop.permute.xlu0 %3159
      %3161 = vrot.lane.b32.xlu0 %v3030, 64
      %v3162 = vpop.permute.xlu0 %3161
      %3163 = vrot.lane.b32.xlu0 %v3042, 64
      %v3164 = vpop.permute.xlu0 %3163
      %3165 = vrot.lane.b32.xlu0 %v3054, 64
      %v3166 = vpop.permute.xlu0 %3165
      %3167 = vrot.lane.b32.xlu0 %v3066, 64
      %v3168 = vpop.permute.xlu0 %3167
      %3169 = vrot.lane.b32.xlu0 %v3078, 64
      %v3170 = vpop.permute.xlu0 %3169
      %3171 = vrot.lane.b32.xlu0 %v3090, 64
      %v3172 = vpop.permute.xlu0 %3171
      %3173 = vrot.lane.b32.xlu0 %v3102, 64
      %v3174 = vpop.permute.xlu0 %3173
      %3175 = vrot.lane.b32.xlu0 %v3114, 64
      %v3176 = vpop.permute.xlu0 %3175
      %3177 = vrot.lane.b32.xlu0 %v3126, 64
      %v3178 = vpop.permute.xlu0 %3177
      %3179 = vrot.lane.b32.xlu0 %v3138, 64
      %v3180 = vpop.permute.xlu0 %3179
      %3181 = vrot.lane.b32.xlu0 %v3150, 64
      %v3182 = vpop.permute.xlu0 %3181
      %3199 = vst.msk [vmem:[#allocation2] sm:$0xff] %vm792, %v3152
      %3200 = vst.msk [vmem:[#allocation2 + $0x10] sm:$0xff] %vm792, %v3154
      %3201 = vst.msk [vmem:[#allocation2 + $0x20] sm:$0xff] %vm792, %v3156
      %3202 = vst.msk [vmem:[#allocation2 + $0x30] sm:$0xff] %vm792, %v3158
      %3203 = vst.msk [vmem:[#allocation2 + $0x40] sm:$0xff] %vm792, %v3160
      %3204 = vst.msk [vmem:[#allocation2 + $0x50] sm:$0xff] %vm792, %v3162
      %3205 = vst.msk [vmem:[#allocation2 + $0x60] sm:$0xff] %vm792, %v3164
      %3206 = vst.msk [vmem:[#allocation2 + $0x70] sm:$0xff] %vm792, %v3166
      %3207 = vst.msk [vmem:[#allocation2 + $0x80] sm:$0xff] %vm792, %v3168
      %3208 = vst.msk [vmem:[#allocation2 + $0x90] sm:$0xff] %vm792, %v3170
      %3209 = vst.msk [vmem:[#allocation2 + $0xa0] sm:$0xff] %vm792, %v3172
      %3210 = vst.msk [vmem:[#allocation2 + $0xb0] sm:$0xff] %vm792, %v3174
      %3211 = vst.msk [vmem:[#allocation2 + $0xc0] sm:$0xff] %vm792, %v3176
      %3212 = vst.msk [vmem:[#allocation2 + $0xd0] sm:$0xff] %vm792, %v3178
      %3213 = vst.msk [vmem:[#allocation2 + $0xe0] sm:$0xff] %vm792, %v3180
      %3214 = vst.msk [vmem:[#allocation2 + $0xf0] sm:$0xff] %vm792, %v3182
      %v3215 = vld [vmem:[%s2638] sm:$0xe]
      %v3216 = vld [vmem:[%s2638 + $0x4] sm:$0xf]
      %v3217 = vld [vmem:[%s2638 + $0x8] sm:$0x1]
      %v3218 = vld [vmem:[%s2638 + $0xc] sm:$0xe]
      %v3219 = vld [vmem:[%s2638 + $0x10] sm:$0xf]
      %v3220 = vld [vmem:[%s2638 + $0x14] sm:$0x1]
      %v3221 = vld [vmem:[%s2638 + $0x18] sm:$0xe]
      %v3222 = vld [vmem:[%s2638 + $0x1c] sm:$0xf]
      %v3223 = vld [vmem:[%s2638 + $0x20] sm:$0x1]
      %v3224 = vld [vmem:[%s2638 + $0x24] sm:$0xe]
      %v3225 = vld [vmem:[%s2638 + $0x28] sm:$0xf]
      %v3226 = vld [vmem:[%s2638 + $0x2c] sm:$0x1]
      %v3227 = vld [vmem:[%s2638 + $0x30] sm:$0xe]
      %v3228 = vld [vmem:[%s2638 + $0x34] sm:$0xf]
      %v3229 = vld [vmem:[%s2638 + $0x38] sm:$0x1]
      %v3230 = vld [vmem:[%s2638 + $0x3c] sm:$0xe]
      %v3231 = vld [vmem:[%s2638 + $0x40] sm:$0xf]
      %v3232 = vld [vmem:[%s2638 + $0x44] sm:$0x1]
      %v3233 = vld [vmem:[%s2638 + $0x48] sm:$0xe]
      %v3234 = vld [vmem:[%s2638 + $0x4c] sm:$0xf]
      %v3235 = vld [vmem:[%s2638 + $0x50] sm:$0x1]
      %v3236 = vld [vmem:[%s2638 + $0x54] sm:$0xe]
      %v3237 = vld [vmem:[%s2638 + $0x58] sm:$0xf]
      %v3238 = vld [vmem:[%s2638 + $0x5c] sm:$0x1]
      %v3239 = vld [vmem:[%s2638 + $0x60] sm:$0xe]
      %v3240 = vld [vmem:[%s2638 + $0x64] sm:$0xf]
      %v3241 = vld [vmem:[%s2638 + $0x68] sm:$0x1]
      %v3242 = vld [vmem:[%s2638 + $0x6c] sm:$0xe]
      %v3243 = vld [vmem:[%s2638 + $0x70] sm:$0xf]
      %v3244 = vld [vmem:[%s2638 + $0x74] sm:$0x1]
      %v3245 = vld [vmem:[%s2638 + $0x78] sm:$0xe]
      %v3246 = vld [vmem:[%s2638 + $0x7c] sm:$0xf]
      %v3247 = vld [vmem:[%s2638 + $0x80] sm:$0x1]
      %v3248 = vld [vmem:[%s2638 + $0x84] sm:$0xe]
      %v3249 = vld [vmem:[%s2638 + $0x88] sm:$0xf]
      %v3250 = vld [vmem:[%s2638 + $0x8c] sm:$0x1]
      %v3251 = vld [vmem:[%s2638 + $0x90] sm:$0xe]
      %v3252 = vld [vmem:[%s2638 + $0x94] sm:$0xf]
      %v3253 = vld [vmem:[%s2638 + $0x98] sm:$0x1]
      %v3254 = vld [vmem:[%s2638 + $0x9c] sm:$0xe]
      %v3255 = vld [vmem:[%s2638 + $0xa0] sm:$0xf]
      %v3256 = vld [vmem:[%s2638 + $0xa4] sm:$0x1]
      %v3257 = vld [vmem:[%s2638 + $0xa8] sm:$0xe]
      %v3258 = vld [vmem:[%s2638 + $0xac] sm:$0xf]
      %v3259 = vld [vmem:[%s2638 + $0xb0] sm:$0x1]
      %v3260 = vld [vmem:[%s2638 + $0xb4] sm:$0xe]
      %v3261 = vld [vmem:[%s2638 + $0xb8] sm:$0xf]
      %v3262 = vld [vmem:[%s2638 + $0xbc] sm:$0x1]
      %v3311 = vunpack.c.l.b16 %v3215
      %v3312 = vunpack.c.l.b16 %v3216
      %v3313 = vunpack.c.l.b16 %v3217
      %v3314 = vunpack.c.l.b16 %v3218
      %v3315 = vunpack.c.l.b16 %v3219
      %v3316 = vunpack.c.l.b16 %v3220
      %v3317 = vunpack.c.l.b16 %v3221
      %v3318 = vunpack.c.l.b16 %v3222
      %v3319 = vunpack.c.l.b16 %v3223
      %v3320 = vunpack.c.l.b16 %v3224
      %v3321 = vunpack.c.l.b16 %v3225
      %v3322 = vunpack.c.l.b16 %v3226
      %v3323 = vunpack.c.l.b16 %v3227
      %v3324 = vunpack.c.l.b16 %v3228
      %v3325 = vunpack.c.l.b16 %v3229
      %v3326 = vunpack.c.l.b16 %v3230
      %v3327 = vunpack.c.l.b16 %v3231
      %v3328 = vunpack.c.l.b16 %v3232
      %v3329 = vunpack.c.l.b16 %v3233
      %v3330 = vunpack.c.l.b16 %v3234
      %v3331 = vunpack.c.l.b16 %v3235
      %v3332 = vunpack.c.l.b16 %v3236
      %v3333 = vunpack.c.l.b16 %v3237
      %v3334 = vunpack.c.l.b16 %v3238
      %v3335 = vunpack.c.l.b16 %v3239
      %v3336 = vunpack.c.l.b16 %v3240
      %v3337 = vunpack.c.l.b16 %v3241
      %v3338 = vunpack.c.l.b16 %v3242
      %v3339 = vunpack.c.l.b16 %v3243
      %v3340 = vunpack.c.l.b16 %v3244
      %v3341 = vunpack.c.l.b16 %v3245
      %v3342 = vunpack.c.l.b16 %v3246
      %v3343 = vunpack.c.l.b16 %v3247
      %v3344 = vunpack.c.l.b16 %v3248
      %v3345 = vunpack.c.l.b16 %v3249
      %v3346 = vunpack.c.l.b16 %v3250
      %v3347 = vunpack.c.l.b16 %v3251
      %v3348 = vunpack.c.l.b16 %v3252
      %v3349 = vunpack.c.l.b16 %v3253
      %v3350 = vunpack.c.l.b16 %v3254
      %v3351 = vunpack.c.l.b16 %v3255
      %v3352 = vunpack.c.l.b16 %v3256
      %v3353 = vunpack.c.l.b16 %v3257
      %v3354 = vunpack.c.l.b16 %v3258
      %v3355 = vunpack.c.l.b16 %v3259
      %v3356 = vunpack.c.l.b16 %v3260
      %v3357 = vunpack.c.l.b16 %v3261
      %v3358 = vunpack.c.l.b16 %v3262
      %v3359 = vpack.c.b16 %v3312, %v3311
      %v3360 = vpack.c.b16 %v3313, %v3313
      %v3361 = vpack.c.b16 %v3315, %v3314
      %v3362 = vpack.c.b16 %v3316, %v3316
      %v3363 = vpack.c.b16 %v3318, %v3317
      %v3364 = vpack.c.b16 %v3319, %v3319
      %v3365 = vpack.c.b16 %v3321, %v3320
      %v3366 = vpack.c.b16 %v3322, %v3322
      %v3367 = vpack.c.b16 %v3324, %v3323
      %v3368 = vpack.c.b16 %v3325, %v3325
      %v3369 = vpack.c.b16 %v3327, %v3326
      %v3370 = vpack.c.b16 %v3328, %v3328
      %v3371 = vpack.c.b16 %v3330, %v3329
      %v3372 = vpack.c.b16 %v3331, %v3331
      %v3373 = vpack.c.b16 %v3333, %v3332
      %v3374 = vpack.c.b16 %v3334, %v3334
      %v3375 = vpack.c.b16 %v3336, %v3335
      %v3376 = vpack.c.b16 %v3337, %v3337
      %v3377 = vpack.c.b16 %v3339, %v3338
      %v3378 = vpack.c.b16 %v3340, %v3340
      %v3379 = vpack.c.b16 %v3342, %v3341
      %v3380 = vpack.c.b16 %v3343, %v3343
      %v3381 = vpack.c.b16 %v3345, %v3344
      %v3382 = vpack.c.b16 %v3346, %v3346
      %v3383 = vpack.c.b16 %v3348, %v3347
      %v3384 = vpack.c.b16 %v3349, %v3349
      %v3385 = vpack.c.b16 %v3351, %v3350
      %v3386 = vpack.c.b16 %v3352, %v3352
      %v3387 = vpack.c.b16 %v3354, %v3353
      %v3388 = vpack.c.b16 %v3355, %v3355
      %v3389 = vpack.c.b16 %v3357, %v3356
      %v3390 = vpack.c.b16 %v3358, %v3358
      %v3391 = vrot.slane %v3359, 1
      %v3392 = vrot.slane %v3360, 1
      %v3393 = vsel %vm985, %v3391, %v3392
      %v3394 = vrot.slane %v3361, 1
      %v3395 = vrot.slane %v3362, 1
      %v3396 = vsel %vm985, %v3394, %v3395
      %v3397 = vrot.slane %v3363, 1
      %v3398 = vrot.slane %v3364, 1
      %v3399 = vsel %vm985, %v3397, %v3398
      %v3400 = vrot.slane %v3365, 1
      %v3401 = vrot.slane %v3366, 1
      %v3402 = vsel %vm985, %v3400, %v3401
      %v3403 = vrot.slane %v3367, 1
      %v3404 = vrot.slane %v3368, 1
      %v3405 = vsel %vm985, %v3403, %v3404
      %v3406 = vrot.slane %v3369, 1
      %v3407 = vrot.slane %v3370, 1
      %v3408 = vsel %vm985, %v3406, %v3407
      %v3409 = vrot.slane %v3371, 1
      %v3410 = vrot.slane %v3372, 1
      %v3411 = vsel %vm985, %v3409, %v3410
      %v3412 = vrot.slane %v3373, 1
      %v3413 = vrot.slane %v3374, 1
      %v3414 = vsel %vm985, %v3412, %v3413
      %v3415 = vrot.slane %v3375, 1
      %v3416 = vrot.slane %v3376, 1
      %v3417 = vsel %vm985, %v3415, %v3416
      %v3418 = vrot.slane %v3377, 1
      %v3419 = vrot.slane %v3378, 1
      %v3420 = vsel %vm985, %v3418, %v3419
      %v3421 = vrot.slane %v3379, 1
      %v3422 = vrot.slane %v3380, 1
      %v3423 = vsel %vm985, %v3421, %v3422
      %v3424 = vrot.slane %v3381, 1
      %v3425 = vrot.slane %v3382, 1
      %v3426 = vsel %vm985, %v3424, %v3425
      %v3427 = vrot.slane %v3383, 1
      %v3428 = vrot.slane %v3384, 1
      %v3429 = vsel %vm985, %v3427, %v3428
      %v3430 = vrot.slane %v3385, 1
      %v3431 = vrot.slane %v3386, 1
      %v3432 = vsel %vm985, %v3430, %v3431
      %v3433 = vrot.slane %v3387, 1
      %v3434 = vrot.slane %v3388, 1
      %v3435 = vsel %vm985, %v3433, %v3434
      %v3436 = vrot.slane %v3389, 1
      %v3437 = vrot.slane %v3390, 1
      %v3438 = vsel %vm985, %v3436, %v3437
      %3455 = vst.msk [vmem:[#allocation2 + $0x8] sm:$0xff] %vm358, %v3393
      %3456 = vst.msk [vmem:[#allocation2 + $0x18] sm:$0xff] %vm358, %v3396
      %3457 = vst.msk [vmem:[#allocation2 + $0x28] sm:$0xff] %vm358, %v3399
      %3458 = vst.msk [vmem:[#allocation2 + $0x38] sm:$0xff] %vm358, %v3402
      %3459 = vst.msk [vmem:[#allocation2 + $0x48] sm:$0xff] %vm358, %v3405
      %3460 = vst.msk [vmem:[#allocation2 + $0x58] sm:$0xff] %vm358, %v3408
      %3461 = vst.msk [vmem:[#allocation2 + $0x68] sm:$0xff] %vm358, %v3411
      %3462 = vst.msk [vmem:[#allocation2 + $0x78] sm:$0xff] %vm358, %v3414
      %3463 = vst.msk [vmem:[#allocation2 + $0x88] sm:$0xff] %vm358, %v3417
      %3464 = vst.msk [vmem:[#allocation2 + $0x98] sm:$0xff] %vm358, %v3420
      %3465 = vst.msk [vmem:[#allocation2 + $0xa8] sm:$0xff] %vm358, %v3423
      %3466 = vst.msk [vmem:[#allocation2 + $0xb8] sm:$0xff] %vm358, %v3426
      %3467 = vst.msk [vmem:[#allocation2 + $0xc8] sm:$0xff] %vm358, %v3429
      %3468 = vst.msk [vmem:[#allocation2 + $0xd8] sm:$0xff] %vm358, %v3432
      %3469 = vst.msk [vmem:[#allocation2 + $0xe8] sm:$0xff] %vm358, %v3435
      %3470 = vst.msk [vmem:[#allocation2 + $0xf8] sm:$0xff] %vm358, %v3438
      %v3471 = vld [vmem:[#allocation2] sm:$0xff]
      %v3472 = vld [vmem:[#allocation2 + $0x8] sm:$0xff]
      %v3473 = vld [vmem:[#allocation2 + $0x10] sm:$0xff]
      %v3474 = vld [vmem:[#allocation2 + $0x18] sm:$0xff]
      %v3475 = vld [vmem:[#allocation2 + $0x20] sm:$0xff]
      %v3476 = vld [vmem:[#allocation2 + $0x28] sm:$0xff]
      %v3477 = vld [vmem:[#allocation2 + $0x30] sm:$0xff]
      %v3478 = vld [vmem:[#allocation2 + $0x38] sm:$0xff]
      %v3479 = vld [vmem:[#allocation2 + $0x40] sm:$0xff]
      %v3480 = vld [vmem:[#allocation2 + $0x48] sm:$0xff]
      %v3481 = vld [vmem:[#allocation2 + $0x50] sm:$0xff]
      %v3482 = vld [vmem:[#allocation2 + $0x58] sm:$0xff]
      %v3483 = vld [vmem:[#allocation2 + $0x60] sm:$0xff]
      %v3484 = vld [vmem:[#allocation2 + $0x68] sm:$0xff]
      %v3485 = vld [vmem:[#allocation2 + $0x70] sm:$0xff]
      %v3486 = vld [vmem:[#allocation2 + $0x78] sm:$0xff]
      %v3487 = vld [vmem:[#allocation2 + $0x80] sm:$0xff]
      %v3488 = vld [vmem:[#allocation2 + $0x88] sm:$0xff]
      %v3489 = vld [vmem:[#allocation2 + $0x90] sm:$0xff]
      %v3490 = vld [vmem:[#allocation2 + $0x98] sm:$0xff]
      %v3491 = vld [vmem:[#allocation2 + $0xa0] sm:$0xff]
      %v3492 = vld [vmem:[#allocation2 + $0xa8] sm:$0xff]
      %v3493 = vld [vmem:[#allocation2 + $0xb0] sm:$0xff]
      %v3494 = vld [vmem:[#allocation2 + $0xb8] sm:$0xff]
      %v3495 = vld [vmem:[#allocation2 + $0xc0] sm:$0xff]
      %v3496 = vld [vmem:[#allocation2 + $0xc8] sm:$0xff]
      %v3497 = vld [vmem:[#allocation2 + $0xd0] sm:$0xff]
      %v3498 = vld [vmem:[#allocation2 + $0xd8] sm:$0xff]
      %v3499 = vld [vmem:[#allocation2 + $0xe0] sm:$0xff]
      %v3500 = vld [vmem:[#allocation2 + $0xe8] sm:$0xff]
      %v3501 = vld [vmem:[#allocation2 + $0xf0] sm:$0xff]
      %v3502 = vld [vmem:[#allocation2 + $0xf8] sm:$0xff]
      %s3503 = scalar_lea.vmem %s210, 192
      %v3504 = vld [vmem:[%s3503] sm:$0xf]
      %v3505 = vld [vmem:[%s3503 + $0x4] sm:$0xf]
      %v3506 = vld [vmem:[%s3503 + $0x8] sm:$0xf]
      %v3507 = vld [vmem:[%s3503 + $0xc] sm:$0xf]
      %v3508 = vld [vmem:[%s3503 + $0x10] sm:$0xf]
      %v3509 = vld [vmem:[%s3503 + $0x14] sm:$0xf]
      %v3510 = vld [vmem:[%s3503 + $0x18] sm:$0xf]
      %v3511 = vld [vmem:[%s3503 + $0x1c] sm:$0xf]
      %v3512 = vld [vmem:[%s3503 + $0x20] sm:$0xf]
      %v3513 = vld [vmem:[%s3503 + $0x24] sm:$0xf]
      %v3514 = vld [vmem:[%s3503 + $0x28] sm:$0xf]
      %v3515 = vld [vmem:[%s3503 + $0x2c] sm:$0xf]
      %v3516 = vld [vmem:[%s3503 + $0x30] sm:$0xf]
      %v3517 = vld [vmem:[%s3503 + $0x34] sm:$0xf]
      %v3518 = vld [vmem:[%s3503 + $0x38] sm:$0xf]
      %v3519 = vld [vmem:[%s3503 + $0x3c] sm:$0xf]
      %v3520 = vld [vmem:[%s3503 + $0x40] sm:$0xf]
      %v3521 = vld [vmem:[%s3503 + $0x44] sm:$0xf]
      %v3522 = vld [vmem:[%s3503 + $0x48] sm:$0xf]
      %v3523 = vld [vmem:[%s3503 + $0x4c] sm:$0xf]
      %v3524 = vld [vmem:[%s3503 + $0x50] sm:$0xf]
      %v3525 = vld [vmem:[%s3503 + $0x54] sm:$0xf]
      %v3526 = vld [vmem:[%s3503 + $0x58] sm:$0xf]
      %v3527 = vld [vmem:[%s3503 + $0x5c] sm:$0xf]
      %v3552 = vunpack.c.l.b16 %v3504
      %v3553 = vunpack.c.l.b16 %v3505
      %v3554 = vunpack.c.l.b16 %v3506
      %v3555 = vunpack.c.l.b16 %v3507
      %v3556 = vunpack.c.l.b16 %v3508
      %v3557 = vunpack.c.l.b16 %v3509
      %v3558 = vunpack.c.l.b16 %v3510
      %v3559 = vunpack.c.l.b16 %v3511
      %v3560 = vunpack.c.l.b16 %v3512
      %v3561 = vunpack.c.l.b16 %v3513
      %v3562 = vunpack.c.l.b16 %v3514
      %v3563 = vunpack.c.l.b16 %v3515
      %v3564 = vunpack.c.l.b16 %v3516
      %v3565 = vunpack.c.l.b16 %v3517
      %v3566 = vunpack.c.l.b16 %v3518
      %v3567 = vunpack.c.l.b16 %v3519
      %v3568 = vunpack.c.l.b16 %v3520
      %v3569 = vunpack.c.l.b16 %v3521
      %v3570 = vunpack.c.l.b16 %v3522
      %v3571 = vunpack.c.l.b16 %v3523
      %v3572 = vunpack.c.l.b16 %v3524
      %v3573 = vunpack.c.l.b16 %v3525
      %v3574 = vunpack.c.l.b16 %v3526
      %v3575 = vunpack.c.l.b16 %v3527
      %v3576 = vpack.c.b16 %v3553, %v3552
      %v3577 = vpack.c.b16 %v3555, %v3554
      %v3578 = vpack.c.b16 %v3557, %v3556
      %v3579 = vpack.c.b16 %v3559, %v3558
      %v3580 = vpack.c.b16 %v3561, %v3560
      %v3581 = vpack.c.b16 %v3563, %v3562
      %v3582 = vpack.c.b16 %v3565, %v3564
      %v3583 = vpack.c.b16 %v3567, %v3566
      %v3584 = vpack.c.b16 %v3569, %v3568
      %v3585 = vpack.c.b16 %v3571, %v3570
      %v3586 = vpack.c.b16 %v3573, %v3572
      %v3587 = vpack.c.b16 %v3575, %v3574
      %v3601 = vsel %vm358, %v3472, 0
      %v3604 = vsel %vm358, %v3474, 0
      %v3607 = vsel %vm358, %v3476, 0
      %v3610 = vsel %vm358, %v3478, 0
      %v3613 = vsel %vm358, %v3480, 0
      %v3616 = vsel %vm358, %v3482, 0
      %v3619 = vsel %vm358, %v3484, 0
      %v3622 = vsel %vm358, %v3486, 0
      %v3625 = vsel %vm358, %v3488, 0
      %v3628 = vsel %vm358, %v3490, 0
      %v3631 = vsel %vm358, %v3492, 0
      %v3634 = vsel %vm358, %v3494, 0
      %v3637 = vsel %vm358, %v3496, 0
      %v3640 = vsel %vm358, %v3498, 0
      %v3643 = vsel %vm358, %v3500, 0
      %v3646 = vsel %vm358, %v3502, 0
      %3648 = vmatprep.subr.bf16.mxu0 0
      %3649 = vmatpush1.bf16.msra.mxu0 %v3576
      %3650 = vmatprep.subr.bf16.mxu0 0
      %3651 = vmatpush1.bf16.msra.mxu0 %v3577
      %3652 = vmatprep.subr.bf16.mxu0 0
      %3653 = vmatpush1.bf16.msra.mxu0 %v3578
      %3654 = vmatprep.subr.bf16.mxu0 0
      %3655 = vmatpush1.bf16.msra.mxu0 %v3579
      %3656 = vmatprep.subr.bf16.mxu0 0
      %3657 = vmatpush1.bf16.msra.mxu0 %v3580
      %3658 = vmatprep.subr.bf16.mxu0 0
      %3659 = vmatpush1.bf16.msra.mxu0 %v3581
      %3660 = vmatprep.subr.bf16.mxu0 0
      %3661 = vmatpush1.bf16.msra.mxu0 %v3582
      %3662 = vmatprep.subr.bf16.mxu0 0
      %3663 = vmatpush1.bf16.msra.mxu0 %v3583
      %3664 = vmatprep.subr.bf16.mxu0 0
      %3665 = vmatpush1.bf16.msra.mxu0 %v3584
      %3666 = vmatprep.subr.bf16.mxu0 0
      %3667 = vmatpush1.bf16.msra.mxu0 %v3585
      %3668 = vmatprep.subr.bf16.mxu0 0
      %3669 = vmatpush1.bf16.msra.mxu0 %v3586
      %3670 = vmatprep.subr.bf16.mxu0 0
      %3671 = vmatpush1.bf16.msra.mxu0 %v3587
      %3672 = vmatprep.subr.bf16.mxu0 0
      %3673 = vmatpush1.bf16.msra.mxu0 0
      %3674 = vmatprep.subr.bf16.mxu0 0
      %3675 = vmatpush1.bf16.msra.mxu0 0
      %3676 = vmatprep.subr.bf16.mxu0 0
      %3677 = vmatpush1.bf16.msra.mxu0 0
      %3678 = vmatprep.subr.bf16.mxu0 0
      %3679 = vmatpush1.bf16.msra.mxu0 0
      %3680 = vmatprep.mubr.bf16.mxu0 %v3601
      %3681 = vmatmul.mubr.bf16.gmra.mrb[0].mxu0 %v3471
      %v3682 = vpop.f32.mrb[0].mxu0
      %v3683 = vadd.f32 0.0, %v3682
      %v3684 = vpop.f32.mrb[0].mxu0
      %v3685 = vpop.f32.mrb[0].mxu0
      %v3686 = vadd.f32 0.0, %v3685
      %v3687 = vpop.f32.mrb[0].mxu0
      %3688 = vmatprep.mubr.bf16.mxu0 %v3604
      %3689 = vmatmul.mubr.bf16.gmra.mrb[0].mxu0 %v3473
      %v3690 = vpop.f32.mrb[0].mxu0
      %v3691 = vadd.f32 0.0, %v3690
      %v3692 = vpop.f32.mrb[0].mxu0
      %v3693 = vpop.f32.mrb[0].mxu0
      %v3694 = vadd.f32 0.0, %v3693
      %v3695 = vpop.f32.mrb[0].mxu0
      %3696 = vmatprep.mubr.bf16.mxu0 %v3607
      %3697 = vmatmul.mubr.bf16.gmra.mrb[0].mxu0 %v3475
      %v3698 = vpop.f32.mrb[0].mxu0
      %v3699 = vadd.f32 0.0, %v3698
      %v3700 = vpop.f32.mrb[0].mxu0
      %v3701 = vpop.f32.mrb[0].mxu0
      %v3702 = vadd.f32 0.0, %v3701
      %v3703 = vpop.f32.mrb[0].mxu0
      %3704 = vmatprep.mubr.bf16.mxu0 %v3610
      %3705 = vmatmul.mubr.bf16.gmra.mrb[0].mxu0 %v3477
      %v3706 = vpop.f32.mrb[0].mxu0
      %v3707 = vadd.f32 0.0, %v3706
      %v3708 = vpop.f32.mrb[0].mxu0
      %v3709 = vpop.f32.mrb[0].mxu0
      %v3710 = vadd.f32 0.0, %v3709
      %v3711 = vpop.f32.mrb[0].mxu0
      %3712 = vmatprep.mubr.bf16.mxu0 %v3613
      %3713 = vmatmul.mubr.bf16.gmra.mrb[0].mxu0 %v3479
      %v3714 = vpop.f32.mrb[0].mxu0
      %v3715 = vadd.f32 0.0, %v3714
      %v3716 = vpop.f32.mrb[0].mxu0
      %v3717 = vpop.f32.mrb[0].mxu0
      %v3718 = vadd.f32 0.0, %v3717
      %v3719 = vpop.f32.mrb[0].mxu0
      %3720 = vmatprep.mubr.bf16.mxu0 %v3616
      %3721 = vmatmul.mubr.bf16.gmra.mrb[0].mxu0 %v3481
      %v3722 = vpop.f32.mrb[0].mxu0
      %v3723 = vadd.f32 0.0, %v3722
      %v3724 = vpop.f32.mrb[0].mxu0
      %v3725 = vpop.f32.mrb[0].mxu0
      %v3726 = vadd.f32 0.0, %v3725
      %v3727 = vpop.f32.mrb[0].mxu0
      %3728 = vmatprep.mubr.bf16.mxu0 %v3619
      %3729 = vmatmul.mubr.bf16.gmra.mrb[0].mxu0 %v3483
      %v3730 = vpop.f32.mrb[0].mxu0
      %v3731 = vadd.f32 0.0, %v3730
      %v3732 = vpop.f32.mrb[0].mxu0
      %v3733 = vpop.f32.mrb[0].mxu0
      %v3734 = vadd.f32 0.0, %v3733
      %v3735 = vpop.f32.mrb[0].mxu0
      %3736 = vmatprep.mubr.bf16.mxu0 %v3622
      %3737 = vmatmul.mubr.bf16.gmra.mrb[0].mxu0 %v3485
      %v3738 = vpop.f32.mrb[0].mxu0
      %v3739 = vadd.f32 0.0, %v3738
      %v3740 = vpop.f32.mrb[0].mxu0
      %v3741 = vpop.f32.mrb[0].mxu0
      %v3742 = vadd.f32 0.0, %v3741
      %v3743 = vpop.f32.mrb[0].mxu0
      %3744 = vmatprep.mubr.bf16.mxu0 %v3625
      %3745 = vmatmul.mubr.bf16.gmra.mrb[0].mxu0 %v3487
      %v3746 = vpop.f32.mrb[0].mxu0
      %v3747 = vadd.f32 0.0, %v3746
      %v3748 = vpop.f32.mrb[0].mxu0
      %v3749 = vpop.f32.mrb[0].mxu0
      %v3750 = vadd.f32 0.0, %v3749
      %v3751 = vpop.f32.mrb[0].mxu0
      %3752 = vmatprep.mubr.bf16.mxu0 %v3628
      %3753 = vmatmul.mubr.bf16.gmra.mrb[0].mxu0 %v3489
      %v3754 = vpop.f32.mrb[0].mxu0
      %v3755 = vadd.f32 0.0, %v3754
      %v3756 = vpop.f32.mrb[0].mxu0
      %v3757 = vpop.f32.mrb[0].mxu0
      %v3758 = vadd.f32 0.0, %v3757
      %v3759 = vpop.f32.mrb[0].mxu0
      %3760 = vmatprep.mubr.bf16.mxu0 %v3631
      %3761 = vmatmul.mubr.bf16.gmra.mrb[0].mxu0 %v3491
      %v3762 = vpop.f32.mrb[0].mxu0
      %v3763 = vadd.f32 0.0, %v3762
      %v3764 = vpop.f32.mrb[0].mxu0
      %v3765 = vpop.f32.mrb[0].mxu0
      %v3766 = vadd.f32 0.0, %v3765
      %v3767 = vpop.f32.mrb[0].mxu0
      %3768 = vmatprep.mubr.bf16.mxu0 %v3634
      %3769 = vmatmul.mubr.bf16.gmra.mrb[0].mxu0 %v3493
      %v3770 = vpop.f32.mrb[0].mxu0
      %v3771 = vadd.f32 0.0, %v3770
      %v3772 = vpop.f32.mrb[0].mxu0
      %v3773 = vpop.f32.mrb[0].mxu0
      %v3774 = vadd.f32 0.0, %v3773
      %v3775 = vpop.f32.mrb[0].mxu0
      %3776 = vmatprep.mubr.bf16.mxu0 %v3637
      %3777 = vmatmul.mubr.bf16.gmra.mrb[0].mxu0 %v3495
      %v3778 = vpop.f32.mrb[0].mxu0
      %v3779 = vadd.f32 0.0, %v3778
      %v3780 = vpop.f32.mrb[0].mxu0
      %v3781 = vpop.f32.mrb[0].mxu0
      %v3782 = vadd.f32 0.0, %v3781
      %v3783 = vpop.f32.mrb[0].mxu0
      %3784 = vmatprep.mubr.bf16.mxu0 %v3640
      %3785 = vmatmul.mubr.bf16.gmra.mrb[0].mxu0 %v3497
      %v3786 = vpop.f32.mrb[0].mxu0
      %v3787 = vadd.f32 0.0, %v3786
      %v3788 = vpop.f32.mrb[0].mxu0
      %v3789 = vpop.f32.mrb[0].mxu0
      %v3790 = vadd.f32 0.0, %v3789
      %v3791 = vpop.f32.mrb[0].mxu0
      %3792 = vmatprep.mubr.bf16.mxu0 %v3643
      %3793 = vmatmul.mubr.bf16.gmra.mrb[0].mxu0 %v3499
      %v3794 = vpop.f32.mrb[0].mxu0
      %v3795 = vadd.f32 0.0, %v3794
      %v3796 = vpop.f32.mrb[0].mxu0
      %v3797 = vpop.f32.mrb[0].mxu0
      %v3798 = vadd.f32 0.0, %v3797
      %v3799 = vpop.f32.mrb[0].mxu0
      %3800 = vmatprep.mubr.bf16.mxu0 %v3646
      %3801 = vmatmul.mubr.bf16.gmra.mrb[0].mxu0 %v3501
      %v3802 = vpop.f32.mrb[0].mxu0
      %v3803 = vadd.f32 0.0, %v3802
      %v3804 = vpop.f32.mrb[0].mxu0
      %v3805 = vpop.f32.mrb[0].mxu0
      %v3806 = vadd.f32 0.0, %v3805
      %v3807 = vpop.f32.mrb[0].mxu0
      %3808 = vdwg.mxu0
      %v3809 = vadd.f32 %v2606, %v3683
      %v3810 = vadd.f32 %v2607, %v3686
      %v3811 = vadd.f32 %v2608, %v3691
      %v3812 = vadd.f32 %v2609, %v3694
      %v3813 = vadd.f32 %v2610, %v3699
      %v3814 = vadd.f32 %v2611, %v3702
      %v3815 = vadd.f32 %v2612, %v3707
      %v3816 = vadd.f32 %v2613, %v3710
      %v3817 = vadd.f32 %v2614, %v3715
      %v3818 = vadd.f32 %v2615, %v3718
      %v3819 = vadd.f32 %v2616, %v3723
      %v3820 = vadd.f32 %v2617, %v3726
      %v3821 = vadd.f32 %v2618, %v3731
      %v3822 = vadd.f32 %v2619, %v3734
      %v3823 = vadd.f32 %v2620, %v3739
      %v3824 = vadd.f32 %v2621, %v3742
      %v3825 = vadd.f32 %v2622, %v3747
      %v3826 = vadd.f32 %v2623, %v3750
      %v3827 = vadd.f32 %v2624, %v3755
      %v3828 = vadd.f32 %v2625, %v3758
      %v3829 = vadd.f32 %v2626, %v3763
      %v3830 = vadd.f32 %v2627, %v3766
      %v3831 = vadd.f32 %v2628, %v3771
      %v3832 = vadd.f32 %v2629, %v3774
      %v3833 = vadd.f32 %v2630, %v3779
      %v3834 = vadd.f32 %v2631, %v3782
      %v3835 = vadd.f32 %v2632, %v3787
      %v3836 = vadd.f32 %v2633, %v3790
      %v3837 = vadd.f32 %v2634, %v3795
      %v3838 = vadd.f32 %v2635, %v3798
      %v3839 = vadd.f32 %v2636, %v3803
      %v3840 = vadd.f32 %v2637, %v3806
      %v3841 = vmax.f32 %v3809, 0.0
      %v3842 = vmax.f32 %v3810, 0.0
      %v3843 = vmax.f32 %v3811, 0.0
      %v3844 = vmax.f32 %v3812, 0.0
      %v3845 = vmax.f32 %v3813, 0.0
      %v3846 = vmax.f32 %v3814, 0.0
      %v3847 = vmax.f32 %v3815, 0.0
      %v3848 = vmax.f32 %v3816, 0.0
      %v3849 = vmax.f32 %v3817, 0.0
      %v3850 = vmax.f32 %v3818, 0.0
      %v3851 = vmax.f32 %v3819, 0.0
      %v3852 = vmax.f32 %v3820, 0.0
      %v3853 = vmax.f32 %v3821, 0.0
      %v3854 = vmax.f32 %v3822, 0.0
      %v3855 = vmax.f32 %v3823, 0.0
      %v3856 = vmax.f32 %v3824, 0.0
      %v3857 = vmax.f32 %v3825, 0.0
      %v3858 = vmax.f32 %v3826, 0.0
      %v3859 = vmax.f32 %v3827, 0.0
      %v3860 = vmax.f32 %v3828, 0.0
      %v3861 = vmax.f32 %v3829, 0.0
      %v3862 = vmax.f32 %v3830, 0.0
      %v3863 = vmax.f32 %v3831, 0.0
      %v3864 = vmax.f32 %v3832, 0.0
      %v3865 = vmax.f32 %v3833, 0.0
      %v3866 = vmax.f32 %v3834, 0.0
      %v3867 = vmax.f32 %v3835, 0.0
      %v3868 = vmax.f32 %v3836, 0.0
      %v3869 = vmax.f32 %v3837, 0.0
      %v3870 = vmax.f32 %v3838, 0.0
      %v3871 = vmax.f32 %v3839, 0.0
      %v3872 = vmax.f32 %v3840, 0.0
      %v3873 = vmax.f32 %v3841, %v3843
      %v3874 = vmax.f32 %v3842, %v3844
      %v3875 = vmax.f32 %v3845, %v3847
      %v3876 = vmax.f32 %v3846, %v3848
      %v3877 = vmax.f32 %v3849, %v3851
      %v3878 = vmax.f32 %v3850, %v3852
      %v3879 = vmax.f32 %v3853, %v3855
      %v3880 = vmax.f32 %v3854, %v3856
      %v3881 = vmax.f32 %v3857, %v3859
      %v3882 = vmax.f32 %v3858, %v3860
      %v3883 = vmax.f32 %v3861, %v3863
      %v3884 = vmax.f32 %v3862, %v3864
      %v3885 = vmax.f32 %v3865, %v3867
      %v3886 = vmax.f32 %v3866, %v3868
      %v3887 = vmax.f32 %v3869, %v3871
      %v3888 = vmax.f32 %v3870, %v3872
      %3889 = vst.msk [vmem:[#allocation3] sm:$0xff] %vm358, %v3873
      %3890 = vst.msk [vmem:[#allocation3 + $0x8] sm:$0xff] %vm358, %v3874
      %3891 = vst.msk [vmem:[#allocation3 + $0x10] sm:$0xff] %vm358, %v3875
      %3892 = vst.msk [vmem:[#allocation3 + $0x18] sm:$0xff] %vm358, %v3876
      %3893 = vst.msk [vmem:[#allocation3 + $0x20] sm:$0xff] %vm358, %v3877
      %3894 = vst.msk [vmem:[#allocation3 + $0x28] sm:$0xff] %vm358, %v3878
      %3895 = vst.msk [vmem:[#allocation3 + $0x30] sm:$0xff] %vm358, %v3879
      %3896 = vst.msk [vmem:[#allocation3 + $0x38] sm:$0xff] %vm358, %v3880
      %3897 = vst.msk [vmem:[#allocation3 + $0x40] sm:$0xff] %vm358, %v3881
      %3898 = vst.msk [vmem:[#allocation3 + $0x48] sm:$0xff] %vm358, %v3882
      %3899 = vst.msk [vmem:[#allocation3 + $0x50] sm:$0xff] %vm358, %v3883
      %3900 = vst.msk [vmem:[#allocation3 + $0x58] sm:$0xff] %vm358, %v3884
      %3901 = vst.msk [vmem:[#allocation3 + $0x60] sm:$0xff] %vm358, %v3885
      %3902 = vst.msk [vmem:[#allocation3 + $0x68] sm:$0xff] %vm358, %v3886
      %3903 = vst.msk [vmem:[#allocation3 + $0x70] sm:$0xff] %vm358, %v3887
      %3904 = vst.msk [vmem:[#allocation3 + $0x78] sm:$0xff] %vm358, %v3888
      %v3905 = vld [vmem:[#allocation3] ss:$2 sm:$0xff]
      %s3906 = scalar_lea.vmem [#allocation3], 16
      %v3907 = vld [vmem:[%s3906] ss:$2 sm:$0xff]
      %s3908 = scalar_lea.vmem [#allocation3], 32
      %v3909 = vld [vmem:[%s3908] ss:$2 sm:$0xff]
      %s3910 = scalar_lea.vmem [#allocation3], 48
      %v3911 = vld [vmem:[%s3910] ss:$2 sm:$0xff]
      %s3912 = scalar_lea.vmem [#allocation3], 64
      %v3913 = vld [vmem:[%s3912] ss:$2 sm:$0xff]
      %s3914 = scalar_lea.vmem [#allocation3], 80
      %v3915 = vld [vmem:[%s3914] ss:$2 sm:$0xff]
      %s3916 = scalar_lea.vmem [#allocation3], 96
      %v3917 = vld [vmem:[%s3916] ss:$2 sm:$0xff]
      %s3918 = scalar_lea.vmem [#allocation3], 112
      %v3919 = vld [vmem:[%s3918] ss:$2 sm:$0xff]
      %s3920 = scalar_lea.vmem [#allocation3], 1
      %v3921 = vld [vmem:[%s3920] ss:$2 sm:$0xff]
      %s3922 = scalar_lea.vmem [#allocation3], 17
      %v3923 = vld [vmem:[%s3922] ss:$2 sm:$0xff]
      %s3924 = scalar_lea.vmem [#allocation3], 33
      %v3925 = vld [vmem:[%s3924] ss:$2 sm:$0xff]
      %s3926 = scalar_lea.vmem [#allocation3], 49
      %v3927 = vld [vmem:[%s3926] ss:$2 sm:$0xff]
      %s3928 = scalar_lea.vmem [#allocation3], 65
      %v3929 = vld [vmem:[%s3928] ss:$2 sm:$0xff]
      %s3930 = scalar_lea.vmem [#allocation3], 81
      %v3931 = vld [vmem:[%s3930] ss:$2 sm:$0xff]
      %s3932 = scalar_lea.vmem [#allocation3], 97
      %v3933 = vld [vmem:[%s3932] ss:$2 sm:$0xff]
      %s3934 = scalar_lea.vmem [#allocation3], 113
      %v3935 = vld [vmem:[%s3934] ss:$2 sm:$0xff]
      %v3936 = vmax.f32 %v3905, %v3921
      %v3937 = vmax.f32 %v3907, %v3923
      %v3938 = vmax.f32 %v3909, %v3925
      %v3939 = vmax.f32 %v3911, %v3927
      %v3940 = vmax.f32 %v3913, %v3929
      %v3941 = vmax.f32 %v3915, %v3931
      %v3942 = vmax.f32 %v3917, %v3933
      %v3943 = vmax.f32 %v3919, %v3935
      %v3944 = vpack.c.bf16 %v3936, %v3936
      %v3945 = vpack.c.bf16 %v3937, %v3937
      %v3946 = vpack.c.bf16 %v3938, %v3938
      %v3947 = vpack.c.bf16 %v3939, %v3939
      %v3948 = vpack.c.bf16 %v3940, %v3940
      %v3949 = vpack.c.bf16 %v3941, %v3941
      %v3950 = vpack.c.bf16 %v3942, %v3942
      %v3951 = vpack.c.bf16 %v3943, %v3943
      %vm3952 = vcmask 519168
      %3953 = vst.msk [vmem:[%s221] sm:$0xf] %vm3952, 0
      %vm3954 = vcmask 516096
      %3955 = vst.msk [vmem:[%s221 + $0x4] sm:$0x1] %vm3954, 0
      %3956 = vst.msk [vmem:[%s221 + $0x8] sm:$0xf] %vm3952, 0
      %3957 = vst.msk [vmem:[%s221 + $0xc] sm:$0x1] %vm3954, 0
      %3958 = vst.msk [vmem:[%s221 + $0x10] sm:$0xf] %vm3952, 0
      %3959 = vst.msk [vmem:[%s221 + $0x14] sm:$0x1] %vm3954, 0
      %3960 = vst.msk [vmem:[%s221 + $0x18] sm:$0xf] %vm3952, 0
      %3961 = vst.msk [vmem:[%s221 + $0x1c] sm:$0x1] %vm3954, 0
      %3962 = vst.msk [vmem:[%s221 + $0x20] sm:$0xf] %vm3952, 0
      %3963 = vst.msk [vmem:[%s221 + $0x24] sm:$0x1] %vm3954, 0
      %3964 = vst.msk [vmem:[%s221 + $0x28] sm:$0xf] %vm3952, 0
      %3965 = vst.msk [vmem:[%s221 + $0x2c] sm:$0x1] %vm3954, 0
      %3966 = vst.msk [vmem:[%s221 + $0x30] sm:$0xf] %vm3952, 0
      %3967 = vst.msk [vmem:[%s221 + $0x34] sm:$0x1] %vm3954, 0
      %3968 = vst.msk [vmem:[%s221 + $0x38] sm:$0xf] %vm3952, 0
      %3969 = vst.msk [vmem:[%s221 + $0x3c] sm:$0x1] %vm3954, 0
      %3970 = vst.msk [vmem:[%s221 + $0x40] sm:$0xf] %vm3952, 0
      %3971 = vst.msk [vmem:[%s221 + $0x44] sm:$0x1] %vm3954, 0
      %3972 = vst.msk [vmem:[%s221 + $0x48] sm:$0xf] %vm3952, 0
      %3973 = vst.msk [vmem:[%s221 + $0x4c] sm:$0x1] %vm3954, 0
      %v3982 = vunpack.c.l.b16 %v3944
      %v3983 = vunpack.c.l.b16 %v3945
      %v3984 = vunpack.c.l.b16 %v3946
      %v3985 = vunpack.c.l.b16 %v3947
      %v3986 = vunpack.c.l.b16 %v3948
      %v3987 = vunpack.c.l.b16 %v3949
      %v3988 = vunpack.c.l.b16 %v3950
      %v3989 = vunpack.c.l.b16 %v3951
      %v3990 = vpack.c.b16 %v3982, %v3982
      %v3991 = vpack.c.b16 %v3983, %v3983
      %v3992 = vpack.c.b16 %v3984, %v3984
      %v3993 = vpack.c.b16 %v3985, %v3985
      %v3994 = vpack.c.b16 %v3986, %v3986
      %v3995 = vpack.c.b16 %v3987, %v3987
      %v3996 = vpack.c.b16 %v3988, %v3988
      %v3997 = vpack.c.b16 %v3989, %v3989
      %v3999 = vshrl.u32 %v3990, 16
      %v4001 = vrot.slane %v3999, 7
      %v4002 = vshll.u32 %v3990, 16
      %v4004 = vor.u32 %v4001, %v4002
      %v4005 = vrot.slane %v4001, 4
      %v4007 = vshrl.u32 %v3991, 16
      %v4009 = vrot.slane %v4007, 7
      %v4010 = vshll.u32 %v3991, 16
      %v4012 = vor.u32 %v4009, %v4010
      %v4013 = vrot.slane %v4009, 4
      %v4015 = vshrl.u32 %v3992, 16
      %v4017 = vrot.slane %v4015, 7
      %v4018 = vshll.u32 %v3992, 16
      %v4020 = vor.u32 %v4017, %v4018
      %v4021 = vrot.slane %v4017, 4
      %v4023 = vshrl.u32 %v3993, 16
      %v4025 = vrot.slane %v4023, 7
      %v4026 = vshll.u32 %v3993, 16
      %v4028 = vor.u32 %v4025, %v4026
      %v4029 = vrot.slane %v4025, 4
      %v4031 = vshrl.u32 %v3994, 16
      %v4033 = vrot.slane %v4031, 7
      %v4034 = vshll.u32 %v3994, 16
      %v4036 = vor.u32 %v4033, %v4034
      %v4037 = vrot.slane %v4033, 4
      %v4039 = vshrl.u32 %v3995, 16
      %v4041 = vrot.slane %v4039, 7
      %v4042 = vshll.u32 %v3995, 16
      %v4044 = vor.u32 %v4041, %v4042
      %v4045 = vrot.slane %v4041, 4
      %v4047 = vshrl.u32 %v3996, 16
      %v4049 = vrot.slane %v4047, 7
      %v4050 = vshll.u32 %v3996, 16
      %v4052 = vor.u32 %v4049, %v4050
      %v4053 = vrot.slane %v4049, 4
      %v4055 = vshrl.u32 %v3997, 16
      %v4057 = vrot.slane %v4055, 7
      %v4058 = vshll.u32 %v3997, 16
      %v4060 = vor.u32 %v4057, %v4058
      %v4061 = vrot.slane %v4057, 4
      %s4078 = scalar_lea.vmem %s221, 8
      %vm4079 = vcmask 519168
      %vm4080 = vsmask.f32 7938
      %vm4081 = vmand %vm4079, %vm4080
      %v4082 = vld [vmem:[%s4078] sm:$0xf]
      %v4083 = vsel %vm4081, %v4004, %v4082
      %4084 = vst [vmem:[%s4078] sm:$0xf] %v4083
      %vm4085 = vcmask 516096
      %vm4086 = vsmask.f32 256
      %vm4087 = vmand %vm4085, %vm4086
      %v4088 = vld [vmem:[%s4078 + $0x4] sm:$0x1]
      %v4089 = vsel %vm4087, %v4005, %v4088
      %4090 = vst [vmem:[%s4078 + $0x4] sm:$0x1] %v4089
      %v4091 = vld [vmem:[%s4078 + $0x8] sm:$0xf]
      %v4092 = vsel %vm4081, %v4012, %v4091
      %4093 = vst [vmem:[%s4078 + $0x8] sm:$0xf] %v4092
      %v4094 = vld [vmem:[%s4078 + $0xc] sm:$0x1]
      %v4095 = vsel %vm4087, %v4013, %v4094
      %4096 = vst [vmem:[%s4078 + $0xc] sm:$0x1] %v4095
      %v4097 = vld [vmem:[%s4078 + $0x10] sm:$0xf]
      %v4098 = vsel %vm4081, %v4020, %v4097
      %4099 = vst [vmem:[%s4078 + $0x10] sm:$0xf] %v4098
      %v4100 = vld [vmem:[%s4078 + $0x14] sm:$0x1]
      %v4101 = vsel %vm4087, %v4021, %v4100
      %4102 = vst [vmem:[%s4078 + $0x14] sm:$0x1] %v4101
      %v4103 = vld [vmem:[%s4078 + $0x18] sm:$0xf]
      %v4104 = vsel %vm4081, %v4028, %v4103
      %4105 = vst [vmem:[%s4078 + $0x18] sm:$0xf] %v4104
      %v4106 = vld [vmem:[%s4078 + $0x1c] sm:$0x1]
      %v4107 = vsel %vm4087, %v4029, %v4106
      %4108 = vst [vmem:[%s4078 + $0x1c] sm:$0x1] %v4107
      %v4109 = vld [vmem:[%s4078 + $0x20] sm:$0xf]
      %v4110 = vsel %vm4081, %v4036, %v4109
      %4111 = vst [vmem:[%s4078 + $0x20] sm:$0xf] %v4110
      %v4112 = vld [vmem:[%s4078 + $0x24] sm:$0x1]
      %v4113 = vsel %vm4087, %v4037, %v4112
      %4114 = vst [vmem:[%s4078 + $0x24] sm:$0x1] %v4113
      %v4115 = vld [vmem:[%s4078 + $0x28] sm:$0xf]
      %v4116 = vsel %vm4081, %v4044, %v4115
      %4117 = vst [vmem:[%s4078 + $0x28] sm:$0xf] %v4116
      %v4118 = vld [vmem:[%s4078 + $0x2c] sm:$0x1]
      %v4119 = vsel %vm4087, %v4045, %v4118
      %4120 = vst [vmem:[%s4078 + $0x2c] sm:$0x1] %v4119
      %v4121 = vld [vmem:[%s4078 + $0x30] sm:$0xf]
      %v4122 = vsel %vm4081, %v4052, %v4121
      %4123 = vst [vmem:[%s4078 + $0x30] sm:$0xf] %v4122
      %v4124 = vld [vmem:[%s4078 + $0x34] sm:$0x1]
      %v4125 = vsel %vm4087, %v4053, %v4124
      %4126 = vst [vmem:[%s4078 + $0x34] sm:$0x1] %v4125
      %v4127 = vld [vmem:[%s4078 + $0x38] sm:$0xf]
      %v4128 = vsel %vm4081, %v4060, %v4127
      %4129 = vst [vmem:[%s4078 + $0x38] sm:$0xf] %v4128
      %v4130 = vld [vmem:[%s4078 + $0x3c] sm:$0x1]
      %v4131 = vsel %vm4087, %v4061, %v4130
      %4132 = vst [vmem:[%s4078 + $0x3c] sm:$0x1] %v4131
      %p4133 = scmp.lt.s32.totalorder %s19, 1
      %s4134 = scalar_select %p4133, %s19, 1
      %p4135 = scmp.lt.s32.totalorder %s18, 0
      %s4136 = scalar_select %p4135, %s18, 0
      %s4137 = smul.addr %s4134, 20
      %s4138 = sadd.s32 %s4136, %s4137
      %s4139 = smul.addr %s4138, 4
      %s4140 = scalar_lea.vmem %s3, %s4139
      // Predicated region
      $region33: #{truncated_vgg19_apply.5} parent=31 // pred_check
        %p4141 = pneg %p124
      $region34: #{truncated_vgg19_apply.5} parent=31 // pred_check_branch
        %4143 = sbr.rel (%p4141) target = $region36
      $region35: #{truncated_vgg19_apply.5} parent=31 // pred_region
        _
      $region36: #{truncated_vgg19_apply.5} parent=31 // pred_fallthru
        _
    $region32: #{truncated_vgg19_apply.5} parent=5 // pred_fallthru
      _
    %p4144 = scmp.le.s32.totalorder 2, %s9
    // Predicated region
    $region37: #{truncated_vgg19_apply.5} parent=5 // pred_check
      %p4145 = pneg %p4144
    $region38: #{truncated_vgg19_apply.5} parent=5 // pred_check_branch
      %4147 = sbr.rel (%p4145) target = $region40
    $region39: #{truncated_vgg19_apply.5} parent=5 // pred_region
      %s4148 = ssub.s32 %s9, 2
      // Predicated region
      $region41: #{truncated_vgg19_apply.5} parent=39 // pred_check
        %p4149 = pneg %p130
      $region42: #{truncated_vgg19_apply.5} parent=39 // pred_check_branch
        %4151 = sbr.rel (%p4149) target = $region44
      $region43: #{truncated_vgg19_apply.5} parent=39 // pred_region
        %p4152 = scmp.lt.s32.totalorder %s21, 1
        %s4153 = scalar_select %p4152, %s21, 1
        %p4154 = scmp.lt.s32.totalorder %s20, 0
        %s4155 = scalar_select %p4154, %s20, 0
        %s4156 = smul.addr %s4153, 20
        %s4157 = sadd.s32 %s4155, %s4156
        %s4158 = smul.addr %s4157, 4
        %s4159 = scalar_lea.vmem %s3, %s4158
      $region44: #{truncated_vgg19_apply.5} parent=39 // pred_fallthru
        _
    $region40: #{truncated_vgg19_apply.5} parent=5 // pred_fallthru
      _
  $region6: #{truncated_vgg19_apply.5} parent=0 // loop_footer
    %s13 = sadd.s32 1, %s9
  $region7: #{truncated_vgg19_apply.5} parent=0 // loop_footer_branch
    %8 = sbr.rel target = $region3
  $region8: #{truncated_vgg19_apply.5} parent=0 // loop_exit
    _

// kernel: truncated_vgg19_apply.7
$region0: #{truncated_vgg19_apply.7}
  #allocation0 [shape = 'u32[]', space=smem, size = 0x4, offset = 0x4, fixed_abs, tag = 'smem constant byte address 0x4 - core index']
  #allocation1 [shape = 'u32[144,128]{1,0:T(1,128)}', space=vmem, size = 0x12000, scoped, tag = 'internal scratch']
  #allocation2 [shape = 'bf16[8,8,384]{2,1,0:T(8,128)(2,1)}', space=vmem, size = 0xc000, scoped, tag = 'scratch operand']
  %s0 = inlined_call_operand.vmem [shape: bf16[2,10,10,128], index: 0, kind: input, shape index: {}]
  %s1 = inlined_call_operand.vmem [shape: bf16[3,384,128], index: 1, kind: input, shape index: {}]
  %s2 = inlined_call_operand.vmem [shape: f32[1,128], index: 2, kind: input, shape index: {}]
  %s3 = inlined_call_operand.vmem [shape: bf16[2,8,8,128], index: 3, kind: output, shape index: {}]
  %s4 = sld [smem:[#allocation0]]
  $region45: #{truncated_vgg19_apply.7} parent=0
    _
  %s6 = ssub.s32 1, %s4
  %s7 = scalar_select 0, %s6, %s4
  loop: start=0, step=1, limit=4
  $region2: #{truncated_vgg19_apply.7} parent=0 // loop_pre_header
    _
  $region3: #{truncated_vgg19_apply.7} parent=0 // loop_header
    %s9 = sphi 0, %s13
    %p10 = scmp.ge.s32.totalorder %s9, 4
    %s16 = sphi 0, %s28
    %s17 = sphi 0, %s24
    %s18 = sphi 0, %s16
    %s19 = sphi 0, %s17
    %s20 = sphi 0, %s18
    %s21 = sphi 0, %s19
    %s31 = sphi 0, %s33
    %s34 = sphi 0, %s31
    %s35 = sphi 0, %s34
    %s51 = sphi 0, %s35
    %s57 = sphi 0, %s59
    %s60 = sphi 0, %s57
    %s61 = sphi 0, %s60
    %s77 = sphi 0, %s61
    %s83 = sphi 0, %s85
    %s86 = sphi 0, %s83
    %s87 = sphi 0, %s86
    %s103 = sphi 0, %s87
    %s111 = sphi 0, %s113
    %s114 = sphi 0, %s111
    %s115 = sphi 0, %s114
    %s131 = sphi 0, %s115
  $region4: #{truncated_vgg19_apply.7} parent=0 // loop_header_branch
    %12 = sbr.rel (%p10) target = $region8
  $region5: #{truncated_vgg19_apply.7} parent=0 // loop_body
    %s14 = ssub.s32 %s9, 1
    %s15 = ssub.s32 %s9, 2
    %s22 = sadd.s32 1, %s17
    %p23 = scmp.ge.s32.totalorder %s22, 2
    %s24 = scalar_select %p23, 0, %s22
    %s25 = sadd.s32 1, %s16
    %s26 = scalar_select %p23, %s25, %s16
    %p27 = scmp.ge.s32.totalorder %s26, 1
    %s28 = scalar_select %p27, 0, %s26
    %s29 = ssub.s32 %s17, %s24
    %p30 = scmp.eq.s32.totalorder %s29, 0
    %s32 = sadd.s32 %s31, 1
    %s33 = scalar_select %p30, %s31, %s32
    %p36 = pneg %p30
    %p37 = scmp.eq.s32.totalorder %s9, 1
    %p38 = por %p36, %p37
    %p39 = scmp.ne.s32.totalorder %s31, %s34
    %p40 = scmp.eq.s32.totalorder %s9, 0
    %p41 = por %p39, %p40
    %p42 = scmp.ne.s32.totalorder %s31, %s34
    %p43 = scmp.eq.s32.totalorder %s14, 1
    %p44 = por %p42, %p43
    %p45 = scmp.ne.s32.totalorder %s34, %s35
    %p46 = scmp.eq.s32.totalorder %s14, 0
    %p47 = por %p45, %p46
    %p48 = scmp.ne.s32.totalorder %s34, %s35
    %p49 = scmp.eq.s32.totalorder %s15, 1
    %p50 = por %p48, %p49
    %p52 = scmp.ne.s32.totalorder %s35, %s51
    %p53 = scmp.eq.s32.totalorder %s15, 0
    %p54 = por %p52, %p53
    %s55 = ssub.s32 %s16, %s28
    %p56 = scmp.eq.s32.totalorder %s55, 0
    %s58 = sadd.s32 %s57, 1
    %s59 = scalar_select %p56, %s57, %s58
    %p62 = pneg %p56
    %p63 = scmp.eq.s32.totalorder %s9, 1
    %p64 = por %p62, %p63
    %p65 = scmp.ne.s32.totalorder %s57, %s60
    %p66 = scmp.eq.s32.totalorder %s9, 0
    %p67 = por %p65, %p66
    %p68 = scmp.ne.s32.totalorder %s57, %s60
    %p69 = scmp.eq.s32.totalorder %s14, 1
    %p70 = por %p68, %p69
    %p71 = scmp.ne.s32.totalorder %s60, %s61
    %p72 = scmp.eq.s32.totalorder %s14, 0
    %p73 = por %p71, %p72
    %p74 = scmp.ne.s32.totalorder %s60, %s61
    %p75 = scmp.eq.s32.totalorder %s15, 1
    %p76 = por %p74, %p75
    %p78 = scmp.ne.s32.totalorder %s61, %s77
    %p79 = scmp.eq.s32.totalorder %s15, 0
    %p80 = por %p78, %p79
    %s81 = ssub.s32 %s16, %s28
    %p82 = scmp.eq.s32.totalorder %s81, 0
    %s84 = sadd.s32 %s83, 1
    %s85 = scalar_select %p82, %s83, %s84
    %p88 = pneg %p82
    %p89 = scmp.eq.s32.totalorder %s9, 1
    %p90 = por %p88, %p89
    %p91 = scmp.ne.s32.totalorder %s83, %s86
    %p92 = scmp.eq.s32.totalorder %s9, 0
    %p93 = por %p91, %p92
    %p94 = scmp.ne.s32.totalorder %s83, %s86
    %p95 = scmp.eq.s32.totalorder %s14, 1
    %p96 = por %p94, %p95
    %p97 = scmp.ne.s32.totalorder %s86, %s87
    %p98 = scmp.eq.s32.totalorder %s14, 0
    %p99 = por %p97, %p98
    %p100 = scmp.ne.s32.totalorder %s86, %s87
    %p101 = scmp.eq.s32.totalorder %s15, 1
    %p102 = por %p100, %p101
    %p104 = scmp.ne.s32.totalorder %s87, %s103
    %p105 = scmp.eq.s32.totalorder %s15, 0
    %p106 = por %p104, %p105
    %s107 = ssub.s32 %s17, %s24
    %s108 = ssub.s32 %s16, %s28
    %s109 = sor.u32 %s107, %s108
    %p110 = scmp.eq.s32.totalorder %s109, 0
    %s112 = sadd.s32 %s111, 1
    %s113 = scalar_select %p110, %s111, %s112
    %p116 = pneg %p110
    %p117 = scmp.eq.s32.totalorder %s9, 1
    %p118 = por %p116, %p117
    %p119 = scmp.ne.s32.totalorder %s111, %s114
    %p120 = scmp.eq.s32.totalorder %s9, 0
    %p121 = por %p119, %p120
    %p122 = scmp.ne.s32.totalorder %s111, %s114
    %p123 = scmp.eq.s32.totalorder %s14, 1
    %p124 = por %p122, %p123
    %p125 = scmp.ne.s32.totalorder %s114, %s115
    %p126 = scmp.eq.s32.totalorder %s14, 0
    %p127 = por %p125, %p126
    %p128 = scmp.ne.s32.totalorder %s114, %s115
    %p129 = scmp.eq.s32.totalorder %s15, 1
    %p130 = por %p128, %p129
    %p132 = scmp.ne.s32.totalorder %s115, %s131
    %p133 = scmp.eq.s32.totalorder %s15, 0
    %p134 = por %p132, %p133
    %p135 = scmp.le.s32.totalorder 1, %s9
    %p136 = scmp.lt.s32.totalorder %s9, 3
    %p137 = pnand %p135, %p136
    %p138 = pneg %p137
    // Predicated region
    $region9: #{truncated_vgg19_apply.7} parent=5 // pred_check
      _
    $region10: #{truncated_vgg19_apply.7} parent=5 // pred_check_branch
      %140 = sbr.rel (%p137) target = $region12
    $region11: #{truncated_vgg19_apply.7} parent=5 // pred_region
      %s141 = ssub.s32 %s9, 1
      // Predicated region
      $region13: #{truncated_vgg19_apply.7} parent=11 // pred_check
        %p142 = pneg %p73
      $region14: #{truncated_vgg19_apply.7} parent=11 // pred_check_branch
        %144 = sbr.rel (%p142) target = $region16
      $region15: #{truncated_vgg19_apply.7} parent=11 // pred_region
        %p145 = scmp.lt.s32.totalorder %s18, 0
        %s146 = scalar_select %p145, %s18, 0
        %s147 = smul.addr %s146, 4
        %s148 = scalar_lea.vmem %s1, %s147
      $region16: #{truncated_vgg19_apply.7} parent=11 // pred_fallthru
        _
      // Predicated region
      $region17: #{truncated_vgg19_apply.7} parent=11 // pred_check
        %p149 = pneg %p99
      $region18: #{truncated_vgg19_apply.7} parent=11 // pred_check_branch
        %151 = sbr.rel (%p149) target = $region20
      $region19: #{truncated_vgg19_apply.7} parent=11 // pred_region
        %p152 = scmp.lt.s32.totalorder %s18, 0
        %s153 = scalar_select %p152, %s18, 0
        %s154 = scalar_lea.vmem %s2, %s153
      $region20: #{truncated_vgg19_apply.7} parent=11 // pred_fallthru
        _
    $region12: #{truncated_vgg19_apply.7} parent=5 // pred_fallthru
      _
    %p155 = scmp.lt.s32.totalorder %s9, 2
    // Predicated region
    $region21: #{truncated_vgg19_apply.7} parent=5 // pred_check
      %p156 = pneg %p155
    $region22: #{truncated_vgg19_apply.7} parent=5 // pred_check_branch
      %158 = sbr.rel (%p156) target = $region24
    $region23: #{truncated_vgg19_apply.7} parent=5 // pred_region
      // Predicated region
      $region25: #{truncated_vgg19_apply.7} parent=23 // pred_check
        %p159 = pneg %p41
      $region26: #{truncated_vgg19_apply.7} parent=23 // pred_check_branch
        %161 = sbr.rel (%p159) target = $region28
      $region27: #{truncated_vgg19_apply.7} parent=23 // pred_region
        %p162 = scmp.lt.s32.totalorder %s17, 1
        %s163 = scalar_select %p162, %s17, 1
        %s164 = smul.addr %s163, 20
        %s165 = smul.addr %s164, 4
        %s166 = scalar_lea.vmem %s0, %s165
      $region28: #{truncated_vgg19_apply.7} parent=23 // pred_fallthru
        _
    $region24: #{truncated_vgg19_apply.7} parent=5 // pred_fallthru
      _
    %p167 = scmp.le.s32.totalorder 1, %s9
    %p168 = scmp.lt.s32.totalorder %s9, 3
    %p169 = pnand %p167, %p168
    %p170 = pneg %p169
    // Predicated region
    $region29: #{truncated_vgg19_apply.7} parent=5 // pred_check
      _
    $region30: #{truncated_vgg19_apply.7} parent=5 // pred_check_branch
      %172 = sbr.rel (%p169) target = $region32
    $region31: #{truncated_vgg19_apply.7} parent=5 // pred_region
      %s173 = ssub.s32 %s9, 1
      %p174 = scmp.lt.s32.totalorder %s19, 1
      %s175 = scalar_select %p174, %s19, 1
      %s176 = smul.addr %s175, 20
      %s177 = smul.addr %s176, 4
      %s178 = scalar_lea.vmem %s0, %s177
      %p179 = pneg %p47
      %p180 = pneg %p44
      %p181 = scmp.lt.s32.totalorder %s18, 0
      %s182 = scalar_select %p181, %s18, 0
      %s183 = smul.addr %s182, 4
      %s184 = scalar_lea.vmem %s1, %s183
      %p185 = pneg %p73
      %p186 = pneg %p70
      %p187 = scmp.lt.s32.totalorder %s18, 0
      %s188 = scalar_select %p187, %s18, 0
      %s189 = scalar_lea.vmem %s2, %s188
      %p190 = pneg %p99
      %p191 = pneg %p96
      %p192 = pneg %p127
      %p193 = pneg %p124
      %p194 = scmp.lt.s32.totalorder %s19, 1
      %s195 = scalar_select %p194, %s19, 1
      %p196 = scmp.lt.s32.totalorder %s18, 0
      %s197 = scalar_select %p196, %s18, 0
      %s198 = smul.addr %s195, 8
      %s199 = sadd.s32 %s197, %s198
      %s200 = smul.addr %s199, 4
      %s201 = scalar_lea.vmem %s3, %s200
      %p202 = scmp.lt.s32.totalorder %s19, 1
      %s203 = scalar_select %p202, %s19, 1
      %s204 = smul.addr %s203, 20
      %s205 = smul.addr %s204, 4
      %s206 = scalar_lea.vmem %s0, %s205
      %p207 = scmp.lt.s32.totalorder %s18, 0
      %s208 = scalar_select %p207, %s18, 0
      %s209 = smul.addr %s208, 4
      %s210 = scalar_lea.vmem %s1, %s209
      %p211 = scmp.lt.s32.totalorder %s18, 0
      %s212 = scalar_select %p211, %s18, 0
      %s213 = scalar_lea.vmem %s2, %s212
      %p214 = scmp.lt.s32.totalorder %s19, 1
      %s215 = scalar_select %p214, %s19, 1
      %p216 = scmp.lt.s32.totalorder %s18, 0
      %s217 = scalar_select %p216, %s18, 0
      %s218 = smul.addr %s215, 8
      %s219 = sadd.s32 %s217, %s218
      %s220 = smul.addr %s219, 4
      %s221 = scalar_lea.vmem %s3, %s220
      %v223 = vld [vmem:[%s213] sm:$0x1]
      %v225 = vlaneseq
      %v226 = vshrl.u32 %v225, 7
      %v227 = vsub.s32 0, %v226
      %v228 = vrot.slane %v223, %v227
      %v230 = vld [vmem:[%s206] sm:$0xf]
      %v231 = vld [vmem:[%s206 + $0x8] sm:$0xf]
      %v232 = vld [vmem:[%s206 + $0x10] sm:$0xf]
      %v233 = vld [vmem:[%s206 + $0x18] sm:$0xf]
      %v234 = vld [vmem:[%s206 + $0x20] sm:$0xf]
      %v235 = vld [vmem:[%s206 + $0x28] sm:$0xf]
      %v236 = vld [vmem:[%s206 + $0x30] sm:$0xf]
      %v237 = vld [vmem:[%s206 + $0x38] sm:$0xf]
      %238 = vst [vmem:[#allocation2] sm:$0xf] %v230
      %239 = vst [vmem:[#allocation2 + $0xc] sm:$0xf] %v231
      %240 = vst [vmem:[#allocation2 + $0x18] sm:$0xf] %v232
      %241 = vst [vmem:[#allocation2 + $0x24] sm:$0xf] %v233
      %242 = vst [vmem:[#allocation2 + $0x30] sm:$0xf] %v234
      %243 = vst [vmem:[#allocation2 + $0x3c] sm:$0xf] %v235
      %244 = vst [vmem:[#allocation2 + $0x48] sm:$0xf] %v236
      %245 = vst [vmem:[#allocation2 + $0x54] sm:$0xf] %v237
      %v246 = vld [vmem:[%s206] sm:$0xf]
      %v247 = vld [vmem:[%s206 + $0x4] sm:$0x1]
      %v248 = vld [vmem:[%s206 + $0x8] sm:$0xf]
      %v249 = vld [vmem:[%s206 + $0xc] sm:$0x1]
      %v250 = vld [vmem:[%s206 + $0x10] sm:$0xf]
      %v251 = vld [vmem:[%s206 + $0x14] sm:$0x1]
      %v252 = vld [vmem:[%s206 + $0x18] sm:$0xf]
      %v253 = vld [vmem:[%s206 + $0x1c] sm:$0x1]
      %v254 = vld [vmem:[%s206 + $0x20] sm:$0xf]
      %v255 = vld [vmem:[%s206 + $0x24] sm:$0x1]
      %v256 = vld [vmem:[%s206 + $0x28] sm:$0xf]
      %v257 = vld [vmem:[%s206 + $0x2c] sm:$0x1]
      %v258 = vld [vmem:[%s206 + $0x30] sm:$0xf]
      %v259 = vld [vmem:[%s206 + $0x34] sm:$0x1]
      %v260 = vld [vmem:[%s206 + $0x38] sm:$0xf]
      %v261 = vld [vmem:[%s206 + $0x3c] sm:$0x1]
      %vm262 = vsmask.f32 3328
      %vm263 = vsmask.f32 7440
      %vm264 = vmor %vm262, %vm263
      %v266 = vshrl.u32 %v246, 16
      %v268 = vrot.slane %v266, 4
      %v269 = vshll.u32 %v246, 16
      %v271 = vrot.slane %v269, 5
      %v272 = vor.u32 %v268, %v271
      %v273 = vrot.slane %v272, 4
      %v275 = vshll.u32 %v247, 16
      %v277 = vrot.slane %v275, 5
      %v278 = vsel %vm264, %v273, %v277
      %v280 = vshrl.u32 %v248, 16
      %v282 = vrot.slane %v280, 4
      %v283 = vshll.u32 %v248, 16
      %v285 = vrot.slane %v283, 5
      %v286 = vor.u32 %v282, %v285
      %v287 = vrot.slane %v286, 4
      %v289 = vshll.u32 %v249, 16
      %v291 = vrot.slane %v289, 5
      %v292 = vsel %vm264, %v287, %v291
      %v294 = vshrl.u32 %v250, 16
      %v296 = vrot.slane %v294, 4
      %v297 = vshll.u32 %v250, 16
      %v299 = vrot.slane %v297, 5
      %v300 = vor.u32 %v296, %v299
      %v301 = vrot.slane %v300, 4
      %v303 = vshll.u32 %v251, 16
      %v305 = vrot.slane %v303, 5
      %v306 = vsel %vm264, %v301, %v305
      %v308 = vshrl.u32 %v252, 16
      %v310 = vrot.slane %v308, 4
      %v311 = vshll.u32 %v252, 16
      %v313 = vrot.slane %v311, 5
      %v314 = vor.u32 %v310, %v313
      %v315 = vrot.slane %v314, 4
      %v317 = vshll.u32 %v253, 16
      %v319 = vrot.slane %v317, 5
      %v320 = vsel %vm264, %v315, %v319
      %v322 = vshrl.u32 %v254, 16
      %v324 = vrot.slane %v322, 4
      %v325 = vshll.u32 %v254, 16
      %v327 = vrot.slane %v325, 5
      %v328 = vor.u32 %v324, %v327
      %v329 = vrot.slane %v328, 4
      %v331 = vshll.u32 %v255, 16
      %v333 = vrot.slane %v331, 5
      %v334 = vsel %vm264, %v329, %v333
      %v336 = vshrl.u32 %v256, 16
      %v338 = vrot.slane %v336, 4
      %v339 = vshll.u32 %v256, 16
      %v341 = vrot.slane %v339, 5
      %v342 = vor.u32 %v338, %v341
      %v343 = vrot.slane %v342, 4
      %v345 = vshll.u32 %v257, 16
      %v347 = vrot.slane %v345, 5
      %v348 = vsel %vm264, %v343, %v347
      %v350 = vshrl.u32 %v258, 16
      %v352 = vrot.slane %v350, 4
      %v353 = vshll.u32 %v258, 16
      %v355 = vrot.slane %v353, 5
      %v356 = vor.u32 %v352, %v355
      %v357 = vrot.slane %v356, 4
      %v359 = vshll.u32 %v259, 16
      %v361 = vrot.slane %v359, 5
      %v362 = vsel %vm264, %v357, %v361
      %v364 = vshrl.u32 %v260, 16
      %v366 = vrot.slane %v364, 4
      %v367 = vshll.u32 %v260, 16
      %v369 = vrot.slane %v367, 5
      %v370 = vor.u32 %v366, %v369
      %v371 = vrot.slane %v370, 4
      %v373 = vshll.u32 %v261, 16
      %v375 = vrot.slane %v373, 5
      %v376 = vsel %vm264, %v371, %v375
      %385 = vst [vmem:[#allocation2 + $0x4] sm:$0xf] %v278
      %386 = vst [vmem:[#allocation2 + $0x10] sm:$0xf] %v292
      %387 = vst [vmem:[#allocation2 + $0x1c] sm:$0xf] %v306
      %388 = vst [vmem:[#allocation2 + $0x28] sm:$0xf] %v320
      %389 = vst [vmem:[#allocation2 + $0x34] sm:$0xf] %v334
      %390 = vst [vmem:[#allocation2 + $0x40] sm:$0xf] %v348
      %391 = vst [vmem:[#allocation2 + $0x4c] sm:$0xf] %v362
      %392 = vst [vmem:[#allocation2 + $0x58] sm:$0xf] %v376
      %v393 = vld [vmem:[%s206] sm:$0xe]
      %v394 = vld [vmem:[%s206 + $0x4] sm:$0x1]
      %v395 = vld [vmem:[%s206 + $0x8] sm:$0xe]
      %v396 = vld [vmem:[%s206 + $0xc] sm:$0x1]
      %v397 = vld [vmem:[%s206 + $0x10] sm:$0xe]
      %v398 = vld [vmem:[%s206 + $0x14] sm:$0x1]
      %v399 = vld [vmem:[%s206 + $0x18] sm:$0xe]
      %v400 = vld [vmem:[%s206 + $0x1c] sm:$0x1]
      %v401 = vld [vmem:[%s206 + $0x20] sm:$0xe]
      %v402 = vld [vmem:[%s206 + $0x24] sm:$0x1]
      %v403 = vld [vmem:[%s206 + $0x28] sm:$0xe]
      %v404 = vld [vmem:[%s206 + $0x2c] sm:$0x1]
      %v405 = vld [vmem:[%s206 + $0x30] sm:$0xe]
      %v406 = vld [vmem:[%s206 + $0x34] sm:$0x1]
      %v407 = vld [vmem:[%s206 + $0x38] sm:$0xe]
      %v408 = vld [vmem:[%s206 + $0x3c] sm:$0x1]
      %vm425 = vcmask 1042432
      %vm426 = vcmask 1046532
      %vm427 = vmor %vm425, %vm426
      %v428 = vrot.slane %v393, 5
      %v429 = vrot.slane %v428, 4
      %v430 = vrot.slane %v394, 5
      %v431 = vsel %vm427, %v429, %v430
      %v432 = vrot.slane %v395, 5
      %v433 = vrot.slane %v432, 4
      %v434 = vrot.slane %v396, 5
      %v435 = vsel %vm427, %v433, %v434
      %v436 = vrot.slane %v397, 5
      %v437 = vrot.slane %v436, 4
      %v438 = vrot.slane %v398, 5
      %v439 = vsel %vm427, %v437, %v438
      %v440 = vrot.slane %v399, 5
      %v441 = vrot.slane %v440, 4
      %v442 = vrot.slane %v400, 5
      %v443 = vsel %vm427, %v441, %v442
      %v444 = vrot.slane %v401, 5
      %v445 = vrot.slane %v444, 4
      %v446 = vrot.slane %v402, 5
      %v447 = vsel %vm427, %v445, %v446
      %v448 = vrot.slane %v403, 5
      %v449 = vrot.slane %v448, 4
      %v450 = vrot.slane %v404, 5
      %v451 = vsel %vm427, %v449, %v450
      %v452 = vrot.slane %v405, 5
      %v453 = vrot.slane %v452, 4
      %v454 = vrot.slane %v406, 5
      %v455 = vsel %vm427, %v453, %v454
      %v456 = vrot.slane %v407, 5
      %v457 = vrot.slane %v456, 4
      %v458 = vrot.slane %v408, 5
      %v459 = vsel %vm427, %v457, %v458
      %468 = vst [vmem:[#allocation2 + $0x8] sm:$0xf] %v431
      %469 = vst [vmem:[#allocation2 + $0x14] sm:$0xf] %v435
      %470 = vst [vmem:[#allocation2 + $0x20] sm:$0xf] %v439
      %471 = vst [vmem:[#allocation2 + $0x2c] sm:$0xf] %v443
      %472 = vst [vmem:[#allocation2 + $0x38] sm:$0xf] %v447
      %473 = vst [vmem:[#allocation2 + $0x44] sm:$0xf] %v451
      %474 = vst [vmem:[#allocation2 + $0x50] sm:$0xf] %v455
      %475 = vst [vmem:[#allocation2 + $0x5c] sm:$0xf] %v459
      %v476 = vld [vmem:[#allocation2] sm:$0xff]
      %v477 = vld [vmem:[#allocation2 + $0x8] sm:$0xf]
      %v478 = vld [vmem:[#allocation2 + $0xc] sm:$0xff]
      %v479 = vld [vmem:[#allocation2 + $0x14] sm:$0xf]
      %v480 = vld [vmem:[#allocation2 + $0x18] sm:$0xff]
      %v481 = vld [vmem:[#allocation2 + $0x20] sm:$0xf]
      %v482 = vld [vmem:[#allocation2 + $0x24] sm:$0xff]
      %v483 = vld [vmem:[#allocation2 + $0x2c] sm:$0xf]
      %v484 = vld [vmem:[#allocation2 + $0x30] sm:$0xff]
      %v485 = vld [vmem:[#allocation2 + $0x38] sm:$0xf]
      %v486 = vld [vmem:[#allocation2 + $0x3c] sm:$0xff]
      %v487 = vld [vmem:[#allocation2 + $0x44] sm:$0xf]
      %v488 = vld [vmem:[#allocation2 + $0x48] sm:$0xff]
      %v489 = vld [vmem:[#allocation2 + $0x50] sm:$0xf]
      %v490 = vld [vmem:[#allocation2 + $0x54] sm:$0xff]
      %v491 = vld [vmem:[#allocation2 + $0x5c] sm:$0xf]
      %v492 = vld [vmem:[%s210] sm:$0xf]
      %v493 = vld [vmem:[%s210 + $0x4] sm:$0xf]
      %v494 = vld [vmem:[%s210 + $0x8] sm:$0xf]
      %v495 = vld [vmem:[%s210 + $0xc] sm:$0xf]
      %v496 = vld [vmem:[%s210 + $0x10] sm:$0xf]
      %v497 = vld [vmem:[%s210 + $0x14] sm:$0xf]
      %v498 = vld [vmem:[%s210 + $0x18] sm:$0xf]
      %v499 = vld [vmem:[%s210 + $0x1c] sm:$0xf]
      %v500 = vld [vmem:[%s210 + $0x20] sm:$0xf]
      %v501 = vld [vmem:[%s210 + $0x24] sm:$0xf]
      %v502 = vld [vmem:[%s210 + $0x28] sm:$0xf]
      %v503 = vld [vmem:[%s210 + $0x2c] sm:$0xf]
      %v504 = vld [vmem:[%s210 + $0x30] sm:$0xf]
      %v505 = vld [vmem:[%s210 + $0x34] sm:$0xf]
      %v506 = vld [vmem:[%s210 + $0x38] sm:$0xf]
      %v507 = vld [vmem:[%s210 + $0x3c] sm:$0xf]
      %v508 = vld [vmem:[%s210 + $0x40] sm:$0xf]
      %v509 = vld [vmem:[%s210 + $0x44] sm:$0xf]
      %v510 = vld [vmem:[%s210 + $0x48] sm:$0xf]
      %v511 = vld [vmem:[%s210 + $0x4c] sm:$0xf]
      %v512 = vld [vmem:[%s210 + $0x50] sm:$0xf]
      %v513 = vld [vmem:[%s210 + $0x54] sm:$0xf]
      %v514 = vld [vmem:[%s210 + $0x58] sm:$0xf]
      %v515 = vld [vmem:[%s210 + $0x5c] sm:$0xf]
      %v516 = vld [vmem:[%s210 + $0x60] sm:$0xf]
      %v517 = vld [vmem:[%s210 + $0x64] sm:$0xf]
      %v518 = vld [vmem:[%s210 + $0x68] sm:$0xf]
      %v519 = vld [vmem:[%s210 + $0x6c] sm:$0xf]
      %v520 = vld [vmem:[%s210 + $0x70] sm:$0xf]
      %v521 = vld [vmem:[%s210 + $0x74] sm:$0xf]
      %v522 = vld [vmem:[%s210 + $0x78] sm:$0xf]
      %v523 = vld [vmem:[%s210 + $0x7c] sm:$0xf]
      %v524 = vld [vmem:[%s210 + $0x80] sm:$0xf]
      %v525 = vld [vmem:[%s210 + $0x84] sm:$0xf]
      %v526 = vld [vmem:[%s210 + $0x88] sm:$0xf]
      %v527 = vld [vmem:[%s210 + $0x8c] sm:$0xf]
      %v528 = vld [vmem:[%s210 + $0x90] sm:$0xf]
      %v529 = vld [vmem:[%s210 + $0x94] sm:$0xf]
      %v530 = vld [vmem:[%s210 + $0x98] sm:$0xf]
      %v531 = vld [vmem:[%s210 + $0x9c] sm:$0xf]
      %v532 = vld [vmem:[%s210 + $0xa0] sm:$0xf]
      %v533 = vld [vmem:[%s210 + $0xa4] sm:$0xf]
      %v534 = vld [vmem:[%s210 + $0xa8] sm:$0xf]
      %v535 = vld [vmem:[%s210 + $0xac] sm:$0xf]
      %v536 = vld [vmem:[%s210 + $0xb0] sm:$0xf]
      %v537 = vld [vmem:[%s210 + $0xb4] sm:$0xf]
      %v538 = vld [vmem:[%s210 + $0xb8] sm:$0xf]
      %v539 = vld [vmem:[%s210 + $0xbc] sm:$0xf]
      %v556 = vunpack.c.l.b16 %v476
      %v557 = vunpack.c.h.b16 %v476
      %v558 = vunpack.c.l.b16 %v477
      %v559 = vunpack.c.l.b16 %v478
      %v560 = vunpack.c.h.b16 %v478
      %v561 = vunpack.c.l.b16 %v479
      %v562 = vunpack.c.l.b16 %v480
      %v563 = vunpack.c.h.b16 %v480
      %v564 = vunpack.c.l.b16 %v481
      %v565 = vunpack.c.l.b16 %v482
      %v566 = vunpack.c.h.b16 %v482
      %v567 = vunpack.c.l.b16 %v483
      %v568 = vunpack.c.l.b16 %v484
      %v569 = vunpack.c.h.b16 %v484
      %v570 = vunpack.c.l.b16 %v485
      %v571 = vunpack.c.l.b16 %v486
      %v572 = vunpack.c.h.b16 %v486
      %v573 = vunpack.c.l.b16 %v487
      %v574 = vunpack.c.l.b16 %v488
      %v575 = vunpack.c.h.b16 %v488
      %v576 = vunpack.c.l.b16 %v489
      %v577 = vunpack.c.l.b16 %v490
      %v578 = vunpack.c.h.b16 %v490
      %v579 = vunpack.c.l.b16 %v491
      %v580 = vpack.c.b16 %v559, %v556
      %v581 = vpack.c.b16 %v560, %v557
      %v582 = vpack.c.b16 %v561, %v558
      %v583 = vpack.c.b16 %v565, %v562
      %v584 = vpack.c.b16 %v566, %v563
      %v585 = vpack.c.b16 %v567, %v564
      %v586 = vpack.c.b16 %v571, %v568
      %v587 = vpack.c.b16 %v572, %v569
      %v588 = vpack.c.b16 %v573, %v570
      %v589 = vpack.c.b16 %v577, %v574
      %v590 = vpack.c.b16 %v578, %v575
      %v591 = vpack.c.b16 %v579, %v576
      %v652 = vunpack.c.l.b16 %v492
      %v653 = vunpack.c.l.b16 %v493
      %v654 = vunpack.c.l.b16 %v494
      %v655 = vunpack.c.l.b16 %v495
      %v656 = vunpack.c.l.b16 %v496
      %v657 = vunpack.c.l.b16 %v497
      %v658 = vunpack.c.l.b16 %v498
      %v659 = vunpack.c.l.b16 %v499
      %v660 = vunpack.c.l.b16 %v500
      %v661 = vunpack.c.l.b16 %v501
      %v662 = vunpack.c.l.b16 %v502
      %v663 = vunpack.c.l.b16 %v503
      %v664 = vunpack.c.l.b16 %v504
      %v665 = vunpack.c.l.b16 %v505
      %v666 = vunpack.c.l.b16 %v506
      %v667 = vunpack.c.l.b16 %v507
      %v668 = vunpack.c.l.b16 %v508
      %v669 = vunpack.c.l.b16 %v509
      %v670 = vunpack.c.l.b16 %v510
      %v671 = vunpack.c.l.b16 %v511
      %v672 = vunpack.c.l.b16 %v512
      %v673 = vunpack.c.l.b16 %v513
      %v674 = vunpack.c.l.b16 %v514
      %v675 = vunpack.c.l.b16 %v515
      %v676 = vunpack.c.l.b16 %v516
      %v677 = vunpack.c.l.b16 %v517
      %v678 = vunpack.c.l.b16 %v518
      %v679 = vunpack.c.l.b16 %v519
      %v680 = vunpack.c.l.b16 %v520
      %v681 = vunpack.c.l.b16 %v521
      %v682 = vunpack.c.l.b16 %v522
      %v683 = vunpack.c.l.b16 %v523
      %v684 = vunpack.c.l.b16 %v524
      %v685 = vunpack.c.l.b16 %v525
      %v686 = vunpack.c.l.b16 %v526
      %v687 = vunpack.c.l.b16 %v527
      %v688 = vunpack.c.l.b16 %v528
      %v689 = vunpack.c.l.b16 %v529
      %v690 = vunpack.c.l.b16 %v530
      %v691 = vunpack.c.l.b16 %v531
      %v692 = vunpack.c.l.b16 %v532
      %v693 = vunpack.c.l.b16 %v533
      %v694 = vunpack.c.l.b16 %v534
      %v695 = vunpack.c.l.b16 %v535
      %v696 = vunpack.c.l.b16 %v536
      %v697 = vunpack.c.l.b16 %v537
      %v698 = vunpack.c.l.b16 %v538
      %v699 = vunpack.c.l.b16 %v539
      %v700 = vpack.c.b16 %v653, %v652
      %v701 = vpack.c.b16 %v655, %v654
      %v702 = vpack.c.b16 %v657, %v656
      %v703 = vpack.c.b16 %v659, %v658
      %v704 = vpack.c.b16 %v661, %v660
      %v705 = vpack.c.b16 %v663, %v662
      %v706 = vpack.c.b16 %v665, %v664
      %v707 = vpack.c.b16 %v667, %v666
      %v708 = vpack.c.b16 %v669, %v668
      %v709 = vpack.c.b16 %v671, %v670
      %v710 = vpack.c.b16 %v673, %v672
      %v711 = vpack.c.b16 %v675, %v674
      %v712 = vpack.c.b16 %v677, %v676
      %v713 = vpack.c.b16 %v679, %v678
      %v714 = vpack.c.b16 %v681, %v680
      %v715 = vpack.c.b16 %v683, %v682
      %v716 = vpack.c.b16 %v685, %v684
      %v717 = vpack.c.b16 %v687, %v686
      %v718 = vpack.c.b16 %v689, %v688
      %v719 = vpack.c.b16 %v691, %v690
      %v720 = vpack.c.b16 %v693, %v692
      %v721 = vpack.c.b16 %v695, %v694
      %v722 = vpack.c.b16 %v697, %v696
      %v723 = vpack.c.b16 %v699, %v698
      %748 = vmatprep.subr.bf16.mxu0 0
      %749 = vmatpush1.bf16.msra.mxu0 %v700
      %750 = vmatprep.subr.bf16.mxu0 0
      %751 = vmatpush1.bf16.msra.mxu0 %v701
      %752 = vmatprep.subr.bf16.mxu0 0
      %753 = vmatpush1.bf16.msra.mxu0 %v702
      %754 = vmatprep.subr.bf16.mxu0 0
      %755 = vmatpush1.bf16.msra.mxu0 %v703
      %756 = vmatprep.subr.bf16.mxu0 0
      %757 = vmatpush1.bf16.msra.mxu0 %v704
      %758 = vmatprep.subr.bf16.mxu0 0
      %759 = vmatpush1.bf16.msra.mxu0 %v705
      %760 = vmatprep.subr.bf16.mxu0 0
      %761 = vmatpush1.bf16.msra.mxu0 %v706
      %762 = vmatprep.subr.bf16.mxu0 0
      %763 = vmatpush1.bf16.msra.mxu0 %v707
      %764 = vmatprep.subr.bf16.mxu0 0
      %765 = vmatpush1.bf16.msra.mxu0 %v708
      %766 = vmatprep.subr.bf16.mxu0 0
      %767 = vmatpush1.bf16.msra.mxu0 %v709
      %768 = vmatprep.subr.bf16.mxu0 0
      %769 = vmatpush1.bf16.msra.mxu0 %v710
      %770 = vmatprep.subr.bf16.mxu0 0
      %771 = vmatpush1.bf16.msra.mxu0 %v711
      %772 = vmatprep.subr.bf16.mxu0 0
      %773 = vmatpush1.bf16.msra.mxu0 %v712
      %774 = vmatprep.subr.bf16.mxu0 0
      %775 = vmatpush1.bf16.msra.mxu0 %v713
      %776 = vmatprep.subr.bf16.mxu0 0
      %777 = vmatpush1.bf16.msra.mxu0 %v714
      %778 = vmatprep.subr.bf16.mxu0 0
      %779 = vmatpush1.bf16.msra.mxu0 %v715
      %780 = vmatprep.mubr.bf16.mxu0 %v581
      %781 = vmatmul.mubr.bf16.gmra.mrb[0].mxu0 %v580
      %v782 = vpop.f32.mrb[0].mxu0
      %v783 = vadd.f32 0.0, %v782
      %v784 = vpop.f32.mrb[0].mxu0
      %v785 = vpop.f32.mrb[0].mxu0
      %v786 = vadd.f32 0.0, %v785
      %v787 = vpop.f32.mrb[0].mxu0
      %788 = vmatprep.mubr.bf16.mxu0 %v584
      %789 = vmatmul.mubr.bf16.gmra.mrb[0].mxu0 %v583
      %v790 = vpop.f32.mrb[0].mxu0
      %v791 = vadd.f32 0.0, %v790
      %v792 = vpop.f32.mrb[0].mxu0
      %v793 = vpop.f32.mrb[0].mxu0
      %v794 = vadd.f32 0.0, %v793
      %v795 = vpop.f32.mrb[0].mxu0
      %796 = vmatprep.mubr.bf16.mxu0 %v587
      %797 = vmatmul.mubr.bf16.gmra.mrb[0].mxu0 %v586
      %v798 = vpop.f32.mrb[0].mxu0
      %v799 = vadd.f32 0.0, %v798
      %v800 = vpop.f32.mrb[0].mxu0
      %v801 = vpop.f32.mrb[0].mxu0
      %v802 = vadd.f32 0.0, %v801
      %v803 = vpop.f32.mrb[0].mxu0
      %804 = vmatprep.mubr.bf16.mxu0 %v590
      %805 = vmatmul.mubr.bf16.gmra.mrb[0].mxu0 %v589
      %v806 = vpop.f32.mrb[0].mxu0
      %v807 = vadd.f32 0.0, %v806
      %v808 = vpop.f32.mrb[0].mxu0
      %v809 = vpop.f32.mrb[0].mxu0
      %v810 = vadd.f32 0.0, %v809
      %v811 = vpop.f32.mrb[0].mxu0
      %812 = vdwg.mxu0
      %813 = vmatprep.subr.bf16.mxu0 0
      %814 = vmatpush1.bf16.msra.mxu0 %v716
      %815 = vmatprep.subr.bf16.mxu0 0
      %816 = vmatpush1.bf16.msra.mxu0 %v717
      %817 = vmatprep.subr.bf16.mxu0 0
      %818 = vmatpush1.bf16.msra.mxu0 %v718
      %819 = vmatprep.subr.bf16.mxu0 0
      %820 = vmatpush1.bf16.msra.mxu0 %v719
      %821 = vmatprep.subr.bf16.mxu0 0
      %822 = vmatpush1.bf16.msra.mxu0 %v720
      %823 = vmatprep.subr.bf16.mxu0 0
      %824 = vmatpush1.bf16.msra.mxu0 %v721
      %825 = vmatprep.subr.bf16.mxu0 0
      %826 = vmatpush1.bf16.msra.mxu0 %v722
      %827 = vmatprep.subr.bf16.mxu0 0
      %828 = vmatpush1.bf16.msra.mxu0 %v723
      %829 = vmatprep.subr.bf16.mxu0 0
      %830 = vmatpush1.bf16.msra.mxu0 0
      %831 = vmatprep.subr.bf16.mxu0 0
      %832 = vmatpush1.bf16.msra.mxu0 0
      %833 = vmatprep.subr.bf16.mxu0 0
      %834 = vmatpush1.bf16.msra.mxu0 0
      %835 = vmatprep.subr.bf16.mxu0 0
      %836 = vmatpush1.bf16.msra.mxu0 0
      %837 = vmatprep.subr.bf16.mxu0 0
      %838 = vmatpush1.bf16.msra.mxu0 0
      %839 = vmatprep.subr.bf16.mxu0 0
      %840 = vmatpush1.bf16.msra.mxu0 0
      %841 = vmatprep.subr.bf16.mxu0 0
      %842 = vmatpush1.bf16.msra.mxu0 0
      %843 = vmatprep.subr.bf16.mxu0 0
      %844 = vmatpush1.bf16.msra.mxu0 0
      %845 = vmatprep.mubr.bf16.mxu0 0
      %846 = vmatmul.mubr.bf16.gmra.mrb[0].mxu0 %v582
      %v847 = vpop.f32.mrb[0].mxu0
      %v848 = vadd.f32 %v783, %v847
      %v849 = vpop.f32.mrb[0].mxu0
      %v850 = vpop.f32.mrb[0].mxu0
      %v851 = vadd.f32 %v786, %v850
      %v852 = vpop.f32.mrb[0].mxu0
      %853 = vmatprep.mubr.bf16.mxu0 0
      %854 = vmatmul.mubr.bf16.gmra.mrb[0].mxu0 %v585
      %v855 = vpop.f32.mrb[0].mxu0
      %v856 = vadd.f32 %v791, %v855
      %v857 = vpop.f32.mrb[0].mxu0
      %v858 = vpop.f32.mrb[0].mxu0
      %v859 = vadd.f32 %v794, %v858
      %v860 = vpop.f32.mrb[0].mxu0
      %861 = vmatprep.mubr.bf16.mxu0 0
      %862 = vmatmul.mubr.bf16.gmra.mrb[0].mxu0 %v588
      %v863 = vpop.f32.mrb[0].mxu0
      %v864 = vadd.f32 %v799, %v863
      %v865 = vpop.f32.mrb[0].mxu0
      %v866 = vpop.f32.mrb[0].mxu0
      %v867 = vadd.f32 %v802, %v866
      %v868 = vpop.f32.mrb[0].mxu0
      %869 = vmatprep.mubr.bf16.mxu0 0
      %870 = vmatmul.mubr.bf16.gmra.mrb[0].mxu0 %v591
      %v871 = vpop.f32.mrb[0].mxu0
      %v872 = vadd.f32 %v807, %v871
      %v873 = vpop.f32.mrb[0].mxu0
      %v874 = vpop.f32.mrb[0].mxu0
      %v875 = vadd.f32 %v810, %v874
      %v876 = vpop.f32.mrb[0].mxu0
      %877 = vdwg.mxu0
      %v878 = vadd.f32 %v228, %v848
      %v879 = vadd.f32 %v228, %v851
      %v880 = vadd.f32 %v228, %v856
      %v881 = vadd.f32 %v228, %v859
      %v882 = vadd.f32 %v228, %v864
      %v883 = vadd.f32 %v228, %v867
      %v884 = vadd.f32 %v228, %v872
      %v885 = vadd.f32 %v228, %v875
      %s886 = scalar_lea.vmem %s206, 8
      %v887 = vld [vmem:[%s886] sm:$0xf]
      %v888 = vld [vmem:[%s886 + $0x8] sm:$0xf]
      %v889 = vld [vmem:[%s886 + $0x10] sm:$0xf]
      %v890 = vld [vmem:[%s886 + $0x18] sm:$0xf]
      %v891 = vld [vmem:[%s886 + $0x20] sm:$0xf]
      %v892 = vld [vmem:[%s886 + $0x28] sm:$0xf]
      %v893 = vld [vmem:[%s886 + $0x30] sm:$0xf]
      %v894 = vld [vmem:[%s886 + $0x38] sm:$0xf]
      %895 = vst [vmem:[#allocation2] sm:$0xf] %v887
      %896 = vst [vmem:[#allocation2 + $0xc] sm:$0xf] %v888
      %897 = vst [vmem:[#allocation2 + $0x18] sm:$0xf] %v889
      %898 = vst [vmem:[#allocation2 + $0x24] sm:$0xf] %v890
      %899 = vst [vmem:[#allocation2 + $0x30] sm:$0xf] %v891
      %900 = vst [vmem:[#allocation2 + $0x3c] sm:$0xf] %v892
      %901 = vst [vmem:[#allocation2 + $0x48] sm:$0xf] %v893
      %902 = vst [vmem:[#allocation2 + $0x54] sm:$0xf] %v894
      %v903 = vld [vmem:[%s886] sm:$0xf]
      %v904 = vld [vmem:[%s886 + $0x4] sm:$0x1]
      %v905 = vld [vmem:[%s886 + $0x8] sm:$0xf]
      %v906 = vld [vmem:[%s886 + $0xc] sm:$0x1]
      %v907 = vld [vmem:[%s886 + $0x10] sm:$0xf]
      %v908 = vld [vmem:[%s886 + $0x14] sm:$0x1]
      %v909 = vld [vmem:[%s886 + $0x18] sm:$0xf]
      %v910 = vld [vmem:[%s886 + $0x1c] sm:$0x1]
      %v911 = vld [vmem:[%s886 + $0x20] sm:$0xf]
      %v912 = vld [vmem:[%s886 + $0x24] sm:$0x1]
      %v913 = vld [vmem:[%s886 + $0x28] sm:$0xf]
      %v914 = vld [vmem:[%s886 + $0x2c] sm:$0x1]
      %v915 = vld [vmem:[%s886 + $0x30] sm:$0xf]
      %v916 = vld [vmem:[%s886 + $0x34] sm:$0x1]
      %v917 = vld [vmem:[%s886 + $0x38] sm:$0xf]
      %v918 = vld [vmem:[%s886 + $0x3c] sm:$0x1]
      %v920 = vshrl.u32 %v903, 16
      %v922 = vrot.slane %v920, 4
      %v923 = vshll.u32 %v903, 16
      %v925 = vrot.slane %v923, 5
      %v926 = vor.u32 %v922, %v925
      %v927 = vrot.slane %v926, 4
      %v929 = vshll.u32 %v904, 16
      %v931 = vrot.slane %v929, 5
      %v932 = vsel %vm264, %v927, %v931
      %v934 = vshrl.u32 %v905, 16
      %v936 = vrot.slane %v934, 4
      %v937 = vshll.u32 %v905, 16
      %v939 = vrot.slane %v937, 5
      %v940 = vor.u32 %v936, %v939
      %v941 = vrot.slane %v940, 4
      %v943 = vshll.u32 %v906, 16
      %v945 = vrot.slane %v943, 5
      %v946 = vsel %vm264, %v941, %v945
      %v948 = vshrl.u32 %v907, 16
      %v950 = vrot.slane %v948, 4
      %v951 = vshll.u32 %v907, 16
      %v953 = vrot.slane %v951, 5
      %v954 = vor.u32 %v950, %v953
      %v955 = vrot.slane %v954, 4
      %v957 = vshll.u32 %v908, 16
      %v959 = vrot.slane %v957, 5
      %v960 = vsel %vm264, %v955, %v959
      %v962 = vshrl.u32 %v909, 16
      %v964 = vrot.slane %v962, 4
      %v965 = vshll.u32 %v909, 16
      %v967 = vrot.slane %v965, 5
      %v968 = vor.u32 %v964, %v967
      %v969 = vrot.slane %v968, 4
      %v971 = vshll.u32 %v910, 16
      %v973 = vrot.slane %v971, 5
      %v974 = vsel %vm264, %v969, %v973
      %v976 = vshrl.u32 %v911, 16
      %v978 = vrot.slane %v976, 4
      %v979 = vshll.u32 %v911, 16
      %v981 = vrot.slane %v979, 5
      %v982 = vor.u32 %v978, %v981
      %v983 = vrot.slane %v982, 4
      %v985 = vshll.u32 %v912, 16
      %v987 = vrot.slane %v985, 5
      %v988 = vsel %vm264, %v983, %v987
      %v990 = vshrl.u32 %v913, 16
      %v992 = vrot.slane %v990, 4
      %v993 = vshll.u32 %v913, 16
      %v995 = vrot.slane %v993, 5
      %v996 = vor.u32 %v992, %v995
      %v997 = vrot.slane %v996, 4
      %v999 = vshll.u32 %v914, 16
      %v1001 = vrot.slane %v999, 5
      %v1002 = vsel %vm264, %v997, %v1001
      %v1004 = vshrl.u32 %v915, 16
      %v1006 = vrot.slane %v1004, 4
      %v1007 = vshll.u32 %v915, 16
      %v1009 = vrot.slane %v1007, 5
      %v1010 = vor.u32 %v1006, %v1009
      %v1011 = vrot.slane %v1010, 4
      %v1013 = vshll.u32 %v916, 16
      %v1015 = vrot.slane %v1013, 5
      %v1016 = vsel %vm264, %v1011, %v1015
      %v1018 = vshrl.u32 %v917, 16
      %v1020 = vrot.slane %v1018, 4
      %v1021 = vshll.u32 %v917, 16
      %v1023 = vrot.slane %v1021, 5
      %v1024 = vor.u32 %v1020, %v1023
      %v1025 = vrot.slane %v1024, 4
      %v1027 = vshll.u32 %v918, 16
      %v1029 = vrot.slane %v1027, 5
      %v1030 = vsel %vm264, %v1025, %v1029
      %1039 = vst [vmem:[#allocation2 + $0x4] sm:$0xf] %v932
      %1040 = vst [vmem:[#allocation2 + $0x10] sm:$0xf] %v946
      %1041 = vst [vmem:[#allocation2 + $0x1c] sm:$0xf] %v960
      %1042 = vst [vmem:[#allocation2 + $0x28] sm:$0xf] %v974
      %1043 = vst [vmem:[#allocation2 + $0x34] sm:$0xf] %v988
      %1044 = vst [vmem:[#allocation2 + $0x40] sm:$0xf] %v1002
      %1045 = vst [vmem:[#allocation2 + $0x4c] sm:$0xf] %v1016
      %1046 = vst [vmem:[#allocation2 + $0x58] sm:$0xf] %v1030
      %v1047 = vld [vmem:[%s886] sm:$0xe]
      %v1048 = vld [vmem:[%s886 + $0x4] sm:$0x1]
      %v1049 = vld [vmem:[%s886 + $0x8] sm:$0xe]
      %v1050 = vld [vmem:[%s886 + $0xc] sm:$0x1]
      %v1051 = vld [vmem:[%s886 + $0x10] sm:$0xe]
      %v1052 = vld [vmem:[%s886 + $0x14] sm:$0x1]
      %v1053 = vld [vmem:[%s886 + $0x18] sm:$0xe]
      %v1054 = vld [vmem:[%s886 + $0x1c] sm:$0x1]
      %v1055 = vld [vmem:[%s886 + $0x20] sm:$0xe]
      %v1056 = vld [vmem:[%s886 + $0x24] sm:$0x1]
      %v1057 = vld [vmem:[%s886 + $0x28] sm:$0xe]
      %v1058 = vld [vmem:[%s886 + $0x2c] sm:$0x1]
      %v1059 = vld [vmem:[%s886 + $0x30] sm:$0xe]
      %v1060 = vld [vmem:[%s886 + $0x34] sm:$0x1]
      %v1061 = vld [vmem:[%s886 + $0x38] sm:$0xe]
      %v1062 = vld [vmem:[%s886 + $0x3c] sm:$0x1]
      %v1079 = vrot.slane %v1047, 5
      %v1080 = vrot.slane %v1079, 4
      %v1081 = vrot.slane %v1048, 5
      %v1082 = vsel %vm427, %v1080, %v1081
      %v1083 = vrot.slane %v1049, 5
      %v1084 = vrot.slane %v1083, 4
      %v1085 = vrot.slane %v1050, 5
      %v1086 = vsel %vm427, %v1084, %v1085
      %v1087 = vrot.slane %v1051, 5
      %v1088 = vrot.slane %v1087, 4
      %v1089 = vrot.slane %v1052, 5
      %v1090 = vsel %vm427, %v1088, %v1089
      %v1091 = vrot.slane %v1053, 5
      %v1092 = vrot.slane %v1091, 4
      %v1093 = vrot.slane %v1054, 5
      %v1094 = vsel %vm427, %v1092, %v1093
      %v1095 = vrot.slane %v1055, 5
      %v1096 = vrot.slane %v1095, 4
      %v1097 = vrot.slane %v1056, 5
      %v1098 = vsel %vm427, %v1096, %v1097
      %v1099 = vrot.slane %v1057, 5
      %v1100 = vrot.slane %v1099, 4
      %v1101 = vrot.slane %v1058, 5
      %v1102 = vsel %vm427, %v1100, %v1101
      %v1103 = vrot.slane %v1059, 5
      %v1104 = vrot.slane %v1103, 4
      %v1105 = vrot.slane %v1060, 5
      %v1106 = vsel %vm427, %v1104, %v1105
      %v1107 = vrot.slane %v1061, 5
      %v1108 = vrot.slane %v1107, 4
      %v1109 = vrot.slane %v1062, 5
      %v1110 = vsel %vm427, %v1108, %v1109
      %1119 = vst [vmem:[#allocation2 + $0x8] sm:$0xf] %v1082
      %1120 = vst [vmem:[#allocation2 + $0x14] sm:$0xf] %v1086
      %1121 = vst [vmem:[#allocation2 + $0x20] sm:$0xf] %v1090
      %1122 = vst [vmem:[#allocation2 + $0x2c] sm:$0xf] %v1094
      %1123 = vst [vmem:[#allocation2 + $0x38] sm:$0xf] %v1098
      %1124 = vst [vmem:[#allocation2 + $0x44] sm:$0xf] %v1102
      %1125 = vst [vmem:[#allocation2 + $0x50] sm:$0xf] %v1106
      %1126 = vst [vmem:[#allocation2 + $0x5c] sm:$0xf] %v1110
      %v1127 = vld [vmem:[#allocation2] sm:$0xff]
      %v1128 = vld [vmem:[#allocation2 + $0x8] sm:$0xf]
      %v1129 = vld [vmem:[#allocation2 + $0xc] sm:$0xff]
      %v1130 = vld [vmem:[#allocation2 + $0x14] sm:$0xf]
      %v1131 = vld [vmem:[#allocation2 + $0x18] sm:$0xff]
      %v1132 = vld [vmem:[#allocation2 + $0x20] sm:$0xf]
      %v1133 = vld [vmem:[#allocation2 + $0x24] sm:$0xff]
      %v1134 = vld [vmem:[#allocation2 + $0x2c] sm:$0xf]
      %v1135 = vld [vmem:[#allocation2 + $0x30] sm:$0xff]
      %v1136 = vld [vmem:[#allocation2 + $0x38] sm:$0xf]
      %v1137 = vld [vmem:[#allocation2 + $0x3c] sm:$0xff]
      %v1138 = vld [vmem:[#allocation2 + $0x44] sm:$0xf]
      %v1139 = vld [vmem:[#allocation2 + $0x48] sm:$0xff]
      %v1140 = vld [vmem:[#allocation2 + $0x50] sm:$0xf]
      %v1141 = vld [vmem:[#allocation2 + $0x54] sm:$0xff]
      %v1142 = vld [vmem:[#allocation2 + $0x5c] sm:$0xf]
      %s1143 = scalar_lea.vmem %s210, 192
      %v1144 = vld [vmem:[%s1143] sm:$0xf]
      %v1145 = vld [vmem:[%s1143 + $0x4] sm:$0xf]
      %v1146 = vld [vmem:[%s1143 + $0x8] sm:$0xf]
      %v1147 = vld [vmem:[%s1143 + $0xc] sm:$0xf]
      %v1148 = vld [vmem:[%s1143 + $0x10] sm:$0xf]
      %v1149 = vld [vmem:[%s1143 + $0x14] sm:$0xf]
      %v1150 = vld [vmem:[%s1143 + $0x18] sm:$0xf]
      %v1151 = vld [vmem:[%s1143 + $0x1c] sm:$0xf]
      %v1152 = vld [vmem:[%s1143 + $0x20] sm:$0xf]
      %v1153 = vld [vmem:[%s1143 + $0x24] sm:$0xf]
      %v1154 = vld [vmem:[%s1143 + $0x28] sm:$0xf]
      %v1155 = vld [vmem:[%s1143 + $0x2c] sm:$0xf]
      %v1156 = vld [vmem:[%s1143 + $0x30] sm:$0xf]
      %v1157 = vld [vmem:[%s1143 + $0x34] sm:$0xf]
      %v1158 = vld [vmem:[%s1143 + $0x38] sm:$0xf]
      %v1159 = vld [vmem:[%s1143 + $0x3c] sm:$0xf]
      %v1160 = vld [vmem:[%s1143 + $0x40] sm:$0xf]
      %v1161 = vld [vmem:[%s1143 + $0x44] sm:$0xf]
      %v1162 = vld [vmem:[%s1143 + $0x48] sm:$0xf]
      %v1163 = vld [vmem:[%s1143 + $0x4c] sm:$0xf]
      %v1164 = vld [vmem:[%s1143 + $0x50] sm:$0xf]
      %v1165 = vld [vmem:[%s1143 + $0x54] sm:$0xf]
      %v1166 = vld [vmem:[%s1143 + $0x58] sm:$0xf]
      %v1167 = vld [vmem:[%s1143 + $0x5c] sm:$0xf]
      %v1168 = vld [vmem:[%s1143 + $0x60] sm:$0xf]
      %v1169 = vld [vmem:[%s1143 + $0x64] sm:$0xf]
      %v1170 = vld [vmem:[%s1143 + $0x68] sm:$0xf]
      %v1171 = vld [vmem:[%s1143 + $0x6c] sm:$0xf]
      %v1172 = vld [vmem:[%s1143 + $0x70] sm:$0xf]
      %v1173 = vld [vmem:[%s1143 + $0x74] sm:$0xf]
      %v1174 = vld [vmem:[%s1143 + $0x78] sm:$0xf]
      %v1175 = vld [vmem:[%s1143 + $0x7c] sm:$0xf]
      %v1176 = vld [vmem:[%s1143 + $0x80] sm:$0xf]
      %v1177 = vld [vmem:[%s1143 + $0x84] sm:$0xf]
      %v1178 = vld [vmem:[%s1143 + $0x88] sm:$0xf]
      %v1179 = vld [vmem:[%s1143 + $0x8c] sm:$0xf]
      %v1180 = vld [vmem:[%s1143 + $0x90] sm:$0xf]
      %v1181 = vld [vmem:[%s1143 + $0x94] sm:$0xf]
      %v1182 = vld [vmem:[%s1143 + $0x98] sm:$0xf]
      %v1183 = vld [vmem:[%s1143 + $0x9c] sm:$0xf]
      %v1184 = vld [vmem:[%s1143 + $0xa0] sm:$0xf]
      %v1185 = vld [vmem:[%s1143 + $0xa4] sm:$0xf]
      %v1186 = vld [vmem:[%s1143 + $0xa8] sm:$0xf]
      %v1187 = vld [vmem:[%s1143 + $0xac] sm:$0xf]
      %v1188 = vld [vmem:[%s1143 + $0xb0] sm:$0xf]
      %v1189 = vld [vmem:[%s1143 + $0xb4] sm:$0xf]
      %v1190 = vld [vmem:[%s1143 + $0xb8] sm:$0xf]
      %v1191 = vld [vmem:[%s1143 + $0xbc] sm:$0xf]
      %v1208 = vunpack.c.l.b16 %v1127
      %v1209 = vunpack.c.h.b16 %v1127
      %v1210 = vunpack.c.l.b16 %v1128
      %v1211 = vunpack.c.l.b16 %v1129
      %v1212 = vunpack.c.h.b16 %v1129
      %v1213 = vunpack.c.l.b16 %v1130
      %v1214 = vunpack.c.l.b16 %v1131
      %v1215 = vunpack.c.h.b16 %v1131
      %v1216 = vunpack.c.l.b16 %v1132
      %v1217 = vunpack.c.l.b16 %v1133
      %v1218 = vunpack.c.h.b16 %v1133
      %v1219 = vunpack.c.l.b16 %v1134
      %v1220 = vunpack.c.l.b16 %v1135
      %v1221 = vunpack.c.h.b16 %v1135
      %v1222 = vunpack.c.l.b16 %v1136
      %v1223 = vunpack.c.l.b16 %v1137
      %v1224 = vunpack.c.h.b16 %v1137
      %v1225 = vunpack.c.l.b16 %v1138
      %v1226 = vunpack.c.l.b16 %v1139
      %v1227 = vunpack.c.h.b16 %v1139
      %v1228 = vunpack.c.l.b16 %v1140
      %v1229 = vunpack.c.l.b16 %v1141
      %v1230 = vunpack.c.h.b16 %v1141
      %v1231 = vunpack.c.l.b16 %v1142
      %v1232 = vpack.c.b16 %v1211, %v1208
      %v1233 = vpack.c.b16 %v1212, %v1209
      %v1234 = vpack.c.b16 %v1213, %v1210
      %v1235 = vpack.c.b16 %v1217, %v1214
      %v1236 = vpack.c.b16 %v1218, %v1215
      %v1237 = vpack.c.b16 %v1219, %v1216
      %v1238 = vpack.c.b16 %v1223, %v1220
      %v1239 = vpack.c.b16 %v1224, %v1221
      %v1240 = vpack.c.b16 %v1225, %v1222
      %v1241 = vpack.c.b16 %v1229, %v1226
      %v1242 = vpack.c.b16 %v1230, %v1227
      %v1243 = vpack.c.b16 %v1231, %v1228
      %v1304 = vunpack.c.l.b16 %v1144
      %v1305 = vunpack.c.l.b16 %v1145
      %v1306 = vunpack.c.l.b16 %v1146
      %v1307 = vunpack.c.l.b16 %v1147
      %v1308 = vunpack.c.l.b16 %v1148
      %v1309 = vunpack.c.l.b16 %v1149
      %v1310 = vunpack.c.l.b16 %v1150
      %v1311 = vunpack.c.l.b16 %v1151
      %v1312 = vunpack.c.l.b16 %v1152
      %v1313 = vunpack.c.l.b16 %v1153
      %v1314 = vunpack.c.l.b16 %v1154
      %v1315 = vunpack.c.l.b16 %v1155
      %v1316 = vunpack.c.l.b16 %v1156
      %v1317 = vunpack.c.l.b16 %v1157
      %v1318 = vunpack.c.l.b16 %v1158
      %v1319 = vunpack.c.l.b16 %v1159
      %v1320 = vunpack.c.l.b16 %v1160
      %v1321 = vunpack.c.l.b16 %v1161
      %v1322 = vunpack.c.l.b16 %v1162
      %v1323 = vunpack.c.l.b16 %v1163
      %v1324 = vunpack.c.l.b16 %v1164
      %v1325 = vunpack.c.l.b16 %v1165
      %v1326 = vunpack.c.l.b16 %v1166
      %v1327 = vunpack.c.l.b16 %v1167
      %v1328 = vunpack.c.l.b16 %v1168
      %v1329 = vunpack.c.l.b16 %v1169
      %v1330 = vunpack.c.l.b16 %v1170
      %v1331 = vunpack.c.l.b16 %v1171
      %v1332 = vunpack.c.l.b16 %v1172
      %v1333 = vunpack.c.l.b16 %v1173
      %v1334 = vunpack.c.l.b16 %v1174
      %v1335 = vunpack.c.l.b16 %v1175
      %v1336 = vunpack.c.l.b16 %v1176
      %v1337 = vunpack.c.l.b16 %v1177
      %v1338 = vunpack.c.l.b16 %v1178
      %v1339 = vunpack.c.l.b16 %v1179
      %v1340 = vunpack.c.l.b16 %v1180
      %v1341 = vunpack.c.l.b16 %v1181
      %v1342 = vunpack.c.l.b16 %v1182
      %v1343 = vunpack.c.l.b16 %v1183
      %v1344 = vunpack.c.l.b16 %v1184
      %v1345 = vunpack.c.l.b16 %v1185
      %v1346 = vunpack.c.l.b16 %v1186
      %v1347 = vunpack.c.l.b16 %v1187
      %v1348 = vunpack.c.l.b16 %v1188
      %v1349 = vunpack.c.l.b16 %v1189
      %v1350 = vunpack.c.l.b16 %v1190
      %v1351 = vunpack.c.l.b16 %v1191
      %v1352 = vpack.c.b16 %v1305, %v1304
      %v1353 = vpack.c.b16 %v1307, %v1306
      %v1354 = vpack.c.b16 %v1309, %v1308
      %v1355 = vpack.c.b16 %v1311, %v1310
      %v1356 = vpack.c.b16 %v1313, %v1312
      %v1357 = vpack.c.b16 %v1315, %v1314
      %v1358 = vpack.c.b16 %v1317, %v1316
      %v1359 = vpack.c.b16 %v1319, %v1318
      %v1360 = vpack.c.b16 %v1321, %v1320
      %v1361 = vpack.c.b16 %v1323, %v1322
      %v1362 = vpack.c.b16 %v1325, %v1324
      %v1363 = vpack.c.b16 %v1327, %v1326
      %v1364 = vpack.c.b16 %v1329, %v1328
      %v1365 = vpack.c.b16 %v1331, %v1330
      %v1366 = vpack.c.b16 %v1333, %v1332
      %v1367 = vpack.c.b16 %v1335, %v1334
      %v1368 = vpack.c.b16 %v1337, %v1336
      %v1369 = vpack.c.b16 %v1339, %v1338
      %v1370 = vpack.c.b16 %v1341, %v1340
      %v1371 = vpack.c.b16 %v1343, %v1342
      %v1372 = vpack.c.b16 %v1345, %v1344
      %v1373 = vpack.c.b16 %v1347, %v1346
      %v1374 = vpack.c.b16 %v1349, %v1348
      %v1375 = vpack.c.b16 %v1351, %v1350
      %1400 = vmatprep.subr.bf16.mxu0 0
      %1401 = vmatpush1.bf16.msra.mxu0 %v1352
      %1402 = vmatprep.subr.bf16.mxu0 0
      %1403 = vmatpush1.bf16.msra.mxu0 %v1353
      %1404 = vmatprep.subr.bf16.mxu0 0
      %1405 = vmatpush1.bf16.msra.mxu0 %v1354
      %1406 = vmatprep.subr.bf16.mxu0 0
      %1407 = vmatpush1.bf16.msra.mxu0 %v1355
      %1408 = vmatprep.subr.bf16.mxu0 0
      %1409 = vmatpush1.bf16.msra.mxu0 %v1356
      %1410 = vmatprep.subr.bf16.mxu0 0
      %1411 = vmatpush1.bf16.msra.mxu0 %v1357
      %1412 = vmatprep.subr.bf16.mxu0 0
      %1413 = vmatpush1.bf16.msra.mxu0 %v1358
      %1414 = vmatprep.subr.bf16.mxu0 0
      %1415 = vmatpush1.bf16.msra.mxu0 %v1359
      %1416 = vmatprep.subr.bf16.mxu0 0
      %1417 = vmatpush1.bf16.msra.mxu0 %v1360
      %1418 = vmatprep.subr.bf16.mxu0 0
      %1419 = vmatpush1.bf16.msra.mxu0 %v1361
      %1420 = vmatprep.subr.bf16.mxu0 0
      %1421 = vmatpush1.bf16.msra.mxu0 %v1362
      %1422 = vmatprep.subr.bf16.mxu0 0
      %1423 = vmatpush1.bf16.msra.mxu0 %v1363
      %1424 = vmatprep.subr.bf16.mxu0 0
      %1425 = vmatpush1.bf16.msra.mxu0 %v1364
      %1426 = vmatprep.subr.bf16.mxu0 0
      %1427 = vmatpush1.bf16.msra.mxu0 %v1365
      %1428 = vmatprep.subr.bf16.mxu0 0
      %1429 = vmatpush1.bf16.msra.mxu0 %v1366
      %1430 = vmatprep.subr.bf16.mxu0 0
      %1431 = vmatpush1.bf16.msra.mxu0 %v1367
      %1432 = vmatprep.mubr.bf16.mxu0 %v1233
      %1433 = vmatmul.mubr.bf16.gmra.mrb[0].mxu0 %v1232
      %v1434 = vpop.f32.mrb[0].mxu0
      %v1435 = vadd.f32 0.0, %v1434
      %v1436 = vpop.f32.mrb[0].mxu0
      %v1437 = vpop.f32.mrb[0].mxu0
      %v1438 = vadd.f32 0.0, %v1437
      %v1439 = vpop.f32.mrb[0].mxu0
      %1440 = vmatprep.mubr.bf16.mxu0 %v1236
      %1441 = vmatmul.mubr.bf16.gmra.mrb[0].mxu0 %v1235
      %v1442 = vpop.f32.mrb[0].mxu0
      %v1443 = vadd.f32 0.0, %v1442
      %v1444 = vpop.f32.mrb[0].mxu0
      %v1445 = vpop.f32.mrb[0].mxu0
      %v1446 = vadd.f32 0.0, %v1445
      %v1447 = vpop.f32.mrb[0].mxu0
      %1448 = vmatprep.mubr.bf16.mxu0 %v1239
      %1449 = vmatmul.mubr.bf16.gmra.mrb[0].mxu0 %v1238
      %v1450 = vpop.f32.mrb[0].mxu0
      %v1451 = vadd.f32 0.0, %v1450
      %v1452 = vpop.f32.mrb[0].mxu0
      %v1453 = vpop.f32.mrb[0].mxu0
      %v1454 = vadd.f32 0.0, %v1453
      %v1455 = vpop.f32.mrb[0].mxu0
      %1456 = vmatprep.mubr.bf16.mxu0 %v1242
      %1457 = vmatmul.mubr.bf16.gmra.mrb[0].mxu0 %v1241
      %v1458 = vpop.f32.mrb[0].mxu0
      %v1459 = vadd.f32 0.0, %v1458
      %v1460 = vpop.f32.mrb[0].mxu0
      %v1461 = vpop.f32.mrb[0].mxu0
      %v1462 = vadd.f32 0.0, %v1461
      %v1463 = vpop.f32.mrb[0].mxu0
      %1464 = vdwg.mxu0
      %1465 = vmatprep.subr.bf16.mxu0 0
      %1466 = vmatpush1.bf16.msra.mxu0 %v1368
      %1467 = vmatprep.subr.bf16.mxu0 0
      %1468 = vmatpush1.bf16.msra.mxu0 %v1369
      %1469 = vmatprep.subr.bf16.mxu0 0
      %1470 = vmatpush1.bf16.msra.mxu0 %v1370
      %1471 = vmatprep.subr.bf16.mxu0 0
      %1472 = vmatpush1.bf16.msra.mxu0 %v1371
      %1473 = vmatprep.subr.bf16.mxu0 0
      %1474 = vmatpush1.bf16.msra.mxu0 %v1372
      %1475 = vmatprep.subr.bf16.mxu0 0
      %1476 = vmatpush1.bf16.msra.mxu0 %v1373
      %1477 = vmatprep.subr.bf16.mxu0 0
      %1478 = vmatpush1.bf16.msra.mxu0 %v1374
      %1479 = vmatprep.subr.bf16.mxu0 0
      %1480 = vmatpush1.bf16.msra.mxu0 %v1375
      %1481 = vmatprep.subr.bf16.mxu0 0
      %1482 = vmatpush1.bf16.msra.mxu0 0
      %1483 = vmatprep.subr.bf16.mxu0 0
      %1484 = vmatpush1.bf16.msra.mxu0 0
      %1485 = vmatprep.subr.bf16.mxu0 0
      %1486 = vmatpush1.bf16.msra.mxu0 0
      %1487 = vmatprep.subr.bf16.mxu0 0
      %1488 = vmatpush1.bf16.msra.mxu0 0
      %1489 = vmatprep.subr.bf16.mxu0 0
      %1490 = vmatpush1.bf16.msra.mxu0 0
      %1491 = vmatprep.subr.bf16.mxu0 0
      %1492 = vmatpush1.bf16.msra.mxu0 0
      %1493 = vmatprep.subr.bf16.mxu0 0
      %1494 = vmatpush1.bf16.msra.mxu0 0
      %1495 = vmatprep.subr.bf16.mxu0 0
      %1496 = vmatpush1.bf16.msra.mxu0 0
      %1497 = vmatprep.mubr.bf16.mxu0 0
      %1498 = vmatmul.mubr.bf16.gmra.mrb[0].mxu0 %v1234
      %v1499 = vpop.f32.mrb[0].mxu0
      %v1500 = vadd.f32 %v1435, %v1499
      %v1501 = vpop.f32.mrb[0].mxu0
      %v1502 = vpop.f32.mrb[0].mxu0
      %v1503 = vadd.f32 %v1438, %v1502
      %v1504 = vpop.f32.mrb[0].mxu0
      %1505 = vmatprep.mubr.bf16.mxu0 0
      %1506 = vmatmul.mubr.bf16.gmra.mrb[0].mxu0 %v1237
      %v1507 = vpop.f32.mrb[0].mxu0
      %v1508 = vadd.f32 %v1443, %v1507
      %v1509 = vpop.f32.mrb[0].mxu0
      %v1510 = vpop.f32.mrb[0].mxu0
      %v1511 = vadd.f32 %v1446, %v1510
      %v1512 = vpop.f32.mrb[0].mxu0
      %1513 = vmatprep.mubr.bf16.mxu0 0
      %1514 = vmatmul.mubr.bf16.gmra.mrb[0].mxu0 %v1240
      %v1515 = vpop.f32.mrb[0].mxu0
      %v1516 = vadd.f32 %v1451, %v1515
      %v1517 = vpop.f32.mrb[0].mxu0
      %v1518 = vpop.f32.mrb[0].mxu0
      %v1519 = vadd.f32 %v1454, %v1518
      %v1520 = vpop.f32.mrb[0].mxu0
      %1521 = vmatprep.mubr.bf16.mxu0 0
      %1522 = vmatmul.mubr.bf16.gmra.mrb[0].mxu0 %v1243
      %v1523 = vpop.f32.mrb[0].mxu0
      %v1524 = vadd.f32 %v1459, %v1523
      %v1525 = vpop.f32.mrb[0].mxu0
      %v1526 = vpop.f32.mrb[0].mxu0
      %v1527 = vadd.f32 %v1462, %v1526
      %v1528 = vpop.f32.mrb[0].mxu0
      %1529 = vdwg.mxu0
      %v1530 = vadd.f32 %v878, %v1500
      %v1531 = vadd.f32 %v879, %v1503
      %v1532 = vadd.f32 %v880, %v1508
      %v1533 = vadd.f32 %v881, %v1511
      %v1534 = vadd.f32 %v882, %v1516
      %v1535 = vadd.f32 %v883, %v1519
      %v1536 = vadd.f32 %v884, %v1524
      %v1537 = vadd.f32 %v885, %v1527
      %s1538 = scalar_lea.vmem %s206, 16
      %v1539 = vld [vmem:[%s1538] sm:$0xf]
      %v1540 = vld [vmem:[%s1538 + $0x8] sm:$0xf]
      %v1541 = vld [vmem:[%s1538 + $0x10] sm:$0xf]
      %v1542 = vld [vmem:[%s1538 + $0x18] sm:$0xf]
      %v1543 = vld [vmem:[%s1538 + $0x20] sm:$0xf]
      %v1544 = vld [vmem:[%s1538 + $0x28] sm:$0xf]
      %v1545 = vld [vmem:[%s1538 + $0x30] sm:$0xf]
      %v1546 = vld [vmem:[%s1538 + $0x38] sm:$0xf]
      %1547 = vst [vmem:[#allocation2] sm:$0xf] %v1539
      %1548 = vst [vmem:[#allocation2 + $0xc] sm:$0xf] %v1540
      %1549 = vst [vmem:[#allocation2 + $0x18] sm:$0xf] %v1541
      %1550 = vst [vmem:[#allocation2 + $0x24] sm:$0xf] %v1542
      %1551 = vst [vmem:[#allocation2 + $0x30] sm:$0xf] %v1543
      %1552 = vst [vmem:[#allocation2 + $0x3c] sm:$0xf] %v1544
      %1553 = vst [vmem:[#allocation2 + $0x48] sm:$0xf] %v1545
      %1554 = vst [vmem:[#allocation2 + $0x54] sm:$0xf] %v1546
      %v1555 = vld [vmem:[%s1538] sm:$0xf]
      %v1556 = vld [vmem:[%s1538 + $0x4] sm:$0x1]
      %v1557 = vld [vmem:[%s1538 + $0x8] sm:$0xf]
      %v1558 = vld [vmem:[%s1538 + $0xc] sm:$0x1]
      %v1559 = vld [vmem:[%s1538 + $0x10] sm:$0xf]
      %v1560 = vld [vmem:[%s1538 + $0x14] sm:$0x1]
      %v1561 = vld [vmem:[%s1538 + $0x18] sm:$0xf]
      %v1562 = vld [vmem:[%s1538 + $0x1c] sm:$0x1]
      %v1563 = vld [vmem:[%s1538 + $0x20] sm:$0xf]
      %v1564 = vld [vmem:[%s1538 + $0x24] sm:$0x1]
      %v1565 = vld [vmem:[%s1538 + $0x28] sm:$0xf]
      %v1566 = vld [vmem:[%s1538 + $0x2c] sm:$0x1]
      %v1567 = vld [vmem:[%s1538 + $0x30] sm:$0xf]
      %v1568 = vld [vmem:[%s1538 + $0x34] sm:$0x1]
      %v1569 = vld [vmem:[%s1538 + $0x38] sm:$0xf]
      %v1570 = vld [vmem:[%s1538 + $0x3c] sm:$0x1]
      %v1572 = vshrl.u32 %v1555, 16
      %v1574 = vrot.slane %v1572, 4
      %v1575 = vshll.u32 %v1555, 16
      %v1577 = vrot.slane %v1575, 5
      %v1578 = vor.u32 %v1574, %v1577
      %v1579 = vrot.slane %v1578, 4
      %v1581 = vshll.u32 %v1556, 16
      %v1583 = vrot.slane %v1581, 5
      %v1584 = vsel %vm264, %v1579, %v1583
      %v1586 = vshrl.u32 %v1557, 16
      %v1588 = vrot.slane %v1586, 4
      %v1589 = vshll.u32 %v1557, 16
      %v1591 = vrot.slane %v1589, 5
      %v1592 = vor.u32 %v1588, %v1591
      %v1593 = vrot.slane %v1592, 4
      %v1595 = vshll.u32 %v1558, 16
      %v1597 = vrot.slane %v1595, 5
      %v1598 = vsel %vm264, %v1593, %v1597
      %v1600 = vshrl.u32 %v1559, 16
      %v1602 = vrot.slane %v1600, 4
      %v1603 = vshll.u32 %v1559, 16
      %v1605 = vrot.slane %v1603, 5
      %v1606 = vor.u32 %v1602, %v1605
      %v1607 = vrot.slane %v1606, 4
      %v1609 = vshll.u32 %v1560, 16
      %v1611 = vrot.slane %v1609, 5
      %v1612 = vsel %vm264, %v1607, %v1611
      %v1614 = vshrl.u32 %v1561, 16
      %v1616 = vrot.slane %v1614, 4
      %v1617 = vshll.u32 %v1561, 16
      %v1619 = vrot.slane %v1617, 5
      %v1620 = vor.u32 %v1616, %v1619
      %v1621 = vrot.slane %v1620, 4
      %v1623 = vshll.u32 %v1562, 16
      %v1625 = vrot.slane %v1623, 5
      %v1626 = vsel %vm264, %v1621, %v1625
      %v1628 = vshrl.u32 %v1563, 16
      %v1630 = vrot.slane %v1628, 4
      %v1631 = vshll.u32 %v1563, 16
      %v1633 = vrot.slane %v1631, 5
      %v1634 = vor.u32 %v1630, %v1633
      %v1635 = vrot.slane %v1634, 4
      %v1637 = vshll.u32 %v1564, 16
      %v1639 = vrot.slane %v1637, 5
      %v1640 = vsel %vm264, %v1635, %v1639
      %v1642 = vshrl.u32 %v1565, 16
      %v1644 = vrot.slane %v1642, 4
      %v1645 = vshll.u32 %v1565, 16
      %v1647 = vrot.slane %v1645, 5
      %v1648 = vor.u32 %v1644, %v1647
      %v1649 = vrot.slane %v1648, 4
      %v1651 = vshll.u32 %v1566, 16
      %v1653 = vrot.slane %v1651, 5
      %v1654 = vsel %vm264, %v1649, %v1653
      %v1656 = vshrl.u32 %v1567, 16
      %v1658 = vrot.slane %v1656, 4
      %v1659 = vshll.u32 %v1567, 16
      %v1661 = vrot.slane %v1659, 5
      %v1662 = vor.u32 %v1658, %v1661
      %v1663 = vrot.slane %v1662, 4
      %v1665 = vshll.u32 %v1568, 16
      %v1667 = vrot.slane %v1665, 5
      %v1668 = vsel %vm264, %v1663, %v1667
      %v1670 = vshrl.u32 %v1569, 16
      %v1672 = vrot.slane %v1670, 4
      %v1673 = vshll.u32 %v1569, 16
      %v1675 = vrot.slane %v1673, 5
      %v1676 = vor.u32 %v1672, %v1675
      %v1677 = vrot.slane %v1676, 4
      %v1679 = vshll.u32 %v1570, 16
      %v1681 = vrot.slane %v1679, 5
      %v1682 = vsel %vm264, %v1677, %v1681
      %1691 = vst [vmem:[#allocation2 + $0x4] sm:$0xf] %v1584
      %1692 = vst [vmem:[#allocation2 + $0x10] sm:$0xf] %v1598
      %1693 = vst [vmem:[#allocation2 + $0x1c] sm:$0xf] %v1612
      %1694 = vst [vmem:[#allocation2 + $0x28] sm:$0xf] %v1626
      %1695 = vst [vmem:[#allocation2 + $0x34] sm:$0xf] %v1640
      %1696 = vst [vmem:[#allocation2 + $0x40] sm:$0xf] %v1654
      %1697 = vst [vmem:[#allocation2 + $0x4c] sm:$0xf] %v1668
      %1698 = vst [vmem:[#allocation2 + $0x58] sm:$0xf] %v1682
      %v1699 = vld [vmem:[%s1538] sm:$0xe]
      %v1700 = vld [vmem:[%s1538 + $0x4] sm:$0x1]
      %v1701 = vld [vmem:[%s1538 + $0x8] sm:$0xe]
      %v1702 = vld [vmem:[%s1538 + $0xc] sm:$0x1]
      %v1703 = vld [vmem:[%s1538 + $0x10] sm:$0xe]
      %v1704 = vld [vmem:[%s1538 + $0x14] sm:$0x1]
      %v1705 = vld [vmem:[%s1538 + $0x18] sm:$0xe]
      %v1706 = vld [vmem:[%s1538 + $0x1c] sm:$0x1]
      %v1707 = vld [vmem:[%s1538 + $0x20] sm:$0xe]
      %v1708 = vld [vmem:[%s1538 + $0x24] sm:$0x1]
      %v1709 = vld [vmem:[%s1538 + $0x28] sm:$0xe]
      %v1710 = vld [vmem:[%s1538 + $0x2c] sm:$0x1]
      %v1711 = vld [vmem:[%s1538 + $0x30] sm:$0xe]
      %v1712 = vld [vmem:[%s1538 + $0x34] sm:$0x1]
      %v1713 = vld [vmem:[%s1538 + $0x38] sm:$0xe]
      %v1714 = vld [vmem:[%s1538 + $0x3c] sm:$0x1]
      %v1731 = vrot.slane %v1699, 5
      %v1732 = vrot.slane %v1731, 4
      %v1733 = vrot.slane %v1700, 5
      %v1734 = vsel %vm427, %v1732, %v1733
      %v1735 = vrot.slane %v1701, 5
      %v1736 = vrot.slane %v1735, 4
      %v1737 = vrot.slane %v1702, 5
      %v1738 = vsel %vm427, %v1736, %v1737
      %v1739 = vrot.slane %v1703, 5
      %v1740 = vrot.slane %v1739, 4
      %v1741 = vrot.slane %v1704, 5
      %v1742 = vsel %vm427, %v1740, %v1741
      %v1743 = vrot.slane %v1705, 5
      %v1744 = vrot.slane %v1743, 4
      %v1745 = vrot.slane %v1706, 5
      %v1746 = vsel %vm427, %v1744, %v1745
      %v1747 = vrot.slane %v1707, 5
      %v1748 = vrot.slane %v1747, 4
      %v1749 = vrot.slane %v1708, 5
      %v1750 = vsel %vm427, %v1748, %v1749
      %v1751 = vrot.slane %v1709, 5
      %v1752 = vrot.slane %v1751, 4
      %v1753 = vrot.slane %v1710, 5
      %v1754 = vsel %vm427, %v1752, %v1753
      %v1755 = vrot.slane %v1711, 5
      %v1756 = vrot.slane %v1755, 4
      %v1757 = vrot.slane %v1712, 5
      %v1758 = vsel %vm427, %v1756, %v1757
      %v1759 = vrot.slane %v1713, 5
      %v1760 = vrot.slane %v1759, 4
      %v1761 = vrot.slane %v1714, 5
      %v1762 = vsel %vm427, %v1760, %v1761
      %1771 = vst [vmem:[#allocation2 + $0x8] sm:$0xf] %v1734
      %1772 = vst [vmem:[#allocation2 + $0x14] sm:$0xf] %v1738
      %1773 = vst [vmem:[#allocation2 + $0x20] sm:$0xf] %v1742
      %1774 = vst [vmem:[#allocation2 + $0x2c] sm:$0xf] %v1746
      %1775 = vst [vmem:[#allocation2 + $0x38] sm:$0xf] %v1750
      %1776 = vst [vmem:[#allocation2 + $0x44] sm:$0xf] %v1754
      %1777 = vst [vmem:[#allocation2 + $0x50] sm:$0xf] %v1758
      %1778 = vst [vmem:[#allocation2 + $0x5c] sm:$0xf] %v1762
      %v1779 = vld [vmem:[#allocation2] sm:$0xff]
      %v1780 = vld [vmem:[#allocation2 + $0x8] sm:$0xf]
      %v1781 = vld [vmem:[#allocation2 + $0xc] sm:$0xff]
      %v1782 = vld [vmem:[#allocation2 + $0x14] sm:$0xf]
      %v1783 = vld [vmem:[#allocation2 + $0x18] sm:$0xff]
      %v1784 = vld [vmem:[#allocation2 + $0x20] sm:$0xf]
      %v1785 = vld [vmem:[#allocation2 + $0x24] sm:$0xff]
      %v1786 = vld [vmem:[#allocation2 + $0x2c] sm:$0xf]
      %v1787 = vld [vmem:[#allocation2 + $0x30] sm:$0xff]
      %v1788 = vld [vmem:[#allocation2 + $0x38] sm:$0xf]
      %v1789 = vld [vmem:[#allocation2 + $0x3c] sm:$0xff]
      %v1790 = vld [vmem:[#allocation2 + $0x44] sm:$0xf]
      %v1791 = vld [vmem:[#allocation2 + $0x48] sm:$0xff]
      %v1792 = vld [vmem:[#allocation2 + $0x50] sm:$0xf]
      %v1793 = vld [vmem:[#allocation2 + $0x54] sm:$0xff]
      %v1794 = vld [vmem:[#allocation2 + $0x5c] sm:$0xf]
      %s1795 = scalar_lea.vmem %s210, 384
      %v1796 = vld [vmem:[%s1795] sm:$0xf]
      %v1797 = vld [vmem:[%s1795 + $0x4] sm:$0xf]
      %v1798 = vld [vmem:[%s1795 + $0x8] sm:$0xf]
      %v1799 = vld [vmem:[%s1795 + $0xc] sm:$0xf]
      %v1800 = vld [vmem:[%s1795 + $0x10] sm:$0xf]
      %v1801 = vld [vmem:[%s1795 + $0x14] sm:$0xf]
      %v1802 = vld [vmem:[%s1795 + $0x18] sm:$0xf]
      %v1803 = vld [vmem:[%s1795 + $0x1c] sm:$0xf]
      %v1804 = vld [vmem:[%s1795 + $0x20] sm:$0xf]
      %v1805 = vld [vmem:[%s1795 + $0x24] sm:$0xf]
      %v1806 = vld [vmem:[%s1795 + $0x28] sm:$0xf]
      %v1807 = vld [vmem:[%s1795 + $0x2c] sm:$0xf]
      %v1808 = vld [vmem:[%s1795 + $0x30] sm:$0xf]
      %v1809 = vld [vmem:[%s1795 + $0x34] sm:$0xf]
      %v1810 = vld [vmem:[%s1795 + $0x38] sm:$0xf]
      %v1811 = vld [vmem:[%s1795 + $0x3c] sm:$0xf]
      %v1812 = vld [vmem:[%s1795 + $0x40] sm:$0xf]
      %v1813 = vld [vmem:[%s1795 + $0x44] sm:$0xf]
      %v1814 = vld [vmem:[%s1795 + $0x48] sm:$0xf]
      %v1815 = vld [vmem:[%s1795 + $0x4c] sm:$0xf]
      %v1816 = vld [vmem:[%s1795 + $0x50] sm:$0xf]
      %v1817 = vld [vmem:[%s1795 + $0x54] sm:$0xf]
      %v1818 = vld [vmem:[%s1795 + $0x58] sm:$0xf]
      %v1819 = vld [vmem:[%s1795 + $0x5c] sm:$0xf]
      %v1820 = vld [vmem:[%s1795 + $0x60] sm:$0xf]
      %v1821 = vld [vmem:[%s1795 + $0x64] sm:$0xf]
      %v1822 = vld [vmem:[%s1795 + $0x68] sm:$0xf]
      %v1823 = vld [vmem:[%s1795 + $0x6c] sm:$0xf]
      %v1824 = vld [vmem:[%s1795 + $0x70] sm:$0xf]
      %v1825 = vld [vmem:[%s1795 + $0x74] sm:$0xf]
      %v1826 = vld [vmem:[%s1795 + $0x78] sm:$0xf]
      %v1827 = vld [vmem:[%s1795 + $0x7c] sm:$0xf]
      %v1828 = vld [vmem:[%s1795 + $0x80] sm:$0xf]
      %v1829 = vld [vmem:[%s1795 + $0x84] sm:$0xf]
      %v1830 = vld [vmem:[%s1795 + $0x88] sm:$0xf]
      %v1831 = vld [vmem:[%s1795 + $0x8c] sm:$0xf]
      %v1832 = vld [vmem:[%s1795 + $0x90] sm:$0xf]
      %v1833 = vld [vmem:[%s1795 + $0x94] sm:$0xf]
      %v1834 = vld [vmem:[%s1795 + $0x98] sm:$0xf]
      %v1835 = vld [vmem:[%s1795 + $0x9c] sm:$0xf]
      %v1836 = vld [vmem:[%s1795 + $0xa0] sm:$0xf]
      %v1837 = vld [vmem:[%s1795 + $0xa4] sm:$0xf]
      %v1838 = vld [vmem:[%s1795 + $0xa8] sm:$0xf]
      %v1839 = vld [vmem:[%s1795 + $0xac] sm:$0xf]
      %v1840 = vld [vmem:[%s1795 + $0xb0] sm:$0xf]
      %v1841 = vld [vmem:[%s1795 + $0xb4] sm:$0xf]
      %v1842 = vld [vmem:[%s1795 + $0xb8] sm:$0xf]
      %v1843 = vld [vmem:[%s1795 + $0xbc] sm:$0xf]
      %v1860 = vunpack.c.l.b16 %v1779
      %v1861 = vunpack.c.h.b16 %v1779
      %v1862 = vunpack.c.l.b16 %v1780
      %v1863 = vunpack.c.l.b16 %v1781
      %v1864 = vunpack.c.h.b16 %v1781
      %v1865 = vunpack.c.l.b16 %v1782
      %v1866 = vunpack.c.l.b16 %v1783
      %v1867 = vunpack.c.h.b16 %v1783
      %v1868 = vunpack.c.l.b16 %v1784
      %v1869 = vunpack.c.l.b16 %v1785
      %v1870 = vunpack.c.h.b16 %v1785
      %v1871 = vunpack.c.l.b16 %v1786
      %v1872 = vunpack.c.l.b16 %v1787
      %v1873 = vunpack.c.h.b16 %v1787
      %v1874 = vunpack.c.l.b16 %v1788
      %v1875 = vunpack.c.l.b16 %v1789
      %v1876 = vunpack.c.h.b16 %v1789
      %v1877 = vunpack.c.l.b16 %v1790
      %v1878 = vunpack.c.l.b16 %v1791
      %v1879 = vunpack.c.h.b16 %v1791
      %v1880 = vunpack.c.l.b16 %v1792
      %v1881 = vunpack.c.l.b16 %v1793
      %v1882 = vunpack.c.h.b16 %v1793
      %v1883 = vunpack.c.l.b16 %v1794
      %v1884 = vpack.c.b16 %v1863, %v1860
      %v1885 = vpack.c.b16 %v1864, %v1861
      %v1886 = vpack.c.b16 %v1865, %v1862
      %v1887 = vpack.c.b16 %v1869, %v1866
      %v1888 = vpack.c.b16 %v1870, %v1867
      %v1889 = vpack.c.b16 %v1871, %v1868
      %v1890 = vpack.c.b16 %v1875, %v1872
      %v1891 = vpack.c.b16 %v1876, %v1873
      %v1892 = vpack.c.b16 %v1877, %v1874
      %v1893 = vpack.c.b16 %v1881, %v1878
      %v1894 = vpack.c.b16 %v1882, %v1879
      %v1895 = vpack.c.b16 %v1883, %v1880
      %v1956 = vunpack.c.l.b16 %v1796
      %v1957 = vunpack.c.l.b16 %v1797
      %v1958 = vunpack.c.l.b16 %v1798
      %v1959 = vunpack.c.l.b16 %v1799
      %v1960 = vunpack.c.l.b16 %v1800
      %v1961 = vunpack.c.l.b16 %v1801
      %v1962 = vunpack.c.l.b16 %v1802
      %v1963 = vunpack.c.l.b16 %v1803
      %v1964 = vunpack.c.l.b16 %v1804
      %v1965 = vunpack.c.l.b16 %v1805
      %v1966 = vunpack.c.l.b16 %v1806
      %v1967 = vunpack.c.l.b16 %v1807
      %v1968 = vunpack.c.l.b16 %v1808
      %v1969 = vunpack.c.l.b16 %v1809
      %v1970 = vunpack.c.l.b16 %v1810
      %v1971 = vunpack.c.l.b16 %v1811
      %v1972 = vunpack.c.l.b16 %v1812
      %v1973 = vunpack.c.l.b16 %v1813
      %v1974 = vunpack.c.l.b16 %v1814
      %v1975 = vunpack.c.l.b16 %v1815
      %v1976 = vunpack.c.l.b16 %v1816
      %v1977 = vunpack.c.l.b16 %v1817
      %v1978 = vunpack.c.l.b16 %v1818
      %v1979 = vunpack.c.l.b16 %v1819
      %v1980 = vunpack.c.l.b16 %v1820
      %v1981 = vunpack.c.l.b16 %v1821
      %v1982 = vunpack.c.l.b16 %v1822
      %v1983 = vunpack.c.l.b16 %v1823
      %v1984 = vunpack.c.l.b16 %v1824
      %v1985 = vunpack.c.l.b16 %v1825
      %v1986 = vunpack.c.l.b16 %v1826
      %v1987 = vunpack.c.l.b16 %v1827
      %v1988 = vunpack.c.l.b16 %v1828
      %v1989 = vunpack.c.l.b16 %v1829
      %v1990 = vunpack.c.l.b16 %v1830
      %v1991 = vunpack.c.l.b16 %v1831
      %v1992 = vunpack.c.l.b16 %v1832
      %v1993 = vunpack.c.l.b16 %v1833
      %v1994 = vunpack.c.l.b16 %v1834
      %v1995 = vunpack.c.l.b16 %v1835
      %v1996 = vunpack.c.l.b16 %v1836
      %v1997 = vunpack.c.l.b16 %v1837
      %v1998 = vunpack.c.l.b16 %v1838
      %v1999 = vunpack.c.l.b16 %v1839
      %v2000 = vunpack.c.l.b16 %v1840
      %v2001 = vunpack.c.l.b16 %v1841
      %v2002 = vunpack.c.l.b16 %v1842
      %v2003 = vunpack.c.l.b16 %v1843
      %v2004 = vpack.c.b16 %v1957, %v1956
      %v2005 = vpack.c.b16 %v1959, %v1958
      %v2006 = vpack.c.b16 %v1961, %v1960
      %v2007 = vpack.c.b16 %v1963, %v1962
      %v2008 = vpack.c.b16 %v1965, %v1964
      %v2009 = vpack.c.b16 %v1967, %v1966
      %v2010 = vpack.c.b16 %v1969, %v1968
      %v2011 = vpack.c.b16 %v1971, %v1970
      %v2012 = vpack.c.b16 %v1973, %v1972
      %v2013 = vpack.c.b16 %v1975, %v1974
      %v2014 = vpack.c.b16 %v1977, %v1976
      %v2015 = vpack.c.b16 %v1979, %v1978
      %v2016 = vpack.c.b16 %v1981, %v1980
      %v2017 = vpack.c.b16 %v1983, %v1982
      %v2018 = vpack.c.b16 %v1985, %v1984
      %v2019 = vpack.c.b16 %v1987, %v1986
      %v2020 = vpack.c.b16 %v1989, %v1988
      %v2021 = vpack.c.b16 %v1991, %v1990
      %v2022 = vpack.c.b16 %v1993, %v1992
      %v2023 = vpack.c.b16 %v1995, %v1994
      %v2024 = vpack.c.b16 %v1997, %v1996
      %v2025 = vpack.c.b16 %v1999, %v1998
      %v2026 = vpack.c.b16 %v2001, %v2000
      %v2027 = vpack.c.b16 %v2003, %v2002
      %2052 = vmatprep.subr.bf16.mxu0 0
      %2053 = vmatpush1.bf16.msra.mxu0 %v2004
      %2054 = vmatprep.subr.bf16.mxu0 0
      %2055 = vmatpush1.bf16.msra.mxu0 %v2005
      %2056 = vmatprep.subr.bf16.mxu0 0
      %2057 = vmatpush1.bf16.msra.mxu0 %v2006
      %2058 = vmatprep.subr.bf16.mxu0 0
      %2059 = vmatpush1.bf16.msra.mxu0 %v2007
      %2060 = vmatprep.subr.bf16.mxu0 0
      %2061 = vmatpush1.bf16.msra.mxu0 %v2008
      %2062 = vmatprep.subr.bf16.mxu0 0
      %2063 = vmatpush1.bf16.msra.mxu0 %v2009
      %2064 = vmatprep.subr.bf16.mxu0 0
      %2065 = vmatpush1.bf16.msra.mxu0 %v2010
      %2066 = vmatprep.subr.bf16.mxu0 0
      %2067 = vmatpush1.bf16.msra.mxu0 %v2011
      %2068 = vmatprep.subr.bf16.mxu0 0
      %2069 = vmatpush1.bf16.msra.mxu0 %v2012
      %2070 = vmatprep.subr.bf16.mxu0 0
      %2071 = vmatpush1.bf16.msra.mxu0 %v2013
      %2072 = vmatprep.subr.bf16.mxu0 0
      %2073 = vmatpush1.bf16.msra.mxu0 %v2014
      %2074 = vmatprep.subr.bf16.mxu0 0
      %2075 = vmatpush1.bf16.msra.mxu0 %v2015
      %2076 = vmatprep.subr.bf16.mxu0 0
      %2077 = vmatpush1.bf16.msra.mxu0 %v2016
      %2078 = vmatprep.subr.bf16.mxu0 0
      %2079 = vmatpush1.bf16.msra.mxu0 %v2017
      %2080 = vmatprep.subr.bf16.mxu0 0
      %2081 = vmatpush1.bf16.msra.mxu0 %v2018
      %2082 = vmatprep.subr.bf16.mxu0 0
      %2083 = vmatpush1.bf16.msra.mxu0 %v2019
      %2084 = vmatprep.mubr.bf16.mxu0 %v1885
      %2085 = vmatmul.mubr.bf16.gmra.mrb[0].mxu0 %v1884
      %v2086 = vpop.f32.mrb[0].mxu0
      %v2087 = vadd.f32 0.0, %v2086
      %v2088 = vpop.f32.mrb[0].mxu0
      %v2089 = vpop.f32.mrb[0].mxu0
      %v2090 = vadd.f32 0.0, %v2089
      %v2091 = vpop.f32.mrb[0].mxu0
      %2092 = vmatprep.mubr.bf16.mxu0 %v1888
      %2093 = vmatmul.mubr.bf16.gmra.mrb[0].mxu0 %v1887
      %v2094 = vpop.f32.mrb[0].mxu0
      %v2095 = vadd.f32 0.0, %v2094
      %v2096 = vpop.f32.mrb[0].mxu0
      %v2097 = vpop.f32.mrb[0].mxu0
      %v2098 = vadd.f32 0.0, %v2097
      %v2099 = vpop.f32.mrb[0].mxu0
      %2100 = vmatprep.mubr.bf16.mxu0 %v1891
      %2101 = vmatmul.mubr.bf16.gmra.mrb[0].mxu0 %v1890
      %v2102 = vpop.f32.mrb[0].mxu0
      %v2103 = vadd.f32 0.0, %v2102
      %v2104 = vpop.f32.mrb[0].mxu0
      %v2105 = vpop.f32.mrb[0].mxu0
      %v2106 = vadd.f32 0.0, %v2105
      %v2107 = vpop.f32.mrb[0].mxu0
      %2108 = vmatprep.mubr.bf16.mxu0 %v1894
      %2109 = vmatmul.mubr.bf16.gmra.mrb[0].mxu0 %v1893
      %v2110 = vpop.f32.mrb[0].mxu0
      %v2111 = vadd.f32 0.0, %v2110
      %v2112 = vpop.f32.mrb[0].mxu0
      %v2113 = vpop.f32.mrb[0].mxu0
      %v2114 = vadd.f32 0.0, %v2113
      %v2115 = vpop.f32.mrb[0].mxu0
      %2116 = vdwg.mxu0
      %2117 = vmatprep.subr.bf16.mxu0 0
      %2118 = vmatpush1.bf16.msra.mxu0 %v2020
      %2119 = vmatprep.subr.bf16.mxu0 0
      %2120 = vmatpush1.bf16.msra.mxu0 %v2021
      %2121 = vmatprep.subr.bf16.mxu0 0
      %2122 = vmatpush1.bf16.msra.mxu0 %v2022
      %2123 = vmatprep.subr.bf16.mxu0 0
      %2124 = vmatpush1.bf16.msra.mxu0 %v2023
      %2125 = vmatprep.subr.bf16.mxu0 0
      %2126 = vmatpush1.bf16.msra.mxu0 %v2024
      %2127 = vmatprep.subr.bf16.mxu0 0
      %2128 = vmatpush1.bf16.msra.mxu0 %v2025
      %2129 = vmatprep.subr.bf16.mxu0 0
      %2130 = vmatpush1.bf16.msra.mxu0 %v2026
      %2131 = vmatprep.subr.bf16.mxu0 0
      %2132 = vmatpush1.bf16.msra.mxu0 %v2027
      %2133 = vmatprep.subr.bf16.mxu0 0
      %2134 = vmatpush1.bf16.msra.mxu0 0
      %2135 = vmatprep.subr.bf16.mxu0 0
      %2136 = vmatpush1.bf16.msra.mxu0 0
      %2137 = vmatprep.subr.bf16.mxu0 0
      %2138 = vmatpush1.bf16.msra.mxu0 0
      %2139 = vmatprep.subr.bf16.mxu0 0
      %2140 = vmatpush1.bf16.msra.mxu0 0
      %2141 = vmatprep.subr.bf16.mxu0 0
      %2142 = vmatpush1.bf16.msra.mxu0 0
      %2143 = vmatprep.subr.bf16.mxu0 0
      %2144 = vmatpush1.bf16.msra.mxu0 0
      %2145 = vmatprep.subr.bf16.mxu0 0
      %2146 = vmatpush1.bf16.msra.mxu0 0
      %2147 = vmatprep.subr.bf16.mxu0 0
      %2148 = vmatpush1.bf16.msra.mxu0 0
      %2149 = vmatprep.mubr.bf16.mxu0 0
      %2150 = vmatmul.mubr.bf16.gmra.mrb[0].mxu0 %v1886
      %v2151 = vpop.f32.mrb[0].mxu0
      %v2152 = vadd.f32 %v2087, %v2151
      %v2153 = vpop.f32.mrb[0].mxu0
      %v2154 = vpop.f32.mrb[0].mxu0
      %v2155 = vadd.f32 %v2090, %v2154
      %v2156 = vpop.f32.mrb[0].mxu0
      %2157 = vmatprep.mubr.bf16.mxu0 0
      %2158 = vmatmul.mubr.bf16.gmra.mrb[0].mxu0 %v1889
      %v2159 = vpop.f32.mrb[0].mxu0
      %v2160 = vadd.f32 %v2095, %v2159
      %v2161 = vpop.f32.mrb[0].mxu0
      %v2162 = vpop.f32.mrb[0].mxu0
      %v2163 = vadd.f32 %v2098, %v2162
      %v2164 = vpop.f32.mrb[0].mxu0
      %2165 = vmatprep.mubr.bf16.mxu0 0
      %2166 = vmatmul.mubr.bf16.gmra.mrb[0].mxu0 %v1892
      %v2167 = vpop.f32.mrb[0].mxu0
      %v2168 = vadd.f32 %v2103, %v2167
      %v2169 = vpop.f32.mrb[0].mxu0
      %v2170 = vpop.f32.mrb[0].mxu0
      %v2171 = vadd.f32 %v2106, %v2170
      %v2172 = vpop.f32.mrb[0].mxu0
      %2173 = vmatprep.mubr.bf16.mxu0 0
      %2174 = vmatmul.mubr.bf16.gmra.mrb[0].mxu0 %v1895
      %v2175 = vpop.f32.mrb[0].mxu0
      %v2176 = vadd.f32 %v2111, %v2175
      %v2177 = vpop.f32.mrb[0].mxu0
      %v2178 = vpop.f32.mrb[0].mxu0
      %v2179 = vadd.f32 %v2114, %v2178
      %v2180 = vpop.f32.mrb[0].mxu0
      %2181 = vdwg.mxu0
      %v2182 = vadd.f32 %v1530, %v2152
      %v2183 = vadd.f32 %v1531, %v2155
      %v2184 = vadd.f32 %v1532, %v2160
      %v2185 = vadd.f32 %v1533, %v2163
      %v2186 = vadd.f32 %v1534, %v2168
      %v2187 = vadd.f32 %v1535, %v2171
      %v2188 = vadd.f32 %v1536, %v2176
      %v2189 = vadd.f32 %v1537, %v2179
      %v2190 = vmax.f32 %v2182, 0.0
      %v2191 = vmax.f32 %v2183, 0.0
      %v2192 = vmax.f32 %v2184, 0.0
      %v2193 = vmax.f32 %v2185, 0.0
      %v2194 = vmax.f32 %v2186, 0.0
      %v2195 = vmax.f32 %v2187, 0.0
      %v2196 = vmax.f32 %v2188, 0.0
      %v2197 = vmax.f32 %v2189, 0.0
      %v2198 = vpack.c.bf16 %v2190, %v2190
      %v2199 = vpack.c.bf16 %v2191, %v2191
      %v2200 = vpack.c.bf16 %v2192, %v2192
      %v2201 = vpack.c.bf16 %v2193, %v2193
      %v2202 = vpack.c.bf16 %v2194, %v2194
      %v2203 = vpack.c.bf16 %v2195, %v2195
      %v2204 = vpack.c.bf16 %v2196, %v2196
      %v2205 = vpack.c.bf16 %v2197, %v2197
      %2206 = vst [vmem:[%s221] sm:$0xf] %v2198
      %2207 = vst [vmem:[%s221 + $0x4] sm:$0xf] %v2199
      %2208 = vst [vmem:[%s221 + $0x8] sm:$0xf] %v2200
      %2209 = vst [vmem:[%s221 + $0xc] sm:$0xf] %v2201
      %2210 = vst [vmem:[%s221 + $0x10] sm:$0xf] %v2202
      %2211 = vst [vmem:[%s221 + $0x14] sm:$0xf] %v2203
      %2212 = vst [vmem:[%s221 + $0x18] sm:$0xf] %v2204
      %2213 = vst [vmem:[%s221 + $0x1c] sm:$0xf] %v2205
      %p2214 = scmp.lt.s32.totalorder %s19, 1
      %s2215 = scalar_select %p2214, %s19, 1
      %p2216 = scmp.lt.s32.totalorder %s18, 0
      %s2217 = scalar_select %p2216, %s18, 0
      %s2218 = smul.addr %s2215, 8
      %s2219 = sadd.s32 %s2217, %s2218
      %s2220 = smul.addr %s2219, 4
      %s2221 = scalar_lea.vmem %s3, %s2220
      // Predicated region
      $region33: #{truncated_vgg19_apply.7} parent=31 // pred_check
        %p2222 = pneg %p124
      $region34: #{truncated_vgg19_apply.7} parent=31 // pred_check_branch
        %2224 = sbr.rel (%p2222) target = $region36
      $region35: #{truncated_vgg19_apply.7} parent=31 // pred_region
        _
      $region36: #{truncated_vgg19_apply.7} parent=31 // pred_fallthru
        _
    $region32: #{truncated_vgg19_apply.7} parent=5 // pred_fallthru
      _
    %p2225 = scmp.le.s32.totalorder 2, %s9
    // Predicated region
    $region37: #{truncated_vgg19_apply.7} parent=5 // pred_check
      %p2226 = pneg %p2225
    $region38: #{truncated_vgg19_apply.7} parent=5 // pred_check_branch
      %2228 = sbr.rel (%p2226) target = $region40
    $region39: #{truncated_vgg19_apply.7} parent=5 // pred_region
      %s2229 = ssub.s32 %s9, 2
      // Predicated region
      $region41: #{truncated_vgg19_apply.7} parent=39 // pred_check
        %p2230 = pneg %p130
      $region42: #{truncated_vgg19_apply.7} parent=39 // pred_check_branch
        %2232 = sbr.rel (%p2230) target = $region44
      $region43: #{truncated_vgg19_apply.7} parent=39 // pred_region
        %p2233 = scmp.lt.s32.totalorder %s21, 1
        %s2234 = scalar_select %p2233, %s21, 1
        %p2235 = scmp.lt.s32.totalorder %s20, 0
        %s2236 = scalar_select %p2235, %s20, 0
        %s2237 = smul.addr %s2234, 8
        %s2238 = sadd.s32 %s2236, %s2237
        %s2239 = smul.addr %s2238, 4
        %s2240 = scalar_lea.vmem %s3, %s2239
      $region44: #{truncated_vgg19_apply.7} parent=39 // pred_fallthru
        _
    $region40: #{truncated_vgg19_apply.7} parent=5 // pred_fallthru
      _
  $region6: #{truncated_vgg19_apply.7} parent=0 // loop_footer
    %s13 = sadd.s32 1, %s9
  $region7: #{truncated_vgg19_apply.7} parent=0 // loop_footer_branch
    %8 = sbr.rel target = $region3
  $region8: #{truncated_vgg19_apply.7} parent=0 // loop_exit
    _

</llo_original>
